<compile_context>
chip_gen: v7x
topology: tpu7x:2x2x1
jax: 0.10.0
libtpu: 0.0.40
codegen_flags: <defaults>
</compile_context>

<pallas_src>
import functools

import jax
import jax.numpy as jnp
from jax.experimental import pallas as pl
from jax.experimental.pallas import tpu as pltpu

_NEG_SLOPE = 0.2
_VMEM_LIMIT = 64 * 1024 * 1024


def _round_up(x, m):
    return ((x + m - 1) // m) * m


def _leaky(x):
    # max(x, 0.2*x) == LeakyReLU(0.2); VPU max+mul in f32 (no cmp+select).
    return jnp.maximum(x, _NEG_SLOPE * x)


# --------------------------- Pallas kernels -------------------------------- #
def _direct_conv_kernel(x_ref, w_ref, b_ref, o_ref, *, wp, ksize, apply_lrelu):
    """Direct 4x4 stride-1 conv on one image, folded patch gather.

    x_ref: (R_total, Cin_p) bf16  row-flattened zero-padded image (full block)
    w_ref: (K*K, Cin_p, Cout_p) bf16  fully resident weights
    b_ref: (1, Cout_p) f32
    o_ref: (M_out, Cout_p)  widened (Ho*Wp rows) output for this image
    """
    m_out = o_ref.shape[0]
    acc = None
    for t in range(ksize * ksize):
        ki, kj = divmod(t, ksize)
        off = ki * wp + kj                     # static flattened-row shift
        lhs = x_ref[pl.ds(off, m_out), :]      # (M_out, Cin_p) bf16
        part = jnp.dot(lhs, w_ref[t], preferred_element_type=jnp.float32)
        acc = part if acc is None else acc + part
    acc = acc + b_ref[...]
    if apply_lrelu:
        acc = _leaky(acc)
    o_ref[...] = acc.astype(o_ref.dtype)


def _mm_bias_act_kernel(a_ref, w_ref, b_ref, o_ref, *, apply_lrelu):
    """One whole-K matmul tile + fused bias + optional LeakyReLU.

    a_ref: (TM, Kdim) bf16 im2col tile, w_ref: (Kdim, Cout_p) bf16 resident,
    b_ref: (1, Cout_p) f32, o_ref: (TM, Cout_p).
    """
    acc = jnp.dot(a_ref[...], w_ref[...], preferred_element_type=jnp.float32)
    acc = acc + b_ref[...]
    if apply_lrelu:
        acc = _leaky(acc)
    o_ref[...] = acc.astype(o_ref.dtype)


# ---------------------- stride-1 layers: direct conv ----------------------- #
def _conv_stride1_direct(x, w, b, apply_lrelu, out_dtype):
    """x: (N, H, W, Cin) bf16 NHWC.  w: (Cout, Cin, 4, 4) f32.  stride=1, pad=1."""
    N, H, W, Cin = x.shape
    Cout, _, K, _ = w.shape
    pad = 1
    Hp, Wp = H + 2 * pad, W + 2 * pad
    Ho, Wo = Hp - K + 1, Wp - K + 1

    Cin_p = _round_up(Cin, 128)
    Cout_p = _round_up(Cout, 128)

    # "Widened" output: Ho x Wp positions; columns wo >= Wo are garbage and are
    # sliced off afterwards.  This makes every (ki,kj) tap a contiguous slice
    # of the row-flattened padded image -> no im2col materialization.
    m_img = Ho * Wp
    m_out = _round_up(m_img, 8)
    r_total = (K - 1) * Wp + (K - 1) + m_out   # rows needed for the last tap

    # Cheap pre-kernel work on the un-blown bf16 activation.
    xp = jnp.pad(x, ((0, 0), (pad, pad), (pad, pad), (0, Cin_p - Cin)))
    xf = xp.reshape(N, Hp * Wp, Cin_p)
    xf = jnp.pad(xf, ((0, 0), (0, r_total - Hp * Wp), (0, 0)))

    # Weights: (Cout,Cin,K,K) -> (K*K, Cin_p, Cout_p) bf16, VMEM-resident.
    wk = jnp.transpose(w, (2, 3, 1, 0)).reshape(K * K, Cin, Cout)
    wk = jnp.pad(wk, ((0, 0), (0, Cin_p - Cin), (0, Cout_p - Cout)))
    wk = wk.astype(jnp.bfloat16)
    bk = jnp.pad(b.astype(jnp.float32), (0, Cout_p - Cout)).reshape(1, Cout_p)

    kernel = functools.partial(
        _direct_conv_kernel, wp=Wp, ksize=K, apply_lrelu=apply_lrelu
    )

    out = pl.pallas_call(
        kernel,
        out_shape=jax.ShapeDtypeStruct((N, m_out, Cout_p), out_dtype),
        grid_spec=pltpu.PrefetchScalarGridSpec(
            num_scalar_prefetch=0,
            grid=(N,),
            in_specs=[
                pl.BlockSpec((None, r_total, Cin_p), lambda n: (n, 0, 0)),
                pl.BlockSpec((K * K, Cin_p, Cout_p), lambda n: (0, 0, 0)),
                pl.BlockSpec((1, Cout_p), lambda n: (0, 0)),
            ],
            out_specs=pl.BlockSpec((None, m_out, Cout_p), lambda n: (n, 0, 0)),
        ),
        compiler_params=pltpu.CompilerParams(
            dimension_semantics=("parallel",),
            vmem_limit_bytes=_VMEM_LIMIT,
        ),
    )(xf, wk, bk)

    # Drop widened/garbage columns, padded rows and padded channels.
    out = out[:, : Ho * Wp, :Cout].reshape(N, Ho, Wp, Cout)[:, :, :Wo, :]
    return out


# --------------------- stride-2 layers: im2col matmul ---------------------- #
def _im2col_nhwc(x, K, stride, pad):
    """x: (N,H,W,C) -> (N*Ho*Wo, K*K*C), feature order (ki, kj, C)."""
    N, H, W, C = x.shape
    xp = jnp.pad(x, ((0, 0), (pad, pad), (pad, pad), (0, 0)))
    Ho = (H + 2 * pad - K) // stride + 1
    Wo = (W + 2 * pad - K) // stride + 1
    cols = []
    for ki in range(K):
        for kj in range(K):
            cols.append(
                xp[:, ki:ki + stride * Ho:stride, kj:kj + stride * Wo:stride, :]
            )
    p = jnp.concatenate(cols, axis=-1)
    return p.reshape(N * Ho * Wo, K * K * C), Ho, Wo


def _conv_stride2_im2col(x, w, b, apply_lrelu, out_dtype):
    """x: (N,H,W,Cin) bf16 NHWC.  w: (Cout,Cin,4,4) f32.  stride=2, pad=1."""
    N, H, W, Cin = x.shape
    Cout, _, K, _ = w.shape
    stride, pad = 2, 1

    # Channel pad BEFORE the gather (un-blown activation) so K*K*Cin_p % 128 == 0.
    Cin_p = _round_up(Cin, 8)
    Cout_p = _round_up(Cout, 128)
    xcp = jnp.pad(x, ((0, 0), (0, 0), (0, 0), (0, Cin_p - Cin)))

    a, Ho, Wo = _im2col_nhwc(xcp, K, stride, pad)     # (M, 16*Cin_p) bf16
    M, Kdim = a.shape

    # TM: large, but >= 2 M-blocks so both v7x TensorCores get work.
    TM = min(1024, _round_up((M + 1) // 2, 8))
    Mp = _round_up(M, TM)
    a = jnp.pad(a, ((0, Mp - M), (0, 0)))

    w2 = jnp.transpose(w, (2, 3, 1, 0))               # (K,K,Cin,Cout)
    w2 = jnp.pad(w2, ((0, 0), (0, 0), (0, Cin_p - Cin), (0, Cout_p - Cout)))
    w2 = w2.reshape(K * K * Cin_p, Cout_p).astype(jnp.bfloat16)
    bk = jnp.pad(b.astype(jnp.float32), (0, Cout_p - Cout)).reshape(1, Cout_p)

    kernel = functools.partial(_mm_bias_act_kernel, apply_lrelu=apply_lrelu)
    out = pl.pallas_call(
        kernel,
        out_shape=jax.ShapeDtypeStruct((Mp, Cout_p), out_dtype),
        grid_spec=pltpu.PrefetchScalarGridSpec(
            num_scalar_prefetch=0,
            grid=(Mp // TM,),
            in_specs=[
                pl.BlockSpec((TM, Kdim), lambda i: (i, 0)),      # patch tile
                pl.BlockSpec((Kdim, Cout_p), lambda i: (0, 0)),  # resident weights
                pl.BlockSpec((1, Cout_p), lambda i: (0, 0)),     # resident bias
            ],
            out_specs=pl.BlockSpec((TM, Cout_p), lambda i: (i, 0)),
        ),
        compiler_params=pltpu.CompilerParams(
            dimension_semantics=("parallel",),
            vmem_limit_bytes=_VMEM_LIMIT,
        ),
    )(a, w2, bk)

    return out[:M, :Cout].reshape(N, Ho, Wo, Cout)


# ------------------------------ model glue --------------------------------- #
def init_params(key, num_classes, ndf):
    """Deterministic synthetic parameters (same shapes as the PyTorch module)."""
    shapes = [
        (ndf, num_classes, 4, 4),      # conv1
        (ndf * 2, ndf, 4, 4),          # conv2
        (ndf * 4, ndf * 2, 4, 4),      # conv3
        (ndf * 4, ndf * 4, 4, 4),      # conv4
        (1, ndf * 4, 4, 4),            # classifier
    ]
    params = []
    for i, s in enumerate(shapes):
        kw, kb = jax.random.split(jax.random.fold_in(key, i))
        fan_in = s[1] * s[2] * s[3]
        bound = 1.0 / jnp.sqrt(fan_in)
        w = jax.random.uniform(kw, s, jnp.float32, -bound, bound)
        b = jax.random.uniform(kb, (s[0],), jnp.float32, -bound, bound)
        params.append((w, b))
    return params


def fc_discriminator_forward(params, x):
    """Forward pass matching FCDiscriminator.forward.  x: (N, num_classes, H, W)."""
    (w1, b1), (w2, b2), (w3, b3), (w4, b4), (wc, bc) = params
    h = jnp.transpose(x, (0, 2, 3, 1)).astype(jnp.bfloat16)   # NCHW->NHWC + bf16, once
    h = _conv_stride2_im2col(h, w1, b1, True, jnp.bfloat16)
    h = _conv_stride2_im2col(h, w2, b2, True, jnp.bfloat16)
    h = _conv_stride1_direct(h, w3, b3, True, jnp.bfloat16)
    h = _conv_stride1_direct(h, w4, b4, True, jnp.bfloat16)
    h = _conv_stride1_direct(h, wc, bc, False, jnp.float32)   # classifier, f32 out
    return jnp.transpose(h, (0, 3, 1, 2))                     # NHWC -> NCHW, once


def _reference_forward(params, x):
    """Pure-JAX f32 reference (lax conv) for a loose numerical check."""
    def conv(h, w, b, stride):
        out = jax.lax.conv_general_dilated(
            h, w, window_strides=(stride, stride), padding=((1, 1), (1, 1)),
            dimension_numbers=("NCHW", "OIHW", "NCHW"))
        return out + b.reshape(1, -1, 1, 1)
    def lrelu(h):
        return jnp.where(h >= 0, h, 0.2 * h)
    (w1, b1), (w2, b2), (w3, b3), (w4, b4), (wc, bc) = params
    h = lrelu(conv(x, w1, b1, 2))
    h = lrelu(conv(h, w2, b2, 2))
    h = lrelu(conv(h, w3, b3, 1))
    h = lrelu(conv(h, w4, b4, 1))
    return conv(h, wc, bc, 1)


if __name__ == "__main__":
    # Small shapes consistent with the module: batch=2, num_classes=4,
    # spatial=16x16, ndf=8 (PyTorch default 64, scaled down for a quick run).
    num_classes, ndf = 4, 8
    key = jax.random.PRNGKey(0)
    kx, kp = jax.random.split(key)
    x = jax.random.normal(kx, (2, num_classes, 16, 16), dtype=jnp.float32)
    params = init_params(kp, num_classes, ndf)

    out = jax.jit(fc_discriminator_forward)(params, x)
    out = jax.block_until_ready(out)

    # Spatial trace: 16 -> 8 -> 4 -> 3 -> 2 -> 1, channels -> 1.
    assert out.shape == (2, 1, 1, 1), out.shape
    assert bool(jnp.all(jnp.isfinite(out)))

    ref = jax.jit(_reference_forward)(params, x)
    ref = jax.block_until_ready(ref)
    assert bool(jnp.allclose(out, ref, atol=5e-2, rtol=1e-1)), (out, ref)

    print("KERNEL_OK")
</pallas_src>

<mosaic_0001>
module attributes {stable_mosaic.version = 11 : i64} {
  func.func @_mm_bias_act_kernel(%arg0: i32, %arg1: memref<64x128xbf16, #tpu.memory_space<vmem>>, %arg2: memref<128x128xbf16, #tpu.memory_space<vmem>>, %arg3: memref<1x128xf32, #tpu.memory_space<vmem>>, %arg4: memref<64x128xbf16, #tpu.memory_space<vmem>>) attributes {dimension_semantics = [#tpu.dimension_semantics<parallel>], iteration_bounds = array<i64: 2>, scalar_prefetch = 0 : i64, scratch_operands = 0 : i64, tpu.core_type = #tpu.core_type<tc>, window_params = [{transform_indices = @transform_0, window_bounds = array<i64: 64, 128>}, {pipeline_mode = #tpu.pipeline_mode<synchronous>, transform_indices = @transform_1, window_bounds = array<i64: 128, 128>}, {pipeline_mode = #tpu.pipeline_mode<synchronous>, transform_indices = @transform_2, window_bounds = array<i64: 1, 128>}, {transform_indices = @transform_3, window_bounds = array<i64: 64, 128>}]} {
    %c0 = arith.constant 0 : index
    %c0_0 = arith.constant 0 : index
    %0 = vector.load %arg1[%c0, %c0_0] : memref<64x128xbf16, #tpu.memory_space<vmem>>, vector<64x128xbf16>
    %c0_1 = arith.constant 0 : index
    %c0_2 = arith.constant 0 : index
    %1 = vector.load %arg2[%c0_1, %c0_2] : memref<128x128xbf16, #tpu.memory_space<vmem>>, vector<128x128xbf16>
    %cst = arith.constant dense<0.000000e+00> : vector<64x128xf32>
    %2 = tpu.matmul %0, %1, %cst {dimension_numbers = #tpu.dot_dimension_numbers<[1], [0], [0], [1], [0, 0, 1, 1], [], []>} : vector<64x128xbf16>, vector<128x128xbf16>, vector<64x128xf32> -> vector<64x128xf32>
    %c0_3 = arith.constant 0 : index
    %c0_4 = arith.constant 0 : index
    %3 = vector.load %arg3[%c0_3, %c0_4] : memref<1x128xf32, #tpu.memory_space<vmem>>, vector<1x128xf32>
    %4 = vector.broadcast %3 : vector<1x128xf32> to vector<64x128xf32>
    %5 = arith.addf %2, %4 : vector<64x128xf32>
    %cst_5 = arith.constant 2.000000e-01 : f32
    %6 = vector.broadcast %cst_5 : f32 to vector<64x128xf32>
    %7 = arith.mulf %6, %5 : vector<64x128xf32>
    %8 = arith.maximumf %5, %7 : vector<64x128xf32>
    %9 = arith.truncf %8 : vector<64x128xf32> to vector<64x128xbf16>
    %c0_6 = arith.constant 0 : index
    %c0_7 = arith.constant 0 : index
    %10 = vector.load %arg4[%c0_6, %c0_7] : memref<64x128xbf16, #tpu.memory_space<vmem>>, vector<64x128xbf16>
    tpu.vector_store %arg4[%c0_6, %c0_7], %9 {strides = array<i32>} : memref<64x128xbf16, #tpu.memory_space<vmem>>, vector<64x128xbf16>,
    return
  }
  func.func @transform_0(%arg0: i32) -> (i32, i32) {
    %c0_i32 = arith.constant 0 : i32
    %c0_i32_0 = arith.constant 0 : i32
    return %arg0, %c0_i32 : i32, i32
  }
  func.func @transform_1(%arg0: i32) -> (i32, i32) {
    %c0_i32 = arith.constant 0 : i32
    %c0_i32_0 = arith.constant 0 : i32
    %c0_i32_1 = arith.constant 0 : i32
    return %c0_i32, %c0_i32_0 : i32, i32
  }
  func.func @transform_2(%arg0: i32) -> (i32, i32) {
    %c0_i32 = arith.constant 0 : i32
    %c0_i32_0 = arith.constant 0 : i32
    %c0_i32_1 = arith.constant 0 : i32
    return %c0_i32, %c0_i32_0 : i32, i32
  }
  func.func @transform_3(%arg0: i32) -> (i32, i32) {
    %c0_i32 = arith.constant 0 : i32
    %c0_i32_0 = arith.constant 0 : i32
    return %arg0, %c0_i32 : i32, i32
  }
}

module attributes {stable_mosaic.version = 11 : i64} {
  func.func @_mm_bias_act_kernel(%arg0: i32, %arg1: memref<16x128xbf16, #tpu.memory_space<vmem>>, %arg2: memref<128x128xbf16, #tpu.memory_space<vmem>>, %arg3: memref<1x128xf32, #tpu.memory_space<vmem>>, %arg4: memref<16x128xbf16, #tpu.memory_space<vmem>>) attributes {dimension_semantics = [#tpu.dimension_semantics<parallel>], iteration_bounds = array<i64: 2>, scalar_prefetch = 0 : i64, scratch_operands = 0 : i64, tpu.core_type = #tpu.core_type<tc>, window_params = [{transform_indices = @transform_0, window_bounds = array<i64: 16, 128>}, {pipeline_mode = #tpu.pipeline_mode<synchronous>, transform_indices = @transform_1, window_bounds = array<i64: 128, 128>}, {pipeline_mode = #tpu.pipeline_mode<synchronous>, transform_indices = @transform_2, window_bounds = array<i64: 1, 128>}, {transform_indices = @transform_3, window_bounds = array<i64: 16, 128>}]} {
    %c0 = arith.constant 0 : index
    %c0_0 = arith.constant 0 : index
    %0 = vector.load %arg1[%c0, %c0_0] : memref<16x128xbf16, #tpu.memory_space<vmem>>, vector<16x128xbf16>
    %c0_1 = arith.constant 0 : index
    %c0_2 = arith.constant 0 : index
    %1 = vector.load %arg2[%c0_1, %c0_2] : memref<128x128xbf16, #tpu.memory_space<vmem>>, vector<128x128xbf16>
    %cst = arith.constant dense<0.000000e+00> : vector<16x128xf32>
    %2 = tpu.matmul %0, %1, %cst {dimension_numbers = #tpu.dot_dimension_numbers<[1], [0], [0], [1], [0, 0, 1, 1], [], []>} : vector<16x128xbf16>, vector<128x128xbf16>, vector<16x128xf32> -> vector<16x128xf32>
    %c0_3 = arith.constant 0 : index
    %c0_4 = arith.constant 0 : index
    %3 = vector.load %arg3[%c0_3, %c0_4] : memref<1x128xf32, #tpu.memory_space<vmem>>, vector<1x128xf32>
    %4 = vector.broadcast %3 : vector<1x128xf32> to vector<16x128xf32>
    %5 = arith.addf %2, %4 : vector<16x128xf32>
    %cst_5 = arith.constant 2.000000e-01 : f32
    %6 = vector.broadcast %cst_5 : f32 to vector<16x128xf32>
    %7 = arith.mulf %6, %5 : vector<16x128xf32>
    %8 = arith.maximumf %5, %7 : vector<16x128xf32>
    %9 = arith.truncf %8 : vector<16x128xf32> to vector<16x128xbf16>
    %c0_6 = arith.constant 0 : index
    %c0_7 = arith.constant 0 : index
    %10 = vector.load %arg4[%c0_6, %c0_7] : memref<16x128xbf16, #tpu.memory_space<vmem>>, vector<16x128xbf16>
    tpu.vector_store %arg4[%c0_6, %c0_7], %9 {strides = array<i32>} : memref<16x128xbf16, #tpu.memory_space<vmem>>, vector<16x128xbf16>,
    return
  }
  func.func @transform_0(%arg0: i32) -> (i32, i32) {
    %c0_i32 = arith.constant 0 : i32
    %c0_i32_0 = arith.constant 0 : i32
    return %arg0, %c0_i32 : i32, i32
  }
  func.func @transform_1(%arg0: i32) -> (i32, i32) {
    %c0_i32 = arith.constant 0 : i32
    %c0_i32_0 = arith.constant 0 : i32
    %c0_i32_1 = arith.constant 0 : i32
    return %c0_i32, %c0_i32_0 : i32, i32
  }
  func.func @transform_2(%arg0: i32) -> (i32, i32) {
    %c0_i32 = arith.constant 0 : i32
    %c0_i32_0 = arith.constant 0 : i32
    %c0_i32_1 = arith.constant 0 : i32
    return %c0_i32, %c0_i32_0 : i32, i32
  }
  func.func @transform_3(%arg0: i32) -> (i32, i32) {
    %c0_i32 = arith.constant 0 : i32
    %c0_i32_0 = arith.constant 0 : i32
    return %arg0, %c0_i32 : i32, i32
  }
}

module attributes {stable_mosaic.version = 11 : i64} {
  func.func @_direct_conv_kernel(%arg0: i32, %arg1: memref<1x45x128xbf16, #tpu.memory_space<vmem>>, %arg2: memref<16x128x128xbf16, #tpu.memory_space<vmem>>, %arg3: memref<1x128xf32, #tpu.memory_space<vmem>>, %arg4: memref<1x24x128xbf16, #tpu.memory_space<vmem>>) attributes {dimension_semantics = [#tpu.dimension_semantics<parallel>], iteration_bounds = array<i64: 2>, scalar_prefetch = 0 : i64, scratch_operands = 0 : i64, tpu.core_type = #tpu.core_type<tc>, window_params = [{transform_indices = @transform_0, window_bounds = array<i64: 1, 45, 128>}, {pipeline_mode = #tpu.pipeline_mode<synchronous>, transform_indices = @transform_1, window_bounds = array<i64: 16, 128, 128>}, {pipeline_mode = #tpu.pipeline_mode<synchronous>, transform_indices = @transform_2, window_bounds = array<i64: 1, 128>}, {transform_indices = @transform_3, window_bounds = array<i64: 1, 24, 128>}]} {
    %c0 = arith.constant 0 : index
    %c0_0 = arith.constant 0 : index
    %c0_1 = arith.constant 0 : index
    %0 = vector.load %arg1[%c0, %c0_0, %c0_1] : memref<1x45x128xbf16, #tpu.memory_space<vmem>>, vector<1x24x128xbf16>
    %1 = vector.shape_cast %0 : vector<1x24x128xbf16> to vector<24x128xbf16>
    %c0_2 = arith.constant 0 : index
    %c0_3 = arith.constant 0 : index
    %c0_4 = arith.constant 0 : index
    %2 = vector.load %arg2[%c0_2, %c0_3, %c0_4] : memref<16x128x128xbf16, #tpu.memory_space<vmem>>, vector<1x128x128xbf16>
    %3 = vector.shape_cast %2 : vector<1x128x128xbf16> to vector<128x128xbf16>
    %cst = arith.constant dense<0.000000e+00> : vector<24x128xf32>
    %4 = tpu.matmul %1, %3, %cst {dimension_numbers = #tpu.dot_dimension_numbers<[1], [0], [0], [1], [0, 0, 1, 1], [], []>} : vector<24x128xbf16>, vector<128x128xbf16>, vector<24x128xf32> -> vector<24x128xf32>
    %c0_5 = arith.constant 0 : index
    %c1 = arith.constant 1 : index
    %c0_6 = arith.constant 0 : index
    %5 = vector.load %arg1[%c0_5, %c1, %c0_6] : memref<1x45x128xbf16, #tpu.memory_space<vmem>>, vector<1x24x128xbf16>
    %6 = vector.shape_cast %5 : vector<1x24x128xbf16> to vector<24x128xbf16>
    %c1_7 = arith.constant 1 : index
    %c0_8 = arith.constant 0 : index
    %c0_9 = arith.constant 0 : index
    %7 = vector.load %arg2[%c1_7, %c0_8, %c0_9] : memref<16x128x128xbf16, #tpu.memory_space<vmem>>, vector<1x128x128xbf16>
    %8 = vector.shape_cast %7 : vector<1x128x128xbf16> to vector<128x128xbf16>
    %cst_10 = arith.constant dense<0.000000e+00> : vector<24x128xf32>
    %9 = tpu.matmul %6, %8, %cst_10 {dimension_numbers = #tpu.dot_dimension_numbers<[1], [0], [0], [1], [0, 0, 1, 1], [], []>} : vector<24x128xbf16>, vector<128x128xbf16>, vector<24x128xf32> -> vector<24x128xf32>
    %10 = arith.addf %4, %9 : vector<24x128xf32>
    %c0_11 = arith.constant 0 : index
    %c2 = arith.constant 2 : index
    %c0_12 = arith.constant 0 : index
    %11 = vector.load %arg1[%c0_11, %c2, %c0_12] : memref<1x45x128xbf16, #tpu.memory_space<vmem>>, vector<1x24x128xbf16>
    %12 = vector.shape_cast %11 : vector<1x24x128xbf16> to vector<24x128xbf16>
    %c2_13 = arith.constant 2 : index
    %c0_14 = arith.constant 0 : index
    %c0_15 = arith.constant 0 : index
    %13 = vector.load %arg2[%c2_13, %c0_14, %c0_15] : memref<16x128x128xbf16, #tpu.memory_space<vmem>>, vector<1x128x128xbf16>
    %14 = vector.shape_cast %13 : vector<1x128x128xbf16> to vector<128x128xbf16>
    %cst_16 = arith.constant dense<0.000000e+00> : vector<24x128xf32>
    %15 = tpu.matmul %12, %14, %cst_16 {dimension_numbers = #tpu.dot_dimension_numbers<[1], [0], [0], [1], [0, 0, 1, 1], [], []>} : vector<24x128xbf16>, vector<128x128xbf16>, vector<24x128xf32> -> vector<24x128xf32>
    %16 = arith.addf %10, %15 : vector<24x128xf32>
    %c0_17 = arith.constant 0 : index
    %c3 = arith.constant 3 : index
    %c0_18 = arith.constant 0 : index
    %17 = vector.load %arg1[%c0_17, %c3, %c0_18] : memref<1x45x128xbf16, #tpu.memory_space<vmem>>, vector<1x24x128xbf16>
    %18 = vector.shape_cast %17 : vector<1x24x128xbf16> to vector<24x128xbf16>
    %c3_19 = arith.constant 3 : index
    %c0_20 = arith.constant 0 : index
    %c0_21 = arith.constant 0 : index
    %19 = vector.load %arg2[%c3_19, %c0_20, %c0_21] : memref<16x128x128xbf16, #tpu.memory_space<vmem>>, vector<1x128x128xbf16>
    %20 = vector.shape_cast %19 : vector<1x128x128xbf16> to vector<128x128xbf16>
    %cst_22 = arith.constant dense<0.000000e+00> : vector<24x128xf32>
    %21 = tpu.matmul %18, %20, %cst_22 {dimension_numbers = #tpu.dot_dimension_numbers<[1], [0], [0], [1], [0, 0, 1, 1], [], []>} : vector<24x128xbf16>, vector<128x128xbf16>, vector<24x128xf32> -> vector<24x128xf32>
    %22 = arith.addf %16, %21 : vector<24x128xf32>
    %c0_23 = arith.constant 0 : index
    %c6 = arith.constant 6 : index
    %c0_24 = arith.constant 0 : index
    %23 = vector.load %arg1[%c0_23, %c6, %c0_24] : memref<1x45x128xbf16, #tpu.memory_space<vmem>>, vector<1x24x128xbf16>
    %24 = vector.shape_cast %23 : vector<1x24x128xbf16> to vector<24x128xbf16>
    %c4 = arith.constant 4 : index
    %c0_25 = arith.constant 0 : index
    %c0_26 = arith.constant 0 : index
    %25 = vector.load %arg2[%c4, %c0_25, %c0_26] : memref<16x128x128xbf16, #tpu.memory_space<vmem>>, vector<1x128x128xbf16>
    %26 = vector.shape_cast %25 : vector<1x128x128xbf16> to vector<128x128xbf16>
    %cst_27 = arith.constant dense<0.000000e+00> : vector<24x128xf32>
    %27 = tpu.matmul %24, %26, %cst_27 {dimension_numbers = #tpu.dot_dimension_numbers<[1], [0], [0], [1], [0, 0, 1, 1], [], []>} : vector<24x128xbf16>, vector<128x128xbf16>, vector<24x128xf32> -> vector<24x128xf32>
    %28 = arith.addf %22, %27 : vector<24x128xf32>
    %c0_28 = arith.constant 0 : index
    %c7 = arith.constant 7 : index
    %c0_29 = arith.constant 0 : index
    %29 = vector.load %arg1[%c0_28, %c7, %c0_29] : memref<1x45x128xbf16, #tpu.memory_space<vmem>>, vector<1x24x128xbf16>
    %30 = vector.shape_cast %29 : vector<1x24x128xbf16> to vector<24x128xbf16>
    %c5 = arith.constant 5 : index
    %c0_30 = arith.constant 0 : index
    %c0_31 = arith.constant 0 : index
    %31 = vector.load %arg2[%c5, %c0_30, %c0_31] : memref<16x128x128xbf16, #tpu.memory_space<vmem>>, vector<1x128x128xbf16>
    %32 = vector.shape_cast %31 : vector<1x128x128xbf16> to vector<128x128xbf16>
    %cst_32 = arith.constant dense<0.000000e+00> : vector<24x128xf32>
    %33 = tpu.matmul %30, %32, %cst_32 {dimension_numbers = #tpu.dot_dimension_numbers<[1], [0], [0], [1], [0, 0, 1, 1], [], []>} : vector<24x128xbf16>, vector<128x128xbf16>, vector<24x128xf32> -> vector<24x128xf32>
    %34 = arith.addf %28, %33 : vector<24x128xf32>
    %c0_33 = arith.constant 0 : index
    %c8 = arith.constant 8 : index
    %c0_34 = arith.constant 0 : index
    %35 = vector.load %arg1[%c0_33, %c8, %c0_34] : memref<1x45x128xbf16, #tpu.memory_space<vmem>>, vector<1x24x128xbf16>
    %36 = vector.shape_cast %35 : vector<1x24x128xbf16> to vector<24x128xbf16>
    %c6_35 = arith.constant 6 : index
    %c0_36 = arith.constant 0 : index
    %c0_37 = arith.constant 0 : index
    %37 = vector.load %arg2[%c6_35, %c0_36, %c0_37] : memref<16x128x128xbf16, #tpu.memory_space<vmem>>, vector<1x128x128xbf16>
    %38 = vector.shape_cast %37 : vector<1x128x128xbf16> to vector<128x128xbf16>
    %cst_38 = arith.constant dense<0.000000e+00> : vector<24x128xf32>
    %39 = tpu.matmul %36, %38, %cst_38 {dimension_numbers = #tpu.dot_dimension_numbers<[1], [0], [0], [1], [0, 0, 1, 1], [], []>} : vector<24x128xbf16>, vector<128x128xbf16>, vector<24x128xf32> -> vector<24x128xf32>
    %40 = arith.addf %34, %39 : vector<24x128xf32>
    %c0_39 = arith.constant 0 : index
    %c9 = arith.constant 9 : index
    %c0_40 = arith.constant 0 : index
    %41 = vector.load %arg1[%c0_39, %c9, %c0_40] : memref<1x45x128xbf16, #tpu.memory_space<vmem>>, vector<1x24x128xbf16>
    %42 = vector.shape_cast %41 : vector<1x24x128xbf16> to vector<24x128xbf16>
    %c7_41 = arith.constant 7 : index
    %c0_42 = arith.constant 0 : index
    %c0_43 = arith.constant 0 : index
    %43 = vector.load %arg2[%c7_41, %c0_42, %c0_43] : memref<16x128x128xbf16, #tpu.memory_space<vmem>>, vector<1x128x128xbf16>
    %44 = vector.shape_cast %43 : vector<1x128x128xbf16> to vector<128x128xbf16>
    %cst_44 = arith.constant dense<0.000000e+00> : vector<24x128xf32>
    %45 = tpu.matmul %42, %44, %cst_44 {dimension_numbers = #tpu.dot_dimension_numbers<[1], [0], [0], [1], [0, 0, 1, 1], [], []>} : vector<24x128xbf16>, vector<128x128xbf16>, vector<24x128xf32> -> vector<24x128xf32>
    %46 = arith.addf %40, %45 : vector<24x128xf32>
    %c0_45 = arith.constant 0 : index
    %c12 = arith.constant 12 : index
    %c0_46 = arith.constant 0 : index
    %47 = vector.load %arg1[%c0_45, %c12, %c0_46] : memref<1x45x128xbf16, #tpu.memory_space<vmem>>, vector<1x24x128xbf16>
    %48 = vector.shape_cast %47 : vector<1x24x128xbf16> to vector<24x128xbf16>
    %c8_47 = arith.constant 8 : index
    %c0_48 = arith.constant 0 : index
    %c0_49 = arith.constant 0 : index
    %49 = vector.load %arg2[%c8_47, %c0_48, %c0_49] : memref<16x128x128xbf16, #tpu.memory_space<vmem>>, vector<1x128x128xbf16>
    %50 = vector.shape_cast %49 : vector<1x128x128xbf16> to vector<128x128xbf16>
    %cst_50 = arith.constant dense<0.000000e+00> : vector<24x128xf32>
    %51 = tpu.matmul %48, %50, %cst_50 {dimension_numbers = #tpu.dot_dimension_numbers<[1], [0], [0], [1], [0, 0, 1, 1], [], []>} : vector<24x128xbf16>, vector<128x128xbf16>, vector<24x128xf32> -> vector<24x128xf32>
    %52 = arith.addf %46, %51 : vector<24x128xf32>
    %c0_51 = arith.constant 0 : index
    %c13 = arith.constant 13 : index
    %c0_52 = arith.constant 0 : index
    %53 = vector.load %arg1[%c0_51, %c13, %c0_52] : memref<1x45x128xbf16, #tpu.memory_space<vmem>>, vector<1x24x128xbf16>
    %54 = vector.shape_cast %53 : vector<1x24x128xbf16> to vector<24x128xbf16>
    %c9_53 = arith.constant 9 : index
    %c0_54 = arith.constant 0 : index
    %c0_55 = arith.constant 0 : index
    %55 = vector.load %arg2[%c9_53, %c0_54, %c0_55] : memref<16x128x128xbf16, #tpu.memory_space<vmem>>, vector<1x128x128xbf16>
    %56 = vector.shape_cast %55 : vector<1x128x128xbf16> to vector<128x128xbf16>
    %cst_56 = arith.constant dense<0.000000e+00> : vector<24x128xf32>
    %57 = tpu.matmul %54, %56, %cst_56 {dimension_numbers = #tpu.dot_dimension_numbers<[1], [0], [0], [1], [0, 0, 1, 1], [], []>} : vector<24x128xbf16>, vector<128x128xbf16>, vector<24x128xf32> -> vector<24x128xf32>
    %58 = arith.addf %52, %57 : vector<24x128xf32>
    %c0_57 = arith.constant 0 : index
    %c14 = arith.constant 14 : index
    %c0_58 = arith.constant 0 : index
    %59 = vector.load %arg1[%c0_57, %c14, %c0_58] : memref<1x45x128xbf16, #tpu.memory_space<vmem>>, vector<1x24x128xbf16>
    %60 = vector.shape_cast %59 : vector<1x24x128xbf16> to vector<24x128xbf16>
    %c10 = arith.constant 10 : index
    %c0_59 = arith.constant 0 : index
    %c0_60 = arith.constant 0 : index
    %61 = vector.load %arg2[%c10, %c0_59, %c0_60] : memref<16x128x128xbf16, #tpu.memory_space<vmem>>, vector<1x128x128xbf16>
    %62 = vector.shape_cast %61 : vector<1x128x128xbf16> to vector<128x128xbf16>
    %cst_61 = arith.constant dense<0.000000e+00> : vector<24x128xf32>
    %63 = tpu.matmul %60, %62, %cst_61 {dimension_numbers = #tpu.dot_dimension_numbers<[1], [0], [0], [1], [0, 0, 1, 1], [], []>} : vector<24x128xbf16>, vector<128x128xbf16>, vector<24x128xf32> -> vector<24x128xf32>
    %64 = arith.addf %58, %63 : vector<24x128xf32>
    %c0_62 = arith.constant 0 : index
    %c15 = arith.constant 15 : index
    %c0_63 = arith.constant 0 : index
    %65 = vector.load %arg1[%c0_62, %c15, %c0_63] : memref<1x45x128xbf16, #tpu.memory_space<vmem>>, vector<1x24x128xbf16>
    %66 = vector.shape_cast %65 : vector<1x24x128xbf16> to vector<24x128xbf16>
    %c11 = arith.constant 11 : index
    %c0_64 = arith.constant 0 : index
    %c0_65 = arith.constant 0 : index
    %67 = vector.load %arg2[%c11, %c0_64, %c0_65] : memref<16x128x128xbf16, #tpu.memory_space<vmem>>, vector<1x128x128xbf16>
    %68 = vector.shape_cast %67 : vector<1x128x128xbf16> to vector<128x128xbf16>
    %cst_66 = arith.constant dense<0.000000e+00> : vector<24x128xf32>
    %69 = tpu.matmul %66, %68, %cst_66 {dimension_numbers = #tpu.dot_dimension_numbers<[1], [0], [0], [1], [0, 0, 1, 1], [], []>} : vector<24x128xbf16>, vector<128x128xbf16>, vector<24x128xf32> -> vector<24x128xf32>
    %70 = arith.addf %64, %69 : vector<24x128xf32>
    %c0_67 = arith.constant 0 : index
    %c18 = arith.constant 18 : index
    %c0_68 = arith.constant 0 : index
    %71 = vector.load %arg1[%c0_67, %c18, %c0_68] : memref<1x45x128xbf16, #tpu.memory_space<vmem>>, vector<1x24x128xbf16>
    %72 = vector.shape_cast %71 : vector<1x24x128xbf16> to vector<24x128xbf16>
    %c12_69 = arith.constant 12 : index
    %c0_70 = arith.constant 0 : index
    %c0_71 = arith.constant 0 : index
    %73 = vector.load %arg2[%c12_69, %c0_70, %c0_71] : memref<16x128x128xbf16, #tpu.memory_space<vmem>>, vector<1x128x128xbf16>
    %74 = vector.shape_cast %73 : vector<1x128x128xbf16> to vector<128x128xbf16>
    %cst_72 = arith.constant dense<0.000000e+00> : vector<24x128xf32>
    %75 = tpu.matmul %72, %74, %cst_72 {dimension_numbers = #tpu.dot_dimension_numbers<[1], [0], [0], [1], [0, 0, 1, 1], [], []>} : vector<24x128xbf16>, vector<128x128xbf16>, vector<24x128xf32> -> vector<24x128xf32>
    %76 = arith.addf %70, %75 : vector<24x128xf32>
    %c0_73 = arith.constant 0 : index
    %c19 = arith.constant 19 : index
    %c0_74 = arith.constant 0 : index
    %77 = vector.load %arg1[%c0_73, %c19, %c0_74] : memref<1x45x128xbf16, #tpu.memory_space<vmem>>, vector<1x24x128xbf16>
    %78 = vector.shape_cast %77 : vector<1x24x128xbf16> to vector<24x128xbf16>
    %c13_75 = arith.constant 13 : index
    %c0_76 = arith.constant 0 : index
    %c0_77 = arith.constant 0 : index
    %79 = vector.load %arg2[%c13_75, %c0_76, %c0_77] : memref<16x128x128xbf16, #tpu.memory_space<vmem>>, vector<1x128x128xbf16>
    %80 = vector.shape_cast %79 : vector<1x128x128xbf16> to vector<128x128xbf16>
    %cst_78 = arith.constant dense<0.000000e+00> : vector<24x128xf32>
    %81 = tpu.matmul %78, %80, %cst_78 {dimension_numbers = #tpu.dot_dimension_numbers<[1], [0], [0], [1], [0, 0, 1, 1], [], []>} : vector<24x128xbf16>, vector<128x128xbf16>, vector<24x128xf32> -> vector<24x128xf32>
    %82 = arith.addf %76, %81 : vector<24x128xf32>
    %c0_79 = arith.constant 0 : index
    %c20 = arith.constant 20 : index
    %c0_80 = arith.constant 0 : index
    %83 = vector.load %arg1[%c0_79, %c20, %c0_80] : memref<1x45x128xbf16, #tpu.memory_space<vmem>>, vector<1x24x128xbf16>
    %84 = vector.shape_cast %83 : vector<1x24x128xbf16> to vector<24x128xbf16>
    %c14_81 = arith.constant 14 : index
    %c0_82 = arith.constant 0 : index
    %c0_83 = arith.constant 0 : index
    %85 = vector.load %arg2[%c14_81, %c0_82, %c0_83] : memref<16x128x128xbf16, #tpu.memory_space<vmem>>, vector<1x128x128xbf16>
    %86 = vector.shape_cast %85 : vector<1x128x128xbf16> to vector<128x128xbf16>
    %cst_84 = arith.constant dense<0.000000e+00> : vector<24x128xf32>
    %87 = tpu.matmul %84, %86, %cst_84 {dimension_numbers = #tpu.dot_dimension_numbers<[1], [0], [0], [1], [0, 0, 1, 1], [], []>} : vector<24x128xbf16>, vector<128x128xbf16>, vector<24x128xf32> -> vector<24x128xf32>
    %88 = arith.addf %82, %87 : vector<24x128xf32>
    %c0_85 = arith.constant 0 : index
    %c21 = arith.constant 21 : index
    %c0_86 = arith.constant 0 : index
    %89 = vector.load %arg1[%c0_85, %c21, %c0_86] : memref<1x45x128xbf16, #tpu.memory_space<vmem>>, vector<1x24x128xbf16>
    %90 = vector.shape_cast %89 : vector<1x24x128xbf16> to vector<24x128xbf16>
    %c15_87 = arith.constant 15 : index
    %c0_88 = arith.constant 0 : index
    %c0_89 = arith.constant 0 : index
    %91 = vector.load %arg2[%c15_87, %c0_88, %c0_89] : memref<16x128x128xbf16, #tpu.memory_space<vmem>>, vector<1x128x128xbf16>
    %92 = vector.shape_cast %91 : vector<1x128x128xbf16> to vector<128x128xbf16>
    %cst_90 = arith.constant dense<0.000000e+00> : vector<24x128xf32>
    %93 = tpu.matmul %90, %92, %cst_90 {dimension_numbers = #tpu.dot_dimension_numbers<[1], [0], [0], [1], [0, 0, 1, 1], [], []>} : vector<24x128xbf16>, vector<128x128xbf16>, vector<24x128xf32> -> vector<24x128xf32>
    %94 = arith.addf %88, %93 : vector<24x128xf32>
    %c0_91 = arith.constant 0 : index
    %c0_92 = arith.constant 0 : index
    %95 = vector.load %arg3[%c0_91, %c0_92] : memref<1x128xf32, #tpu.memory_space<vmem>>, vector<1x128xf32>
    %96 = vector.broadcast %95 : vector<1x128xf32> to vector<24x128xf32>
    %97 = arith.addf %94, %96 : vector<24x128xf32>
    %cst_93 = arith.constant 2.000000e-01 : f32
    %98 = vector.broadcast %cst_93 : f32 to vector<24x128xf32>
    %99 = arith.mulf %98, %97 : vector<24x128xf32>
    %100 = arith.maximumf %97, %99 : vector<24x128xf32>
    %101 = arith.truncf %100 : vector<24x128xf32> to vector<24x128xbf16>
    %c0_94 = arith.constant 0 : index
    %c0_95 = arith.constant 0 : index
    %c0_96 = arith.constant 0 : index
    %102 = vector.load %arg4[%c0_94, %c0_95, %c0_96] : memref<1x24x128xbf16, #tpu.memory_space<vmem>>, vector<1x24x128xbf16>
    %103 = vector.shape_cast %102 : vector<1x24x128xbf16> to vector<24x128xbf16>
    %104 = vector.shape_cast %101 : vector<24x128xbf16> to vector<1x24x128xbf16>
    tpu.vector_store %arg4[%c0_94, %c0_95, %c0_96], %104 {strides = array<i32>} : memref<1x24x128xbf16, #tpu.memory_space<vmem>>, vector<1x24x128xbf16>,
    return
  }
  func.func @transform_0(%arg0: i32) -> (i32, i32, i32) {
    %c0_i32 = arith.constant 0 : i32
    %c0_i32_0 = arith.constant 0 : i32
    %c0_i32_1 = arith.constant 0 : i32
    return %arg0, %c0_i32, %c0_i32_0 : i32, i32, i32
  }
  func.func @transform_1(%arg0: i32) -> (i32, i32, i32) {
    %c0_i32 = arith.constant 0 : i32
    %c0_i32_0 = arith.constant 0 : i32
    %c0_i32_1 = arith.constant 0 : i32
    %c0_i32_2 = arith.constant 0 : i32
    return %c0_i32, %c0_i32_0, %c0_i32_1 : i32, i32, i32
  }
  func.func @transform_2(%arg0: i32) -> (i32, i32) {
    %c0_i32 = arith.constant 0 : i32
    %c0_i32_0 = arith.constant 0 : i32
    %c0_i32_1 = arith.constant 0 : i32
    return %c0_i32, %c0_i32_0 : i32, i32
  }
  func.func @transform_3(%arg0: i32) -> (i32, i32, i32) {
    %c0_i32 = arith.constant 0 : i32
    %c0_i32_0 = arith.constant 0 : i32
    %c0_i32_1 = arith.constant 0 : i32
    return %arg0, %c0_i32, %c0_i32_0 : i32, i32, i32
  }
}

module attributes {stable_mosaic.version = 11 : i64} {
  func.func @_direct_conv_kernel(%arg0: i32, %arg1: memref<1x34x128xbf16, #tpu.memory_space<vmem>>, %arg2: memref<16x128x128xbf16, #tpu.memory_space<vmem>>, %arg3: memref<1x128xf32, #tpu.memory_space<vmem>>, %arg4: memref<1x16x128xbf16, #tpu.memory_space<vmem>>) attributes {dimension_semantics = [#tpu.dimension_semantics<parallel>], iteration_bounds = array<i64: 2>, scalar_prefetch = 0 : i64, scratch_operands = 0 : i64, tpu.core_type = #tpu.core_type<tc>, window_params = [{transform_indices = @transform_0, window_bounds = array<i64: 1, 34, 128>}, {pipeline_mode = #tpu.pipeline_mode<synchronous>, transform_indices = @transform_1, window_bounds = array<i64: 16, 128, 128>}, {pipeline_mode = #tpu.pipeline_mode<synchronous>, transform_indices = @transform_2, window_bounds = array<i64: 1, 128>}, {transform_indices = @transform_3, window_bounds = array<i64: 1, 16, 128>}]} {
    %c0 = arith.constant 0 : index
    %c0_0 = arith.constant 0 : index
    %c0_1 = arith.constant 0 : index
    %0 = vector.load %arg1[%c0, %c0_0, %c0_1] : memref<1x34x128xbf16, #tpu.memory_space<vmem>>, vector<1x16x128xbf16>
    %1 = vector.shape_cast %0 : vector<1x16x128xbf16> to vector<16x128xbf16>
    %c0_2 = arith.constant 0 : index
    %c0_3 = arith.constant 0 : index
    %c0_4 = arith.constant 0 : index
    %2 = vector.load %arg2[%c0_2, %c0_3, %c0_4] : memref<16x128x128xbf16, #tpu.memory_space<vmem>>, vector<1x128x128xbf16>
    %3 = vector.shape_cast %2 : vector<1x128x128xbf16> to vector<128x128xbf16>
    %cst = arith.constant dense<0.000000e+00> : vector<16x128xf32>
    %4 = tpu.matmul %1, %3, %cst {dimension_numbers = #tpu.dot_dimension_numbers<[1], [0], [0], [1], [0, 0, 1, 1], [], []>} : vector<16x128xbf16>, vector<128x128xbf16>, vector<16x128xf32> -> vector<16x128xf32>
    %c0_5 = arith.constant 0 : index
    %c1 = arith.constant 1 : index
    %c0_6 = arith.constant 0 : index
    %5 = vector.load %arg1[%c0_5, %c1, %c0_6] : memref<1x34x128xbf16, #tpu.memory_space<vmem>>, vector<1x16x128xbf16>
    %6 = vector.shape_cast %5 : vector<1x16x128xbf16> to vector<16x128xbf16>
    %c1_7 = arith.constant 1 : index
    %c0_8 = arith.constant 0 : index
    %c0_9 = arith.constant 0 : index
    %7 = vector.load %arg2[%c1_7, %c0_8, %c0_9] : memref<16x128x128xbf16, #tpu.memory_space<vmem>>, vector<1x128x128xbf16>
    %8 = vector.shape_cast %7 : vector<1x128x128xbf16> to vector<128x128xbf16>
    %cst_10 = arith.constant dense<0.000000e+00> : vector<16x128xf32>
    %9 = tpu.matmul %6, %8, %cst_10 {dimension_numbers = #tpu.dot_dimension_numbers<[1], [0], [0], [1], [0, 0, 1, 1], [], []>} : vector<16x128xbf16>, vector<128x128xbf16>, vector<16x128xf32> -> vector<16x128xf32>
    %10 = arith.addf %4, %9 : vector<16x128xf32>
    %c0_11 = arith.constant 0 : index
    %c2 = arith.constant 2 : index
    %c0_12 = arith.constant 0 : index
    %11 = vector.load %arg1[%c0_11, %c2, %c0_12] : memref<1x34x128xbf16, #tpu.memory_space<vmem>>, vector<1x16x128xbf16>
    %12 = vector.shape_cast %11 : vector<1x16x128xbf16> to vector<16x128xbf16>
    %c2_13 = arith.constant 2 : index
    %c0_14 = arith.constant 0 : index
    %c0_15 = arith.constant 0 : index
    %13 = vector.load %arg2[%c2_13, %c0_14, %c0_15] : memref<16x128x128xbf16, #tpu.memory_space<vmem>>, vector<1x128x128xbf16>
    %14 = vector.shape_cast %13 : vector<1x128x128xbf16> to vector<128x128xbf16>
    %cst_16 = arith.constant dense<0.000000e+00> : vector<16x128xf32>
    %15 = tpu.matmul %12, %14, %cst_16 {dimension_numbers = #tpu.dot_dimension_numbers<[1], [0], [0], [1], [0, 0, 1, 1], [], []>} : vector<16x128xbf16>, vector<128x128xbf16>, vector<16x128xf32> -> vector<16x128xf32>
    %16 = arith.addf %10, %15 : vector<16x128xf32>
    %c0_17 = arith.constant 0 : index
    %c3 = arith.constant 3 : index
    %c0_18 = arith.constant 0 : index
    %17 = vector.load %arg1[%c0_17, %c3, %c0_18] : memref<1x34x128xbf16, #tpu.memory_space<vmem>>, vector<1x16x128xbf16>
    %18 = vector.shape_cast %17 : vector<1x16x128xbf16> to vector<16x128xbf16>
    %c3_19 = arith.constant 3 : index
    %c0_20 = arith.constant 0 : index
    %c0_21 = arith.constant 0 : index
    %19 = vector.load %arg2[%c3_19, %c0_20, %c0_21] : memref<16x128x128xbf16, #tpu.memory_space<vmem>>, vector<1x128x128xbf16>
    %20 = vector.shape_cast %19 : vector<1x128x128xbf16> to vector<128x128xbf16>
    %cst_22 = arith.constant dense<0.000000e+00> : vector<16x128xf32>
    %21 = tpu.matmul %18, %20, %cst_22 {dimension_numbers = #tpu.dot_dimension_numbers<[1], [0], [0], [1], [0, 0, 1, 1], [], []>} : vector<16x128xbf16>, vector<128x128xbf16>, vector<16x128xf32> -> vector<16x128xf32>
    %22 = arith.addf %16, %21 : vector<16x128xf32>
    %c0_23 = arith.constant 0 : index
    %c5 = arith.constant 5 : index
    %c0_24 = arith.constant 0 : index
    %23 = vector.load %arg1[%c0_23, %c5, %c0_24] : memref<1x34x128xbf16, #tpu.memory_space<vmem>>, vector<1x16x128xbf16>
    %24 = vector.shape_cast %23 : vector<1x16x128xbf16> to vector<16x128xbf16>
    %c4 = arith.constant 4 : index
    %c0_25 = arith.constant 0 : index
    %c0_26 = arith.constant 0 : index
    %25 = vector.load %arg2[%c4, %c0_25, %c0_26] : memref<16x128x128xbf16, #tpu.memory_space<vmem>>, vector<1x128x128xbf16>
    %26 = vector.shape_cast %25 : vector<1x128x128xbf16> to vector<128x128xbf16>
    %cst_27 = arith.constant dense<0.000000e+00> : vector<16x128xf32>
    %27 = tpu.matmul %24, %26, %cst_27 {dimension_numbers = #tpu.dot_dimension_numbers<[1], [0], [0], [1], [0, 0, 1, 1], [], []>} : vector<16x128xbf16>, vector<128x128xbf16>, vector<16x128xf32> -> vector<16x128xf32>
    %28 = arith.addf %22, %27 : vector<16x128xf32>
    %c0_28 = arith.constant 0 : index
    %c6 = arith.constant 6 : index
    %c0_29 = arith.constant 0 : index
    %29 = vector.load %arg1[%c0_28, %c6, %c0_29] : memref<1x34x128xbf16, #tpu.memory_space<vmem>>, vector<1x16x128xbf16>
    %30 = vector.shape_cast %29 : vector<1x16x128xbf16> to vector<16x128xbf16>
    %c5_30 = arith.constant 5 : index
    %c0_31 = arith.constant 0 : index
    %c0_32 = arith.constant 0 : index
    %31 = vector.load %arg2[%c5_30, %c0_31, %c0_32] : memref<16x128x128xbf16, #tpu.memory_space<vmem>>, vector<1x128x128xbf16>
    %32 = vector.shape_cast %31 : vector<1x128x128xbf16> to vector<128x128xbf16>
    %cst_33 = arith.constant dense<0.000000e+00> : vector<16x128xf32>
    %33 = tpu.matmul %30, %32, %cst_33 {dimension_numbers = #tpu.dot_dimension_numbers<[1], [0], [0], [1], [0, 0, 1, 1], [], []>} : vector<16x128xbf16>, vector<128x128xbf16>, vector<16x128xf32> -> vector<16x128xf32>
    %34 = arith.addf %28, %33 : vector<16x128xf32>
    %c0_34 = arith.constant 0 : index
    %c7 = arith.constant 7 : index
    %c0_35 = arith.constant 0 : index
    %35 = vector.load %arg1[%c0_34, %c7, %c0_35] : memref<1x34x128xbf16, #tpu.memory_space<vmem>>, vector<1x16x128xbf16>
    %36 = vector.shape_cast %35 : vector<1x16x128xbf16> to vector<16x128xbf16>
    %c6_36 = arith.constant 6 : index
    %c0_37 = arith.constant 0 : index
    %c0_38 = arith.constant 0 : index
    %37 = vector.load %arg2[%c6_36, %c0_37, %c0_38] : memref<16x128x128xbf16, #tpu.memory_space<vmem>>, vector<1x128x128xbf16>
    %38 = vector.shape_cast %37 : vector<1x128x128xbf16> to vector<128x128xbf16>
    %cst_39 = arith.constant dense<0.000000e+00> : vector<16x128xf32>
    %39 = tpu.matmul %36, %38, %cst_39 {dimension_numbers = #tpu.dot_dimension_numbers<[1], [0], [0], [1], [0, 0, 1, 1], [], []>} : vector<16x128xbf16>, vector<128x128xbf16>, vector<16x128xf32> -> vector<16x128xf32>
    %40 = arith.addf %34, %39 : vector<16x128xf32>
    %c0_40 = arith.constant 0 : index
    %c8 = arith.constant 8 : index
    %c0_41 = arith.constant 0 : index
    %41 = vector.load %arg1[%c0_40, %c8, %c0_41] : memref<1x34x128xbf16, #tpu.memory_space<vmem>>, vector<1x16x128xbf16>
    %42 = vector.shape_cast %41 : vector<1x16x128xbf16> to vector<16x128xbf16>
    %c7_42 = arith.constant 7 : index
    %c0_43 = arith.constant 0 : index
    %c0_44 = arith.constant 0 : index
    %43 = vector.load %arg2[%c7_42, %c0_43, %c0_44] : memref<16x128x128xbf16, #tpu.memory_space<vmem>>, vector<1x128x128xbf16>
    %44 = vector.shape_cast %43 : vector<1x128x128xbf16> to vector<128x128xbf16>
    %cst_45 = arith.constant dense<0.000000e+00> : vector<16x128xf32>
    %45 = tpu.matmul %42, %44, %cst_45 {dimension_numbers = #tpu.dot_dimension_numbers<[1], [0], [0], [1], [0, 0, 1, 1], [], []>} : vector<16x128xbf16>, vector<128x128xbf16>, vector<16x128xf32> -> vector<16x128xf32>
    %46 = arith.addf %40, %45 : vector<16x128xf32>
    %c0_46 = arith.constant 0 : index
    %c10 = arith.constant 10 : index
    %c0_47 = arith.constant 0 : index
    %47 = vector.load %arg1[%c0_46, %c10, %c0_47] : memref<1x34x128xbf16, #tpu.memory_space<vmem>>, vector<1x16x128xbf16>
    %48 = vector.shape_cast %47 : vector<1x16x128xbf16> to vector<16x128xbf16>
    %c8_48 = arith.constant 8 : index
    %c0_49 = arith.constant 0 : index
    %c0_50 = arith.constant 0 : index
    %49 = vector.load %arg2[%c8_48, %c0_49, %c0_50] : memref<16x128x128xbf16, #tpu.memory_space<vmem>>, vector<1x128x128xbf16>
    %50 = vector.shape_cast %49 : vector<1x128x128xbf16> to vector<128x128xbf16>
    %cst_51 = arith.constant dense<0.000000e+00> : vector<16x128xf32>
    %51 = tpu.matmul %48, %50, %cst_51 {dimension_numbers = #tpu.dot_dimension_numbers<[1], [0], [0], [1], [0, 0, 1, 1], [], []>} : vector<16x128xbf16>, vector<128x128xbf16>, vector<16x128xf32> -> vector<16x128xf32>
    %52 = arith.addf %46, %51 : vector<16x128xf32>
    %c0_52 = arith.constant 0 : index
    %c11 = arith.constant 11 : index
    %c0_53 = arith.constant 0 : index
    %53 = vector.load %arg1[%c0_52, %c11, %c0_53] : memref<1x34x128xbf16, #tpu.memory_space<vmem>>, vector<1x16x128xbf16>
    %54 = vector.shape_cast %53 : vector<1x16x128xbf16> to vector<16x128xbf16>
    %c9 = arith.constant 9 : index
    %c0_54 = arith.constant 0 : index
    %c0_55 = arith.constant 0 : index
    %55 = vector.load %arg2[%c9, %c0_54, %c0_55] : memref<16x128x128xbf16, #tpu.memory_space<vmem>>, vector<1x128x128xbf16>
    %56 = vector.shape_cast %55 : vector<1x128x128xbf16> to vector<128x128xbf16>
    %cst_56 = arith.constant dense<0.000000e+00> : vector<16x128xf32>
    %57 = tpu.matmul %54, %56, %cst_56 {dimension_numbers = #tpu.dot_dimension_numbers<[1], [0], [0], [1], [0, 0, 1, 1], [], []>} : vector<16x128xbf16>, vector<128x128xbf16>, vector<16x128xf32> -> vector<16x128xf32>
    %58 = arith.addf %52, %57 : vector<16x128xf32>
    %c0_57 = arith.constant 0 : index
    %c12 = arith.constant 12 : index
    %c0_58 = arith.constant 0 : index
    %59 = vector.load %arg1[%c0_57, %c12, %c0_58] : memref<1x34x128xbf16, #tpu.memory_space<vmem>>, vector<1x16x128xbf16>
    %60 = vector.shape_cast %59 : vector<1x16x128xbf16> to vector<16x128xbf16>
    %c10_59 = arith.constant 10 : index
    %c0_60 = arith.constant 0 : index
    %c0_61 = arith.constant 0 : index
    %61 = vector.load %arg2[%c10_59, %c0_60, %c0_61] : memref<16x128x128xbf16, #tpu.memory_space<vmem>>, vector<1x128x128xbf16>
    %62 = vector.shape_cast %61 : vector<1x128x128xbf16> to vector<128x128xbf16>
    %cst_62 = arith.constant dense<0.000000e+00> : vector<16x128xf32>
    %63 = tpu.matmul %60, %62, %cst_62 {dimension_numbers = #tpu.dot_dimension_numbers<[1], [0], [0], [1], [0, 0, 1, 1], [], []>} : vector<16x128xbf16>, vector<128x128xbf16>, vector<16x128xf32> -> vector<16x128xf32>
    %64 = arith.addf %58, %63 : vector<16x128xf32>
    %c0_63 = arith.constant 0 : index
    %c13 = arith.constant 13 : index
    %c0_64 = arith.constant 0 : index
    %65 = vector.load %arg1[%c0_63, %c13, %c0_64] : memref<1x34x128xbf16, #tpu.memory_space<vmem>>, vector<1x16x128xbf16>
    %66 = vector.shape_cast %65 : vector<1x16x128xbf16> to vector<16x128xbf16>
    %c11_65 = arith.constant 11 : index
    %c0_66 = arith.constant 0 : index
    %c0_67 = arith.constant 0 : index
    %67 = vector.load %arg2[%c11_65, %c0_66, %c0_67] : memref<16x128x128xbf16, #tpu.memory_space<vmem>>, vector<1x128x128xbf16>
    %68 = vector.shape_cast %67 : vector<1x128x128xbf16> to vector<128x128xbf16>
    %cst_68 = arith.constant dense<0.000000e+00> : vector<16x128xf32>
    %69 = tpu.matmul %66, %68, %cst_68 {dimension_numbers = #tpu.dot_dimension_numbers<[1], [0], [0], [1], [0, 0, 1, 1], [], []>} : vector<16x128xbf16>, vector<128x128xbf16>, vector<16x128xf32> -> vector<16x128xf32>
    %70 = arith.addf %64, %69 : vector<16x128xf32>
    %c0_69 = arith.constant 0 : index
    %c15 = arith.constant 15 : index
    %c0_70 = arith.constant 0 : index
    %71 = vector.load %arg1[%c0_69, %c15, %c0_70] : memref<1x34x128xbf16, #tpu.memory_space<vmem>>, vector<1x16x128xbf16>
    %72 = vector.shape_cast %71 : vector<1x16x128xbf16> to vector<16x128xbf16>
    %c12_71 = arith.constant 12 : index
    %c0_72 = arith.constant 0 : index
    %c0_73 = arith.constant 0 : index
    %73 = vector.load %arg2[%c12_71, %c0_72, %c0_73] : memref<16x128x128xbf16, #tpu.memory_space<vmem>>, vector<1x128x128xbf16>
    %74 = vector.shape_cast %73 : vector<1x128x128xbf16> to vector<128x128xbf16>
    %cst_74 = arith.constant dense<0.000000e+00> : vector<16x128xf32>
    %75 = tpu.matmul %72, %74, %cst_74 {dimension_numbers = #tpu.dot_dimension_numbers<[1], [0], [0], [1], [0, 0, 1, 1], [], []>} : vector<16x128xbf16>, vector<128x128xbf16>, vector<16x128xf32> -> vector<16x128xf32>
    %76 = arith.addf %70, %75 : vector<16x128xf32>
    %c0_75 = arith.constant 0 : index
    %c16 = arith.constant 16 : index
    %c0_76 = arith.constant 0 : index
    %77 = vector.load %arg1[%c0_75, %c16, %c0_76] : memref<1x34x128xbf16, #tpu.memory_space<vmem>>, vector<1x16x128xbf16>
    %78 = vector.shape_cast %77 : vector<1x16x128xbf16> to vector<16x128xbf16>
    %c13_77 = arith.constant 13 : index
    %c0_78 = arith.constant 0 : index
    %c0_79 = arith.constant 0 : index
    %79 = vector.load %arg2[%c13_77, %c0_78, %c0_79] : memref<16x128x128xbf16, #tpu.memory_space<vmem>>, vector<1x128x128xbf16>
    %80 = vector.shape_cast %79 : vector<1x128x128xbf16> to vector<128x128xbf16>
    %cst_80 = arith.constant dense<0.000000e+00> : vector<16x128xf32>
    %81 = tpu.matmul %78, %80, %cst_80 {dimension_numbers = #tpu.dot_dimension_numbers<[1], [0], [0], [1], [0, 0, 1, 1], [], []>} : vector<16x128xbf16>, vector<128x128xbf16>, vector<16x128xf32> -> vector<16x128xf32>
    %82 = arith.addf %76, %81 : vector<16x128xf32>
    %c0_81 = arith.constant 0 : index
    %c17 = arith.constant 17 : index
    %c0_82 = arith.constant 0 : index
    %83 = vector.load %arg1[%c0_81, %c17, %c0_82] : memref<1x34x128xbf16, #tpu.memory_space<vmem>>, vector<1x16x128xbf16>
    %84 = vector.shape_cast %83 : vector<1x16x128xbf16> to vector<16x128xbf16>
    %c14 = arith.constant 14 : index
    %c0_83 = arith.constant 0 : index
    %c0_84 = arith.constant 0 : index
    %85 = vector.load %arg2[%c14, %c0_83, %c0_84] : memref<16x128x128xbf16, #tpu.memory_space<vmem>>, vector<1x128x128xbf16>
    %86 = vector.shape_cast %85 : vector<1x128x128xbf16> to vector<128x128xbf16>
    %cst_85 = arith.constant dense<0.000000e+00> : vector<16x128xf32>
    %87 = tpu.matmul %84, %86, %cst_85 {dimension_numbers = #tpu.dot_dimension_numbers<[1], [0], [0], [1], [0, 0, 1, 1], [], []>} : vector<16x128xbf16>, vector<128x128xbf16>, vector<16x128xf32> -> vector<16x128xf32>
    %88 = arith.addf %82, %87 : vector<16x128xf32>
    %c0_86 = arith.constant 0 : index
    %c18 = arith.constant 18 : index
    %c0_87 = arith.constant 0 : index
    %89 = vector.load %arg1[%c0_86, %c18, %c0_87] : memref<1x34x128xbf16, #tpu.memory_space<vmem>>, vector<1x16x128xbf16>
    %90 = vector.shape_cast %89 : vector<1x16x128xbf16> to vector<16x128xbf16>
    %c15_88 = arith.constant 15 : index
    %c0_89 = arith.constant 0 : index
    %c0_90 = arith.constant 0 : index
    %91 = vector.load %arg2[%c15_88, %c0_89, %c0_90] : memref<16x128x128xbf16, #tpu.memory_space<vmem>>, vector<1x128x128xbf16>
    %92 = vector.shape_cast %91 : vector<1x128x128xbf16> to vector<128x128xbf16>
    %cst_91 = arith.constant dense<0.000000e+00> : vector<16x128xf32>
    %93 = tpu.matmul %90, %92, %cst_91 {dimension_numbers = #tpu.dot_dimension_numbers<[1], [0], [0], [1], [0, 0, 1, 1], [], []>} : vector<16x128xbf16>, vector<128x128xbf16>, vector<16x128xf32> -> vector<16x128xf32>
    %94 = arith.addf %88, %93 : vector<16x128xf32>
    %c0_92 = arith.constant 0 : index
    %c0_93 = arith.constant 0 : index
    %95 = vector.load %arg3[%c0_92, %c0_93] : memref<1x128xf32, #tpu.memory_space<vmem>>, vector<1x128xf32>
    %96 = vector.broadcast %95 : vector<1x128xf32> to vector<16x128xf32>
    %97 = arith.addf %94, %96 : vector<16x128xf32>
    %cst_94 = arith.constant 2.000000e-01 : f32
    %98 = vector.broadcast %cst_94 : f32 to vector<16x128xf32>
    %99 = arith.mulf %98, %97 : vector<16x128xf32>
    %100 = arith.maximumf %97, %99 : vector<16x128xf32>
    %101 = arith.truncf %100 : vector<16x128xf32> to vector<16x128xbf16>
    %c0_95 = arith.constant 0 : index
    %c0_96 = arith.constant 0 : index
    %c0_97 = arith.constant 0 : index
    %102 = vector.load %arg4[%c0_95, %c0_96, %c0_97] : memref<1x16x128xbf16, #tpu.memory_space<vmem>>, vector<1x16x128xbf16>
    %103 = vector.shape_cast %102 : vector<1x16x128xbf16> to vector<16x128xbf16>
    %104 = vector.shape_cast %101 : vector<16x128xbf16> to vector<1x16x128xbf16>
    tpu.vector_store %arg4[%c0_95, %c0_96, %c0_97], %104 {strides = array<i32>} : memref<1x16x128xbf16, #tpu.memory_space<vmem>>, vector<1x16x128xbf16>,
    return
  }
  func.func @transform_0(%arg0: i32) -> (i32, i32, i32) {
    %c0_i32 = arith.constant 0 : i32
    %c0_i32_0 = arith.constant 0 : i32
    %c0_i32_1 = arith.constant 0 : i32
    return %arg0, %c0_i32, %c0_i32_0 : i32, i32, i32
  }
  func.func @transform_1(%arg0: i32) -> (i32, i32, i32) {
    %c0_i32 = arith.constant 0 : i32
    %c0_i32_0 = arith.constant 0 : i32
    %c0_i32_1 = arith.constant 0 : i32
    %c0_i32_2 = arith.constant 0 : i32
    return %c0_i32, %c0_i32_0, %c0_i32_1 : i32, i32, i32
  }
  func.func @transform_2(%arg0: i32) -> (i32, i32) {
    %c0_i32 = arith.constant 0 : i32
    %c0_i32_0 = arith.constant 0 : i32
    %c0_i32_1 = arith.constant 0 : i32
    return %c0_i32, %c0_i32_0 : i32, i32
  }
  func.func @transform_3(%arg0: i32) -> (i32, i32, i32) {
    %c0_i32 = arith.constant 0 : i32
    %c0_i32_0 = arith.constant 0 : i32
    %c0_i32_1 = arith.constant 0 : i32
    return %arg0, %c0_i32, %c0_i32_0 : i32, i32, i32
  }
}

module attributes {stable_mosaic.version = 11 : i64} {
  func.func @_direct_conv_kernel(%arg0: i32, %arg1: memref<1x23x128xbf16, #tpu.memory_space<vmem>>, %arg2: memref<16x128x128xbf16, #tpu.memory_space<vmem>>, %arg3: memref<1x128xf32, #tpu.memory_space<vmem>>, %arg4: memref<1x8x128xf32, #tpu.memory_space<vmem>>) attributes {dimension_semantics = [#tpu.dimension_semantics<parallel>], iteration_bounds = array<i64: 2>, scalar_prefetch = 0 : i64, scratch_operands = 0 : i64, tpu.core_type = #tpu.core_type<tc>, window_params = [{transform_indices = @transform_0, window_bounds = array<i64: 1, 23, 128>}, {pipeline_mode = #tpu.pipeline_mode<synchronous>, transform_indices = @transform_1, window_bounds = array<i64: 16, 128, 128>}, {pipeline_mode = #tpu.pipeline_mode<synchronous>, transform_indices = @transform_2, window_bounds = array<i64: 1, 128>}, {transform_indices = @transform_3, window_bounds = array<i64: 1, 8, 128>}]} {
    %c0 = arith.constant 0 : index
    %c0_0 = arith.constant 0 : index
    %c0_1 = arith.constant 0 : index
    %0 = vector.load %arg1[%c0, %c0_0, %c0_1] : memref<1x23x128xbf16, #tpu.memory_space<vmem>>, vector<1x8x128xbf16>
    %1 = vector.shape_cast %0 : vector<1x8x128xbf16> to vector<8x128xbf16>
    %c0_2 = arith.constant 0 : index
    %c0_3 = arith.constant 0 : index
    %c0_4 = arith.constant 0 : index
    %2 = vector.load %arg2[%c0_2, %c0_3, %c0_4] : memref<16x128x128xbf16, #tpu.memory_space<vmem>>, vector<1x128x128xbf16>
    %3 = vector.shape_cast %2 : vector<1x128x128xbf16> to vector<128x128xbf16>
    %cst = arith.constant dense<0.000000e+00> : vector<8x128xf32>
    %4 = tpu.matmul %1, %3, %cst {dimension_numbers = #tpu.dot_dimension_numbers<[1], [0], [0], [1], [0, 0, 1, 1], [], []>} : vector<8x128xbf16>, vector<128x128xbf16>, vector<8x128xf32> -> vector<8x128xf32>
    %c0_5 = arith.constant 0 : index
    %c1 = arith.constant 1 : index
    %c0_6 = arith.constant 0 : index
    %5 = vector.load %arg1[%c0_5, %c1, %c0_6] : memref<1x23x128xbf16, #tpu.memory_space<vmem>>, vector<1x8x128xbf16>
    %6 = vector.shape_cast %5 : vector<1x8x128xbf16> to vector<8x128xbf16>
    %c1_7 = arith.constant 1 : index
    %c0_8 = arith.constant 0 : index
    %c0_9 = arith.constant 0 : index
    %7 = vector.load %arg2[%c1_7, %c0_8, %c0_9] : memref<16x128x128xbf16, #tpu.memory_space<vmem>>, vector<1x128x128xbf16>
    %8 = vector.shape_cast %7 : vector<1x128x128xbf16> to vector<128x128xbf16>
    %cst_10 = arith.constant dense<0.000000e+00> : vector<8x128xf32>
    %9 = tpu.matmul %6, %8, %cst_10 {dimension_numbers = #tpu.dot_dimension_numbers<[1], [0], [0], [1], [0, 0, 1, 1], [], []>} : vector<8x128xbf16>, vector<128x128xbf16>, vector<8x128xf32> -> vector<8x128xf32>
    %10 = arith.addf %4, %9 : vector<8x128xf32>
    %c0_11 = arith.constant 0 : index
    %c2 = arith.constant 2 : index
    %c0_12 = arith.constant 0 : index
    %11 = vector.load %arg1[%c0_11, %c2, %c0_12] : memref<1x23x128xbf16, #tpu.memory_space<vmem>>, vector<1x8x128xbf16>
    %12 = vector.shape_cast %11 : vector<1x8x128xbf16> to vector<8x128xbf16>
    %c2_13 = arith.constant 2 : index
    %c0_14 = arith.constant 0 : index
    %c0_15 = arith.constant 0 : index
    %13 = vector.load %arg2[%c2_13, %c0_14, %c0_15] : memref<16x128x128xbf16, #tpu.memory_space<vmem>>, vector<1x128x128xbf16>
    %14 = vector.shape_cast %13 : vector<1x128x128xbf16> to vector<128x128xbf16>
    %cst_16 = arith.constant dense<0.000000e+00> : vector<8x128xf32>
    %15 = tpu.matmul %12, %14, %cst_16 {dimension_numbers = #tpu.dot_dimension_numbers<[1], [0], [0], [1], [0, 0, 1, 1], [], []>} : vector<8x128xbf16>, vector<128x128xbf16>, vector<8x128xf32> -> vector<8x128xf32>
    %16 = arith.addf %10, %15 : vector<8x128xf32>
    %c0_17 = arith.constant 0 : index
    %c3 = arith.constant 3 : index
    %c0_18 = arith.constant 0 : index
    %17 = vector.load %arg1[%c0_17, %c3, %c0_18] : memref<1x23x128xbf16, #tpu.memory_space<vmem>>, vector<1x8x128xbf16>
    %18 = vector.shape_cast %17 : vector<1x8x128xbf16> to vector<8x128xbf16>
    %c3_19 = arith.constant 3 : index
    %c0_20 = arith.constant 0 : index
    %c0_21 = arith.constant 0 : index
    %19 = vector.load %arg2[%c3_19, %c0_20, %c0_21] : memref<16x128x128xbf16, #tpu.memory_space<vmem>>, vector<1x128x128xbf16>
    %20 = vector.shape_cast %19 : vector<1x128x128xbf16> to vector<128x128xbf16>
    %cst_22 = arith.constant dense<0.000000e+00> : vector<8x128xf32>
    %21 = tpu.matmul %18, %20, %cst_22 {dimension_numbers = #tpu.dot_dimension_numbers<[1], [0], [0], [1], [0, 0, 1, 1], [], []>} : vector<8x128xbf16>, vector<128x128xbf16>, vector<8x128xf32> -> vector<8x128xf32>
    %22 = arith.addf %16, %21 : vector<8x128xf32>
    %c0_23 = arith.constant 0 : index
    %c4 = arith.constant 4 : index
    %c0_24 = arith.constant 0 : index
    %23 = vector.load %arg1[%c0_23, %c4, %c0_24] : memref<1x23x128xbf16, #tpu.memory_space<vmem>>, vector<1x8x128xbf16>
    %24 = vector.shape_cast %23 : vector<1x8x128xbf16> to vector<8x128xbf16>
    %c4_25 = arith.constant 4 : index
    %c0_26 = arith.constant 0 : index
    %c0_27 = arith.constant 0 : index
    %25 = vector.load %arg2[%c4_25, %c0_26, %c0_27] : memref<16x128x128xbf16, #tpu.memory_space<vmem>>, vector<1x128x128xbf16>
    %26 = vector.shape_cast %25 : vector<1x128x128xbf16> to vector<128x128xbf16>
    %cst_28 = arith.constant dense<0.000000e+00> : vector<8x128xf32>
    %27 = tpu.matmul %24, %26, %cst_28 {dimension_numbers = #tpu.dot_dimension_numbers<[1], [0], [0], [1], [0, 0, 1, 1], [], []>} : vector<8x128xbf16>, vector<128x128xbf16>, vector<8x128xf32> -> vector<8x128xf32>
    %28 = arith.addf %22, %27 : vector<8x128xf32>
    %c0_29 = arith.constant 0 : index
    %c5 = arith.constant 5 : index
    %c0_30 = arith.constant 0 : index
    %29 = vector.load %arg1[%c0_29, %c5, %c0_30] : memref<1x23x128xbf16, #tpu.memory_space<vmem>>, vector<1x8x128xbf16>
    %30 = vector.shape_cast %29 : vector<1x8x128xbf16> to vector<8x128xbf16>
    %c5_31 = arith.constant 5 : index
    %c0_32 = arith.constant 0 : index
    %c0_33 = arith.constant 0 : index
    %31 = vector.load %arg2[%c5_31, %c0_32, %c0_33] : memref<16x128x128xbf16, #tpu.memory_space<vmem>>, vector<1x128x128xbf16>
    %32 = vector.shape_cast %31 : vector<1x128x128xbf16> to vector<128x128xbf16>
    %cst_34 = arith.constant dense<0.000000e+00> : vector<8x128xf32>
    %33 = tpu.matmul %30, %32, %cst_34 {dimension_numbers = #tpu.dot_dimension_numbers<[1], [0], [0], [1], [0, 0, 1, 1], [], []>} : vector<8x128xbf16>, vector<128x128xbf16>, vector<8x128xf32> -> vector<8x128xf32>
    %34 = arith.addf %28, %33 : vector<8x128xf32>
    %c0_35 = arith.constant 0 : index
    %c6 = arith.constant 6 : index
    %c0_36 = arith.constant 0 : index
    %35 = vector.load %arg1[%c0_35, %c6, %c0_36] : memref<1x23x128xbf16, #tpu.memory_space<vmem>>, vector<1x8x128xbf16>
    %36 = vector.shape_cast %35 : vector<1x8x128xbf16> to vector<8x128xbf16>
    %c6_37 = arith.constant 6 : index
    %c0_38 = arith.constant 0 : index
    %c0_39 = arith.constant 0 : index
    %37 = vector.load %arg2[%c6_37, %c0_38, %c0_39] : memref<16x128x128xbf16, #tpu.memory_space<vmem>>, vector<1x128x128xbf16>
    %38 = vector.shape_cast %37 : vector<1x128x128xbf16> to vector<128x128xbf16>
    %cst_40 = arith.constant dense<0.000000e+00> : vector<8x128xf32>
    %39 = tpu.matmul %36, %38, %cst_40 {dimension_numbers = #tpu.dot_dimension_numbers<[1], [0], [0], [1], [0, 0, 1, 1], [], []>} : vector<8x128xbf16>, vector<128x128xbf16>, vector<8x128xf32> -> vector<8x128xf32>
    %40 = arith.addf %34, %39 : vector<8x128xf32>
    %c0_41 = arith.constant 0 : index
    %c7 = arith.constant 7 : index
    %c0_42 = arith.constant 0 : index
    %41 = vector.load %arg1[%c0_41, %c7, %c0_42] : memref<1x23x128xbf16, #tpu.memory_space<vmem>>, vector<1x8x128xbf16>
    %42 = vector.shape_cast %41 : vector<1x8x128xbf16> to vector<8x128xbf16>
    %c7_43 = arith.constant 7 : index
    %c0_44 = arith.constant 0 : index
    %c0_45 = arith.constant 0 : index
    %43 = vector.load %arg2[%c7_43, %c0_44, %c0_45] : memref<16x128x128xbf16, #tpu.memory_space<vmem>>, vector<1x128x128xbf16>
    %44 = vector.shape_cast %43 : vector<1x128x128xbf16> to vector<128x128xbf16>
    %cst_46 = arith.constant dense<0.000000e+00> : vector<8x128xf32>
    %45 = tpu.matmul %42, %44, %cst_46 {dimension_numbers = #tpu.dot_dimension_numbers<[1], [0], [0], [1], [0, 0, 1, 1], [], []>} : vector<8x128xbf16>, vector<128x128xbf16>, vector<8x128xf32> -> vector<8x128xf32>
    %46 = arith.addf %40, %45 : vector<8x128xf32>
    %c0_47 = arith.constant 0 : index
    %c8 = arith.constant 8 : index
    %c0_48 = arith.constant 0 : index
    %47 = vector.load %arg1[%c0_47, %c8, %c0_48] : memref<1x23x128xbf16, #tpu.memory_space<vmem>>, vector<1x8x128xbf16>
    %48 = vector.shape_cast %47 : vector<1x8x128xbf16> to vector<8x128xbf16>
    %c8_49 = arith.constant 8 : index
    %c0_50 = arith.constant 0 : index
    %c0_51 = arith.constant 0 : index
    %49 = vector.load %arg2[%c8_49, %c0_50, %c0_51] : memref<16x128x128xbf16, #tpu.memory_space<vmem>>, vector<1x128x128xbf16>
    %50 = vector.shape_cast %49 : vector<1x128x128xbf16> to vector<128x128xbf16>
    %cst_52 = arith.constant dense<0.000000e+00> : vector<8x128xf32>
    %51 = tpu.matmul %48, %50, %cst_52 {dimension_numbers = #tpu.dot_dimension_numbers<[1], [0], [0], [1], [0, 0, 1, 1], [], []>} : vector<8x128xbf16>, vector<128x128xbf16>, vector<8x128xf32> -> vector<8x128xf32>
    %52 = arith.addf %46, %51 : vector<8x128xf32>
    %c0_53 = arith.constant 0 : index
    %c9 = arith.constant 9 : index
    %c0_54 = arith.constant 0 : index
    %53 = vector.load %arg1[%c0_53, %c9, %c0_54] : memref<1x23x128xbf16, #tpu.memory_space<vmem>>, vector<1x8x128xbf16>
    %54 = vector.shape_cast %53 : vector<1x8x128xbf16> to vector<8x128xbf16>
    %c9_55 = arith.constant 9 : index
    %c0_56 = arith.constant 0 : index
    %c0_57 = arith.constant 0 : index
    %55 = vector.load %arg2[%c9_55, %c0_56, %c0_57] : memref<16x128x128xbf16, #tpu.memory_space<vmem>>, vector<1x128x128xbf16>
    %56 = vector.shape_cast %55 : vector<1x128x128xbf16> to vector<128x128xbf16>
    %cst_58 = arith.constant dense<0.000000e+00> : vector<8x128xf32>
    %57 = tpu.matmul %54, %56, %cst_58 {dimension_numbers = #tpu.dot_dimension_numbers<[1], [0], [0], [1], [0, 0, 1, 1], [], []>} : vector<8x128xbf16>, vector<128x128xbf16>, vector<8x128xf32> -> vector<8x128xf32>
    %58 = arith.addf %52, %57 : vector<8x128xf32>
    %c0_59 = arith.constant 0 : index
    %c10 = arith.constant 10 : index
    %c0_60 = arith.constant 0 : index
    %59 = vector.load %arg1[%c0_59, %c10, %c0_60] : memref<1x23x128xbf16, #tpu.memory_space<vmem>>, vector<1x8x128xbf16>
    %60 = vector.shape_cast %59 : vector<1x8x128xbf16> to vector<8x128xbf16>
    %c10_61 = arith.constant 10 : index
    %c0_62 = arith.constant 0 : index
    %c0_63 = arith.constant 0 : index
    %61 = vector.load %arg2[%c10_61, %c0_62, %c0_63] : memref<16x128x128xbf16, #tpu.memory_space<vmem>>, vector<1x128x128xbf16>
    %62 = vector.shape_cast %61 : vector<1x128x128xbf16> to vector<128x128xbf16>
    %cst_64 = arith.constant dense<0.000000e+00> : vector<8x128xf32>
    %63 = tpu.matmul %60, %62, %cst_64 {dimension_numbers = #tpu.dot_dimension_numbers<[1], [0], [0], [1], [0, 0, 1, 1], [], []>} : vector<8x128xbf16>, vector<128x128xbf16>, vector<8x128xf32> -> vector<8x128xf32>
    %64 = arith.addf %58, %63 : vector<8x128xf32>
    %c0_65 = arith.constant 0 : index
    %c11 = arith.constant 11 : index
    %c0_66 = arith.constant 0 : index
    %65 = vector.load %arg1[%c0_65, %c11, %c0_66] : memref<1x23x128xbf16, #tpu.memory_space<vmem>>, vector<1x8x128xbf16>
    %66 = vector.shape_cast %65 : vector<1x8x128xbf16> to vector<8x128xbf16>
    %c11_67 = arith.constant 11 : index
    %c0_68 = arith.constant 0 : index
    %c0_69 = arith.constant 0 : index
    %67 = vector.load %arg2[%c11_67, %c0_68, %c0_69] : memref<16x128x128xbf16, #tpu.memory_space<vmem>>, vector<1x128x128xbf16>
    %68 = vector.shape_cast %67 : vector<1x128x128xbf16> to vector<128x128xbf16>
    %cst_70 = arith.constant dense<0.000000e+00> : vector<8x128xf32>
    %69 = tpu.matmul %66, %68, %cst_70 {dimension_numbers = #tpu.dot_dimension_numbers<[1], [0], [0], [1], [0, 0, 1, 1], [], []>} : vector<8x128xbf16>, vector<128x128xbf16>, vector<8x128xf32> -> vector<8x128xf32>
    %70 = arith.addf %64, %69 : vector<8x128xf32>
    %c0_71 = arith.constant 0 : index
    %c12 = arith.constant 12 : index
    %c0_72 = arith.constant 0 : index
    %71 = vector.load %arg1[%c0_71, %c12, %c0_72] : memref<1x23x128xbf16, #tpu.memory_space<vmem>>, vector<1x8x128xbf16>
    %72 = vector.shape_cast %71 : vector<1x8x128xbf16> to vector<8x128xbf16>
    %c12_73 = arith.constant 12 : index
    %c0_74 = arith.constant 0 : index
    %c0_75 = arith.constant 0 : index
    %73 = vector.load %arg2[%c12_73, %c0_74, %c0_75] : memref<16x128x128xbf16, #tpu.memory_space<vmem>>, vector<1x128x128xbf16>
    %74 = vector.shape_cast %73 : vector<1x128x128xbf16> to vector<128x128xbf16>
    %cst_76 = arith.constant dense<0.000000e+00> : vector<8x128xf32>
    %75 = tpu.matmul %72, %74, %cst_76 {dimension_numbers = #tpu.dot_dimension_numbers<[1], [0], [0], [1], [0, 0, 1, 1], [], []>} : vector<8x128xbf16>, vector<128x128xbf16>, vector<8x128xf32> -> vector<8x128xf32>
    %76 = arith.addf %70, %75 : vector<8x128xf32>
    %c0_77 = arith.constant 0 : index
    %c13 = arith.constant 13 : index
    %c0_78 = arith.constant 0 : index
    %77 = vector.load %arg1[%c0_77, %c13, %c0_78] : memref<1x23x128xbf16, #tpu.memory_space<vmem>>, vector<1x8x128xbf16>
    %78 = vector.shape_cast %77 : vector<1x8x128xbf16> to vector<8x128xbf16>
    %c13_79 = arith.constant 13 : index
    %c0_80 = arith.constant 0 : index
    %c0_81 = arith.constant 0 : index
    %79 = vector.load %arg2[%c13_79, %c0_80, %c0_81] : memref<16x128x128xbf16, #tpu.memory_space<vmem>>, vector<1x128x128xbf16>
    %80 = vector.shape_cast %79 : vector<1x128x128xbf16> to vector<128x128xbf16>
    %cst_82 = arith.constant dense<0.000000e+00> : vector<8x128xf32>
    %81 = tpu.matmul %78, %80, %cst_82 {dimension_numbers = #tpu.dot_dimension_numbers<[1], [0], [0], [1], [0, 0, 1, 1], [], []>} : vector<8x128xbf16>, vector<128x128xbf16>, vector<8x128xf32> -> vector<8x128xf32>
    %82 = arith.addf %76, %81 : vector<8x128xf32>
    %c0_83 = arith.constant 0 : index
    %c14 = arith.constant 14 : index
    %c0_84 = arith.constant 0 : index
    %83 = vector.load %arg1[%c0_83, %c14, %c0_84] : memref<1x23x128xbf16, #tpu.memory_space<vmem>>, vector<1x8x128xbf16>
    %84 = vector.shape_cast %83 : vector<1x8x128xbf16> to vector<8x128xbf16>
    %c14_85 = arith.constant 14 : index
    %c0_86 = arith.constant 0 : index
    %c0_87 = arith.constant 0 : index
    %85 = vector.load %arg2[%c14_85, %c0_86, %c0_87] : memref<16x128x128xbf16, #tpu.memory_space<vmem>>, vector<1x128x128xbf16>
    %86 = vector.shape_cast %85 : vector<1x128x128xbf16> to vector<128x128xbf16>
    %cst_88 = arith.constant dense<0.000000e+00> : vector<8x128xf32>
    %87 = tpu.matmul %84, %86, %cst_88 {dimension_numbers = #tpu.dot_dimension_numbers<[1], [0], [0], [1], [0, 0, 1, 1], [], []>} : vector<8x128xbf16>, vector<128x128xbf16>, vector<8x128xf32> -> vector<8x128xf32>
    %88 = arith.addf %82, %87 : vector<8x128xf32>
    %c0_89 = arith.constant 0 : index
    %c15 = arith.constant 15 : index
    %c0_90 = arith.constant 0 : index
    %89 = vector.load %arg1[%c0_89, %c15, %c0_90] : memref<1x23x128xbf16, #tpu.memory_space<vmem>>, vector<1x8x128xbf16>
    %90 = vector.shape_cast %89 : vector<1x8x128xbf16> to vector<8x128xbf16>
    %c15_91 = arith.constant 15 : index
    %c0_92 = arith.constant 0 : index
    %c0_93 = arith.constant 0 : index
    %91 = vector.load %arg2[%c15_91, %c0_92, %c0_93] : memref<16x128x128xbf16, #tpu.memory_space<vmem>>, vector<1x128x128xbf16>
    %92 = vector.shape_cast %91 : vector<1x128x128xbf16> to vector<128x128xbf16>
    %cst_94 = arith.constant dense<0.000000e+00> : vector<8x128xf32>
    %93 = tpu.matmul %90, %92, %cst_94 {dimension_numbers = #tpu.dot_dimension_numbers<[1], [0], [0], [1], [0, 0, 1, 1], [], []>} : vector<8x128xbf16>, vector<128x128xbf16>, vector<8x128xf32> -> vector<8x128xf32>
    %94 = arith.addf %88, %93 : vector<8x128xf32>
    %c0_95 = arith.constant 0 : index
    %c0_96 = arith.constant 0 : index
    %95 = vector.load %arg3[%c0_95, %c0_96] : memref<1x128xf32, #tpu.memory_space<vmem>>, vector<1x128xf32>
    %96 = vector.broadcast %95 : vector<1x128xf32> to vector<8x128xf32>
    %97 = arith.addf %94, %96 : vector<8x128xf32>
    %c0_97 = arith.constant 0 : index
    %c0_98 = arith.constant 0 : index
    %c0_99 = arith.constant 0 : index
    %98 = vector.load %arg4[%c0_97, %c0_98, %c0_99] : memref<1x8x128xf32, #tpu.memory_space<vmem>>, vector<1x8x128xf32>
    %99 = vector.shape_cast %98 : vector<1x8x128xf32> to vector<8x128xf32>
    %100 = vector.shape_cast %97 : vector<8x128xf32> to vector<1x8x128xf32>
    tpu.vector_store %arg4[%c0_97, %c0_98, %c0_99], %100 {strides = array<i32>} : memref<1x8x128xf32, #tpu.memory_space<vmem>>, vector<1x8x128xf32>,
    return
  }
  func.func @transform_0(%arg0: i32) -> (i32, i32, i32) {
    %c0_i32 = arith.constant 0 : i32
    %c0_i32_0 = arith.constant 0 : i32
    %c0_i32_1 = arith.constant 0 : i32
    return %arg0, %c0_i32, %c0_i32_0 : i32, i32, i32
  }
  func.func @transform_1(%arg0: i32) -> (i32, i32, i32) {
    %c0_i32 = arith.constant 0 : i32
    %c0_i32_0 = arith.constant 0 : i32
    %c0_i32_1 = arith.constant 0 : i32
    %c0_i32_2 = arith.constant 0 : i32
    return %c0_i32, %c0_i32_0, %c0_i32_1 : i32, i32, i32
  }
  func.func @transform_2(%arg0: i32) -> (i32, i32) {
    %c0_i32 = arith.constant 0 : i32
    %c0_i32_0 = arith.constant 0 : i32
    %c0_i32_1 = arith.constant 0 : i32
    return %c0_i32, %c0_i32_0 : i32, i32
  }
  func.func @transform_3(%arg0: i32) -> (i32, i32, i32) {
    %c0_i32 = arith.constant 0 : i32
    %c0_i32_0 = arith.constant 0 : i32
    %c0_i32_1 = arith.constant 0 : i32
    return %arg0, %c0_i32, %c0_i32_0 : i32, i32, i32
  }
}

</mosaic_0001>

<llo_original>
// kernel: fc_discriminator_forward.5
$region0: #{fc_discriminator_forward.5}
  #allocation0 [shape = 'u32[]', space=smem, size = 0x4, offset = 0x4, fixed_abs, tag = 'smem constant byte address 0x4 - core index']
  #allocation1 [shape = 'u32[144,128]{1,0:T(1,128)}', space=vmem, size = 0x12000, scoped, tag = 'internal scratch']
  %s0 = inlined_call_operand.hbm [shape: bf16[128,128], index: 0, kind: input, shape index: {}]
  %s1 = inlined_call_operand.hbm [shape: bf16[128,128], index: 1, kind: input, shape index: {}]
  %s2 = inlined_call_operand.hbm [shape: f32[1,128], index: 2, kind: input, shape index: {}]
  %s3 = inlined_call_operand.hbm [shape: bf16[128,128], index: 3, kind: output, shape index: {}]
  %s4 = sld [smem:[#allocation0]]
  $region57: #{fc_discriminator_forward.5} parent=0
    _
  %s6 = ssub.s32 1, %s4
  %s7 = scalar_select 0, %s6, %s4
  $region1: #{fc_discriminator_forward.5} parent=0
    #allocation2 [shape = 'u8[32768]{0}', space=vmem, size = 0x8000, scoped, tag = 'input window, operand 0']
    #allocation3 [shape = 's32[2]{0}', space=sflag, size = 0x8, scoped, tag = 'scoped memory for fc_discriminator_forward.5']
    #allocation4 [shape = 's32[2]{0}', space=sflag, size = 0x8, scoped, tag = 'scoped memory for fc_discriminator_forward.5']
    #allocation5 [shape = 'u8[32768]{0}', space=vmem, size = 0x8000, scoped, tag = 'input window, operand 1, single buffered']
    #allocation6 [shape = 's32[1]{0}', space=sflag, size = 0x4, scoped, tag = 'scoped memory for fc_discriminator_forward.5']
    #allocation7 [shape = 'u8[512]{0}', space=vmem, size = 0x400, scoped, tag = 'input window, operand 2, single buffered']
    #allocation8 [shape = 'u8[32768]{0}', space=vmem, size = 0x8000, scoped, tag = 'output window, operand 0']
    %8 = vsyncpa [#allocation3], 0
    %s9 = scalar_lea.sflag [#allocation3], 1
    %10 = vsyncpa %s9, 0
    %11 = vsyncpa [#allocation6], 0
    %12 = vsyncpa [#allocation4], 0
    %s13 = scalar_lea.sflag [#allocation4], 1
    %14 = vsyncpa %s13, 0
    loop: start=0, step=1, limit=4
    $region2: #{fc_discriminator_forward.5} parent=1 // loop_pre_header
      _
    $region3: #{fc_discriminator_forward.5} parent=1 // loop_header
      %s16 = sphi 0, %s20
      %p17 = scmp.ge.s32.totalorder %s16, 4
      %s26 = sphi 0, %s28
      %s29 = sphi 0, %s26
      %s30 = sphi 0, %s29
      %s46 = sphi 0, %s30
      %s50 = sphi 0, %s50
      %s52 = sphi 0, %s50
      %s53 = sphi 0, %s52
      %s67 = sphi 0, %s53
      %s71 = sphi 0, %s71
      %s73 = sphi 0, %s71
      %s74 = sphi 0, %s73
      %s88 = sphi 0, %s74
      %s94 = sphi 0, %s96
      %s97 = sphi 0, %s94
      %s98 = sphi 0, %s97
      %s114 = sphi 0, %s98
    $region4: #{fc_discriminator_forward.5} parent=1 // loop_header_branch
      %19 = sbr.rel (%p17) target = $region8
    $region5: #{fc_discriminator_forward.5} parent=1 // loop_body
      %s21 = ssub.s32 %s16, 1
      %s22 = ssub.s32 %s16, 2
      %s23 = sadd.s32 %s16, 1
      %s24 = ssub.s32 %s16, %s23
      %p25 = scmp.eq.s32.totalorder %s24, 0
      %s27 = sadd.s32 %s26, 1
      %s28 = scalar_select %p25, %s26, %s27
      %p31 = pneg %p25
      %p32 = scmp.eq.s32.totalorder %s16, 1
      %p33 = por %p31, %p32
      %p34 = scmp.ne.s32.totalorder %s26, %s29
      %p35 = scmp.eq.s32.totalorder %s16, 0
      %p36 = por %p34, %p35
      %p37 = scmp.ne.s32.totalorder %s26, %s29
      %p38 = scmp.eq.s32.totalorder %s21, 1
      %p39 = por %p37, %p38
      %p40 = scmp.ne.s32.totalorder %s29, %s30
      %p41 = scmp.eq.s32.totalorder %s21, 0
      %p42 = por %p40, %p41
      %p43 = scmp.ne.s32.totalorder %s29, %s30
      %p44 = scmp.eq.s32.totalorder %s22, 1
      %p45 = por %p43, %p44
      %p47 = scmp.ne.s32.totalorder %s30, %s46
      %p48 = scmp.eq.s32.totalorder %s22, 0
      %p49 = por %p47, %p48
      %s51 = sadd.s32 %s50, 1
      %p54 = scmp.eq.s32.totalorder %s16, 1
      %p55 = scmp.ne.s32.totalorder %s50, %s52
      %p56 = scmp.eq.s32.totalorder %s16, 0
      %p57 = por %p55, %p56
      %p58 = scmp.ne.s32.totalorder %s50, %s52
      %p59 = scmp.eq.s32.totalorder %s21, 1
      %p60 = por %p58, %p59
      %p61 = scmp.ne.s32.totalorder %s52, %s53
      %p62 = scmp.eq.s32.totalorder %s21, 0
      %p63 = por %p61, %p62
      %p64 = scmp.ne.s32.totalorder %s52, %s53
      %p65 = scmp.eq.s32.totalorder %s22, 1
      %p66 = por %p64, %p65
      %p68 = scmp.ne.s32.totalorder %s53, %s67
      %p69 = scmp.eq.s32.totalorder %s22, 0
      %p70 = por %p68, %p69
      %s72 = sadd.s32 %s71, 1
      %p75 = scmp.eq.s32.totalorder %s16, 1
      %p76 = scmp.ne.s32.totalorder %s71, %s73
      %p77 = scmp.eq.s32.totalorder %s16, 0
      %p78 = por %p76, %p77
      %p79 = scmp.ne.s32.totalorder %s71, %s73
      %p80 = scmp.eq.s32.totalorder %s21, 1
      %p81 = por %p79, %p80
      %p82 = scmp.ne.s32.totalorder %s73, %s74
      %p83 = scmp.eq.s32.totalorder %s21, 0
      %p84 = por %p82, %p83
      %p85 = scmp.ne.s32.totalorder %s73, %s74
      %p86 = scmp.eq.s32.totalorder %s22, 1
      %p87 = por %p85, %p86
      %p89 = scmp.ne.s32.totalorder %s74, %s88
      %p90 = scmp.eq.s32.totalorder %s22, 0
      %p91 = por %p89, %p90
      %s92 = ssub.s32 %s16, %s23
      %p93 = scmp.eq.s32.totalorder %s92, 0
      %s95 = sadd.s32 %s94, 1
      %s96 = scalar_select %p93, %s94, %s95
      %p99 = pneg %p93
      %p100 = scmp.eq.s32.totalorder %s16, 1
      %p101 = por %p99, %p100
      %p102 = scmp.ne.s32.totalorder %s94, %s97
      %p103 = scmp.eq.s32.totalorder %s16, 0
      %p104 = por %p102, %p103
      %p105 = scmp.ne.s32.totalorder %s94, %s97
      %p106 = scmp.eq.s32.totalorder %s21, 1
      %p107 = por %p105, %p106
      %p108 = scmp.ne.s32.totalorder %s97, %s98
      %p109 = scmp.eq.s32.totalorder %s21, 0
      %p110 = por %p108, %p109
      %p111 = scmp.ne.s32.totalorder %s97, %s98
      %p112 = scmp.eq.s32.totalorder %s22, 1
      %p113 = por %p111, %p112
      %p115 = scmp.ne.s32.totalorder %s98, %s114
      %p116 = scmp.eq.s32.totalorder %s22, 0
      %p117 = por %p115, %p116
      %p118 = scmp.le.s32.totalorder 1, %s16
      %p119 = scmp.lt.s32.totalorder %s16, 3
      %p120 = pnand %p118, %p119
      %p121 = pneg %p120
      // Predicated region
      $region9: #{fc_discriminator_forward.5} parent=5 // pred_check
        _
      $region10: #{fc_discriminator_forward.5} parent=5 // pred_check_branch
        %123 = sbr.rel (%p120) target = $region12
      $region11: #{fc_discriminator_forward.5} parent=5 // pred_region
        %s124 = ssub.s32 %s16, 1
        // Predicated region
        $region13: #{fc_discriminator_forward.5} parent=11 // pred_check
          %p125 = pneg %p63
        $region14: #{fc_discriminator_forward.5} parent=11 // pred_check_branch
          %127 = sbr.rel (%p125) target = $region16
        $region15: #{fc_discriminator_forward.5} parent=11 // pred_region
          %s129 = ssub.s32 1024, 1024
          %130 = vsyncadd [#allocation6], %s129
          %s131 = sshll.u32 [#allocation5], 4
          %s132 = int_to_ptr.vmem [resolvable:$true] %s131
          %137 = dma.hbm_to_vmem [thread:$0]  %s1, 1024, %s132, [#allocation6], 64, 64, 4
        $region16: #{fc_discriminator_forward.5} parent=11 // pred_fallthru
          _
        // Predicated region
        $region17: #{fc_discriminator_forward.5} parent=11 // pred_check
          %p138 = pneg %p84
        $region18: #{fc_discriminator_forward.5} parent=11 // pred_check_branch
          %140 = sbr.rel (%p138) target = $region20
        $region19: #{fc_discriminator_forward.5} parent=11 // pred_region
          %s142 = ssub.s32 16, 16
          %143 = vsyncadd [#allocation6], %s142
          %s145 = sshll.u32 [#allocation7], 4
          %s146 = int_to_ptr.vmem [resolvable:$true] %s145
          %148 = dma.hbm_to_vmem [thread:$0]  %s2, 16, %s146, [#allocation6]
        $region20: #{fc_discriminator_forward.5} parent=11 // pred_fallthru
          _
      $region12: #{fc_discriminator_forward.5} parent=5 // pred_fallthru
        _
      %p149 = scmp.lt.s32.totalorder %s16, 2
      // Predicated region
      $region21: #{fc_discriminator_forward.5} parent=5 // pred_check
        %p150 = pneg %p149
      $region22: #{fc_discriminator_forward.5} parent=5 // pred_check_branch
        %152 = sbr.rel (%p150) target = $region24
      $region23: #{fc_discriminator_forward.5} parent=5 // pred_region
        // Predicated region
        $region25: #{fc_discriminator_forward.5} parent=23 // pred_check
          %p153 = pneg %p36
        $region26: #{fc_discriminator_forward.5} parent=23 // pred_check_branch
          %155 = sbr.rel (%p153) target = $region28
        $region27: #{fc_discriminator_forward.5} parent=23 // pred_region
          %s156 = sand.u32 %s26, 1
          %s157 = scalar_lea.sflag [#allocation3], %s156
          %s158 = sand.u32 %s26, 1
          %s159 = smul.addr %s158, 32
          %s160 = scalar_lea.vmem [#allocation2], %s159
          %s161 = smul.u32 8, %s16
          %s163 = ssub.s32 512, 512
          %164 = vsyncadd %s157, %s163
          %s165 = smul.addr %s161, 64
          %s166 = scalar_lea.hbm %s0, %s165
          %s167 = sshll.u32 %s160, 4
          %s168 = int_to_ptr.vmem [resolvable:$true] %s167
          %173 = dma.hbm_to_vmem [thread:$0]  %s166, 512, %s168, %s157, 64, 64, 4
        $region28: #{fc_discriminator_forward.5} parent=23 // pred_fallthru
          _
      $region24: #{fc_discriminator_forward.5} parent=5 // pred_fallthru
        _
      %p174 = scmp.le.s32.totalorder 1, %s16
      %p175 = scmp.lt.s32.totalorder %s16, 3
      %p176 = pnand %p174, %p175
      %p177 = pneg %p176
      // Predicated region
      $region29: #{fc_discriminator_forward.5} parent=5 // pred_check
        _
      $region30: #{fc_discriminator_forward.5} parent=5 // pred_check_branch
        %179 = sbr.rel (%p176) target = $region32
      $region31: #{fc_discriminator_forward.5} parent=5 // pred_region
        %s180 = ssub.s32 %s16, 1
        %s181 = sand.u32 %s29, 1
        %s182 = scalar_lea.sflag [#allocation3], %s181
        %s183 = sand.u32 %s29, 1
        %s184 = smul.addr %s183, 32
        %s185 = scalar_lea.vmem [#allocation2], %s184
        // Predicated region
        $region33: #{fc_discriminator_forward.5} parent=31 // pred_check
          %p186 = pneg %p42
        $region34: #{fc_discriminator_forward.5} parent=31 // pred_check_branch
          %188 = sbr.rel (%p186) target = $region36
        $region35: #{fc_discriminator_forward.5} parent=31 // pred_region
          %189 = dma.done %s182, 512
        $region36: #{fc_discriminator_forward.5} parent=31 // pred_fallthru
          _
        // Predicated region
        $region37: #{fc_discriminator_forward.5} parent=31 // pred_check
          %p190 = pneg %p63
        $region38: #{fc_discriminator_forward.5} parent=31 // pred_check_branch
          %192 = sbr.rel (%p190) target = $region40
        $region39: #{fc_discriminator_forward.5} parent=31 // pred_region
          %193 = dma.done [#allocation6], 1024
        $region40: #{fc_discriminator_forward.5} parent=31 // pred_fallthru
          _
        // Predicated region
        $region41: #{fc_discriminator_forward.5} parent=31 // pred_check
          %p194 = pneg %p84
        $region42: #{fc_discriminator_forward.5} parent=31 // pred_check_branch
          %196 = sbr.rel (%p194) target = $region44
        $region43: #{fc_discriminator_forward.5} parent=31 // pred_region
          %197 = dma.done [#allocation6], 16
        $region44: #{fc_discriminator_forward.5} parent=31 // pred_fallthru
          _
        %s198 = sand.u32 %s29, 1
        %s199 = scalar_lea.sflag [#allocation3], %s198
        %s200 = sand.u32 %s29, 1
        %s201 = smul.addr %s200, 32
        %s202 = scalar_lea.vmem [#allocation2], %s201
        %p203 = pneg %p42
        %p204 = pneg %p39
        %p205 = pneg %p63
        %p206 = pneg %p60
        %p207 = pneg %p84
        %p208 = pneg %p81
        %p209 = pneg %p110
        %p210 = pneg %p107
        %s211 = sand.u32 %s97, 1
        %s212 = scalar_lea.sflag [#allocation4], %s211
        %s213 = sand.u32 %s97, 1
        %s214 = smul.addr %s213, 32
        %s215 = scalar_lea.vmem [#allocation8], %s214
        %s216 = smul.u32 8, %s21
        %s217 = smul.u32 8, %s21
        %v219 = vld [vmem:[%s185] sm:$0xf]
        %v220 = vld [vmem:[%s185 + $0x4] sm:$0xf]
        %v221 = vld [vmem:[%s185 + $0x8] sm:$0xf]
        %v222 = vld [vmem:[%s185 + $0xc] sm:$0xf]
        %v223 = vld [vmem:[%s185 + $0x10] sm:$0xf]
        %v224 = vld [vmem:[%s185 + $0x14] sm:$0xf]
        %v225 = vld [vmem:[%s185 + $0x18] sm:$0xf]
        %v226 = vld [vmem:[%s185 + $0x1c] sm:$0xf]
        %v227 = vld [vmem:[#allocation5] sm:$0xf]
        %v228 = vld [vmem:[#allocation5 + $0x4] sm:$0xf]
        %v229 = vld [vmem:[#allocation5 + $0x8] sm:$0xf]
        %v230 = vld [vmem:[#allocation5 + $0xc] sm:$0xf]
        %v231 = vld [vmem:[#allocation5 + $0x10] sm:$0xf]
        %v232 = vld [vmem:[#allocation5 + $0x14] sm:$0xf]
        %v233 = vld [vmem:[#allocation5 + $0x18] sm:$0xf]
        %v234 = vld [vmem:[#allocation5 + $0x1c] sm:$0xf]
        %v235 = vld [vmem:[#allocation5 + $0x20] sm:$0xf]
        %v236 = vld [vmem:[#allocation5 + $0x24] sm:$0xf]
        %v237 = vld [vmem:[#allocation5 + $0x28] sm:$0xf]
        %v238 = vld [vmem:[#allocation5 + $0x2c] sm:$0xf]
        %v239 = vld [vmem:[#allocation5 + $0x30] sm:$0xf]
        %v240 = vld [vmem:[#allocation5 + $0x34] sm:$0xf]
        %v241 = vld [vmem:[#allocation5 + $0x38] sm:$0xf]
        %v242 = vld [vmem:[#allocation5 + $0x3c] sm:$0xf]
        %v243 = vld [vmem:[#allocation7] sm:$0x1]
        %v245 = vlaneseq
        %v246 = vshrl.u32 %v245, 7
        %v247 = vsub.s32 0, %v246
        %v248 = vrot.slane %v243, %v247
        %v258 = vunpack.c.l.b16 %v219
        %v259 = vunpack.c.l.b16 %v220
        %v260 = vunpack.c.l.b16 %v221
        %v261 = vunpack.c.l.b16 %v222
        %v262 = vunpack.c.l.b16 %v223
        %v263 = vunpack.c.l.b16 %v224
        %v264 = vunpack.c.l.b16 %v225
        %v265 = vunpack.c.l.b16 %v226
        %v266 = vpack.c.b16 %v259, %v258
        %v267 = vpack.c.b16 %v261, %v260
        %v268 = vpack.c.b16 %v263, %v262
        %v269 = vpack.c.b16 %v265, %v264
        %v290 = vunpack.c.l.b16 %v227
        %v291 = vunpack.c.l.b16 %v228
        %v292 = vunpack.c.l.b16 %v229
        %v293 = vunpack.c.l.b16 %v230
        %v294 = vunpack.c.l.b16 %v231
        %v295 = vunpack.c.l.b16 %v232
        %v296 = vunpack.c.l.b16 %v233
        %v297 = vunpack.c.l.b16 %v234
        %v298 = vunpack.c.l.b16 %v235
        %v299 = vunpack.c.l.b16 %v236
        %v300 = vunpack.c.l.b16 %v237
        %v301 = vunpack.c.l.b16 %v238
        %v302 = vunpack.c.l.b16 %v239
        %v303 = vunpack.c.l.b16 %v240
        %v304 = vunpack.c.l.b16 %v241
        %v305 = vunpack.c.l.b16 %v242
        %v306 = vpack.c.b16 %v291, %v290
        %v307 = vpack.c.b16 %v293, %v292
        %v308 = vpack.c.b16 %v295, %v294
        %v309 = vpack.c.b16 %v297, %v296
        %v310 = vpack.c.b16 %v299, %v298
        %v311 = vpack.c.b16 %v301, %v300
        %v312 = vpack.c.b16 %v303, %v302
        %v313 = vpack.c.b16 %v305, %v304
        %322 = vmatprep.subr.bf16.mxu0 0
        %323 = vmatpush1.bf16.msra.mxu0 %v306
        %324 = vmatprep.subr.bf16.mxu0 0
        %325 = vmatpush1.bf16.msra.mxu0 %v307
        %326 = vmatprep.subr.bf16.mxu0 0
        %327 = vmatpush1.bf16.msra.mxu0 %v308
        %328 = vmatprep.subr.bf16.mxu0 0
        %329 = vmatpush1.bf16.msra.mxu0 %v309
        %330 = vmatprep.subr.bf16.mxu0 0
        %331 = vmatpush1.bf16.msra.mxu0 %v310
        %332 = vmatprep.subr.bf16.mxu0 0
        %333 = vmatpush1.bf16.msra.mxu0 %v311
        %334 = vmatprep.subr.bf16.mxu0 0
        %335 = vmatpush1.bf16.msra.mxu0 %v312
        %336 = vmatprep.subr.bf16.mxu0 0
        %337 = vmatpush1.bf16.msra.mxu0 %v313
        %338 = vmatprep.subr.bf16.mxu0 0
        %339 = vmatpush1.bf16.msra.mxu0 0
        %340 = vmatprep.subr.bf16.mxu0 0
        %341 = vmatpush1.bf16.msra.mxu0 0
        %342 = vmatprep.subr.bf16.mxu0 0
        %343 = vmatpush1.bf16.msra.mxu0 0
        %344 = vmatprep.subr.bf16.mxu0 0
        %345 = vmatpush1.bf16.msra.mxu0 0
        %346 = vmatprep.subr.bf16.mxu0 0
        %347 = vmatpush1.bf16.msra.mxu0 0
        %348 = vmatprep.subr.bf16.mxu0 0
        %349 = vmatpush1.bf16.msra.mxu0 0
        %350 = vmatprep.subr.bf16.mxu0 0
        %351 = vmatpush1.bf16.msra.mxu0 0
        %352 = vmatprep.subr.bf16.mxu0 0
        %353 = vmatpush1.bf16.msra.mxu0 0
        %354 = vmatprep.mubr.bf16.mxu0 0
        %355 = vmatmul.mubr.bf16.gmra.mrb[0].mxu0 %v266
        %v356 = vpop.f32.mrb[0].mxu0
        %v357 = vadd.f32 %v248, %v356
        %v358 = vpop.f32.mrb[0].mxu0
        %v359 = vpop.f32.mrb[0].mxu0
        %v360 = vadd.f32 %v248, %v359
        %v361 = vpop.f32.mrb[0].mxu0
        %362 = vmatprep.mubr.bf16.mxu0 0
        %363 = vmatmul.mubr.bf16.gmra.mrb[0].mxu0 %v267
        %v364 = vpop.f32.mrb[0].mxu0
        %v365 = vadd.f32 %v248, %v364
        %v366 = vpop.f32.mrb[0].mxu0
        %v367 = vpop.f32.mrb[0].mxu0
        %v368 = vadd.f32 %v248, %v367
        %v369 = vpop.f32.mrb[0].mxu0
        %370 = vmatprep.mubr.bf16.mxu0 0
        %371 = vmatmul.mubr.bf16.gmra.mrb[0].mxu0 %v268
        %v372 = vpop.f32.mrb[0].mxu0
        %v373 = vadd.f32 %v248, %v372
        %v374 = vpop.f32.mrb[0].mxu0
        %v375 = vpop.f32.mrb[0].mxu0
        %v376 = vadd.f32 %v248, %v375
        %v377 = vpop.f32.mrb[0].mxu0
        %378 = vmatprep.mubr.bf16.mxu0 0
        %379 = vmatmul.mubr.bf16.gmra.mrb[0].mxu0 %v269
        %v380 = vpop.f32.mrb[0].mxu0
        %v381 = vadd.f32 %v248, %v380
        %v382 = vpop.f32.mrb[0].mxu0
        %v383 = vpop.f32.mrb[0].mxu0
        %v384 = vadd.f32 %v248, %v383
        %v385 = vpop.f32.mrb[0].mxu0
        %386 = vdwg.mxu0
        %v387 = vmul.f32 %v357, 0.2
        %v388 = vmul.f32 %v360, 0.2
        %v389 = vmul.f32 %v365, 0.2
        %v390 = vmul.f32 %v368, 0.2
        %v391 = vmul.f32 %v373, 0.2
        %v392 = vmul.f32 %v376, 0.2
        %v393 = vmul.f32 %v381, 0.2
        %v394 = vmul.f32 %v384, 0.2
        %v395 = vmax.f32 %v357, %v387
        %v396 = vmax.f32 %v360, %v388
        %v397 = vmax.f32 %v365, %v389
        %v398 = vmax.f32 %v368, %v390
        %v399 = vmax.f32 %v373, %v391
        %v400 = vmax.f32 %v376, %v392
        %v401 = vmax.f32 %v381, %v393
        %v402 = vmax.f32 %v384, %v394
        %v403 = vpack.c.bf16 %v396, %v395
        %v404 = vpack.c.bf16 %v398, %v397
        %v405 = vpack.c.bf16 %v400, %v399
        %v406 = vpack.c.bf16 %v402, %v401
        %v411 = vunpack.c.l.b16 %v403
        %v412 = vunpack.c.h.b16 %v403
        %v413 = vunpack.c.l.b16 %v404
        %v414 = vunpack.c.h.b16 %v404
        %v415 = vunpack.c.l.b16 %v405
        %v416 = vunpack.c.h.b16 %v405
        %v417 = vunpack.c.l.b16 %v406
        %v418 = vunpack.c.h.b16 %v406
        %v419 = vpack.c.b16 %v411, %v411
        %v420 = vpack.c.b16 %v412, %v412
        %v421 = vpack.c.b16 %v413, %v413
        %v422 = vpack.c.b16 %v414, %v414
        %v423 = vpack.c.b16 %v415, %v415
        %v424 = vpack.c.b16 %v416, %v416
        %v425 = vpack.c.b16 %v417, %v417
        %v426 = vpack.c.b16 %v418, %v418
        %435 = vst [vmem:[%s215] sm:$0xf] %v419
        %436 = vst [vmem:[%s215 + $0x4] sm:$0xf] %v420
        %437 = vst [vmem:[%s215 + $0x8] sm:$0xf] %v421
        %438 = vst [vmem:[%s215 + $0xc] sm:$0xf] %v422
        %439 = vst [vmem:[%s215 + $0x10] sm:$0xf] %v423
        %440 = vst [vmem:[%s215 + $0x14] sm:$0xf] %v424
        %441 = vst [vmem:[%s215 + $0x18] sm:$0xf] %v425
        %442 = vst [vmem:[%s215 + $0x1c] sm:$0xf] %v426
        %s443 = sand.u32 %s97, 1
        %s444 = scalar_lea.sflag [#allocation4], %s443
        %s445 = sand.u32 %s97, 1
        %s446 = smul.addr %s445, 32
        %s447 = scalar_lea.vmem [#allocation8], %s446
        // Predicated region
        $region45: #{fc_discriminator_forward.5} parent=31 // pred_check
          %p448 = pneg %p107
        $region46: #{fc_discriminator_forward.5} parent=31 // pred_check_branch
          %450 = sbr.rel (%p448) target = $region48
        $region47: #{fc_discriminator_forward.5} parent=31 // pred_region
          %s451 = smul.u32 8, %s21
          %s453 = ssub.s32 512, 512
          %454 = vsyncadd %s444, %s453
          %s455 = smul.addr %s451, 64
          %s456 = scalar_lea.hbm %s3, %s455
          %s457 = sshll.u32 %s447, 4
          %s458 = int_to_ptr.vmem [resolvable:$true] %s457
          %463 = dma.vmem_to_hbm [thread:$0]  %s458, 512, %s456, %s444, 64, 64, 4
        $region48: #{fc_discriminator_forward.5} parent=31 // pred_fallthru
          _
      $region32: #{fc_discriminator_forward.5} parent=5 // pred_fallthru
        _
      %p464 = scmp.le.s32.totalorder 2, %s16
      // Predicated region
      $region49: #{fc_discriminator_forward.5} parent=5 // pred_check
        %p465 = pneg %p464
      $region50: #{fc_discriminator_forward.5} parent=5 // pred_check_branch
        %467 = sbr.rel (%p465) target = $region52
      $region51: #{fc_discriminator_forward.5} parent=5 // pred_region
        %s468 = ssub.s32 %s16, 2
        // Predicated region
        $region53: #{fc_discriminator_forward.5} parent=51 // pred_check
          %p469 = pneg %p113
        $region54: #{fc_discriminator_forward.5} parent=51 // pred_check_branch
          %471 = sbr.rel (%p469) target = $region56
        $region55: #{fc_discriminator_forward.5} parent=51 // pred_region
          %s472 = sand.u32 %s98, 1
          %s473 = scalar_lea.sflag [#allocation4], %s472
          %s474 = sand.u32 %s98, 1
          %s475 = smul.addr %s474, 32
          %s476 = scalar_lea.vmem [#allocation8], %s475
          %477 = dma.done %s473, 512
        $region56: #{fc_discriminator_forward.5} parent=51 // pred_fallthru
          _
      $region52: #{fc_discriminator_forward.5} parent=5 // pred_fallthru
        _
    $region6: #{fc_discriminator_forward.5} parent=1 // loop_footer
      %s20 = sadd.s32 1, %s16
    $region7: #{fc_discriminator_forward.5} parent=1 // loop_footer_branch
      %15 = sbr.rel target = $region3
    $region8: #{fc_discriminator_forward.5} parent=1 // loop_exit
      _
    %478 = vsyncpa [#allocation3], 1
    %s479 = scalar_lea.sflag [#allocation3], 1
    %480 = vsyncpa %s479, 1
    %481 = vsyncpa [#allocation6], 1
    %482 = vsyncpa [#allocation4], 1
    %s483 = scalar_lea.sflag [#allocation4], 1
    %484 = vsyncpa %s483, 1

// kernel: fc_discriminator_forward.6
$region0: #{fc_discriminator_forward.6}
  #allocation0 [shape = 'u32[]', space=smem, size = 0x4, offset = 0x4, fixed_abs, tag = 'smem constant byte address 0x4 - core index']
  #allocation1 [shape = 'u32[144,128]{1,0:T(1,128)}', space=vmem, size = 0x12000, scoped, tag = 'internal scratch']
  %s0 = inlined_call_operand.hbm [shape: bf16[32,128], index: 0, kind: input, shape index: {}]
  %s1 = inlined_call_operand.hbm [shape: bf16[128,128], index: 1, kind: input, shape index: {}]
  %s2 = inlined_call_operand.hbm [shape: f32[1,128], index: 2, kind: input, shape index: {}]
  %s3 = inlined_call_operand.hbm [shape: bf16[32,128], index: 3, kind: output, shape index: {}]
  %s4 = sld [smem:[#allocation0]]
  $region57: #{fc_discriminator_forward.6} parent=0
    _
  %s6 = ssub.s32 1, %s4
  %s7 = scalar_select 0, %s6, %s4
  $region1: #{fc_discriminator_forward.6} parent=0
    #allocation2 [shape = 'u8[8192]{0}', space=vmem, size = 0x2000, scoped, tag = 'input window, operand 0']
    #allocation3 [shape = 's32[2]{0}', space=sflag, size = 0x8, scoped, tag = 'scoped memory for fc_discriminator_forward.6']
    #allocation4 [shape = 's32[2]{0}', space=sflag, size = 0x8, scoped, tag = 'scoped memory for fc_discriminator_forward.6']
    #allocation5 [shape = 'u8[32768]{0}', space=vmem, size = 0x8000, scoped, tag = 'input window, operand 1, single buffered']
    #allocation6 [shape = 's32[1]{0}', space=sflag, size = 0x4, scoped, tag = 'scoped memory for fc_discriminator_forward.6']
    #allocation7 [shape = 'u8[512]{0}', space=vmem, size = 0x400, scoped, tag = 'input window, operand 2, single buffered']
    #allocation8 [shape = 'u8[8192]{0}', space=vmem, size = 0x2000, scoped, tag = 'output window, operand 0']
    %8 = vsyncpa [#allocation3], 0
    %s9 = scalar_lea.sflag [#allocation3], 1
    %10 = vsyncpa %s9, 0
    %11 = vsyncpa [#allocation6], 0
    %12 = vsyncpa [#allocation4], 0
    %s13 = scalar_lea.sflag [#allocation4], 1
    %14 = vsyncpa %s13, 0
    loop: start=0, step=1, limit=4
    $region2: #{fc_discriminator_forward.6} parent=1 // loop_pre_header
      _
    $region3: #{fc_discriminator_forward.6} parent=1 // loop_header
      %s16 = sphi 0, %s20
      %p17 = scmp.ge.s32.totalorder %s16, 4
      %s26 = sphi 0, %s28
      %s29 = sphi 0, %s26
      %s30 = sphi 0, %s29
      %s46 = sphi 0, %s30
      %s50 = sphi 0, %s50
      %s52 = sphi 0, %s50
      %s53 = sphi 0, %s52
      %s67 = sphi 0, %s53
      %s71 = sphi 0, %s71
      %s73 = sphi 0, %s71
      %s74 = sphi 0, %s73
      %s88 = sphi 0, %s74
      %s94 = sphi 0, %s96
      %s97 = sphi 0, %s94
      %s98 = sphi 0, %s97
      %s114 = sphi 0, %s98
    $region4: #{fc_discriminator_forward.6} parent=1 // loop_header_branch
      %19 = sbr.rel (%p17) target = $region8
    $region5: #{fc_discriminator_forward.6} parent=1 // loop_body
      %s21 = ssub.s32 %s16, 1
      %s22 = ssub.s32 %s16, 2
      %s23 = sadd.s32 %s16, 1
      %s24 = ssub.s32 %s16, %s23
      %p25 = scmp.eq.s32.totalorder %s24, 0
      %s27 = sadd.s32 %s26, 1
      %s28 = scalar_select %p25, %s26, %s27
      %p31 = pneg %p25
      %p32 = scmp.eq.s32.totalorder %s16, 1
      %p33 = por %p31, %p32
      %p34 = scmp.ne.s32.totalorder %s26, %s29
      %p35 = scmp.eq.s32.totalorder %s16, 0
      %p36 = por %p34, %p35
      %p37 = scmp.ne.s32.totalorder %s26, %s29
      %p38 = scmp.eq.s32.totalorder %s21, 1
      %p39 = por %p37, %p38
      %p40 = scmp.ne.s32.totalorder %s29, %s30
      %p41 = scmp.eq.s32.totalorder %s21, 0
      %p42 = por %p40, %p41
      %p43 = scmp.ne.s32.totalorder %s29, %s30
      %p44 = scmp.eq.s32.totalorder %s22, 1
      %p45 = por %p43, %p44
      %p47 = scmp.ne.s32.totalorder %s30, %s46
      %p48 = scmp.eq.s32.totalorder %s22, 0
      %p49 = por %p47, %p48
      %s51 = sadd.s32 %s50, 1
      %p54 = scmp.eq.s32.totalorder %s16, 1
      %p55 = scmp.ne.s32.totalorder %s50, %s52
      %p56 = scmp.eq.s32.totalorder %s16, 0
      %p57 = por %p55, %p56
      %p58 = scmp.ne.s32.totalorder %s50, %s52
      %p59 = scmp.eq.s32.totalorder %s21, 1
      %p60 = por %p58, %p59
      %p61 = scmp.ne.s32.totalorder %s52, %s53
      %p62 = scmp.eq.s32.totalorder %s21, 0
      %p63 = por %p61, %p62
      %p64 = scmp.ne.s32.totalorder %s52, %s53
      %p65 = scmp.eq.s32.totalorder %s22, 1
      %p66 = por %p64, %p65
      %p68 = scmp.ne.s32.totalorder %s53, %s67
      %p69 = scmp.eq.s32.totalorder %s22, 0
      %p70 = por %p68, %p69
      %s72 = sadd.s32 %s71, 1
      %p75 = scmp.eq.s32.totalorder %s16, 1
      %p76 = scmp.ne.s32.totalorder %s71, %s73
      %p77 = scmp.eq.s32.totalorder %s16, 0
      %p78 = por %p76, %p77
      %p79 = scmp.ne.s32.totalorder %s71, %s73
      %p80 = scmp.eq.s32.totalorder %s21, 1
      %p81 = por %p79, %p80
      %p82 = scmp.ne.s32.totalorder %s73, %s74
      %p83 = scmp.eq.s32.totalorder %s21, 0
      %p84 = por %p82, %p83
      %p85 = scmp.ne.s32.totalorder %s73, %s74
      %p86 = scmp.eq.s32.totalorder %s22, 1
      %p87 = por %p85, %p86
      %p89 = scmp.ne.s32.totalorder %s74, %s88
      %p90 = scmp.eq.s32.totalorder %s22, 0
      %p91 = por %p89, %p90
      %s92 = ssub.s32 %s16, %s23
      %p93 = scmp.eq.s32.totalorder %s92, 0
      %s95 = sadd.s32 %s94, 1
      %s96 = scalar_select %p93, %s94, %s95
      %p99 = pneg %p93
      %p100 = scmp.eq.s32.totalorder %s16, 1
      %p101 = por %p99, %p100
      %p102 = scmp.ne.s32.totalorder %s94, %s97
      %p103 = scmp.eq.s32.totalorder %s16, 0
      %p104 = por %p102, %p103
      %p105 = scmp.ne.s32.totalorder %s94, %s97
      %p106 = scmp.eq.s32.totalorder %s21, 1
      %p107 = por %p105, %p106
      %p108 = scmp.ne.s32.totalorder %s97, %s98
      %p109 = scmp.eq.s32.totalorder %s21, 0
      %p110 = por %p108, %p109
      %p111 = scmp.ne.s32.totalorder %s97, %s98
      %p112 = scmp.eq.s32.totalorder %s22, 1
      %p113 = por %p111, %p112
      %p115 = scmp.ne.s32.totalorder %s98, %s114
      %p116 = scmp.eq.s32.totalorder %s22, 0
      %p117 = por %p115, %p116
      %p118 = scmp.le.s32.totalorder 1, %s16
      %p119 = scmp.lt.s32.totalorder %s16, 3
      %p120 = pnand %p118, %p119
      %p121 = pneg %p120
      // Predicated region
      $region9: #{fc_discriminator_forward.6} parent=5 // pred_check
        _
      $region10: #{fc_discriminator_forward.6} parent=5 // pred_check_branch
        %123 = sbr.rel (%p120) target = $region12
      $region11: #{fc_discriminator_forward.6} parent=5 // pred_region
        %s124 = ssub.s32 %s16, 1
        // Predicated region
        $region13: #{fc_discriminator_forward.6} parent=11 // pred_check
          %p125 = pneg %p63
        $region14: #{fc_discriminator_forward.6} parent=11 // pred_check_branch
          %127 = sbr.rel (%p125) target = $region16
        $region15: #{fc_discriminator_forward.6} parent=11 // pred_region
          %s129 = ssub.s32 1024, 1024
          %130 = vsyncadd [#allocation6], %s129
          %s131 = sshll.u32 [#allocation5], 4
          %s132 = int_to_ptr.vmem [resolvable:$true] %s131
          %137 = dma.hbm_to_vmem [thread:$0]  %s1, 1024, %s132, [#allocation6], 64, 64, 4
        $region16: #{fc_discriminator_forward.6} parent=11 // pred_fallthru
          _
        // Predicated region
        $region17: #{fc_discriminator_forward.6} parent=11 // pred_check
          %p138 = pneg %p84
        $region18: #{fc_discriminator_forward.6} parent=11 // pred_check_branch
          %140 = sbr.rel (%p138) target = $region20
        $region19: #{fc_discriminator_forward.6} parent=11 // pred_region
          %s142 = ssub.s32 16, 16
          %143 = vsyncadd [#allocation6], %s142
          %s145 = sshll.u32 [#allocation7], 4
          %s146 = int_to_ptr.vmem [resolvable:$true] %s145
          %148 = dma.hbm_to_vmem [thread:$0]  %s2, 16, %s146, [#allocation6]
        $region20: #{fc_discriminator_forward.6} parent=11 // pred_fallthru
          _
      $region12: #{fc_discriminator_forward.6} parent=5 // pred_fallthru
        _
      %p149 = scmp.lt.s32.totalorder %s16, 2
      // Predicated region
      $region21: #{fc_discriminator_forward.6} parent=5 // pred_check
        %p150 = pneg %p149
      $region22: #{fc_discriminator_forward.6} parent=5 // pred_check_branch
        %152 = sbr.rel (%p150) target = $region24
      $region23: #{fc_discriminator_forward.6} parent=5 // pred_region
        // Predicated region
        $region25: #{fc_discriminator_forward.6} parent=23 // pred_check
          %p153 = pneg %p36
        $region26: #{fc_discriminator_forward.6} parent=23 // pred_check_branch
          %155 = sbr.rel (%p153) target = $region28
        $region27: #{fc_discriminator_forward.6} parent=23 // pred_region
          %s156 = sand.u32 %s26, 1
          %s157 = scalar_lea.sflag [#allocation3], %s156
          %s158 = sand.u32 %s26, 1
          %s159 = smul.addr %s158, 8
          %s160 = scalar_lea.vmem [#allocation2], %s159
          %s161 = smul.u32 2, %s16
          %s163 = ssub.s32 128, 128
          %164 = vsyncadd %s157, %s163
          %s165 = smul.addr %s161, 64
          %s166 = scalar_lea.hbm %s0, %s165
          %s167 = sshll.u32 %s160, 4
          %s168 = int_to_ptr.vmem [resolvable:$true] %s167
          %173 = dma.hbm_to_vmem [thread:$0]  %s166, 128, %s168, %s157, 64, 64, 4
        $region28: #{fc_discriminator_forward.6} parent=23 // pred_fallthru
          _
      $region24: #{fc_discriminator_forward.6} parent=5 // pred_fallthru
        _
      %p174 = scmp.le.s32.totalorder 1, %s16
      %p175 = scmp.lt.s32.totalorder %s16, 3
      %p176 = pnand %p174, %p175
      %p177 = pneg %p176
      // Predicated region
      $region29: #{fc_discriminator_forward.6} parent=5 // pred_check
        _
      $region30: #{fc_discriminator_forward.6} parent=5 // pred_check_branch
        %179 = sbr.rel (%p176) target = $region32
      $region31: #{fc_discriminator_forward.6} parent=5 // pred_region
        %s180 = ssub.s32 %s16, 1
        %s181 = sand.u32 %s29, 1
        %s182 = scalar_lea.sflag [#allocation3], %s181
        %s183 = sand.u32 %s29, 1
        %s184 = smul.addr %s183, 8
        %s185 = scalar_lea.vmem [#allocation2], %s184
        // Predicated region
        $region33: #{fc_discriminator_forward.6} parent=31 // pred_check
          %p186 = pneg %p42
        $region34: #{fc_discriminator_forward.6} parent=31 // pred_check_branch
          %188 = sbr.rel (%p186) target = $region36
        $region35: #{fc_discriminator_forward.6} parent=31 // pred_region
          %189 = dma.done %s182, 128
        $region36: #{fc_discriminator_forward.6} parent=31 // pred_fallthru
          _
        // Predicated region
        $region37: #{fc_discriminator_forward.6} parent=31 // pred_check
          %p190 = pneg %p63
        $region38: #{fc_discriminator_forward.6} parent=31 // pred_check_branch
          %192 = sbr.rel (%p190) target = $region40
        $region39: #{fc_discriminator_forward.6} parent=31 // pred_region
          %193 = dma.done [#allocation6], 1024
        $region40: #{fc_discriminator_forward.6} parent=31 // pred_fallthru
          _
        // Predicated region
        $region41: #{fc_discriminator_forward.6} parent=31 // pred_check
          %p194 = pneg %p84
        $region42: #{fc_discriminator_forward.6} parent=31 // pred_check_branch
          %196 = sbr.rel (%p194) target = $region44
        $region43: #{fc_discriminator_forward.6} parent=31 // pred_region
          %197 = dma.done [#allocation6], 16
        $region44: #{fc_discriminator_forward.6} parent=31 // pred_fallthru
          _
        %s198 = sand.u32 %s29, 1
        %s199 = scalar_lea.sflag [#allocation3], %s198
        %s200 = sand.u32 %s29, 1
        %s201 = smul.addr %s200, 8
        %s202 = scalar_lea.vmem [#allocation2], %s201
        %p203 = pneg %p42
        %p204 = pneg %p39
        %p205 = pneg %p63
        %p206 = pneg %p60
        %p207 = pneg %p84
        %p208 = pneg %p81
        %p209 = pneg %p110
        %p210 = pneg %p107
        %s211 = sand.u32 %s97, 1
        %s212 = scalar_lea.sflag [#allocation4], %s211
        %s213 = sand.u32 %s97, 1
        %s214 = smul.addr %s213, 8
        %s215 = scalar_lea.vmem [#allocation8], %s214
        %s216 = smul.u32 2, %s21
        %s217 = smul.u32 2, %s21
        %v219 = vld [vmem:[%s185] sm:$0xf]
        %v220 = vld [vmem:[%s185 + $0x4] sm:$0xf]
        %v221 = vld [vmem:[#allocation5] sm:$0xf]
        %v222 = vld [vmem:[#allocation5 + $0x4] sm:$0xf]
        %v223 = vld [vmem:[#allocation5 + $0x8] sm:$0xf]
        %v224 = vld [vmem:[#allocation5 + $0xc] sm:$0xf]
        %v225 = vld [vmem:[#allocation5 + $0x10] sm:$0xf]
        %v226 = vld [vmem:[#allocation5 + $0x14] sm:$0xf]
        %v227 = vld [vmem:[#allocation5 + $0x18] sm:$0xf]
        %v228 = vld [vmem:[#allocation5 + $0x1c] sm:$0xf]
        %v229 = vld [vmem:[#allocation5 + $0x20] sm:$0xf]
        %v230 = vld [vmem:[#allocation5 + $0x24] sm:$0xf]
        %v231 = vld [vmem:[#allocation5 + $0x28] sm:$0xf]
        %v232 = vld [vmem:[#allocation5 + $0x2c] sm:$0xf]
        %v233 = vld [vmem:[#allocation5 + $0x30] sm:$0xf]
        %v234 = vld [vmem:[#allocation5 + $0x34] sm:$0xf]
        %v235 = vld [vmem:[#allocation5 + $0x38] sm:$0xf]
        %v236 = vld [vmem:[#allocation5 + $0x3c] sm:$0xf]
        %v237 = vld [vmem:[#allocation7] sm:$0x1]
        %v239 = vlaneseq
        %v240 = vshrl.u32 %v239, 7
        %v241 = vsub.s32 0, %v240
        %v242 = vrot.slane %v237, %v241
        %v246 = vunpack.c.l.b16 %v219
        %v247 = vunpack.c.l.b16 %v220
        %v248 = vpack.c.b16 %v247, %v246
        %v266 = vunpack.c.l.b16 %v221
        %v267 = vunpack.c.l.b16 %v222
        %v268 = vunpack.c.l.b16 %v223
        %v269 = vunpack.c.l.b16 %v224
        %v270 = vunpack.c.l.b16 %v225
        %v271 = vunpack.c.l.b16 %v226
        %v272 = vunpack.c.l.b16 %v227
        %v273 = vunpack.c.l.b16 %v228
        %v274 = vunpack.c.l.b16 %v229
        %v275 = vunpack.c.l.b16 %v230
        %v276 = vunpack.c.l.b16 %v231
        %v277 = vunpack.c.l.b16 %v232
        %v278 = vunpack.c.l.b16 %v233
        %v279 = vunpack.c.l.b16 %v234
        %v280 = vunpack.c.l.b16 %v235
        %v281 = vunpack.c.l.b16 %v236
        %v282 = vpack.c.b16 %v267, %v266
        %v283 = vpack.c.b16 %v269, %v268
        %v284 = vpack.c.b16 %v271, %v270
        %v285 = vpack.c.b16 %v273, %v272
        %v286 = vpack.c.b16 %v275, %v274
        %v287 = vpack.c.b16 %v277, %v276
        %v288 = vpack.c.b16 %v279, %v278
        %v289 = vpack.c.b16 %v281, %v280
        %298 = vmatprep.subr.bf16.mxu0 0
        %299 = vmatpush1.bf16.msra.mxu0 %v282
        %300 = vmatprep.subr.bf16.mxu0 0
        %301 = vmatpush1.bf16.msra.mxu0 %v283
        %302 = vmatprep.subr.bf16.mxu0 0
        %303 = vmatpush1.bf16.msra.mxu0 %v284
        %304 = vmatprep.subr.bf16.mxu0 0
        %305 = vmatpush1.bf16.msra.mxu0 %v285
        %306 = vmatprep.subr.bf16.mxu0 0
        %307 = vmatpush1.bf16.msra.mxu0 %v286
        %308 = vmatprep.subr.bf16.mxu0 0
        %309 = vmatpush1.bf16.msra.mxu0 %v287
        %310 = vmatprep.subr.bf16.mxu0 0
        %311 = vmatpush1.bf16.msra.mxu0 %v288
        %312 = vmatprep.subr.bf16.mxu0 0
        %313 = vmatpush1.bf16.msra.mxu0 %v289
        %314 = vmatprep.subr.bf16.mxu0 0
        %315 = vmatpush1.bf16.msra.mxu0 0
        %316 = vmatprep.subr.bf16.mxu0 0
        %317 = vmatpush1.bf16.msra.mxu0 0
        %318 = vmatprep.subr.bf16.mxu0 0
        %319 = vmatpush1.bf16.msra.mxu0 0
        %320 = vmatprep.subr.bf16.mxu0 0
        %321 = vmatpush1.bf16.msra.mxu0 0
        %322 = vmatprep.subr.bf16.mxu0 0
        %323 = vmatpush1.bf16.msra.mxu0 0
        %324 = vmatprep.subr.bf16.mxu0 0
        %325 = vmatpush1.bf16.msra.mxu0 0
        %326 = vmatprep.subr.bf16.mxu0 0
        %327 = vmatpush1.bf16.msra.mxu0 0
        %328 = vmatprep.subr.bf16.mxu0 0
        %329 = vmatpush1.bf16.msra.mxu0 0
        %330 = vmatprep.mubr.bf16.mxu0 0
        %331 = vmatmul.mubr.bf16.gmra.mrb[0].mxu0 %v248
        %v332 = vpop.f32.mrb[0].mxu0
        %v333 = vadd.f32 %v242, %v332
        %v334 = vpop.f32.mrb[0].mxu0
        %v335 = vpop.f32.mrb[0].mxu0
        %v336 = vadd.f32 %v242, %v335
        %v337 = vpop.f32.mrb[0].mxu0
        %338 = vdwg.mxu0
        %v339 = vmul.f32 %v333, 0.2
        %v340 = vmul.f32 %v336, 0.2
        %v341 = vmax.f32 %v333, %v339
        %v342 = vmax.f32 %v336, %v340
        %v343 = vpack.c.bf16 %v342, %v341
        %v345 = vunpack.c.l.b16 %v343
        %v346 = vunpack.c.h.b16 %v343
        %v347 = vpack.c.b16 %v345, %v345
        %v348 = vpack.c.b16 %v346, %v346
        %351 = vst [vmem:[%s215] sm:$0xf] %v347
        %352 = vst [vmem:[%s215 + $0x4] sm:$0xf] %v348
        %s353 = sand.u32 %s97, 1
        %s354 = scalar_lea.sflag [#allocation4], %s353
        %s355 = sand.u32 %s97, 1
        %s356 = smul.addr %s355, 8
        %s357 = scalar_lea.vmem [#allocation8], %s356
        // Predicated region
        $region45: #{fc_discriminator_forward.6} parent=31 // pred_check
          %p358 = pneg %p107
        $region46: #{fc_discriminator_forward.6} parent=31 // pred_check_branch
          %360 = sbr.rel (%p358) target = $region48
        $region47: #{fc_discriminator_forward.6} parent=31 // pred_region
          %s361 = smul.u32 2, %s21
          %s363 = ssub.s32 128, 128
          %364 = vsyncadd %s354, %s363
          %s365 = smul.addr %s361, 64
          %s366 = scalar_lea.hbm %s3, %s365
          %s367 = sshll.u32 %s357, 4
          %s368 = int_to_ptr.vmem [resolvable:$true] %s367
          %373 = dma.vmem_to_hbm [thread:$0]  %s368, 128, %s366, %s354, 64, 64, 4
        $region48: #{fc_discriminator_forward.6} parent=31 // pred_fallthru
          _
      $region32: #{fc_discriminator_forward.6} parent=5 // pred_fallthru
        _
      %p374 = scmp.le.s32.totalorder 2, %s16
      // Predicated region
      $region49: #{fc_discriminator_forward.6} parent=5 // pred_check
        %p375 = pneg %p374
      $region50: #{fc_discriminator_forward.6} parent=5 // pred_check_branch
        %377 = sbr.rel (%p375) target = $region52
      $region51: #{fc_discriminator_forward.6} parent=5 // pred_region
        %s378 = ssub.s32 %s16, 2
        // Predicated region
        $region53: #{fc_discriminator_forward.6} parent=51 // pred_check
          %p379 = pneg %p113
        $region54: #{fc_discriminator_forward.6} parent=51 // pred_check_branch
          %381 = sbr.rel (%p379) target = $region56
        $region55: #{fc_discriminator_forward.6} parent=51 // pred_region
          %s382 = sand.u32 %s98, 1
          %s383 = scalar_lea.sflag [#allocation4], %s382
          %s384 = sand.u32 %s98, 1
          %s385 = smul.addr %s384, 8
          %s386 = scalar_lea.vmem [#allocation8], %s385
          %387 = dma.done %s383, 128
        $region56: #{fc_discriminator_forward.6} parent=51 // pred_fallthru
          _
      $region52: #{fc_discriminator_forward.6} parent=5 // pred_fallthru
        _
    $region6: #{fc_discriminator_forward.6} parent=1 // loop_footer
      %s20 = sadd.s32 1, %s16
    $region7: #{fc_discriminator_forward.6} parent=1 // loop_footer_branch
      %15 = sbr.rel target = $region3
    $region8: #{fc_discriminator_forward.6} parent=1 // loop_exit
      _
    %388 = vsyncpa [#allocation3], 1
    %s389 = scalar_lea.sflag [#allocation3], 1
    %390 = vsyncpa %s389, 1
    %391 = vsyncpa [#allocation6], 1
    %392 = vsyncpa [#allocation4], 1
    %s393 = scalar_lea.sflag [#allocation4], 1
    %394 = vsyncpa %s393, 1

// kernel: fc_discriminator_forward.7
$region0: #{fc_discriminator_forward.7}
  #allocation0 [shape = 'u32[]', space=smem, size = 0x4, offset = 0x4, fixed_abs, tag = 'smem constant byte address 0x4 - core index']
  #allocation1 [shape = 'u32[144,128]{1,0:T(1,128)}', space=vmem, size = 0x12000, scoped, tag = 'internal scratch']
  %s0 = inlined_call_operand.hbm [shape: bf16[2,45,128], index: 0, kind: input, shape index: {}]
  %s1 = inlined_call_operand.hbm [shape: bf16[16,128,128], index: 1, kind: input, shape index: {}]
  %s2 = inlined_call_operand.hbm [shape: f32[1,128], index: 2, kind: input, shape index: {}]
  %s3 = inlined_call_operand.hbm [shape: bf16[2,24,128], index: 3, kind: output, shape index: {}]
  %s4 = sld [smem:[#allocation0]]
  $region57: #{fc_discriminator_forward.7} parent=0
    _
  %s6 = ssub.s32 1, %s4
  %s7 = scalar_select 0, %s6, %s4
  $region1: #{fc_discriminator_forward.7} parent=0
    #allocation2 [shape = 'u8[24576]{0}', space=vmem, size = 0x6000, scoped, tag = 'input window, operand 0']
    #allocation3 [shape = 's32[2]{0}', space=sflag, size = 0x8, scoped, tag = 'scoped memory for fc_discriminator_forward.7']
    #allocation4 [shape = 's32[2]{0}', space=sflag, size = 0x8, scoped, tag = 'scoped memory for fc_discriminator_forward.7']
    #allocation5 [shape = 'u8[524288]{0}', space=vmem, size = 0x80000, scoped, tag = 'input window, operand 1, single buffered']
    #allocation6 [shape = 's32[1]{0}', space=sflag, size = 0x4, scoped, tag = 'scoped memory for fc_discriminator_forward.7']
    #allocation7 [shape = 'u8[512]{0}', space=vmem, size = 0x400, scoped, tag = 'input window, operand 2, single buffered']
    #allocation8 [shape = 'u8[12288]{0}', space=vmem, size = 0x3000, scoped, tag = 'output window, operand 0']
    %8 = vsyncpa [#allocation3], 0
    %s9 = scalar_lea.sflag [#allocation3], 1
    %10 = vsyncpa %s9, 0
    %11 = vsyncpa [#allocation6], 0
    %12 = vsyncpa [#allocation4], 0
    %s13 = scalar_lea.sflag [#allocation4], 1
    %14 = vsyncpa %s13, 0
    loop: start=0, step=1, limit=4
    $region2: #{fc_discriminator_forward.7} parent=1 // loop_pre_header
      _
    $region3: #{fc_discriminator_forward.7} parent=1 // loop_header
      %s16 = sphi 0, %s20
      %p17 = scmp.ge.s32.totalorder %s16, 4
      %s26 = sphi 0, %s28
      %s29 = sphi 0, %s26
      %s30 = sphi 0, %s29
      %s46 = sphi 0, %s30
      %s50 = sphi 0, %s50
      %s52 = sphi 0, %s50
      %s53 = sphi 0, %s52
      %s67 = sphi 0, %s53
      %s71 = sphi 0, %s71
      %s73 = sphi 0, %s71
      %s74 = sphi 0, %s73
      %s88 = sphi 0, %s74
      %s94 = sphi 0, %s96
      %s97 = sphi 0, %s94
      %s98 = sphi 0, %s97
      %s114 = sphi 0, %s98
    $region4: #{fc_discriminator_forward.7} parent=1 // loop_header_branch
      %19 = sbr.rel (%p17) target = $region8
    $region5: #{fc_discriminator_forward.7} parent=1 // loop_body
      %s21 = ssub.s32 %s16, 1
      %s22 = ssub.s32 %s16, 2
      %s23 = sadd.s32 %s16, 1
      %s24 = ssub.s32 %s16, %s23
      %p25 = scmp.eq.s32.totalorder %s24, 0
      %s27 = sadd.s32 %s26, 1
      %s28 = scalar_select %p25, %s26, %s27
      %p31 = pneg %p25
      %p32 = scmp.eq.s32.totalorder %s16, 1
      %p33 = por %p31, %p32
      %p34 = scmp.ne.s32.totalorder %s26, %s29
      %p35 = scmp.eq.s32.totalorder %s16, 0
      %p36 = por %p34, %p35
      %p37 = scmp.ne.s32.totalorder %s26, %s29
      %p38 = scmp.eq.s32.totalorder %s21, 1
      %p39 = por %p37, %p38
      %p40 = scmp.ne.s32.totalorder %s29, %s30
      %p41 = scmp.eq.s32.totalorder %s21, 0
      %p42 = por %p40, %p41
      %p43 = scmp.ne.s32.totalorder %s29, %s30
      %p44 = scmp.eq.s32.totalorder %s22, 1
      %p45 = por %p43, %p44
      %p47 = scmp.ne.s32.totalorder %s30, %s46
      %p48 = scmp.eq.s32.totalorder %s22, 0
      %p49 = por %p47, %p48
      %s51 = sadd.s32 %s50, 1
      %p54 = scmp.eq.s32.totalorder %s16, 1
      %p55 = scmp.ne.s32.totalorder %s50, %s52
      %p56 = scmp.eq.s32.totalorder %s16, 0
      %p57 = por %p55, %p56
      %p58 = scmp.ne.s32.totalorder %s50, %s52
      %p59 = scmp.eq.s32.totalorder %s21, 1
      %p60 = por %p58, %p59
      %p61 = scmp.ne.s32.totalorder %s52, %s53
      %p62 = scmp.eq.s32.totalorder %s21, 0
      %p63 = por %p61, %p62
      %p64 = scmp.ne.s32.totalorder %s52, %s53
      %p65 = scmp.eq.s32.totalorder %s22, 1
      %p66 = por %p64, %p65
      %p68 = scmp.ne.s32.totalorder %s53, %s67
      %p69 = scmp.eq.s32.totalorder %s22, 0
      %p70 = por %p68, %p69
      %s72 = sadd.s32 %s71, 1
      %p75 = scmp.eq.s32.totalorder %s16, 1
      %p76 = scmp.ne.s32.totalorder %s71, %s73
      %p77 = scmp.eq.s32.totalorder %s16, 0
      %p78 = por %p76, %p77
      %p79 = scmp.ne.s32.totalorder %s71, %s73
      %p80 = scmp.eq.s32.totalorder %s21, 1
      %p81 = por %p79, %p80
      %p82 = scmp.ne.s32.totalorder %s73, %s74
      %p83 = scmp.eq.s32.totalorder %s21, 0
      %p84 = por %p82, %p83
      %p85 = scmp.ne.s32.totalorder %s73, %s74
      %p86 = scmp.eq.s32.totalorder %s22, 1
      %p87 = por %p85, %p86
      %p89 = scmp.ne.s32.totalorder %s74, %s88
      %p90 = scmp.eq.s32.totalorder %s22, 0
      %p91 = por %p89, %p90
      %s92 = ssub.s32 %s16, %s23
      %p93 = scmp.eq.s32.totalorder %s92, 0
      %s95 = sadd.s32 %s94, 1
      %s96 = scalar_select %p93, %s94, %s95
      %p99 = pneg %p93
      %p100 = scmp.eq.s32.totalorder %s16, 1
      %p101 = por %p99, %p100
      %p102 = scmp.ne.s32.totalorder %s94, %s97
      %p103 = scmp.eq.s32.totalorder %s16, 0
      %p104 = por %p102, %p103
      %p105 = scmp.ne.s32.totalorder %s94, %s97
      %p106 = scmp.eq.s32.totalorder %s21, 1
      %p107 = por %p105, %p106
      %p108 = scmp.ne.s32.totalorder %s97, %s98
      %p109 = scmp.eq.s32.totalorder %s21, 0
      %p110 = por %p108, %p109
      %p111 = scmp.ne.s32.totalorder %s97, %s98
      %p112 = scmp.eq.s32.totalorder %s22, 1
      %p113 = por %p111, %p112
      %p115 = scmp.ne.s32.totalorder %s98, %s114
      %p116 = scmp.eq.s32.totalorder %s22, 0
      %p117 = por %p115, %p116
      %p118 = scmp.le.s32.totalorder 1, %s16
      %p119 = scmp.lt.s32.totalorder %s16, 3
      %p120 = pnand %p118, %p119
      %p121 = pneg %p120
      // Predicated region
      $region9: #{fc_discriminator_forward.7} parent=5 // pred_check
        _
      $region10: #{fc_discriminator_forward.7} parent=5 // pred_check_branch
        %123 = sbr.rel (%p120) target = $region12
      $region11: #{fc_discriminator_forward.7} parent=5 // pred_region
        %s124 = ssub.s32 %s16, 1
        // Predicated region
        $region13: #{fc_discriminator_forward.7} parent=11 // pred_check
          %p125 = pneg %p63
        $region14: #{fc_discriminator_forward.7} parent=11 // pred_check_branch
          %127 = sbr.rel (%p125) target = $region16
        $region15: #{fc_discriminator_forward.7} parent=11 // pred_region
          %s129 = ssub.s32 16384, 16384
          %130 = vsyncadd [#allocation6], %s129
          %s131 = sshll.u32 [#allocation5], 4
          %s132 = int_to_ptr.vmem [resolvable:$true] %s131
          %137 = dma.hbm_to_vmem [thread:$0]  %s1, 16384, %s132, [#allocation6], 64, 64, 4
        $region16: #{fc_discriminator_forward.7} parent=11 // pred_fallthru
          _
        // Predicated region
        $region17: #{fc_discriminator_forward.7} parent=11 // pred_check
          %p138 = pneg %p84
        $region18: #{fc_discriminator_forward.7} parent=11 // pred_check_branch
          %140 = sbr.rel (%p138) target = $region20
        $region19: #{fc_discriminator_forward.7} parent=11 // pred_region
          %s142 = ssub.s32 16, 16
          %143 = vsyncadd [#allocation6], %s142
          %s145 = sshll.u32 [#allocation7], 4
          %s146 = int_to_ptr.vmem [resolvable:$true] %s145
          %148 = dma.hbm_to_vmem [thread:$0]  %s2, 16, %s146, [#allocation6]
        $region20: #{fc_discriminator_forward.7} parent=11 // pred_fallthru
          _
      $region12: #{fc_discriminator_forward.7} parent=5 // pred_fallthru
        _
      %p149 = scmp.lt.s32.totalorder %s16, 2
      // Predicated region
      $region21: #{fc_discriminator_forward.7} parent=5 // pred_check
        %p150 = pneg %p149
      $region22: #{fc_discriminator_forward.7} parent=5 // pred_check_branch
        %152 = sbr.rel (%p150) target = $region24
      $region23: #{fc_discriminator_forward.7} parent=5 // pred_region
        // Predicated region
        $region25: #{fc_discriminator_forward.7} parent=23 // pred_check
          %p153 = pneg %p36
        $region26: #{fc_discriminator_forward.7} parent=23 // pred_check_branch
          %155 = sbr.rel (%p153) target = $region28
        $region27: #{fc_discriminator_forward.7} parent=23 // pred_region
          %s156 = sand.u32 %s26, 1
          %s157 = scalar_lea.sflag [#allocation3], %s156
          %s158 = sand.u32 %s26, 1
          %s159 = smul.addr %s158, 24
          %s160 = scalar_lea.vmem [#allocation2], %s159
          %s162 = ssub.s32 384, 384
          %163 = vsyncadd %s157, %s162
          %s164 = smul.addr %s16, 6
          %s165 = smul.addr %s164, 64
          %s166 = scalar_lea.hbm %s0, %s165
          %s167 = sshll.u32 %s160, 4
          %s168 = int_to_ptr.vmem [resolvable:$true] %s167
          %173 = dma.hbm_to_vmem [thread:$0]  %s166, 384, %s168, %s157, 64, 64, 4
        $region28: #{fc_discriminator_forward.7} parent=23 // pred_fallthru
          _
      $region24: #{fc_discriminator_forward.7} parent=5 // pred_fallthru
        _
      %p174 = scmp.le.s32.totalorder 1, %s16
      %p175 = scmp.lt.s32.totalorder %s16, 3
      %p176 = pnand %p174, %p175
      %p177 = pneg %p176
      // Predicated region
      $region29: #{fc_discriminator_forward.7} parent=5 // pred_check
        _
      $region30: #{fc_discriminator_forward.7} parent=5 // pred_check_branch
        %179 = sbr.rel (%p176) target = $region32
      $region31: #{fc_discriminator_forward.7} parent=5 // pred_region
        %s180 = ssub.s32 %s16, 1
        %s181 = sand.u32 %s29, 1
        %s182 = scalar_lea.sflag [#allocation3], %s181
        %s183 = sand.u32 %s29, 1
        %s184 = smul.addr %s183, 24
        %s185 = scalar_lea.vmem [#allocation2], %s184
        // Predicated region
        $region33: #{fc_discriminator_forward.7} parent=31 // pred_check
          %p186 = pneg %p42
        $region34: #{fc_discriminator_forward.7} parent=31 // pred_check_branch
          %188 = sbr.rel (%p186) target = $region36
        $region35: #{fc_discriminator_forward.7} parent=31 // pred_region
          %189 = dma.done %s182, 384
        $region36: #{fc_discriminator_forward.7} parent=31 // pred_fallthru
          _
        // Predicated region
        $region37: #{fc_discriminator_forward.7} parent=31 // pred_check
          %p190 = pneg %p63
        $region38: #{fc_discriminator_forward.7} parent=31 // pred_check_branch
          %192 = sbr.rel (%p190) target = $region40
        $region39: #{fc_discriminator_forward.7} parent=31 // pred_region
          %193 = dma.done [#allocation6], 16384
        $region40: #{fc_discriminator_forward.7} parent=31 // pred_fallthru
          _
        // Predicated region
        $region41: #{fc_discriminator_forward.7} parent=31 // pred_check
          %p194 = pneg %p84
        $region42: #{fc_discriminator_forward.7} parent=31 // pred_check_branch
          %196 = sbr.rel (%p194) target = $region44
        $region43: #{fc_discriminator_forward.7} parent=31 // pred_region
          %197 = dma.done [#allocation6], 16
        $region44: #{fc_discriminator_forward.7} parent=31 // pred_fallthru
          _
        %s198 = sand.u32 %s29, 1
        %s199 = scalar_lea.sflag [#allocation3], %s198
        %s200 = sand.u32 %s29, 1
        %s201 = smul.addr %s200, 24
        %s202 = scalar_lea.vmem [#allocation2], %s201
        %p203 = pneg %p42
        %p204 = pneg %p39
        %p205 = pneg %p63
        %p206 = pneg %p60
        %p207 = pneg %p84
        %p208 = pneg %p81
        %p209 = pneg %p110
        %p210 = pneg %p107
        %s211 = sand.u32 %s97, 1
        %s212 = scalar_lea.sflag [#allocation4], %s211
        %s213 = sand.u32 %s97, 1
        %s214 = smul.addr %s213, 12
        %s215 = scalar_lea.vmem [#allocation8], %s214
        %v217 = vld [vmem:[%s185] sm:$0xf]
        %v218 = vld [vmem:[%s185 + $0x4] sm:$0xf]
        %v219 = vld [vmem:[%s185 + $0x8] sm:$0xf]
        %v220 = vld [vmem:[#allocation5] sm:$0xf]
        %v221 = vld [vmem:[#allocation5 + $0x4] sm:$0xf]
        %v222 = vld [vmem:[#allocation5 + $0x8] sm:$0xf]
        %v223 = vld [vmem:[#allocation5 + $0xc] sm:$0xf]
        %v224 = vld [vmem:[#allocation5 + $0x10] sm:$0xf]
        %v225 = vld [vmem:[#allocation5 + $0x14] sm:$0xf]
        %v226 = vld [vmem:[#allocation5 + $0x18] sm:$0xf]
        %v227 = vld [vmem:[#allocation5 + $0x1c] sm:$0xf]
        %v228 = vld [vmem:[#allocation5 + $0x20] sm:$0xf]
        %v229 = vld [vmem:[#allocation5 + $0x24] sm:$0xf]
        %v230 = vld [vmem:[#allocation5 + $0x28] sm:$0xf]
        %v231 = vld [vmem:[#allocation5 + $0x2c] sm:$0xf]
        %v232 = vld [vmem:[#allocation5 + $0x30] sm:$0xf]
        %v233 = vld [vmem:[#allocation5 + $0x34] sm:$0xf]
        %v234 = vld [vmem:[#allocation5 + $0x38] sm:$0xf]
        %v235 = vld [vmem:[#allocation5 + $0x3c] sm:$0xf]
        %v236 = vld [vmem:[%s185 + $0xc] sm:$0x1]
        %s237 = scalar_lea.vmem [#allocation5], 64
        %v238 = vld [vmem:[%s237] sm:$0xf]
        %v239 = vld [vmem:[%s237 + $0x4] sm:$0xf]
        %v240 = vld [vmem:[%s237 + $0x8] sm:$0xf]
        %v241 = vld [vmem:[%s237 + $0xc] sm:$0xf]
        %v242 = vld [vmem:[%s237 + $0x10] sm:$0xf]
        %v243 = vld [vmem:[%s237 + $0x14] sm:$0xf]
        %v244 = vld [vmem:[%s237 + $0x18] sm:$0xf]
        %v245 = vld [vmem:[%s237 + $0x1c] sm:$0xf]
        %v246 = vld [vmem:[%s237 + $0x20] sm:$0xf]
        %v247 = vld [vmem:[%s237 + $0x24] sm:$0xf]
        %v248 = vld [vmem:[%s237 + $0x28] sm:$0xf]
        %v249 = vld [vmem:[%s237 + $0x2c] sm:$0xf]
        %v250 = vld [vmem:[%s237 + $0x30] sm:$0xf]
        %v251 = vld [vmem:[%s237 + $0x34] sm:$0xf]
        %v252 = vld [vmem:[%s237 + $0x38] sm:$0xf]
        %v253 = vld [vmem:[%s237 + $0x3c] sm:$0xf]
        %v258 = vunpack.c.l.b16 %v217
        %v259 = vunpack.c.l.b16 %v218
        %v260 = vunpack.c.l.b16 %v219
        %v261 = vunpack.c.l.b16 %v236
        %v262 = vpack.c.b16 %v259, %v258
        %v263 = vpack.c.b16 %v261, %v260
        %vm264 = vsmask.f32 7424
        %v266 = vshrl.u32 %v262, 16
        %v268 = vshll.u32 %v262, 16
        %v270 = vrot.slane %v268, 1
        %v271 = vor.u32 %v266, %v270
        %v273 = vshll.u32 %v263, 16
        %v275 = vrot.slane %v273, 1
        %v276 = vsel %vm264, %v271, %v275
        %v277 = vshrl.u32 %v263, 16
        %v279 = vor.u32 %v277, %v275
        %v298 = vunpack.c.l.b16 %v238
        %v299 = vunpack.c.l.b16 %v239
        %v300 = vunpack.c.l.b16 %v240
        %v301 = vunpack.c.l.b16 %v241
        %v302 = vunpack.c.l.b16 %v242
        %v303 = vunpack.c.l.b16 %v243
        %v304 = vunpack.c.l.b16 %v244
        %v305 = vunpack.c.l.b16 %v245
        %v306 = vunpack.c.l.b16 %v246
        %v307 = vunpack.c.l.b16 %v247
        %v308 = vunpack.c.l.b16 %v248
        %v309 = vunpack.c.l.b16 %v249
        %v310 = vunpack.c.l.b16 %v250
        %v311 = vunpack.c.l.b16 %v251
        %v312 = vunpack.c.l.b16 %v252
        %v313 = vunpack.c.l.b16 %v253
        %v314 = vpack.c.b16 %v299, %v298
        %v315 = vpack.c.b16 %v301, %v300
        %v316 = vpack.c.b16 %v303, %v302
        %v317 = vpack.c.b16 %v305, %v304
        %v318 = vpack.c.b16 %v307, %v306
        %v319 = vpack.c.b16 %v309, %v308
        %v320 = vpack.c.b16 %v311, %v310
        %v321 = vpack.c.b16 %v313, %v312
        %330 = vmatprep.subr.bf16.mxu0 0
        %331 = vmatpush1.bf16.msra.mxu0 %v314
        %332 = vmatprep.subr.bf16.mxu0 0
        %333 = vmatpush1.bf16.msra.mxu0 %v315
        %334 = vmatprep.subr.bf16.mxu0 0
        %335 = vmatpush1.bf16.msra.mxu0 %v316
        %336 = vmatprep.subr.bf16.mxu0 0
        %337 = vmatpush1.bf16.msra.mxu0 %v317
        %338 = vmatprep.subr.bf16.mxu0 0
        %339 = vmatpush1.bf16.msra.mxu0 %v318
        %340 = vmatprep.subr.bf16.mxu0 0
        %341 = vmatpush1.bf16.msra.mxu0 %v319
        %342 = vmatprep.subr.bf16.mxu0 0
        %343 = vmatpush1.bf16.msra.mxu0 %v320
        %344 = vmatprep.subr.bf16.mxu0 0
        %345 = vmatpush1.bf16.msra.mxu0 %v321
        %346 = vmatprep.subr.bf16.mxu0 0
        %347 = vmatpush1.bf16.msra.mxu0 0
        %348 = vmatprep.subr.bf16.mxu0 0
        %349 = vmatpush1.bf16.msra.mxu0 0
        %350 = vmatprep.subr.bf16.mxu0 0
        %351 = vmatpush1.bf16.msra.mxu0 0
        %352 = vmatprep.subr.bf16.mxu0 0
        %353 = vmatpush1.bf16.msra.mxu0 0
        %354 = vmatprep.subr.bf16.mxu0 0
        %355 = vmatpush1.bf16.msra.mxu0 0
        %356 = vmatprep.subr.bf16.mxu0 0
        %357 = vmatpush1.bf16.msra.mxu0 0
        %358 = vmatprep.subr.bf16.mxu0 0
        %359 = vmatpush1.bf16.msra.mxu0 0
        %360 = vmatprep.subr.bf16.mxu0 0
        %361 = vmatpush1.bf16.msra.mxu0 0
        %362 = vmatprep.mubr.bf16.mxu0 0
        %363 = vmatmul.mubr.bf16.gmra.mrb[0].mxu0 %v276
        %v364 = vpop.f32.mrb[0].mxu0
        %v365 = vadd.f32 0.0, %v364
        %v366 = vpop.f32.mrb[0].mxu0
        %v367 = vpop.f32.mrb[0].mxu0
        %v368 = vadd.f32 0.0, %v367
        %v369 = vpop.f32.mrb[0].mxu0
        %370 = vmatprep.mubr.bf16.mxu0 0
        %371 = vmatmul.mubr.bf16.gmra.mrb[0].mxu0 %v279
        %v372 = vpop.f32.mrb[0].mxu0
        %v373 = vadd.f32 0.0, %v372
        %v374 = vpop.f32.mrb[0].mxu0
        %v375 = vpop.f32.mrb[0].mxu0
        %v376 = vpop.f32.mrb[0].mxu0
        %377 = vdwg.mxu0
        %v378 = vpack.c.b16 %v260, %v260
        %v397 = vunpack.c.l.b16 %v220
        %v398 = vunpack.c.l.b16 %v221
        %v399 = vunpack.c.l.b16 %v222
        %v400 = vunpack.c.l.b16 %v223
        %v401 = vunpack.c.l.b16 %v224
        %v402 = vunpack.c.l.b16 %v225
        %v403 = vunpack.c.l.b16 %v226
        %v404 = vunpack.c.l.b16 %v227
        %v405 = vunpack.c.l.b16 %v228
        %v406 = vunpack.c.l.b16 %v229
        %v407 = vunpack.c.l.b16 %v230
        %v408 = vunpack.c.l.b16 %v231
        %v409 = vunpack.c.l.b16 %v232
        %v410 = vunpack.c.l.b16 %v233
        %v411 = vunpack.c.l.b16 %v234
        %v412 = vunpack.c.l.b16 %v235
        %v413 = vpack.c.b16 %v398, %v397
        %v414 = vpack.c.b16 %v400, %v399
        %v415 = vpack.c.b16 %v402, %v401
        %v416 = vpack.c.b16 %v404, %v403
        %v417 = vpack.c.b16 %v406, %v405
        %v418 = vpack.c.b16 %v408, %v407
        %v419 = vpack.c.b16 %v410, %v409
        %v420 = vpack.c.b16 %v412, %v411
        %429 = vmatprep.subr.bf16.mxu0 0
        %430 = vmatpush1.bf16.msra.mxu0 %v413
        %431 = vmatprep.subr.bf16.mxu0 0
        %432 = vmatpush1.bf16.msra.mxu0 %v414
        %433 = vmatprep.subr.bf16.mxu0 0
        %434 = vmatpush1.bf16.msra.mxu0 %v415
        %435 = vmatprep.subr.bf16.mxu0 0
        %436 = vmatpush1.bf16.msra.mxu0 %v416
        %437 = vmatprep.subr.bf16.mxu0 0
        %438 = vmatpush1.bf16.msra.mxu0 %v417
        %439 = vmatprep.subr.bf16.mxu0 0
        %440 = vmatpush1.bf16.msra.mxu0 %v418
        %441 = vmatprep.subr.bf16.mxu0 0
        %442 = vmatpush1.bf16.msra.mxu0 %v419
        %443 = vmatprep.subr.bf16.mxu0 0
        %444 = vmatpush1.bf16.msra.mxu0 %v420
        %445 = vmatprep.subr.bf16.mxu0 0
        %446 = vmatpush1.bf16.msra.mxu0 0
        %447 = vmatprep.subr.bf16.mxu0 0
        %448 = vmatpush1.bf16.msra.mxu0 0
        %449 = vmatprep.subr.bf16.mxu0 0
        %450 = vmatpush1.bf16.msra.mxu0 0
        %451 = vmatprep.subr.bf16.mxu0 0
        %452 = vmatpush1.bf16.msra.mxu0 0
        %453 = vmatprep.subr.bf16.mxu0 0
        %454 = vmatpush1.bf16.msra.mxu0 0
        %455 = vmatprep.subr.bf16.mxu0 0
        %456 = vmatpush1.bf16.msra.mxu0 0
        %457 = vmatprep.subr.bf16.mxu0 0
        %458 = vmatpush1.bf16.msra.mxu0 0
        %459 = vmatprep.subr.bf16.mxu0 0
        %460 = vmatpush1.bf16.msra.mxu0 0
        %461 = vmatprep.mubr.bf16.mxu0 0
        %462 = vmatmul.mubr.bf16.gmra.mrb[0].mxu0 %v262
        %v463 = vpop.f32.mrb[0].mxu0
        %v464 = vadd.f32 %v365, %v463
        %v465 = vpop.f32.mrb[0].mxu0
        %v466 = vpop.f32.mrb[0].mxu0
        %v467 = vadd.f32 %v368, %v466
        %v468 = vpop.f32.mrb[0].mxu0
        %469 = vmatprep.mubr.bf16.mxu0 0
        %470 = vmatmul.mubr.bf16.gmra.mrb[0].mxu0 %v378
        %v471 = vpop.f32.mrb[0].mxu0
        %v472 = vadd.f32 %v373, %v471
        %v473 = vpop.f32.mrb[0].mxu0
        %v474 = vpop.f32.mrb[0].mxu0
        %v475 = vpop.f32.mrb[0].mxu0
        %476 = vdwg.mxu0
        %v477 = vld [vmem:[%s185] sm:$0xe]
        %s478 = scalar_lea.vmem [#allocation5], 128
        %v479 = vld [vmem:[%s478] sm:$0xf]
        %v480 = vld [vmem:[%s478 + $0x4] sm:$0xf]
        %v481 = vld [vmem:[%s478 + $0x8] sm:$0xf]
        %v482 = vld [vmem:[%s478 + $0xc] sm:$0xf]
        %v483 = vld [vmem:[%s478 + $0x10] sm:$0xf]
        %v484 = vld [vmem:[%s478 + $0x14] sm:$0xf]
        %v485 = vld [vmem:[%s478 + $0x18] sm:$0xf]
        %v486 = vld [vmem:[%s478 + $0x1c] sm:$0xf]
        %v487 = vld [vmem:[%s478 + $0x20] sm:$0xf]
        %v488 = vld [vmem:[%s478 + $0x24] sm:$0xf]
        %v489 = vld [vmem:[%s478 + $0x28] sm:$0xf]
        %v490 = vld [vmem:[%s478 + $0x2c] sm:$0xf]
        %v491 = vld [vmem:[%s478 + $0x30] sm:$0xf]
        %v492 = vld [vmem:[%s478 + $0x34] sm:$0xf]
        %v493 = vld [vmem:[%s478 + $0x38] sm:$0xf]
        %v494 = vld [vmem:[%s478 + $0x3c] sm:$0xf]
        %v496 = vunpack.c.l.b16 %v477
        %v497 = vpack.c.b16 %v259, %v496
        %vm498 = vcmask 1046528
        %v499 = vrot.slane %v497, 1
        %v500 = vrot.slane %v263, 1
        %v501 = vsel %vm498, %v499, %v500
        %v520 = vunpack.c.l.b16 %v479
        %v521 = vunpack.c.l.b16 %v480
        %v522 = vunpack.c.l.b16 %v481
        %v523 = vunpack.c.l.b16 %v482
        %v524 = vunpack.c.l.b16 %v483
        %v525 = vunpack.c.l.b16 %v484
        %v526 = vunpack.c.l.b16 %v485
        %v527 = vunpack.c.l.b16 %v486
        %v528 = vunpack.c.l.b16 %v487
        %v529 = vunpack.c.l.b16 %v488
        %v530 = vunpack.c.l.b16 %v489
        %v531 = vunpack.c.l.b16 %v490
        %v532 = vunpack.c.l.b16 %v491
        %v533 = vunpack.c.l.b16 %v492
        %v534 = vunpack.c.l.b16 %v493
        %v535 = vunpack.c.l.b16 %v494
        %v536 = vpack.c.b16 %v521, %v520
        %v537 = vpack.c.b16 %v523, %v522
        %v538 = vpack.c.b16 %v525, %v524
        %v539 = vpack.c.b16 %v527, %v526
        %v540 = vpack.c.b16 %v529, %v528
        %v541 = vpack.c.b16 %v531, %v530
        %v542 = vpack.c.b16 %v533, %v532
        %v543 = vpack.c.b16 %v535, %v534
        %552 = vmatprep.subr.bf16.mxu0 0
        %553 = vmatpush1.bf16.msra.mxu0 %v536
        %554 = vmatprep.subr.bf16.mxu0 0
        %555 = vmatpush1.bf16.msra.mxu0 %v537
        %556 = vmatprep.subr.bf16.mxu0 0
        %557 = vmatpush1.bf16.msra.mxu0 %v538
        %558 = vmatprep.subr.bf16.mxu0 0
        %559 = vmatpush1.bf16.msra.mxu0 %v539
        %560 = vmatprep.subr.bf16.mxu0 0
        %561 = vmatpush1.bf16.msra.mxu0 %v540
        %562 = vmatprep.subr.bf16.mxu0 0
        %563 = vmatpush1.bf16.msra.mxu0 %v541
        %564 = vmatprep.subr.bf16.mxu0 0
        %565 = vmatpush1.bf16.msra.mxu0 %v542
        %566 = vmatprep.subr.bf16.mxu0 0
        %567 = vmatpush1.bf16.msra.mxu0 %v543
        %568 = vmatprep.subr.bf16.mxu0 0
        %569 = vmatpush1.bf16.msra.mxu0 0
        %570 = vmatprep.subr.bf16.mxu0 0
        %571 = vmatpush1.bf16.msra.mxu0 0
        %572 = vmatprep.subr.bf16.mxu0 0
        %573 = vmatpush1.bf16.msra.mxu0 0
        %574 = vmatprep.subr.bf16.mxu0 0
        %575 = vmatpush1.bf16.msra.mxu0 0
        %576 = vmatprep.subr.bf16.mxu0 0
        %577 = vmatpush1.bf16.msra.mxu0 0
        %578 = vmatprep.subr.bf16.mxu0 0
        %579 = vmatpush1.bf16.msra.mxu0 0
        %580 = vmatprep.subr.bf16.mxu0 0
        %581 = vmatpush1.bf16.msra.mxu0 0
        %582 = vmatprep.subr.bf16.mxu0 0
        %583 = vmatpush1.bf16.msra.mxu0 0
        %584 = vmatprep.mubr.bf16.mxu0 0
        %585 = vmatmul.mubr.bf16.gmra.mrb[0].mxu0 %v501
        %v586 = vpop.f32.mrb[0].mxu0
        %v587 = vadd.f32 0.0, %v586
        %v588 = vpop.f32.mrb[0].mxu0
        %v589 = vpop.f32.mrb[0].mxu0
        %v590 = vadd.f32 0.0, %v589
        %v591 = vpop.f32.mrb[0].mxu0
        %592 = vmatprep.mubr.bf16.mxu0 0
        %593 = vmatmul.mubr.bf16.gmra.mrb[0].mxu0 %v500
        %v594 = vpop.f32.mrb[0].mxu0
        %v595 = vadd.f32 0.0, %v594
        %v596 = vpop.f32.mrb[0].mxu0
        %v597 = vpop.f32.mrb[0].mxu0
        %v598 = vpop.f32.mrb[0].mxu0
        %599 = vdwg.mxu0
        %v600 = vadd.f32 %v464, %v587
        %v601 = vadd.f32 %v467, %v590
        %v602 = vadd.f32 %v472, %v595
        %v603 = vld [vmem:[%s185 + $0xc] sm:$0x3]
        %s604 = scalar_lea.vmem [#allocation5], 192
        %v605 = vld [vmem:[%s604] sm:$0xf]
        %v606 = vld [vmem:[%s604 + $0x4] sm:$0xf]
        %v607 = vld [vmem:[%s604 + $0x8] sm:$0xf]
        %v608 = vld [vmem:[%s604 + $0xc] sm:$0xf]
        %v609 = vld [vmem:[%s604 + $0x10] sm:$0xf]
        %v610 = vld [vmem:[%s604 + $0x14] sm:$0xf]
        %v611 = vld [vmem:[%s604 + $0x18] sm:$0xf]
        %v612 = vld [vmem:[%s604 + $0x1c] sm:$0xf]
        %v613 = vld [vmem:[%s604 + $0x20] sm:$0xf]
        %v614 = vld [vmem:[%s604 + $0x24] sm:$0xf]
        %v615 = vld [vmem:[%s604 + $0x28] sm:$0xf]
        %v616 = vld [vmem:[%s604 + $0x2c] sm:$0xf]
        %v617 = vld [vmem:[%s604 + $0x30] sm:$0xf]
        %v618 = vld [vmem:[%s604 + $0x34] sm:$0xf]
        %v619 = vld [vmem:[%s604 + $0x38] sm:$0xf]
        %v620 = vld [vmem:[%s604 + $0x3c] sm:$0xf]
        %v622 = vunpack.c.l.b16 %v603
        %v623 = vpack.c.b16 %v622, %v260
        %vm624 = vsmask.f32 6400
        %v626 = vshrl.u32 %v497, 16
        %v628 = vrot.slane %v626, 1
        %v629 = vshll.u32 %v497, 16
        %v631 = vrot.slane %v629, 2
        %v632 = vor.u32 %v628, %v631
        %v634 = vshrl.u32 %v623, 16
        %v636 = vrot.slane %v634, 1
        %v637 = vshll.u32 %v623, 16
        %v639 = vrot.slane %v637, 2
        %v640 = vor.u32 %v636, %v639
        %v641 = vsel %vm624, %v632, %v640
        %v660 = vunpack.c.l.b16 %v605
        %v661 = vunpack.c.l.b16 %v606
        %v662 = vunpack.c.l.b16 %v607
        %v663 = vunpack.c.l.b16 %v608
        %v664 = vunpack.c.l.b16 %v609
        %v665 = vunpack.c.l.b16 %v610
        %v666 = vunpack.c.l.b16 %v611
        %v667 = vunpack.c.l.b16 %v612
        %v668 = vunpack.c.l.b16 %v613
        %v669 = vunpack.c.l.b16 %v614
        %v670 = vunpack.c.l.b16 %v615
        %v671 = vunpack.c.l.b16 %v616
        %v672 = vunpack.c.l.b16 %v617
        %v673 = vunpack.c.l.b16 %v618
        %v674 = vunpack.c.l.b16 %v619
        %v675 = vunpack.c.l.b16 %v620
        %v676 = vpack.c.b16 %v661, %v660
        %v677 = vpack.c.b16 %v663, %v662
        %v678 = vpack.c.b16 %v665, %v664
        %v679 = vpack.c.b16 %v667, %v666
        %v680 = vpack.c.b16 %v669, %v668
        %v681 = vpack.c.b16 %v671, %v670
        %v682 = vpack.c.b16 %v673, %v672
        %v683 = vpack.c.b16 %v675, %v674
        %692 = vmatprep.subr.bf16.mxu0 0
        %693 = vmatpush1.bf16.msra.mxu0 %v676
        %694 = vmatprep.subr.bf16.mxu0 0
        %695 = vmatpush1.bf16.msra.mxu0 %v677
        %696 = vmatprep.subr.bf16.mxu0 0
        %697 = vmatpush1.bf16.msra.mxu0 %v678
        %698 = vmatprep.subr.bf16.mxu0 0
        %699 = vmatpush1.bf16.msra.mxu0 %v679
        %700 = vmatprep.subr.bf16.mxu0 0
        %701 = vmatpush1.bf16.msra.mxu0 %v680
        %702 = vmatprep.subr.bf16.mxu0 0
        %703 = vmatpush1.bf16.msra.mxu0 %v681
        %704 = vmatprep.subr.bf16.mxu0 0
        %705 = vmatpush1.bf16.msra.mxu0 %v682
        %706 = vmatprep.subr.bf16.mxu0 0
        %707 = vmatpush1.bf16.msra.mxu0 %v683
        %708 = vmatprep.subr.bf16.mxu0 0
        %709 = vmatpush1.bf16.msra.mxu0 0
        %710 = vmatprep.subr.bf16.mxu0 0
        %711 = vmatpush1.bf16.msra.mxu0 0
        %712 = vmatprep.subr.bf16.mxu0 0
        %713 = vmatpush1.bf16.msra.mxu0 0
        %714 = vmatprep.subr.bf16.mxu0 0
        %715 = vmatpush1.bf16.msra.mxu0 0
        %716 = vmatprep.subr.bf16.mxu0 0
        %717 = vmatpush1.bf16.msra.mxu0 0
        %718 = vmatprep.subr.bf16.mxu0 0
        %719 = vmatpush1.bf16.msra.mxu0 0
        %720 = vmatprep.subr.bf16.mxu0 0
        %721 = vmatpush1.bf16.msra.mxu0 0
        %722 = vmatprep.subr.bf16.mxu0 0
        %723 = vmatpush1.bf16.msra.mxu0 0
        %724 = vmatprep.mubr.bf16.mxu0 0
        %725 = vmatmul.mubr.bf16.gmra.mrb[0].mxu0 %v641
        %v726 = vpop.f32.mrb[0].mxu0
        %v727 = vadd.f32 0.0, %v726
        %v728 = vpop.f32.mrb[0].mxu0
        %v729 = vpop.f32.mrb[0].mxu0
        %v730 = vadd.f32 0.0, %v729
        %v731 = vpop.f32.mrb[0].mxu0
        %732 = vmatprep.mubr.bf16.mxu0 0
        %733 = vmatmul.mubr.bf16.gmra.mrb[0].mxu0 %v640
        %v734 = vpop.f32.mrb[0].mxu0
        %v735 = vadd.f32 0.0, %v734
        %v736 = vpop.f32.mrb[0].mxu0
        %v737 = vpop.f32.mrb[0].mxu0
        %v738 = vpop.f32.mrb[0].mxu0
        %739 = vdwg.mxu0
        %v740 = vadd.f32 %v600, %v727
        %v741 = vadd.f32 %v601, %v730
        %v742 = vadd.f32 %v602, %v735
        %v743 = vld [vmem:[%s185] sm:$0x8]
        %v744 = vld [vmem:[%s185 + $0xc] sm:$0x7]
        %s745 = scalar_lea.vmem [#allocation5], 256
        %v746 = vld [vmem:[%s745] sm:$0xf]
        %v747 = vld [vmem:[%s745 + $0x4] sm:$0xf]
        %v748 = vld [vmem:[%s745 + $0x8] sm:$0xf]
        %v749 = vld [vmem:[%s745 + $0xc] sm:$0xf]
        %v750 = vld [vmem:[%s745 + $0x10] sm:$0xf]
        %v751 = vld [vmem:[%s745 + $0x14] sm:$0xf]
        %v752 = vld [vmem:[%s745 + $0x18] sm:$0xf]
        %v753 = vld [vmem:[%s745 + $0x1c] sm:$0xf]
        %v754 = vld [vmem:[%s745 + $0x20] sm:$0xf]
        %v755 = vld [vmem:[%s745 + $0x24] sm:$0xf]
        %v756 = vld [vmem:[%s745 + $0x28] sm:$0xf]
        %v757 = vld [vmem:[%s745 + $0x2c] sm:$0xf]
        %v758 = vld [vmem:[%s745 + $0x30] sm:$0xf]
        %v759 = vld [vmem:[%s745 + $0x34] sm:$0xf]
        %v760 = vld [vmem:[%s745 + $0x38] sm:$0xf]
        %v761 = vld [vmem:[%s745 + $0x3c] sm:$0xf]
        %v764 = vunpack.c.l.b16 %v743
        %v765 = vunpack.c.l.b16 %v744
        %v766 = vpack.c.b16 %v259, %v764
        %v767 = vpack.c.b16 %v765, %v260
        %vm768 = vcmask 1044480
        %v769 = vrot.slane %v766, 3
        %v770 = vrot.slane %v767, 3
        %v771 = vsel %vm768, %v769, %v770
        %v790 = vunpack.c.l.b16 %v746
        %v791 = vunpack.c.l.b16 %v747
        %v792 = vunpack.c.l.b16 %v748
        %v793 = vunpack.c.l.b16 %v749
        %v794 = vunpack.c.l.b16 %v750
        %v795 = vunpack.c.l.b16 %v751
        %v796 = vunpack.c.l.b16 %v752
        %v797 = vunpack.c.l.b16 %v753
        %v798 = vunpack.c.l.b16 %v754
        %v799 = vunpack.c.l.b16 %v755
        %v800 = vunpack.c.l.b16 %v756
        %v801 = vunpack.c.l.b16 %v757
        %v802 = vunpack.c.l.b16 %v758
        %v803 = vunpack.c.l.b16 %v759
        %v804 = vunpack.c.l.b16 %v760
        %v805 = vunpack.c.l.b16 %v761
        %v806 = vpack.c.b16 %v791, %v790
        %v807 = vpack.c.b16 %v793, %v792
        %v808 = vpack.c.b16 %v795, %v794
        %v809 = vpack.c.b16 %v797, %v796
        %v810 = vpack.c.b16 %v799, %v798
        %v811 = vpack.c.b16 %v801, %v800
        %v812 = vpack.c.b16 %v803, %v802
        %v813 = vpack.c.b16 %v805, %v804
        %822 = vmatprep.subr.bf16.mxu0 0
        %823 = vmatpush1.bf16.msra.mxu0 %v806
        %824 = vmatprep.subr.bf16.mxu0 0
        %825 = vmatpush1.bf16.msra.mxu0 %v807
        %826 = vmatprep.subr.bf16.mxu0 0
        %827 = vmatpush1.bf16.msra.mxu0 %v808
        %828 = vmatprep.subr.bf16.mxu0 0
        %829 = vmatpush1.bf16.msra.mxu0 %v809
        %830 = vmatprep.subr.bf16.mxu0 0
        %831 = vmatpush1.bf16.msra.mxu0 %v810
        %832 = vmatprep.subr.bf16.mxu0 0
        %833 = vmatpush1.bf16.msra.mxu0 %v811
        %834 = vmatprep.subr.bf16.mxu0 0
        %835 = vmatpush1.bf16.msra.mxu0 %v812
        %836 = vmatprep.subr.bf16.mxu0 0
        %837 = vmatpush1.bf16.msra.mxu0 %v813
        %838 = vmatprep.subr.bf16.mxu0 0
        %839 = vmatpush1.bf16.msra.mxu0 0
        %840 = vmatprep.subr.bf16.mxu0 0
        %841 = vmatpush1.bf16.msra.mxu0 0
        %842 = vmatprep.subr.bf16.mxu0 0
        %843 = vmatpush1.bf16.msra.mxu0 0
        %844 = vmatprep.subr.bf16.mxu0 0
        %845 = vmatpush1.bf16.msra.mxu0 0
        %846 = vmatprep.subr.bf16.mxu0 0
        %847 = vmatpush1.bf16.msra.mxu0 0
        %848 = vmatprep.subr.bf16.mxu0 0
        %849 = vmatpush1.bf16.msra.mxu0 0
        %850 = vmatprep.subr.bf16.mxu0 0
        %851 = vmatpush1.bf16.msra.mxu0 0
        %852 = vmatprep.subr.bf16.mxu0 0
        %853 = vmatpush1.bf16.msra.mxu0 0
        %854 = vmatprep.mubr.bf16.mxu0 0
        %855 = vmatmul.mubr.bf16.gmra.mrb[0].mxu0 %v771
        %v856 = vpop.f32.mrb[0].mxu0
        %v857 = vadd.f32 0.0, %v856
        %v858 = vpop.f32.mrb[0].mxu0
        %v859 = vpop.f32.mrb[0].mxu0
        %v860 = vadd.f32 0.0, %v859
        %v861 = vpop.f32.mrb[0].mxu0
        %862 = vmatprep.mubr.bf16.mxu0 0
        %863 = vmatmul.mubr.bf16.gmra.mrb[0].mxu0 %v770
        %v864 = vpop.f32.mrb[0].mxu0
        %v865 = vadd.f32 0.0, %v864
        %v866 = vpop.f32.mrb[0].mxu0
        %v867 = vpop.f32.mrb[0].mxu0
        %v868 = vpop.f32.mrb[0].mxu0
        %869 = vdwg.mxu0
        %v870 = vadd.f32 %v740, %v857
        %v871 = vadd.f32 %v741, %v860
        %v872 = vadd.f32 %v742, %v865
        %v873 = vld [vmem:[%s185 + $0xc] sm:$0xf]
        %s874 = scalar_lea.vmem [#allocation5], 320
        %v875 = vld [vmem:[%s874] sm:$0xf]
        %v876 = vld [vmem:[%s874 + $0x4] sm:$0xf]
        %v877 = vld [vmem:[%s874 + $0x8] sm:$0xf]
        %v878 = vld [vmem:[%s874 + $0xc] sm:$0xf]
        %v879 = vld [vmem:[%s874 + $0x10] sm:$0xf]
        %v880 = vld [vmem:[%s874 + $0x14] sm:$0xf]
        %v881 = vld [vmem:[%s874 + $0x18] sm:$0xf]
        %v882 = vld [vmem:[%s874 + $0x1c] sm:$0xf]
        %v883 = vld [vmem:[%s874 + $0x20] sm:$0xf]
        %v884 = vld [vmem:[%s874 + $0x24] sm:$0xf]
        %v885 = vld [vmem:[%s874 + $0x28] sm:$0xf]
        %v886 = vld [vmem:[%s874 + $0x2c] sm:$0xf]
        %v887 = vld [vmem:[%s874 + $0x30] sm:$0xf]
        %v888 = vld [vmem:[%s874 + $0x34] sm:$0xf]
        %v889 = vld [vmem:[%s874 + $0x38] sm:$0xf]
        %v890 = vld [vmem:[%s874 + $0x3c] sm:$0xf]
        %v892 = vunpack.c.l.b16 %v873
        %v893 = vpack.c.b16 %v892, %v260
        %vm894 = vsmask.f32 4352
        %v896 = vshrl.u32 %v766, 16
        %v898 = vrot.slane %v896, 3
        %v899 = vshll.u32 %v766, 16
        %v901 = vrot.slane %v899, 4
        %v902 = vor.u32 %v898, %v901
        %v904 = vshrl.u32 %v893, 16
        %v906 = vrot.slane %v904, 3
        %v907 = vshll.u32 %v893, 16
        %v909 = vrot.slane %v907, 4
        %v910 = vor.u32 %v906, %v909
        %v911 = vsel %vm894, %v902, %v910
        %v930 = vunpack.c.l.b16 %v875
        %v931 = vunpack.c.l.b16 %v876
        %v932 = vunpack.c.l.b16 %v877
        %v933 = vunpack.c.l.b16 %v878
        %v934 = vunpack.c.l.b16 %v879
        %v935 = vunpack.c.l.b16 %v880
        %v936 = vunpack.c.l.b16 %v881
        %v937 = vunpack.c.l.b16 %v882
        %v938 = vunpack.c.l.b16 %v883
        %v939 = vunpack.c.l.b16 %v884
        %v940 = vunpack.c.l.b16 %v885
        %v941 = vunpack.c.l.b16 %v886
        %v942 = vunpack.c.l.b16 %v887
        %v943 = vunpack.c.l.b16 %v888
        %v944 = vunpack.c.l.b16 %v889
        %v945 = vunpack.c.l.b16 %v890
        %v946 = vpack.c.b16 %v931, %v930
        %v947 = vpack.c.b16 %v933, %v932
        %v948 = vpack.c.b16 %v935, %v934
        %v949 = vpack.c.b16 %v937, %v936
        %v950 = vpack.c.b16 %v939, %v938
        %v951 = vpack.c.b16 %v941, %v940
        %v952 = vpack.c.b16 %v943, %v942
        %v953 = vpack.c.b16 %v945, %v944
        %962 = vmatprep.subr.bf16.mxu0 0
        %963 = vmatpush1.bf16.msra.mxu0 %v946
        %964 = vmatprep.subr.bf16.mxu0 0
        %965 = vmatpush1.bf16.msra.mxu0 %v947
        %966 = vmatprep.subr.bf16.mxu0 0
        %967 = vmatpush1.bf16.msra.mxu0 %v948
        %968 = vmatprep.subr.bf16.mxu0 0
        %969 = vmatpush1.bf16.msra.mxu0 %v949
        %970 = vmatprep.subr.bf16.mxu0 0
        %971 = vmatpush1.bf16.msra.mxu0 %v950
        %972 = vmatprep.subr.bf16.mxu0 0
        %973 = vmatpush1.bf16.msra.mxu0 %v951
        %974 = vmatprep.subr.bf16.mxu0 0
        %975 = vmatpush1.bf16.msra.mxu0 %v952
        %976 = vmatprep.subr.bf16.mxu0 0
        %977 = vmatpush1.bf16.msra.mxu0 %v953
        %978 = vmatprep.subr.bf16.mxu0 0
        %979 = vmatpush1.bf16.msra.mxu0 0
        %980 = vmatprep.subr.bf16.mxu0 0
        %981 = vmatpush1.bf16.msra.mxu0 0
        %982 = vmatprep.subr.bf16.mxu0 0
        %983 = vmatpush1.bf16.msra.mxu0 0
        %984 = vmatprep.subr.bf16.mxu0 0
        %985 = vmatpush1.bf16.msra.mxu0 0
        %986 = vmatprep.subr.bf16.mxu0 0
        %987 = vmatpush1.bf16.msra.mxu0 0
        %988 = vmatprep.subr.bf16.mxu0 0
        %989 = vmatpush1.bf16.msra.mxu0 0
        %990 = vmatprep.subr.bf16.mxu0 0
        %991 = vmatpush1.bf16.msra.mxu0 0
        %992 = vmatprep.subr.bf16.mxu0 0
        %993 = vmatpush1.bf16.msra.mxu0 0
        %994 = vmatprep.mubr.bf16.mxu0 0
        %995 = vmatmul.mubr.bf16.gmra.mrb[0].mxu0 %v911
        %v996 = vpop.f32.mrb[0].mxu0
        %v997 = vadd.f32 0.0, %v996
        %v998 = vpop.f32.mrb[0].mxu0
        %v999 = vpop.f32.mrb[0].mxu0
        %v1000 = vadd.f32 0.0, %v999
        %v1001 = vpop.f32.mrb[0].mxu0
        %1002 = vmatprep.mubr.bf16.mxu0 0
        %1003 = vmatmul.mubr.bf16.gmra.mrb[0].mxu0 %v910
        %v1004 = vpop.f32.mrb[0].mxu0
        %v1005 = vadd.f32 0.0, %v1004
        %v1006 = vpop.f32.mrb[0].mxu0
        %v1007 = vpop.f32.mrb[0].mxu0
        %v1008 = vpop.f32.mrb[0].mxu0
        %1009 = vdwg.mxu0
        %v1010 = vadd.f32 %v870, %v997
        %v1011 = vadd.f32 %v871, %v1000
        %v1012 = vadd.f32 %v872, %v1005
        %s1013 = scalar_lea.vmem [#allocation5], 384
        %v1014 = vld [vmem:[%s1013] sm:$0xf]
        %v1015 = vld [vmem:[%s1013 + $0x4] sm:$0xf]
        %v1016 = vld [vmem:[%s1013 + $0x8] sm:$0xf]
        %v1017 = vld [vmem:[%s1013 + $0xc] sm:$0xf]
        %v1018 = vld [vmem:[%s1013 + $0x10] sm:$0xf]
        %v1019 = vld [vmem:[%s1013 + $0x14] sm:$0xf]
        %v1020 = vld [vmem:[%s1013 + $0x18] sm:$0xf]
        %v1021 = vld [vmem:[%s1013 + $0x1c] sm:$0xf]
        %v1022 = vld [vmem:[%s1013 + $0x20] sm:$0xf]
        %v1023 = vld [vmem:[%s1013 + $0x24] sm:$0xf]
        %v1024 = vld [vmem:[%s1013 + $0x28] sm:$0xf]
        %v1025 = vld [vmem:[%s1013 + $0x2c] sm:$0xf]
        %v1026 = vld [vmem:[%s1013 + $0x30] sm:$0xf]
        %v1027 = vld [vmem:[%s1013 + $0x34] sm:$0xf]
        %v1028 = vld [vmem:[%s1013 + $0x38] sm:$0xf]
        %v1029 = vld [vmem:[%s1013 + $0x3c] sm:$0xf]
        %v1030 = vpack.c.b16 %v260, %v259
        %v1031 = vpack.c.b16 %v892, %v892
        %v1050 = vunpack.c.l.b16 %v1014
        %v1051 = vunpack.c.l.b16 %v1015
        %v1052 = vunpack.c.l.b16 %v1016
        %v1053 = vunpack.c.l.b16 %v1017
        %v1054 = vunpack.c.l.b16 %v1018
        %v1055 = vunpack.c.l.b16 %v1019
        %v1056 = vunpack.c.l.b16 %v1020
        %v1057 = vunpack.c.l.b16 %v1021
        %v1058 = vunpack.c.l.b16 %v1022
        %v1059 = vunpack.c.l.b16 %v1023
        %v1060 = vunpack.c.l.b16 %v1024
        %v1061 = vunpack.c.l.b16 %v1025
        %v1062 = vunpack.c.l.b16 %v1026
        %v1063 = vunpack.c.l.b16 %v1027
        %v1064 = vunpack.c.l.b16 %v1028
        %v1065 = vunpack.c.l.b16 %v1029
        %v1066 = vpack.c.b16 %v1051, %v1050
        %v1067 = vpack.c.b16 %v1053, %v1052
        %v1068 = vpack.c.b16 %v1055, %v1054
        %v1069 = vpack.c.b16 %v1057, %v1056
        %v1070 = vpack.c.b16 %v1059, %v1058
        %v1071 = vpack.c.b16 %v1061, %v1060
        %v1072 = vpack.c.b16 %v1063, %v1062
        %v1073 = vpack.c.b16 %v1065, %v1064
        %1082 = vmatprep.subr.bf16.mxu0 0
        %1083 = vmatpush1.bf16.msra.mxu0 %v1066
        %1084 = vmatprep.subr.bf16.mxu0 0
        %1085 = vmatpush1.bf16.msra.mxu0 %v1067
        %1086 = vmatprep.subr.bf16.mxu0 0
        %1087 = vmatpush1.bf16.msra.mxu0 %v1068
        %1088 = vmatprep.subr.bf16.mxu0 0
        %1089 = vmatpush1.bf16.msra.mxu0 %v1069
        %1090 = vmatprep.subr.bf16.mxu0 0
        %1091 = vmatpush1.bf16.msra.mxu0 %v1070
        %1092 = vmatprep.subr.bf16.mxu0 0
        %1093 = vmatpush1.bf16.msra.mxu0 %v1071
        %1094 = vmatprep.subr.bf16.mxu0 0
        %1095 = vmatpush1.bf16.msra.mxu0 %v1072
        %1096 = vmatprep.subr.bf16.mxu0 0
        %1097 = vmatpush1.bf16.msra.mxu0 %v1073
        %1098 = vmatprep.subr.bf16.mxu0 0
        %1099 = vmatpush1.bf16.msra.mxu0 0
        %1100 = vmatprep.subr.bf16.mxu0 0
        %1101 = vmatpush1.bf16.msra.mxu0 0
        %1102 = vmatprep.subr.bf16.mxu0 0
        %1103 = vmatpush1.bf16.msra.mxu0 0
        %1104 = vmatprep.subr.bf16.mxu0 0
        %1105 = vmatpush1.bf16.msra.mxu0 0
        %1106 = vmatprep.subr.bf16.mxu0 0
        %1107 = vmatpush1.bf16.msra.mxu0 0
        %1108 = vmatprep.subr.bf16.mxu0 0
        %1109 = vmatpush1.bf16.msra.mxu0 0
        %1110 = vmatprep.subr.bf16.mxu0 0
        %1111 = vmatpush1.bf16.msra.mxu0 0
        %1112 = vmatprep.subr.bf16.mxu0 0
        %1113 = vmatpush1.bf16.msra.mxu0 0
        %1114 = vmatprep.mubr.bf16.mxu0 0
        %1115 = vmatmul.mubr.bf16.gmra.mrb[0].mxu0 %v1030
        %v1116 = vpop.f32.mrb[0].mxu0
        %v1117 = vadd.f32 0.0, %v1116
        %v1118 = vpop.f32.mrb[0].mxu0
        %v1119 = vpop.f32.mrb[0].mxu0
        %v1120 = vadd.f32 0.0, %v1119
        %v1121 = vpop.f32.mrb[0].mxu0
        %1122 = vmatprep.mubr.bf16.mxu0 0
        %1123 = vmatmul.mubr.bf16.gmra.mrb[0].mxu0 %v1031
        %v1124 = vpop.f32.mrb[0].mxu0
        %v1125 = vadd.f32 0.0, %v1124
        %v1126 = vpop.f32.mrb[0].mxu0
        %v1127 = vpop.f32.mrb[0].mxu0
        %v1128 = vpop.f32.mrb[0].mxu0
        %1129 = vdwg.mxu0
        %v1130 = vadd.f32 %v1010, %v1117
        %v1131 = vadd.f32 %v1011, %v1120
        %v1132 = vadd.f32 %v1012, %v1125
        %v1133 = vld [vmem:[%s185 + $0x4] sm:$0xf]
        %v1134 = vld [vmem:[%s185 + $0x8] sm:$0xf]
        %v1135 = vld [vmem:[%s185 + $0xc] sm:$0xf]
        %v1136 = vld [vmem:[%s185 + $0x10] sm:$0x1]
        %s1137 = scalar_lea.vmem [#allocation5], 448
        %v1138 = vld [vmem:[%s1137] sm:$0xf]
        %v1139 = vld [vmem:[%s1137 + $0x4] sm:$0xf]
        %v1140 = vld [vmem:[%s1137 + $0x8] sm:$0xf]
        %v1141 = vld [vmem:[%s1137 + $0xc] sm:$0xf]
        %v1142 = vld [vmem:[%s1137 + $0x10] sm:$0xf]
        %v1143 = vld [vmem:[%s1137 + $0x14] sm:$0xf]
        %v1144 = vld [vmem:[%s1137 + $0x18] sm:$0xf]
        %v1145 = vld [vmem:[%s1137 + $0x1c] sm:$0xf]
        %v1146 = vld [vmem:[%s1137 + $0x20] sm:$0xf]
        %v1147 = vld [vmem:[%s1137 + $0x24] sm:$0xf]
        %v1148 = vld [vmem:[%s1137 + $0x28] sm:$0xf]
        %v1149 = vld [vmem:[%s1137 + $0x2c] sm:$0xf]
        %v1150 = vld [vmem:[%s1137 + $0x30] sm:$0xf]
        %v1151 = vld [vmem:[%s1137 + $0x34] sm:$0xf]
        %v1152 = vld [vmem:[%s1137 + $0x38] sm:$0xf]
        %v1153 = vld [vmem:[%s1137 + $0x3c] sm:$0xf]
        %v1158 = vunpack.c.l.b16 %v1133
        %v1159 = vunpack.c.l.b16 %v1134
        %v1160 = vunpack.c.l.b16 %v1135
        %v1161 = vunpack.c.l.b16 %v1136
        %v1162 = vpack.c.b16 %v1159, %v1158
        %v1163 = vpack.c.b16 %v1161, %v1160
        %v1165 = vshrl.u32 %v1162, 16
        %v1167 = vshll.u32 %v1162, 16
        %v1169 = vrot.slane %v1167, 1
        %v1170 = vor.u32 %v1165, %v1169
        %v1172 = vshll.u32 %v1163, 16
        %v1174 = vrot.slane %v1172, 1
        %v1175 = vsel %vm264, %v1170, %v1174
        %v1176 = vshrl.u32 %v1163, 16
        %v1178 = vor.u32 %v1176, %v1174
        %v1197 = vunpack.c.l.b16 %v1138
        %v1198 = vunpack.c.l.b16 %v1139
        %v1199 = vunpack.c.l.b16 %v1140
        %v1200 = vunpack.c.l.b16 %v1141
        %v1201 = vunpack.c.l.b16 %v1142
        %v1202 = vunpack.c.l.b16 %v1143
        %v1203 = vunpack.c.l.b16 %v1144
        %v1204 = vunpack.c.l.b16 %v1145
        %v1205 = vunpack.c.l.b16 %v1146
        %v1206 = vunpack.c.l.b16 %v1147
        %v1207 = vunpack.c.l.b16 %v1148
        %v1208 = vunpack.c.l.b16 %v1149
        %v1209 = vunpack.c.l.b16 %v1150
        %v1210 = vunpack.c.l.b16 %v1151
        %v1211 = vunpack.c.l.b16 %v1152
        %v1212 = vunpack.c.l.b16 %v1153
        %v1213 = vpack.c.b16 %v1198, %v1197
        %v1214 = vpack.c.b16 %v1200, %v1199
        %v1215 = vpack.c.b16 %v1202, %v1201
        %v1216 = vpack.c.b16 %v1204, %v1203
        %v1217 = vpack.c.b16 %v1206, %v1205
        %v1218 = vpack.c.b16 %v1208, %v1207
        %v1219 = vpack.c.b16 %v1210, %v1209
        %v1220 = vpack.c.b16 %v1212, %v1211
        %1229 = vmatprep.subr.bf16.mxu0 0
        %1230 = vmatpush1.bf16.msra.mxu0 %v1213
        %1231 = vmatprep.subr.bf16.mxu0 0
        %1232 = vmatpush1.bf16.msra.mxu0 %v1214
        %1233 = vmatprep.subr.bf16.mxu0 0
        %1234 = vmatpush1.bf16.msra.mxu0 %v1215
        %1235 = vmatprep.subr.bf16.mxu0 0
        %1236 = vmatpush1.bf16.msra.mxu0 %v1216
        %1237 = vmatprep.subr.bf16.mxu0 0
        %1238 = vmatpush1.bf16.msra.mxu0 %v1217
        %1239 = vmatprep.subr.bf16.mxu0 0
        %1240 = vmatpush1.bf16.msra.mxu0 %v1218
        %1241 = vmatprep.subr.bf16.mxu0 0
        %1242 = vmatpush1.bf16.msra.mxu0 %v1219
        %1243 = vmatprep.subr.bf16.mxu0 0
        %1244 = vmatpush1.bf16.msra.mxu0 %v1220
        %1245 = vmatprep.subr.bf16.mxu0 0
        %1246 = vmatpush1.bf16.msra.mxu0 0
        %1247 = vmatprep.subr.bf16.mxu0 0
        %1248 = vmatpush1.bf16.msra.mxu0 0
        %1249 = vmatprep.subr.bf16.mxu0 0
        %1250 = vmatpush1.bf16.msra.mxu0 0
        %1251 = vmatprep.subr.bf16.mxu0 0
        %1252 = vmatpush1.bf16.msra.mxu0 0
        %1253 = vmatprep.subr.bf16.mxu0 0
        %1254 = vmatpush1.bf16.msra.mxu0 0
        %1255 = vmatprep.subr.bf16.mxu0 0
        %1256 = vmatpush1.bf16.msra.mxu0 0
        %1257 = vmatprep.subr.bf16.mxu0 0
        %1258 = vmatpush1.bf16.msra.mxu0 0
        %1259 = vmatprep.subr.bf16.mxu0 0
        %1260 = vmatpush1.bf16.msra.mxu0 0
        %1261 = vmatprep.mubr.bf16.mxu0 0
        %1262 = vmatmul.mubr.bf16.gmra.mrb[0].mxu0 %v1175
        %v1263 = vpop.f32.mrb[0].mxu0
        %v1264 = vadd.f32 0.0, %v1263
        %v1265 = vpop.f32.mrb[0].mxu0
        %v1266 = vpop.f32.mrb[0].mxu0
        %v1267 = vadd.f32 0.0, %v1266
        %v1268 = vpop.f32.mrb[0].mxu0
        %1269 = vmatprep.mubr.bf16.mxu0 0
        %1270 = vmatmul.mubr.bf16.gmra.mrb[0].mxu0 %v1178
        %v1271 = vpop.f32.mrb[0].mxu0
        %v1272 = vadd.f32 0.0, %v1271
        %v1273 = vpop.f32.mrb[0].mxu0
        %v1274 = vpop.f32.mrb[0].mxu0
        %v1275 = vpop.f32.mrb[0].mxu0
        %1276 = vdwg.mxu0
        %v1277 = vadd.f32 %v1130, %v1264
        %v1278 = vadd.f32 %v1131, %v1267
        %v1279 = vadd.f32 %v1132, %v1272
        %v1280 = vld [vmem:[%s185 + $0x4] sm:$0xc]
        %v1281 = vld [vmem:[%s185 + $0x10] sm:$0x3]
        %s1282 = scalar_lea.vmem [#allocation5], 512
        %v1283 = vld [vmem:[%s1282] sm:$0xf]
        %v1284 = vld [vmem:[%s1282 + $0x4] sm:$0xf]
        %v1285 = vld [vmem:[%s1282 + $0x8] sm:$0xf]
        %v1286 = vld [vmem:[%s1282 + $0xc] sm:$0xf]
        %v1287 = vld [vmem:[%s1282 + $0x10] sm:$0xf]
        %v1288 = vld [vmem:[%s1282 + $0x14] sm:$0xf]
        %v1289 = vld [vmem:[%s1282 + $0x18] sm:$0xf]
        %v1290 = vld [vmem:[%s1282 + $0x1c] sm:$0xf]
        %v1291 = vld [vmem:[%s1282 + $0x20] sm:$0xf]
        %v1292 = vld [vmem:[%s1282 + $0x24] sm:$0xf]
        %v1293 = vld [vmem:[%s1282 + $0x28] sm:$0xf]
        %v1294 = vld [vmem:[%s1282 + $0x2c] sm:$0xf]
        %v1295 = vld [vmem:[%s1282 + $0x30] sm:$0xf]
        %v1296 = vld [vmem:[%s1282 + $0x34] sm:$0xf]
        %v1297 = vld [vmem:[%s1282 + $0x38] sm:$0xf]
        %v1298 = vld [vmem:[%s1282 + $0x3c] sm:$0xf]
        %v1301 = vunpack.c.l.b16 %v1280
        %v1302 = vunpack.c.l.b16 %v1281
        %v1303 = vpack.c.b16 %v1159, %v1301
        %v1304 = vpack.c.b16 %v1302, %v1160
        %vm1305 = vcmask 1045504
        %v1306 = vrot.slane %v1303, 2
        %v1307 = vrot.slane %v1304, 2
        %v1308 = vsel %vm1305, %v1306, %v1307
        %v1327 = vunpack.c.l.b16 %v1283
        %v1328 = vunpack.c.l.b16 %v1284
        %v1329 = vunpack.c.l.b16 %v1285
        %v1330 = vunpack.c.l.b16 %v1286
        %v1331 = vunpack.c.l.b16 %v1287
        %v1332 = vunpack.c.l.b16 %v1288
        %v1333 = vunpack.c.l.b16 %v1289
        %v1334 = vunpack.c.l.b16 %v1290
        %v1335 = vunpack.c.l.b16 %v1291
        %v1336 = vunpack.c.l.b16 %v1292
        %v1337 = vunpack.c.l.b16 %v1293
        %v1338 = vunpack.c.l.b16 %v1294
        %v1339 = vunpack.c.l.b16 %v1295
        %v1340 = vunpack.c.l.b16 %v1296
        %v1341 = vunpack.c.l.b16 %v1297
        %v1342 = vunpack.c.l.b16 %v1298
        %v1343 = vpack.c.b16 %v1328, %v1327
        %v1344 = vpack.c.b16 %v1330, %v1329
        %v1345 = vpack.c.b16 %v1332, %v1331
        %v1346 = vpack.c.b16 %v1334, %v1333
        %v1347 = vpack.c.b16 %v1336, %v1335
        %v1348 = vpack.c.b16 %v1338, %v1337
        %v1349 = vpack.c.b16 %v1340, %v1339
        %v1350 = vpack.c.b16 %v1342, %v1341
        %1359 = vmatprep.subr.bf16.mxu0 0
        %1360 = vmatpush1.bf16.msra.mxu0 %v1343
        %1361 = vmatprep.subr.bf16.mxu0 0
        %1362 = vmatpush1.bf16.msra.mxu0 %v1344
        %1363 = vmatprep.subr.bf16.mxu0 0
        %1364 = vmatpush1.bf16.msra.mxu0 %v1345
        %1365 = vmatprep.subr.bf16.mxu0 0
        %1366 = vmatpush1.bf16.msra.mxu0 %v1346
        %1367 = vmatprep.subr.bf16.mxu0 0
        %1368 = vmatpush1.bf16.msra.mxu0 %v1347
        %1369 = vmatprep.subr.bf16.mxu0 0
        %1370 = vmatpush1.bf16.msra.mxu0 %v1348
        %1371 = vmatprep.subr.bf16.mxu0 0
        %1372 = vmatpush1.bf16.msra.mxu0 %v1349
        %1373 = vmatprep.subr.bf16.mxu0 0
        %1374 = vmatpush1.bf16.msra.mxu0 %v1350
        %1375 = vmatprep.subr.bf16.mxu0 0
        %1376 = vmatpush1.bf16.msra.mxu0 0
        %1377 = vmatprep.subr.bf16.mxu0 0
        %1378 = vmatpush1.bf16.msra.mxu0 0
        %1379 = vmatprep.subr.bf16.mxu0 0
        %1380 = vmatpush1.bf16.msra.mxu0 0
        %1381 = vmatprep.subr.bf16.mxu0 0
        %1382 = vmatpush1.bf16.msra.mxu0 0
        %1383 = vmatprep.subr.bf16.mxu0 0
        %1384 = vmatpush1.bf16.msra.mxu0 0
        %1385 = vmatprep.subr.bf16.mxu0 0
        %1386 = vmatpush1.bf16.msra.mxu0 0
        %1387 = vmatprep.subr.bf16.mxu0 0
        %1388 = vmatpush1.bf16.msra.mxu0 0
        %1389 = vmatprep.subr.bf16.mxu0 0
        %1390 = vmatpush1.bf16.msra.mxu0 0
        %1391 = vmatprep.mubr.bf16.mxu0 0
        %1392 = vmatmul.mubr.bf16.gmra.mrb[0].mxu0 %v1308
        %v1393 = vpop.f32.mrb[0].mxu0
        %v1394 = vadd.f32 0.0, %v1393
        %v1395 = vpop.f32.mrb[0].mxu0
        %v1396 = vpop.f32.mrb[0].mxu0
        %v1397 = vadd.f32 0.0, %v1396
        %v1398 = vpop.f32.mrb[0].mxu0
        %1399 = vmatprep.mubr.bf16.mxu0 0
        %1400 = vmatmul.mubr.bf16.gmra.mrb[0].mxu0 %v1307
        %v1401 = vpop.f32.mrb[0].mxu0
        %v1402 = vadd.f32 0.0, %v1401
        %v1403 = vpop.f32.mrb[0].mxu0
        %v1404 = vpop.f32.mrb[0].mxu0
        %v1405 = vpop.f32.mrb[0].mxu0
        %1406 = vdwg.mxu0
        %v1407 = vadd.f32 %v1277, %v1394
        %v1408 = vadd.f32 %v1278, %v1397
        %v1409 = vadd.f32 %v1279, %v1402
        %v1410 = vld [vmem:[%s185 + $0x10] sm:$0x7]
        %s1411 = scalar_lea.vmem [#allocation5], 576
        %v1412 = vld [vmem:[%s1411] sm:$0xf]
        %v1413 = vld [vmem:[%s1411 + $0x4] sm:$0xf]
        %v1414 = vld [vmem:[%s1411 + $0x8] sm:$0xf]
        %v1415 = vld [vmem:[%s1411 + $0xc] sm:$0xf]
        %v1416 = vld [vmem:[%s1411 + $0x10] sm:$0xf]
        %v1417 = vld [vmem:[%s1411 + $0x14] sm:$0xf]
        %v1418 = vld [vmem:[%s1411 + $0x18] sm:$0xf]
        %v1419 = vld [vmem:[%s1411 + $0x1c] sm:$0xf]
        %v1420 = vld [vmem:[%s1411 + $0x20] sm:$0xf]
        %v1421 = vld [vmem:[%s1411 + $0x24] sm:$0xf]
        %v1422 = vld [vmem:[%s1411 + $0x28] sm:$0xf]
        %v1423 = vld [vmem:[%s1411 + $0x2c] sm:$0xf]
        %v1424 = vld [vmem:[%s1411 + $0x30] sm:$0xf]
        %v1425 = vld [vmem:[%s1411 + $0x34] sm:$0xf]
        %v1426 = vld [vmem:[%s1411 + $0x38] sm:$0xf]
        %v1427 = vld [vmem:[%s1411 + $0x3c] sm:$0xf]
        %v1429 = vunpack.c.l.b16 %v1410
        %v1430 = vpack.c.b16 %v1429, %v1160
        %vm1431 = vsmask.f32 5376
        %v1433 = vshrl.u32 %v1303, 16
        %v1435 = vrot.slane %v1433, 2
        %v1436 = vshll.u32 %v1303, 16
        %v1438 = vrot.slane %v1436, 3
        %v1439 = vor.u32 %v1435, %v1438
        %v1441 = vshrl.u32 %v1430, 16
        %v1443 = vrot.slane %v1441, 2
        %v1444 = vshll.u32 %v1430, 16
        %v1446 = vrot.slane %v1444, 3
        %v1447 = vor.u32 %v1443, %v1446
        %v1448 = vsel %vm1431, %v1439, %v1447
        %v1467 = vunpack.c.l.b16 %v1412
        %v1468 = vunpack.c.l.b16 %v1413
        %v1469 = vunpack.c.l.b16 %v1414
        %v1470 = vunpack.c.l.b16 %v1415
        %v1471 = vunpack.c.l.b16 %v1416
        %v1472 = vunpack.c.l.b16 %v1417
        %v1473 = vunpack.c.l.b16 %v1418
        %v1474 = vunpack.c.l.b16 %v1419
        %v1475 = vunpack.c.l.b16 %v1420
        %v1476 = vunpack.c.l.b16 %v1421
        %v1477 = vunpack.c.l.b16 %v1422
        %v1478 = vunpack.c.l.b16 %v1423
        %v1479 = vunpack.c.l.b16 %v1424
        %v1480 = vunpack.c.l.b16 %v1425
        %v1481 = vunpack.c.l.b16 %v1426
        %v1482 = vunpack.c.l.b16 %v1427
        %v1483 = vpack.c.b16 %v1468, %v1467
        %v1484 = vpack.c.b16 %v1470, %v1469
        %v1485 = vpack.c.b16 %v1472, %v1471
        %v1486 = vpack.c.b16 %v1474, %v1473
        %v1487 = vpack.c.b16 %v1476, %v1475
        %v1488 = vpack.c.b16 %v1478, %v1477
        %v1489 = vpack.c.b16 %v1480, %v1479
        %v1490 = vpack.c.b16 %v1482, %v1481
        %1499 = vmatprep.subr.bf16.mxu0 0
        %1500 = vmatpush1.bf16.msra.mxu0 %v1483
        %1501 = vmatprep.subr.bf16.mxu0 0
        %1502 = vmatpush1.bf16.msra.mxu0 %v1484
        %1503 = vmatprep.subr.bf16.mxu0 0
        %1504 = vmatpush1.bf16.msra.mxu0 %v1485
        %1505 = vmatprep.subr.bf16.mxu0 0
        %1506 = vmatpush1.bf16.msra.mxu0 %v1486
        %1507 = vmatprep.subr.bf16.mxu0 0
        %1508 = vmatpush1.bf16.msra.mxu0 %v1487
        %1509 = vmatprep.subr.bf16.mxu0 0
        %1510 = vmatpush1.bf16.msra.mxu0 %v1488
        %1511 = vmatprep.subr.bf16.mxu0 0
        %1512 = vmatpush1.bf16.msra.mxu0 %v1489
        %1513 = vmatprep.subr.bf16.mxu0 0
        %1514 = vmatpush1.bf16.msra.mxu0 %v1490
        %1515 = vmatprep.subr.bf16.mxu0 0
        %1516 = vmatpush1.bf16.msra.mxu0 0
        %1517 = vmatprep.subr.bf16.mxu0 0
        %1518 = vmatpush1.bf16.msra.mxu0 0
        %1519 = vmatprep.subr.bf16.mxu0 0
        %1520 = vmatpush1.bf16.msra.mxu0 0
        %1521 = vmatprep.subr.bf16.mxu0 0
        %1522 = vmatpush1.bf16.msra.mxu0 0
        %1523 = vmatprep.subr.bf16.mxu0 0
        %1524 = vmatpush1.bf16.msra.mxu0 0
        %1525 = vmatprep.subr.bf16.mxu0 0
        %1526 = vmatpush1.bf16.msra.mxu0 0
        %1527 = vmatprep.subr.bf16.mxu0 0
        %1528 = vmatpush1.bf16.msra.mxu0 0
        %1529 = vmatprep.subr.bf16.mxu0 0
        %1530 = vmatpush1.bf16.msra.mxu0 0
        %1531 = vmatprep.mubr.bf16.mxu0 0
        %1532 = vmatmul.mubr.bf16.gmra.mrb[0].mxu0 %v1448
        %v1533 = vpop.f32.mrb[0].mxu0
        %v1534 = vadd.f32 0.0, %v1533
        %v1535 = vpop.f32.mrb[0].mxu0
        %v1536 = vpop.f32.mrb[0].mxu0
        %v1537 = vadd.f32 0.0, %v1536
        %v1538 = vpop.f32.mrb[0].mxu0
        %1539 = vmatprep.mubr.bf16.mxu0 0
        %1540 = vmatmul.mubr.bf16.gmra.mrb[0].mxu0 %v1447
        %v1541 = vpop.f32.mrb[0].mxu0
        %v1542 = vadd.f32 0.0, %v1541
        %v1543 = vpop.f32.mrb[0].mxu0
        %v1544 = vpop.f32.mrb[0].mxu0
        %v1545 = vpop.f32.mrb[0].mxu0
        %1546 = vdwg.mxu0
        %v1547 = vadd.f32 %v1407, %v1534
        %v1548 = vadd.f32 %v1408, %v1537
        %v1549 = vadd.f32 %v1409, %v1542
        %v1550 = vld [vmem:[%s185 + $0x4] sm:$0x8]
        %s1551 = scalar_lea.vmem [#allocation5], 640
        %v1552 = vld [vmem:[%s1551] sm:$0xf]
        %v1553 = vld [vmem:[%s1551 + $0x4] sm:$0xf]
        %v1554 = vld [vmem:[%s1551 + $0x8] sm:$0xf]
        %v1555 = vld [vmem:[%s1551 + $0xc] sm:$0xf]
        %v1556 = vld [vmem:[%s1551 + $0x10] sm:$0xf]
        %v1557 = vld [vmem:[%s1551 + $0x14] sm:$0xf]
        %v1558 = vld [vmem:[%s1551 + $0x18] sm:$0xf]
        %v1559 = vld [vmem:[%s1551 + $0x1c] sm:$0xf]
        %v1560 = vld [vmem:[%s1551 + $0x20] sm:$0xf]
        %v1561 = vld [vmem:[%s1551 + $0x24] sm:$0xf]
        %v1562 = vld [vmem:[%s1551 + $0x28] sm:$0xf]
        %v1563 = vld [vmem:[%s1551 + $0x2c] sm:$0xf]
        %v1564 = vld [vmem:[%s1551 + $0x30] sm:$0xf]
        %v1565 = vld [vmem:[%s1551 + $0x34] sm:$0xf]
        %v1566 = vld [vmem:[%s1551 + $0x38] sm:$0xf]
        %v1567 = vld [vmem:[%s1551 + $0x3c] sm:$0xf]
        %v1569 = vunpack.c.l.b16 %v1550
        %v1570 = vpack.c.b16 %v1159, %v1569
        %v1571 = vrot.slane %v1570, 3
        %v1572 = vrot.slane %v1430, 3
        %v1573 = vsel %vm768, %v1571, %v1572
        %v1592 = vunpack.c.l.b16 %v1552
        %v1593 = vunpack.c.l.b16 %v1553
        %v1594 = vunpack.c.l.b16 %v1554
        %v1595 = vunpack.c.l.b16 %v1555
        %v1596 = vunpack.c.l.b16 %v1556
        %v1597 = vunpack.c.l.b16 %v1557
        %v1598 = vunpack.c.l.b16 %v1558
        %v1599 = vunpack.c.l.b16 %v1559
        %v1600 = vunpack.c.l.b16 %v1560
        %v1601 = vunpack.c.l.b16 %v1561
        %v1602 = vunpack.c.l.b16 %v1562
        %v1603 = vunpack.c.l.b16 %v1563
        %v1604 = vunpack.c.l.b16 %v1564
        %v1605 = vunpack.c.l.b16 %v1565
        %v1606 = vunpack.c.l.b16 %v1566
        %v1607 = vunpack.c.l.b16 %v1567
        %v1608 = vpack.c.b16 %v1593, %v1592
        %v1609 = vpack.c.b16 %v1595, %v1594
        %v1610 = vpack.c.b16 %v1597, %v1596
        %v1611 = vpack.c.b16 %v1599, %v1598
        %v1612 = vpack.c.b16 %v1601, %v1600
        %v1613 = vpack.c.b16 %v1603, %v1602
        %v1614 = vpack.c.b16 %v1605, %v1604
        %v1615 = vpack.c.b16 %v1607, %v1606
        %1624 = vmatprep.subr.bf16.mxu0 0
        %1625 = vmatpush1.bf16.msra.mxu0 %v1608
        %1626 = vmatprep.subr.bf16.mxu0 0
        %1627 = vmatpush1.bf16.msra.mxu0 %v1609
        %1628 = vmatprep.subr.bf16.mxu0 0
        %1629 = vmatpush1.bf16.msra.mxu0 %v1610
        %1630 = vmatprep.subr.bf16.mxu0 0
        %1631 = vmatpush1.bf16.msra.mxu0 %v1611
        %1632 = vmatprep.subr.bf16.mxu0 0
        %1633 = vmatpush1.bf16.msra.mxu0 %v1612
        %1634 = vmatprep.subr.bf16.mxu0 0
        %1635 = vmatpush1.bf16.msra.mxu0 %v1613
        %1636 = vmatprep.subr.bf16.mxu0 0
        %1637 = vmatpush1.bf16.msra.mxu0 %v1614
        %1638 = vmatprep.subr.bf16.mxu0 0
        %1639 = vmatpush1.bf16.msra.mxu0 %v1615
        %1640 = vmatprep.subr.bf16.mxu0 0
        %1641 = vmatpush1.bf16.msra.mxu0 0
        %1642 = vmatprep.subr.bf16.mxu0 0
        %1643 = vmatpush1.bf16.msra.mxu0 0
        %1644 = vmatprep.subr.bf16.mxu0 0
        %1645 = vmatpush1.bf16.msra.mxu0 0
        %1646 = vmatprep.subr.bf16.mxu0 0
        %1647 = vmatpush1.bf16.msra.mxu0 0
        %1648 = vmatprep.subr.bf16.mxu0 0
        %1649 = vmatpush1.bf16.msra.mxu0 0
        %1650 = vmatprep.subr.bf16.mxu0 0
        %1651 = vmatpush1.bf16.msra.mxu0 0
        %1652 = vmatprep.subr.bf16.mxu0 0
        %1653 = vmatpush1.bf16.msra.mxu0 0
        %1654 = vmatprep.subr.bf16.mxu0 0
        %1655 = vmatpush1.bf16.msra.mxu0 0
        %1656 = vmatprep.mubr.bf16.mxu0 0
        %1657 = vmatmul.mubr.bf16.gmra.mrb[0].mxu0 %v1573
        %v1658 = vpop.f32.mrb[0].mxu0
        %v1659 = vadd.f32 0.0, %v1658
        %v1660 = vpop.f32.mrb[0].mxu0
        %v1661 = vpop.f32.mrb[0].mxu0
        %v1662 = vadd.f32 0.0, %v1661
        %v1663 = vpop.f32.mrb[0].mxu0
        %1664 = vmatprep.mubr.bf16.mxu0 0
        %1665 = vmatmul.mubr.bf16.gmra.mrb[0].mxu0 %v1572
        %v1666 = vpop.f32.mrb[0].mxu0
        %v1667 = vadd.f32 0.0, %v1666
        %v1668 = vpop.f32.mrb[0].mxu0
        %v1669 = vpop.f32.mrb[0].mxu0
        %v1670 = vpop.f32.mrb[0].mxu0
        %1671 = vdwg.mxu0
        %v1672 = vadd.f32 %v1547, %v1659
        %v1673 = vadd.f32 %v1548, %v1662
        %v1674 = vadd.f32 %v1549, %v1667
        %v1675 = vld [vmem:[%s185 + $0x10] sm:$0xf]
        %s1676 = scalar_lea.vmem [#allocation5], 704
        %v1677 = vld [vmem:[%s1676] sm:$0xf]
        %v1678 = vld [vmem:[%s1676 + $0x4] sm:$0xf]
        %v1679 = vld [vmem:[%s1676 + $0x8] sm:$0xf]
        %v1680 = vld [vmem:[%s1676 + $0xc] sm:$0xf]
        %v1681 = vld [vmem:[%s1676 + $0x10] sm:$0xf]
        %v1682 = vld [vmem:[%s1676 + $0x14] sm:$0xf]
        %v1683 = vld [vmem:[%s1676 + $0x18] sm:$0xf]
        %v1684 = vld [vmem:[%s1676 + $0x1c] sm:$0xf]
        %v1685 = vld [vmem:[%s1676 + $0x20] sm:$0xf]
        %v1686 = vld [vmem:[%s1676 + $0x24] sm:$0xf]
        %v1687 = vld [vmem:[%s1676 + $0x28] sm:$0xf]
        %v1688 = vld [vmem:[%s1676 + $0x2c] sm:$0xf]
        %v1689 = vld [vmem:[%s1676 + $0x30] sm:$0xf]
        %v1690 = vld [vmem:[%s1676 + $0x34] sm:$0xf]
        %v1691 = vld [vmem:[%s1676 + $0x38] sm:$0xf]
        %v1692 = vld [vmem:[%s1676 + $0x3c] sm:$0xf]
        %v1694 = vunpack.c.l.b16 %v1675
        %v1695 = vpack.c.b16 %v1694, %v1160
        %v1697 = vshrl.u32 %v1570, 16
        %v1699 = vrot.slane %v1697, 3
        %v1700 = vshll.u32 %v1570, 16
        %v1702 = vrot.slane %v1700, 4
        %v1703 = vor.u32 %v1699, %v1702
        %v1705 = vshrl.u32 %v1695, 16
        %v1707 = vrot.slane %v1705, 3
        %v1708 = vshll.u32 %v1695, 16
        %v1710 = vrot.slane %v1708, 4
        %v1711 = vor.u32 %v1707, %v1710
        %v1712 = vsel %vm894, %v1703, %v1711
        %v1731 = vunpack.c.l.b16 %v1677
        %v1732 = vunpack.c.l.b16 %v1678
        %v1733 = vunpack.c.l.b16 %v1679
        %v1734 = vunpack.c.l.b16 %v1680
        %v1735 = vunpack.c.l.b16 %v1681
        %v1736 = vunpack.c.l.b16 %v1682
        %v1737 = vunpack.c.l.b16 %v1683
        %v1738 = vunpack.c.l.b16 %v1684
        %v1739 = vunpack.c.l.b16 %v1685
        %v1740 = vunpack.c.l.b16 %v1686
        %v1741 = vunpack.c.l.b16 %v1687
        %v1742 = vunpack.c.l.b16 %v1688
        %v1743 = vunpack.c.l.b16 %v1689
        %v1744 = vunpack.c.l.b16 %v1690
        %v1745 = vunpack.c.l.b16 %v1691
        %v1746 = vunpack.c.l.b16 %v1692
        %v1747 = vpack.c.b16 %v1732, %v1731
        %v1748 = vpack.c.b16 %v1734, %v1733
        %v1749 = vpack.c.b16 %v1736, %v1735
        %v1750 = vpack.c.b16 %v1738, %v1737
        %v1751 = vpack.c.b16 %v1740, %v1739
        %v1752 = vpack.c.b16 %v1742, %v1741
        %v1753 = vpack.c.b16 %v1744, %v1743
        %v1754 = vpack.c.b16 %v1746, %v1745
        %1763 = vmatprep.subr.bf16.mxu0 0
        %1764 = vmatpush1.bf16.msra.mxu0 %v1747
        %1765 = vmatprep.subr.bf16.mxu0 0
        %1766 = vmatpush1.bf16.msra.mxu0 %v1748
        %1767 = vmatprep.subr.bf16.mxu0 0
        %1768 = vmatpush1.bf16.msra.mxu0 %v1749
        %1769 = vmatprep.subr.bf16.mxu0 0
        %1770 = vmatpush1.bf16.msra.mxu0 %v1750
        %1771 = vmatprep.subr.bf16.mxu0 0
        %1772 = vmatpush1.bf16.msra.mxu0 %v1751
        %1773 = vmatprep.subr.bf16.mxu0 0
        %1774 = vmatpush1.bf16.msra.mxu0 %v1752
        %1775 = vmatprep.subr.bf16.mxu0 0
        %1776 = vmatpush1.bf16.msra.mxu0 %v1753
        %1777 = vmatprep.subr.bf16.mxu0 0
        %1778 = vmatpush1.bf16.msra.mxu0 %v1754
        %1779 = vmatprep.subr.bf16.mxu0 0
        %1780 = vmatpush1.bf16.msra.mxu0 0
        %1781 = vmatprep.subr.bf16.mxu0 0
        %1782 = vmatpush1.bf16.msra.mxu0 0
        %1783 = vmatprep.subr.bf16.mxu0 0
        %1784 = vmatpush1.bf16.msra.mxu0 0
        %1785 = vmatprep.subr.bf16.mxu0 0
        %1786 = vmatpush1.bf16.msra.mxu0 0
        %1787 = vmatprep.subr.bf16.mxu0 0
        %1788 = vmatpush1.bf16.msra.mxu0 0
        %1789 = vmatprep.subr.bf16.mxu0 0
        %1790 = vmatpush1.bf16.msra.mxu0 0
        %1791 = vmatprep.subr.bf16.mxu0 0
        %1792 = vmatpush1.bf16.msra.mxu0 0
        %1793 = vmatprep.subr.bf16.mxu0 0
        %1794 = vmatpush1.bf16.msra.mxu0 0
        %1795 = vmatprep.mubr.bf16.mxu0 0
        %1796 = vmatmul.mubr.bf16.gmra.mrb[0].mxu0 %v1712
        %v1797 = vpop.f32.mrb[0].mxu0
        %v1798 = vadd.f32 0.0, %v1797
        %v1799 = vpop.f32.mrb[0].mxu0
        %v1800 = vpop.f32.mrb[0].mxu0
        %v1801 = vadd.f32 0.0, %v1800
        %v1802 = vpop.f32.mrb[0].mxu0
        %1803 = vmatprep.mubr.bf16.mxu0 0
        %1804 = vmatmul.mubr.bf16.gmra.mrb[0].mxu0 %v1711
        %v1805 = vpop.f32.mrb[0].mxu0
        %v1806 = vadd.f32 0.0, %v1805
        %v1807 = vpop.f32.mrb[0].mxu0
        %v1808 = vpop.f32.mrb[0].mxu0
        %v1809 = vpop.f32.mrb[0].mxu0
        %1810 = vdwg.mxu0
        %v1811 = vadd.f32 %v1672, %v1798
        %v1812 = vadd.f32 %v1673, %v1801
        %v1813 = vadd.f32 %v1674, %v1806
        %v1814 = vld [vmem:[%s185 + $0x8] sm:$0xe]
        %v1815 = vld [vmem:[%s185 + $0xc] sm:$0xf]
        %v1816 = vld [vmem:[%s185 + $0x10] sm:$0xf]
        %v1817 = vld [vmem:[%s185 + $0x14] sm:$0x1]
        %s1818 = scalar_lea.vmem [#allocation5], 768
        %v1819 = vld [vmem:[%s1818] sm:$0xf]
        %v1820 = vld [vmem:[%s1818 + $0x4] sm:$0xf]
        %v1821 = vld [vmem:[%s1818 + $0x8] sm:$0xf]
        %v1822 = vld [vmem:[%s1818 + $0xc] sm:$0xf]
        %v1823 = vld [vmem:[%s1818 + $0x10] sm:$0xf]
        %v1824 = vld [vmem:[%s1818 + $0x14] sm:$0xf]
        %v1825 = vld [vmem:[%s1818 + $0x18] sm:$0xf]
        %v1826 = vld [vmem:[%s1818 + $0x1c] sm:$0xf]
        %v1827 = vld [vmem:[%s1818 + $0x20] sm:$0xf]
        %v1828 = vld [vmem:[%s1818 + $0x24] sm:$0xf]
        %v1829 = vld [vmem:[%s1818 + $0x28] sm:$0xf]
        %v1830 = vld [vmem:[%s1818 + $0x2c] sm:$0xf]
        %v1831 = vld [vmem:[%s1818 + $0x30] sm:$0xf]
        %v1832 = vld [vmem:[%s1818 + $0x34] sm:$0xf]
        %v1833 = vld [vmem:[%s1818 + $0x38] sm:$0xf]
        %v1834 = vld [vmem:[%s1818 + $0x3c] sm:$0xf]
        %v1839 = vunpack.c.l.b16 %v1814
        %v1840 = vunpack.c.l.b16 %v1815
        %v1841 = vunpack.c.l.b16 %v1816
        %v1842 = vunpack.c.l.b16 %v1817
        %v1843 = vpack.c.b16 %v1840, %v1839
        %v1844 = vpack.c.b16 %v1842, %v1841
        %v1845 = vrot.slane %v1843, 1
        %v1846 = vrot.slane %v1844, 1
        %v1847 = vsel %vm498, %v1845, %v1846
        %v1866 = vunpack.c.l.b16 %v1819
        %v1867 = vunpack.c.l.b16 %v1820
        %v1868 = vunpack.c.l.b16 %v1821
        %v1869 = vunpack.c.l.b16 %v1822
        %v1870 = vunpack.c.l.b16 %v1823
        %v1871 = vunpack.c.l.b16 %v1824
        %v1872 = vunpack.c.l.b16 %v1825
        %v1873 = vunpack.c.l.b16 %v1826
        %v1874 = vunpack.c.l.b16 %v1827
        %v1875 = vunpack.c.l.b16 %v1828
        %v1876 = vunpack.c.l.b16 %v1829
        %v1877 = vunpack.c.l.b16 %v1830
        %v1878 = vunpack.c.l.b16 %v1831
        %v1879 = vunpack.c.l.b16 %v1832
        %v1880 = vunpack.c.l.b16 %v1833
        %v1881 = vunpack.c.l.b16 %v1834
        %v1882 = vpack.c.b16 %v1867, %v1866
        %v1883 = vpack.c.b16 %v1869, %v1868
        %v1884 = vpack.c.b16 %v1871, %v1870
        %v1885 = vpack.c.b16 %v1873, %v1872
        %v1886 = vpack.c.b16 %v1875, %v1874
        %v1887 = vpack.c.b16 %v1877, %v1876
        %v1888 = vpack.c.b16 %v1879, %v1878
        %v1889 = vpack.c.b16 %v1881, %v1880
        %1898 = vmatprep.subr.bf16.mxu0 0
        %1899 = vmatpush1.bf16.msra.mxu0 %v1882
        %1900 = vmatprep.subr.bf16.mxu0 0
        %1901 = vmatpush1.bf16.msra.mxu0 %v1883
        %1902 = vmatprep.subr.bf16.mxu0 0
        %1903 = vmatpush1.bf16.msra.mxu0 %v1884
        %1904 = vmatprep.subr.bf16.mxu0 0
        %1905 = vmatpush1.bf16.msra.mxu0 %v1885
        %1906 = vmatprep.subr.bf16.mxu0 0
        %1907 = vmatpush1.bf16.msra.mxu0 %v1886
        %1908 = vmatprep.subr.bf16.mxu0 0
        %1909 = vmatpush1.bf16.msra.mxu0 %v1887
        %1910 = vmatprep.subr.bf16.mxu0 0
        %1911 = vmatpush1.bf16.msra.mxu0 %v1888
        %1912 = vmatprep.subr.bf16.mxu0 0
        %1913 = vmatpush1.bf16.msra.mxu0 %v1889
        %1914 = vmatprep.subr.bf16.mxu0 0
        %1915 = vmatpush1.bf16.msra.mxu0 0
        %1916 = vmatprep.subr.bf16.mxu0 0
        %1917 = vmatpush1.bf16.msra.mxu0 0
        %1918 = vmatprep.subr.bf16.mxu0 0
        %1919 = vmatpush1.bf16.msra.mxu0 0
        %1920 = vmatprep.subr.bf16.mxu0 0
        %1921 = vmatpush1.bf16.msra.mxu0 0
        %1922 = vmatprep.subr.bf16.mxu0 0
        %1923 = vmatpush1.bf16.msra.mxu0 0
        %1924 = vmatprep.subr.bf16.mxu0 0
        %1925 = vmatpush1.bf16.msra.mxu0 0
        %1926 = vmatprep.subr.bf16.mxu0 0
        %1927 = vmatpush1.bf16.msra.mxu0 0
        %1928 = vmatprep.subr.bf16.mxu0 0
        %1929 = vmatpush1.bf16.msra.mxu0 0
        %1930 = vmatprep.mubr.bf16.mxu0 0
        %1931 = vmatmul.mubr.bf16.gmra.mrb[0].mxu0 %v1847
        %v1932 = vpop.f32.mrb[0].mxu0
        %v1933 = vadd.f32 0.0, %v1932
        %v1934 = vpop.f32.mrb[0].mxu0
        %v1935 = vpop.f32.mrb[0].mxu0
        %v1936 = vadd.f32 0.0, %v1935
        %v1937 = vpop.f32.mrb[0].mxu0
        %1938 = vmatprep.mubr.bf16.mxu0 0
        %1939 = vmatmul.mubr.bf16.gmra.mrb[0].mxu0 %v1846
        %v1940 = vpop.f32.mrb[0].mxu0
        %v1941 = vadd.f32 0.0, %v1940
        %v1942 = vpop.f32.mrb[0].mxu0
        %v1943 = vpop.f32.mrb[0].mxu0
        %v1944 = vpop.f32.mrb[0].mxu0
        %1945 = vdwg.mxu0
        %v1946 = vadd.f32 %v1811, %v1933
        %v1947 = vadd.f32 %v1812, %v1936
        %v1948 = vadd.f32 %v1813, %v1941
        %v1949 = vld [vmem:[%s185 + $0x14] sm:$0x3]
        %s1950 = scalar_lea.vmem [#allocation5], 832
        %v1951 = vld [vmem:[%s1950] sm:$0xf]
        %v1952 = vld [vmem:[%s1950 + $0x4] sm:$0xf]
        %v1953 = vld [vmem:[%s1950 + $0x8] sm:$0xf]
        %v1954 = vld [vmem:[%s1950 + $0xc] sm:$0xf]
        %v1955 = vld [vmem:[%s1950 + $0x10] sm:$0xf]
        %v1956 = vld [vmem:[%s1950 + $0x14] sm:$0xf]
        %v1957 = vld [vmem:[%s1950 + $0x18] sm:$0xf]
        %v1958 = vld [vmem:[%s1950 + $0x1c] sm:$0xf]
        %v1959 = vld [vmem:[%s1950 + $0x20] sm:$0xf]
        %v1960 = vld [vmem:[%s1950 + $0x24] sm:$0xf]
        %v1961 = vld [vmem:[%s1950 + $0x28] sm:$0xf]
        %v1962 = vld [vmem:[%s1950 + $0x2c] sm:$0xf]
        %v1963 = vld [vmem:[%s1950 + $0x30] sm:$0xf]
        %v1964 = vld [vmem:[%s1950 + $0x34] sm:$0xf]
        %v1965 = vld [vmem:[%s1950 + $0x38] sm:$0xf]
        %v1966 = vld [vmem:[%s1950 + $0x3c] sm:$0xf]
        %v1968 = vunpack.c.l.b16 %v1949
        %v1969 = vpack.c.b16 %v1968, %v1841
        %v1971 = vshrl.u32 %v1843, 16
        %v1973 = vrot.slane %v1971, 1
        %v1974 = vshll.u32 %v1843, 16
        %v1976 = vrot.slane %v1974, 2
        %v1977 = vor.u32 %v1973, %v1976
        %v1979 = vshrl.u32 %v1969, 16
        %v1981 = vrot.slane %v1979, 1
        %v1982 = vshll.u32 %v1969, 16
        %v1984 = vrot.slane %v1982, 2
        %v1985 = vor.u32 %v1981, %v1984
        %v1986 = vsel %vm624, %v1977, %v1985
        %v2005 = vunpack.c.l.b16 %v1951
        %v2006 = vunpack.c.l.b16 %v1952
        %v2007 = vunpack.c.l.b16 %v1953
        %v2008 = vunpack.c.l.b16 %v1954
        %v2009 = vunpack.c.l.b16 %v1955
        %v2010 = vunpack.c.l.b16 %v1956
        %v2011 = vunpack.c.l.b16 %v1957
        %v2012 = vunpack.c.l.b16 %v1958
        %v2013 = vunpack.c.l.b16 %v1959
        %v2014 = vunpack.c.l.b16 %v1960
        %v2015 = vunpack.c.l.b16 %v1961
        %v2016 = vunpack.c.l.b16 %v1962
        %v2017 = vunpack.c.l.b16 %v1963
        %v2018 = vunpack.c.l.b16 %v1964
        %v2019 = vunpack.c.l.b16 %v1965
        %v2020 = vunpack.c.l.b16 %v1966
        %v2021 = vpack.c.b16 %v2006, %v2005
        %v2022 = vpack.c.b16 %v2008, %v2007
        %v2023 = vpack.c.b16 %v2010, %v2009
        %v2024 = vpack.c.b16 %v2012, %v2011
        %v2025 = vpack.c.b16 %v2014, %v2013
        %v2026 = vpack.c.b16 %v2016, %v2015
        %v2027 = vpack.c.b16 %v2018, %v2017
        %v2028 = vpack.c.b16 %v2020, %v2019
        %2037 = vmatprep.subr.bf16.mxu0 0
        %2038 = vmatpush1.bf16.msra.mxu0 %v2021
        %2039 = vmatprep.subr.bf16.mxu0 0
        %2040 = vmatpush1.bf16.msra.mxu0 %v2022
        %2041 = vmatprep.subr.bf16.mxu0 0
        %2042 = vmatpush1.bf16.msra.mxu0 %v2023
        %2043 = vmatprep.subr.bf16.mxu0 0
        %2044 = vmatpush1.bf16.msra.mxu0 %v2024
        %2045 = vmatprep.subr.bf16.mxu0 0
        %2046 = vmatpush1.bf16.msra.mxu0 %v2025
        %2047 = vmatprep.subr.bf16.mxu0 0
        %2048 = vmatpush1.bf16.msra.mxu0 %v2026
        %2049 = vmatprep.subr.bf16.mxu0 0
        %2050 = vmatpush1.bf16.msra.mxu0 %v2027
        %2051 = vmatprep.subr.bf16.mxu0 0
        %2052 = vmatpush1.bf16.msra.mxu0 %v2028
        %2053 = vmatprep.subr.bf16.mxu0 0
        %2054 = vmatpush1.bf16.msra.mxu0 0
        %2055 = vmatprep.subr.bf16.mxu0 0
        %2056 = vmatpush1.bf16.msra.mxu0 0
        %2057 = vmatprep.subr.bf16.mxu0 0
        %2058 = vmatpush1.bf16.msra.mxu0 0
        %2059 = vmatprep.subr.bf16.mxu0 0
        %2060 = vmatpush1.bf16.msra.mxu0 0
        %2061 = vmatprep.subr.bf16.mxu0 0
        %2062 = vmatpush1.bf16.msra.mxu0 0
        %2063 = vmatprep.subr.bf16.mxu0 0
        %2064 = vmatpush1.bf16.msra.mxu0 0
        %2065 = vmatprep.subr.bf16.mxu0 0
        %2066 = vmatpush1.bf16.msra.mxu0 0
        %2067 = vmatprep.subr.bf16.mxu0 0
        %2068 = vmatpush1.bf16.msra.mxu0 0
        %2069 = vmatprep.mubr.bf16.mxu0 0
        %2070 = vmatmul.mubr.bf16.gmra.mrb[0].mxu0 %v1986
        %v2071 = vpop.f32.mrb[0].mxu0
        %v2072 = vadd.f32 0.0, %v2071
        %v2073 = vpop.f32.mrb[0].mxu0
        %v2074 = vpop.f32.mrb[0].mxu0
        %v2075 = vadd.f32 0.0, %v2074
        %v2076 = vpop.f32.mrb[0].mxu0
        %2077 = vmatprep.mubr.bf16.mxu0 0
        %2078 = vmatmul.mubr.bf16.gmra.mrb[0].mxu0 %v1985
        %v2079 = vpop.f32.mrb[0].mxu0
        %v2080 = vadd.f32 0.0, %v2079
        %v2081 = vpop.f32.mrb[0].mxu0
        %v2082 = vpop.f32.mrb[0].mxu0
        %v2083 = vpop.f32.mrb[0].mxu0
        %2084 = vdwg.mxu0
        %v2085 = vadd.f32 %v1946, %v2072
        %v2086 = vadd.f32 %v1947, %v2075
        %v2087 = vadd.f32 %v1948, %v2080
        %v2088 = vld [vmem:[%s185 + $0x8] sm:$0xc]
        %s2089 = scalar_lea.vmem [#allocation5], 896
        %v2090 = vld [vmem:[%s2089] sm:$0xf]
        %v2091 = vld [vmem:[%s2089 + $0x4] sm:$0xf]
        %v2092 = vld [vmem:[%s2089 + $0x8] sm:$0xf]
        %v2093 = vld [vmem:[%s2089 + $0xc] sm:$0xf]
        %v2094 = vld [vmem:[%s2089 + $0x10] sm:$0xf]
        %v2095 = vld [vmem:[%s2089 + $0x14] sm:$0xf]
        %v2096 = vld [vmem:[%s2089 + $0x18] sm:$0xf]
        %v2097 = vld [vmem:[%s2089 + $0x1c] sm:$0xf]
        %v2098 = vld [vmem:[%s2089 + $0x20] sm:$0xf]
        %v2099 = vld [vmem:[%s2089 + $0x24] sm:$0xf]
        %v2100 = vld [vmem:[%s2089 + $0x28] sm:$0xf]
        %v2101 = vld [vmem:[%s2089 + $0x2c] sm:$0xf]
        %v2102 = vld [vmem:[%s2089 + $0x30] sm:$0xf]
        %v2103 = vld [vmem:[%s2089 + $0x34] sm:$0xf]
        %v2104 = vld [vmem:[%s2089 + $0x38] sm:$0xf]
        %v2105 = vld [vmem:[%s2089 + $0x3c] sm:$0xf]
        %v2107 = vunpack.c.l.b16 %v2088
        %v2108 = vpack.c.b16 %v1840, %v2107
        %v2109 = vrot.slane %v2108, 2
        %v2110 = vrot.slane %v1969, 2
        %v2111 = vsel %vm1305, %v2109, %v2110
        %v2130 = vunpack.c.l.b16 %v2090
        %v2131 = vunpack.c.l.b16 %v2091
        %v2132 = vunpack.c.l.b16 %v2092
        %v2133 = vunpack.c.l.b16 %v2093
        %v2134 = vunpack.c.l.b16 %v2094
        %v2135 = vunpack.c.l.b16 %v2095
        %v2136 = vunpack.c.l.b16 %v2096
        %v2137 = vunpack.c.l.b16 %v2097
        %v2138 = vunpack.c.l.b16 %v2098
        %v2139 = vunpack.c.l.b16 %v2099
        %v2140 = vunpack.c.l.b16 %v2100
        %v2141 = vunpack.c.l.b16 %v2101
        %v2142 = vunpack.c.l.b16 %v2102
        %v2143 = vunpack.c.l.b16 %v2103
        %v2144 = vunpack.c.l.b16 %v2104
        %v2145 = vunpack.c.l.b16 %v2105
        %v2146 = vpack.c.b16 %v2131, %v2130
        %v2147 = vpack.c.b16 %v2133, %v2132
        %v2148 = vpack.c.b16 %v2135, %v2134
        %v2149 = vpack.c.b16 %v2137, %v2136
        %v2150 = vpack.c.b16 %v2139, %v2138
        %v2151 = vpack.c.b16 %v2141, %v2140
        %v2152 = vpack.c.b16 %v2143, %v2142
        %v2153 = vpack.c.b16 %v2145, %v2144
        %2162 = vmatprep.subr.bf16.mxu0 0
        %2163 = vmatpush1.bf16.msra.mxu0 %v2146
        %2164 = vmatprep.subr.bf16.mxu0 0
        %2165 = vmatpush1.bf16.msra.mxu0 %v2147
        %2166 = vmatprep.subr.bf16.mxu0 0
        %2167 = vmatpush1.bf16.msra.mxu0 %v2148
        %2168 = vmatprep.subr.bf16.mxu0 0
        %2169 = vmatpush1.bf16.msra.mxu0 %v2149
        %2170 = vmatprep.subr.bf16.mxu0 0
        %2171 = vmatpush1.bf16.msra.mxu0 %v2150
        %2172 = vmatprep.subr.bf16.mxu0 0
        %2173 = vmatpush1.bf16.msra.mxu0 %v2151
        %2174 = vmatprep.subr.bf16.mxu0 0
        %2175 = vmatpush1.bf16.msra.mxu0 %v2152
        %2176 = vmatprep.subr.bf16.mxu0 0
        %2177 = vmatpush1.bf16.msra.mxu0 %v2153
        %2178 = vmatprep.subr.bf16.mxu0 0
        %2179 = vmatpush1.bf16.msra.mxu0 0
        %2180 = vmatprep.subr.bf16.mxu0 0
        %2181 = vmatpush1.bf16.msra.mxu0 0
        %2182 = vmatprep.subr.bf16.mxu0 0
        %2183 = vmatpush1.bf16.msra.mxu0 0
        %2184 = vmatprep.subr.bf16.mxu0 0
        %2185 = vmatpush1.bf16.msra.mxu0 0
        %2186 = vmatprep.subr.bf16.mxu0 0
        %2187 = vmatpush1.bf16.msra.mxu0 0
        %2188 = vmatprep.subr.bf16.mxu0 0
        %2189 = vmatpush1.bf16.msra.mxu0 0
        %2190 = vmatprep.subr.bf16.mxu0 0
        %2191 = vmatpush1.bf16.msra.mxu0 0
        %2192 = vmatprep.subr.bf16.mxu0 0
        %2193 = vmatpush1.bf16.msra.mxu0 0
        %2194 = vmatprep.mubr.bf16.mxu0 0
        %2195 = vmatmul.mubr.bf16.gmra.mrb[0].mxu0 %v2111
        %v2196 = vpop.f32.mrb[0].mxu0
        %v2197 = vadd.f32 0.0, %v2196
        %v2198 = vpop.f32.mrb[0].mxu0
        %v2199 = vpop.f32.mrb[0].mxu0
        %v2200 = vadd.f32 0.0, %v2199
        %v2201 = vpop.f32.mrb[0].mxu0
        %2202 = vmatprep.mubr.bf16.mxu0 0
        %2203 = vmatmul.mubr.bf16.gmra.mrb[0].mxu0 %v2110
        %v2204 = vpop.f32.mrb[0].mxu0
        %v2205 = vadd.f32 0.0, %v2204
        %v2206 = vpop.f32.mrb[0].mxu0
        %v2207 = vpop.f32.mrb[0].mxu0
        %v2208 = vpop.f32.mrb[0].mxu0
        %2209 = vdwg.mxu0
        %v2210 = vadd.f32 %v2085, %v2197
        %v2211 = vadd.f32 %v2086, %v2200
        %v2212 = vadd.f32 %v2087, %v2205
        %v2213 = vld [vmem:[%s185 + $0x14] sm:$0x7]
        %s2214 = scalar_lea.vmem [#allocation5], 960
        %v2215 = vld [vmem:[%s2214] sm:$0xf]
        %v2216 = vld [vmem:[%s2214 + $0x4] sm:$0xf]
        %v2217 = vld [vmem:[%s2214 + $0x8] sm:$0xf]
        %v2218 = vld [vmem:[%s2214 + $0xc] sm:$0xf]
        %v2219 = vld [vmem:[%s2214 + $0x10] sm:$0xf]
        %v2220 = vld [vmem:[%s2214 + $0x14] sm:$0xf]
        %v2221 = vld [vmem:[%s2214 + $0x18] sm:$0xf]
        %v2222 = vld [vmem:[%s2214 + $0x1c] sm:$0xf]
        %v2223 = vld [vmem:[%s2214 + $0x20] sm:$0xf]
        %v2224 = vld [vmem:[%s2214 + $0x24] sm:$0xf]
        %v2225 = vld [vmem:[%s2214 + $0x28] sm:$0xf]
        %v2226 = vld [vmem:[%s2214 + $0x2c] sm:$0xf]
        %v2227 = vld [vmem:[%s2214 + $0x30] sm:$0xf]
        %v2228 = vld [vmem:[%s2214 + $0x34] sm:$0xf]
        %v2229 = vld [vmem:[%s2214 + $0x38] sm:$0xf]
        %v2230 = vld [vmem:[%s2214 + $0x3c] sm:$0xf]
        %v2232 = vunpack.c.l.b16 %v2213
        %v2233 = vpack.c.b16 %v2232, %v1841
        %v2235 = vshrl.u32 %v2108, 16
        %v2237 = vrot.slane %v2235, 2
        %v2238 = vshll.u32 %v2108, 16
        %v2240 = vrot.slane %v2238, 3
        %v2241 = vor.u32 %v2237, %v2240
        %v2243 = vshrl.u32 %v2233, 16
        %v2245 = vrot.slane %v2243, 2
        %v2246 = vshll.u32 %v2233, 16
        %v2248 = vrot.slane %v2246, 3
        %v2249 = vor.u32 %v2245, %v2248
        %v2250 = vsel %vm1431, %v2241, %v2249
        %v2269 = vunpack.c.l.b16 %v2215
        %v2270 = vunpack.c.l.b16 %v2216
        %v2271 = vunpack.c.l.b16 %v2217
        %v2272 = vunpack.c.l.b16 %v2218
        %v2273 = vunpack.c.l.b16 %v2219
        %v2274 = vunpack.c.l.b16 %v2220
        %v2275 = vunpack.c.l.b16 %v2221
        %v2276 = vunpack.c.l.b16 %v2222
        %v2277 = vunpack.c.l.b16 %v2223
        %v2278 = vunpack.c.l.b16 %v2224
        %v2279 = vunpack.c.l.b16 %v2225
        %v2280 = vunpack.c.l.b16 %v2226
        %v2281 = vunpack.c.l.b16 %v2227
        %v2282 = vunpack.c.l.b16 %v2228
        %v2283 = vunpack.c.l.b16 %v2229
        %v2284 = vunpack.c.l.b16 %v2230
        %v2285 = vpack.c.b16 %v2270, %v2269
        %v2286 = vpack.c.b16 %v2272, %v2271
        %v2287 = vpack.c.b16 %v2274, %v2273
        %v2288 = vpack.c.b16 %v2276, %v2275
        %v2289 = vpack.c.b16 %v2278, %v2277
        %v2290 = vpack.c.b16 %v2280, %v2279
        %v2291 = vpack.c.b16 %v2282, %v2281
        %v2292 = vpack.c.b16 %v2284, %v2283
        %2301 = vmatprep.subr.bf16.mxu0 0
        %2302 = vmatpush1.bf16.msra.mxu0 %v2285
        %2303 = vmatprep.subr.bf16.mxu0 0
        %2304 = vmatpush1.bf16.msra.mxu0 %v2286
        %2305 = vmatprep.subr.bf16.mxu0 0
        %2306 = vmatpush1.bf16.msra.mxu0 %v2287
        %2307 = vmatprep.subr.bf16.mxu0 0
        %2308 = vmatpush1.bf16.msra.mxu0 %v2288
        %2309 = vmatprep.subr.bf16.mxu0 0
        %2310 = vmatpush1.bf16.msra.mxu0 %v2289
        %2311 = vmatprep.subr.bf16.mxu0 0
        %2312 = vmatpush1.bf16.msra.mxu0 %v2290
        %2313 = vmatprep.subr.bf16.mxu0 0
        %2314 = vmatpush1.bf16.msra.mxu0 %v2291
        %2315 = vmatprep.subr.bf16.mxu0 0
        %2316 = vmatpush1.bf16.msra.mxu0 %v2292
        %2317 = vmatprep.subr.bf16.mxu0 0
        %2318 = vmatpush1.bf16.msra.mxu0 0
        %2319 = vmatprep.subr.bf16.mxu0 0
        %2320 = vmatpush1.bf16.msra.mxu0 0
        %2321 = vmatprep.subr.bf16.mxu0 0
        %2322 = vmatpush1.bf16.msra.mxu0 0
        %2323 = vmatprep.subr.bf16.mxu0 0
        %2324 = vmatpush1.bf16.msra.mxu0 0
        %2325 = vmatprep.subr.bf16.mxu0 0
        %2326 = vmatpush1.bf16.msra.mxu0 0
        %2327 = vmatprep.subr.bf16.mxu0 0
        %2328 = vmatpush1.bf16.msra.mxu0 0
        %2329 = vmatprep.subr.bf16.mxu0 0
        %2330 = vmatpush1.bf16.msra.mxu0 0
        %2331 = vmatprep.subr.bf16.mxu0 0
        %2332 = vmatpush1.bf16.msra.mxu0 0
        %2333 = vmatprep.mubr.bf16.mxu0 0
        %2334 = vmatmul.mubr.bf16.gmra.mrb[0].mxu0 %v2250
        %v2335 = vpop.f32.mrb[0].mxu0
        %v2336 = vadd.f32 0.0, %v2335
        %v2337 = vpop.f32.mrb[0].mxu0
        %v2338 = vpop.f32.mrb[0].mxu0
        %v2339 = vadd.f32 0.0, %v2338
        %v2340 = vpop.f32.mrb[0].mxu0
        %2341 = vmatprep.mubr.bf16.mxu0 0
        %2342 = vmatmul.mubr.bf16.gmra.mrb[0].mxu0 %v2249
        %v2343 = vpop.f32.mrb[0].mxu0
        %v2344 = vadd.f32 0.0, %v2343
        %v2345 = vpop.f32.mrb[0].mxu0
        %v2346 = vpop.f32.mrb[0].mxu0
        %v2347 = vpop.f32.mrb[0].mxu0
        %2348 = vdwg.mxu0
        %v2349 = vadd.f32 %v2210, %v2336
        %v2350 = vadd.f32 %v2211, %v2339
        %v2351 = vadd.f32 %v2212, %v2344
        %v2352 = vld [vmem:[#allocation7] sm:$0x1]
        %v2354 = vlaneseq
        %v2355 = vshrl.u32 %v2354, 7
        %v2356 = vsub.s32 0, %v2355
        %v2357 = vrot.slane %v2352, %v2356
        %v2359 = vadd.f32 %v2349, %v2357
        %v2360 = vadd.f32 %v2350, %v2357
        %v2361 = vadd.f32 %v2351, %v2357
        %v2362 = vmul.f32 %v2359, 0.2
        %v2363 = vmul.f32 %v2360, 0.2
        %v2364 = vmul.f32 %v2361, 0.2
        %v2365 = vmax.f32 %v2359, %v2362
        %v2366 = vmax.f32 %v2360, %v2363
        %v2367 = vmax.f32 %v2361, %v2364
        %v2368 = vpack.c.bf16 %v2366, %v2365
        %v2369 = vpack.c.bf16 %v2367, %v2367
        %v2372 = vunpack.c.l.b16 %v2368
        %v2373 = vunpack.c.h.b16 %v2368
        %v2374 = vunpack.c.l.b16 %v2369
        %v2375 = vpack.c.b16 %v2372, %v2372
        %v2376 = vpack.c.b16 %v2373, %v2373
        %v2377 = vpack.c.b16 %v2374, %v2374
        %2381 = vst [vmem:[%s215] sm:$0xf] %v2375
        %2382 = vst [vmem:[%s215 + $0x4] sm:$0xf] %v2376
        %2383 = vst [vmem:[%s215 + $0x8] sm:$0xf] %v2377
        %s2384 = sand.u32 %s97, 1
        %s2385 = scalar_lea.sflag [#allocation4], %s2384
        %s2386 = sand.u32 %s97, 1
        %s2387 = smul.addr %s2386, 12
        %s2388 = scalar_lea.vmem [#allocation8], %s2387
        // Predicated region
        $region45: #{fc_discriminator_forward.7} parent=31 // pred_check
          %p2389 = pneg %p107
        $region46: #{fc_discriminator_forward.7} parent=31 // pred_check_branch
          %2391 = sbr.rel (%p2389) target = $region48
        $region47: #{fc_discriminator_forward.7} parent=31 // pred_region
          %s2393 = ssub.s32 192, 192
          %2394 = vsyncadd %s2385, %s2393
          %s2395 = smul.addr %s21, 3
          %s2396 = smul.addr %s2395, 64
          %s2397 = scalar_lea.hbm %s3, %s2396
          %s2398 = sshll.u32 %s2388, 4
          %s2399 = int_to_ptr.vmem [resolvable:$true] %s2398
          %2404 = dma.vmem_to_hbm [thread:$0]  %s2399, 192, %s2397, %s2385, 64, 64, 4
        $region48: #{fc_discriminator_forward.7} parent=31 // pred_fallthru
          _
      $region32: #{fc_discriminator_forward.7} parent=5 // pred_fallthru
        _
      %p2405 = scmp.le.s32.totalorder 2, %s16
      // Predicated region
      $region49: #{fc_discriminator_forward.7} parent=5 // pred_check
        %p2406 = pneg %p2405
      $region50: #{fc_discriminator_forward.7} parent=5 // pred_check_branch
        %2408 = sbr.rel (%p2406) target = $region52
      $region51: #{fc_discriminator_forward.7} parent=5 // pred_region
        %s2409 = ssub.s32 %s16, 2
        // Predicated region
        $region53: #{fc_discriminator_forward.7} parent=51 // pred_check
          %p2410 = pneg %p113
        $region54: #{fc_discriminator_forward.7} parent=51 // pred_check_branch
          %2412 = sbr.rel (%p2410) target = $region56
        $region55: #{fc_discriminator_forward.7} parent=51 // pred_region
          %s2413 = sand.u32 %s98, 1
          %s2414 = scalar_lea.sflag [#allocation4], %s2413
          %s2415 = sand.u32 %s98, 1
          %s2416 = smul.addr %s2415, 12
          %s2417 = scalar_lea.vmem [#allocation8], %s2416
          %2418 = dma.done %s2414, 192
        $region56: #{fc_discriminator_forward.7} parent=51 // pred_fallthru
          _
      $region52: #{fc_discriminator_forward.7} parent=5 // pred_fallthru
        _
    $region6: #{fc_discriminator_forward.7} parent=1 // loop_footer
      %s20 = sadd.s32 1, %s16
    $region7: #{fc_discriminator_forward.7} parent=1 // loop_footer_branch
      %15 = sbr.rel target = $region3
    $region8: #{fc_discriminator_forward.7} parent=1 // loop_exit
      _
    %2419 = vsyncpa [#allocation3], 1
    %s2420 = scalar_lea.sflag [#allocation3], 1
    %2421 = vsyncpa %s2420, 1
    %2422 = vsyncpa [#allocation6], 1
    %2423 = vsyncpa [#allocation4], 1
    %s2424 = scalar_lea.sflag [#allocation4], 1
    %2425 = vsyncpa %s2424, 1

// kernel: fc_discriminator_forward.8
$region0: #{fc_discriminator_forward.8}
  #allocation0 [shape = 'u32[]', space=smem, size = 0x4, offset = 0x4, fixed_abs, tag = 'smem constant byte address 0x4 - core index']
  #allocation1 [shape = 'u32[144,128]{1,0:T(1,128)}', space=vmem, size = 0x12000, scoped, tag = 'internal scratch']
  %s0 = inlined_call_operand.hbm [shape: bf16[2,34,128], index: 0, kind: input, shape index: {}]
  %s1 = inlined_call_operand.hbm [shape: bf16[16,128,128], index: 1, kind: input, shape index: {}]
  %s2 = inlined_call_operand.hbm [shape: f32[1,128], index: 2, kind: input, shape index: {}]
  %s3 = inlined_call_operand.hbm [shape: bf16[2,16,128], index: 3, kind: output, shape index: {}]
  %s4 = sld [smem:[#allocation0]]
  $region57: #{fc_discriminator_forward.8} parent=0
    _
  %s6 = ssub.s32 1, %s4
  %s7 = scalar_select 0, %s6, %s4
  $region1: #{fc_discriminator_forward.8} parent=0
    #allocation2 [shape = 'u8[20480]{0}', space=vmem, size = 0x5000, scoped, tag = 'input window, operand 0']
    #allocation3 [shape = 's32[2]{0}', space=sflag, size = 0x8, scoped, tag = 'scoped memory for fc_discriminator_forward.8']
    #allocation4 [shape = 's32[2]{0}', space=sflag, size = 0x8, scoped, tag = 'scoped memory for fc_discriminator_forward.8']
    #allocation5 [shape = 'u8[524288]{0}', space=vmem, size = 0x80000, scoped, tag = 'input window, operand 1, single buffered']
    #allocation6 [shape = 's32[1]{0}', space=sflag, size = 0x4, scoped, tag = 'scoped memory for fc_discriminator_forward.8']
    #allocation7 [shape = 'u8[512]{0}', space=vmem, size = 0x400, scoped, tag = 'input window, operand 2, single buffered']
    #allocation8 [shape = 'u8[8192]{0}', space=vmem, size = 0x2000, scoped, tag = 'output window, operand 0']
    %8 = vsyncpa [#allocation3], 0
    %s9 = scalar_lea.sflag [#allocation3], 1
    %10 = vsyncpa %s9, 0
    %11 = vsyncpa [#allocation6], 0
    %12 = vsyncpa [#allocation4], 0
    %s13 = scalar_lea.sflag [#allocation4], 1
    %14 = vsyncpa %s13, 0
    loop: start=0, step=1, limit=4
    $region2: #{fc_discriminator_forward.8} parent=1 // loop_pre_header
      _
    $region3: #{fc_discriminator_forward.8} parent=1 // loop_header
      %s16 = sphi 0, %s20
      %p17 = scmp.ge.s32.totalorder %s16, 4
      %s26 = sphi 0, %s28
      %s29 = sphi 0, %s26
      %s30 = sphi 0, %s29
      %s46 = sphi 0, %s30
      %s50 = sphi 0, %s50
      %s52 = sphi 0, %s50
      %s53 = sphi 0, %s52
      %s67 = sphi 0, %s53
      %s71 = sphi 0, %s71
      %s73 = sphi 0, %s71
      %s74 = sphi 0, %s73
      %s88 = sphi 0, %s74
      %s94 = sphi 0, %s96
      %s97 = sphi 0, %s94
      %s98 = sphi 0, %s97
      %s114 = sphi 0, %s98
    $region4: #{fc_discriminator_forward.8} parent=1 // loop_header_branch
      %19 = sbr.rel (%p17) target = $region8
    $region5: #{fc_discriminator_forward.8} parent=1 // loop_body
      %s21 = ssub.s32 %s16, 1
      %s22 = ssub.s32 %s16, 2
      %s23 = sadd.s32 %s16, 1
      %s24 = ssub.s32 %s16, %s23
      %p25 = scmp.eq.s32.totalorder %s24, 0
      %s27 = sadd.s32 %s26, 1
      %s28 = scalar_select %p25, %s26, %s27
      %p31 = pneg %p25
      %p32 = scmp.eq.s32.totalorder %s16, 1
      %p33 = por %p31, %p32
      %p34 = scmp.ne.s32.totalorder %s26, %s29
      %p35 = scmp.eq.s32.totalorder %s16, 0
      %p36 = por %p34, %p35
      %p37 = scmp.ne.s32.totalorder %s26, %s29
      %p38 = scmp.eq.s32.totalorder %s21, 1
      %p39 = por %p37, %p38
      %p40 = scmp.ne.s32.totalorder %s29, %s30
      %p41 = scmp.eq.s32.totalorder %s21, 0
      %p42 = por %p40, %p41
      %p43 = scmp.ne.s32.totalorder %s29, %s30
      %p44 = scmp.eq.s32.totalorder %s22, 1
      %p45 = por %p43, %p44
      %p47 = scmp.ne.s32.totalorder %s30, %s46
      %p48 = scmp.eq.s32.totalorder %s22, 0
      %p49 = por %p47, %p48
      %s51 = sadd.s32 %s50, 1
      %p54 = scmp.eq.s32.totalorder %s16, 1
      %p55 = scmp.ne.s32.totalorder %s50, %s52
      %p56 = scmp.eq.s32.totalorder %s16, 0
      %p57 = por %p55, %p56
      %p58 = scmp.ne.s32.totalorder %s50, %s52
      %p59 = scmp.eq.s32.totalorder %s21, 1
      %p60 = por %p58, %p59
      %p61 = scmp.ne.s32.totalorder %s52, %s53
      %p62 = scmp.eq.s32.totalorder %s21, 0
      %p63 = por %p61, %p62
      %p64 = scmp.ne.s32.totalorder %s52, %s53
      %p65 = scmp.eq.s32.totalorder %s22, 1
      %p66 = por %p64, %p65
      %p68 = scmp.ne.s32.totalorder %s53, %s67
      %p69 = scmp.eq.s32.totalorder %s22, 0
      %p70 = por %p68, %p69
      %s72 = sadd.s32 %s71, 1
      %p75 = scmp.eq.s32.totalorder %s16, 1
      %p76 = scmp.ne.s32.totalorder %s71, %s73
      %p77 = scmp.eq.s32.totalorder %s16, 0
      %p78 = por %p76, %p77
      %p79 = scmp.ne.s32.totalorder %s71, %s73
      %p80 = scmp.eq.s32.totalorder %s21, 1
      %p81 = por %p79, %p80
      %p82 = scmp.ne.s32.totalorder %s73, %s74
      %p83 = scmp.eq.s32.totalorder %s21, 0
      %p84 = por %p82, %p83
      %p85 = scmp.ne.s32.totalorder %s73, %s74
      %p86 = scmp.eq.s32.totalorder %s22, 1
      %p87 = por %p85, %p86
      %p89 = scmp.ne.s32.totalorder %s74, %s88
      %p90 = scmp.eq.s32.totalorder %s22, 0
      %p91 = por %p89, %p90
      %s92 = ssub.s32 %s16, %s23
      %p93 = scmp.eq.s32.totalorder %s92, 0
      %s95 = sadd.s32 %s94, 1
      %s96 = scalar_select %p93, %s94, %s95
      %p99 = pneg %p93
      %p100 = scmp.eq.s32.totalorder %s16, 1
      %p101 = por %p99, %p100
      %p102 = scmp.ne.s32.totalorder %s94, %s97
      %p103 = scmp.eq.s32.totalorder %s16, 0
      %p104 = por %p102, %p103
      %p105 = scmp.ne.s32.totalorder %s94, %s97
      %p106 = scmp.eq.s32.totalorder %s21, 1
      %p107 = por %p105, %p106
      %p108 = scmp.ne.s32.totalorder %s97, %s98
      %p109 = scmp.eq.s32.totalorder %s21, 0
      %p110 = por %p108, %p109
      %p111 = scmp.ne.s32.totalorder %s97, %s98
      %p112 = scmp.eq.s32.totalorder %s22, 1
      %p113 = por %p111, %p112
      %p115 = scmp.ne.s32.totalorder %s98, %s114
      %p116 = scmp.eq.s32.totalorder %s22, 0
      %p117 = por %p115, %p116
      %p118 = scmp.le.s32.totalorder 1, %s16
      %p119 = scmp.lt.s32.totalorder %s16, 3
      %p120 = pnand %p118, %p119
      %p121 = pneg %p120
      // Predicated region
      $region9: #{fc_discriminator_forward.8} parent=5 // pred_check
        _
      $region10: #{fc_discriminator_forward.8} parent=5 // pred_check_branch
        %123 = sbr.rel (%p120) target = $region12
      $region11: #{fc_discriminator_forward.8} parent=5 // pred_region
        %s124 = ssub.s32 %s16, 1
        // Predicated region
        $region13: #{fc_discriminator_forward.8} parent=11 // pred_check
          %p125 = pneg %p63
        $region14: #{fc_discriminator_forward.8} parent=11 // pred_check_branch
          %127 = sbr.rel (%p125) target = $region16
        $region15: #{fc_discriminator_forward.8} parent=11 // pred_region
          %s129 = ssub.s32 16384, 16384
          %130 = vsyncadd [#allocation6], %s129
          %s131 = sshll.u32 [#allocation5], 4
          %s132 = int_to_ptr.vmem [resolvable:$true] %s131
          %137 = dma.hbm_to_vmem [thread:$0]  %s1, 16384, %s132, [#allocation6], 64, 64, 4
        $region16: #{fc_discriminator_forward.8} parent=11 // pred_fallthru
          _
        // Predicated region
        $region17: #{fc_discriminator_forward.8} parent=11 // pred_check
          %p138 = pneg %p84
        $region18: #{fc_discriminator_forward.8} parent=11 // pred_check_branch
          %140 = sbr.rel (%p138) target = $region20
        $region19: #{fc_discriminator_forward.8} parent=11 // pred_region
          %s142 = ssub.s32 16, 16
          %143 = vsyncadd [#allocation6], %s142
          %s145 = sshll.u32 [#allocation7], 4
          %s146 = int_to_ptr.vmem [resolvable:$true] %s145
          %148 = dma.hbm_to_vmem [thread:$0]  %s2, 16, %s146, [#allocation6]
        $region20: #{fc_discriminator_forward.8} parent=11 // pred_fallthru
          _
      $region12: #{fc_discriminator_forward.8} parent=5 // pred_fallthru
        _
      %p149 = scmp.lt.s32.totalorder %s16, 2
      // Predicated region
      $region21: #{fc_discriminator_forward.8} parent=5 // pred_check
        %p150 = pneg %p149
      $region22: #{fc_discriminator_forward.8} parent=5 // pred_check_branch
        %152 = sbr.rel (%p150) target = $region24
      $region23: #{fc_discriminator_forward.8} parent=5 // pred_region
        // Predicated region
        $region25: #{fc_discriminator_forward.8} parent=23 // pred_check
          %p153 = pneg %p36
        $region26: #{fc_discriminator_forward.8} parent=23 // pred_check_branch
          %155 = sbr.rel (%p153) target = $region28
        $region27: #{fc_discriminator_forward.8} parent=23 // pred_region
          %s156 = sand.u32 %s26, 1
          %s157 = scalar_lea.sflag [#allocation3], %s156
          %s158 = sand.u32 %s26, 1
          %s159 = smul.addr %s158, 20
          %s160 = scalar_lea.vmem [#allocation2], %s159
          %s162 = ssub.s32 320, 320
          %163 = vsyncadd %s157, %s162
          %s164 = smul.addr %s16, 5
          %s165 = smul.addr %s164, 64
          %s166 = scalar_lea.hbm %s0, %s165
          %s167 = sshll.u32 %s160, 4
          %s168 = int_to_ptr.vmem [resolvable:$true] %s167
          %173 = dma.hbm_to_vmem [thread:$0]  %s166, 320, %s168, %s157, 64, 64, 4
        $region28: #{fc_discriminator_forward.8} parent=23 // pred_fallthru
          _
      $region24: #{fc_discriminator_forward.8} parent=5 // pred_fallthru
        _
      %p174 = scmp.le.s32.totalorder 1, %s16
      %p175 = scmp.lt.s32.totalorder %s16, 3
      %p176 = pnand %p174, %p175
      %p177 = pneg %p176
      // Predicated region
      $region29: #{fc_discriminator_forward.8} parent=5 // pred_check
        _
      $region30: #{fc_discriminator_forward.8} parent=5 // pred_check_branch
        %179 = sbr.rel (%p176) target = $region32
      $region31: #{fc_discriminator_forward.8} parent=5 // pred_region
        %s180 = ssub.s32 %s16, 1
        %s181 = sand.u32 %s29, 1
        %s182 = scalar_lea.sflag [#allocation3], %s181
        %s183 = sand.u32 %s29, 1
        %s184 = smul.addr %s183, 20
        %s185 = scalar_lea.vmem [#allocation2], %s184
        // Predicated region
        $region33: #{fc_discriminator_forward.8} parent=31 // pred_check
          %p186 = pneg %p42
        $region34: #{fc_discriminator_forward.8} parent=31 // pred_check_branch
          %188 = sbr.rel (%p186) target = $region36
        $region35: #{fc_discriminator_forward.8} parent=31 // pred_region
          %189 = dma.done %s182, 320
        $region36: #{fc_discriminator_forward.8} parent=31 // pred_fallthru
          _
        // Predicated region
        $region37: #{fc_discriminator_forward.8} parent=31 // pred_check
          %p190 = pneg %p63
        $region38: #{fc_discriminator_forward.8} parent=31 // pred_check_branch
          %192 = sbr.rel (%p190) target = $region40
        $region39: #{fc_discriminator_forward.8} parent=31 // pred_region
          %193 = dma.done [#allocation6], 16384
        $region40: #{fc_discriminator_forward.8} parent=31 // pred_fallthru
          _
        // Predicated region
        $region41: #{fc_discriminator_forward.8} parent=31 // pred_check
          %p194 = pneg %p84
        $region42: #{fc_discriminator_forward.8} parent=31 // pred_check_branch
          %196 = sbr.rel (%p194) target = $region44
        $region43: #{fc_discriminator_forward.8} parent=31 // pred_region
          %197 = dma.done [#allocation6], 16
        $region44: #{fc_discriminator_forward.8} parent=31 // pred_fallthru
          _
        %s198 = sand.u32 %s29, 1
        %s199 = scalar_lea.sflag [#allocation3], %s198
        %s200 = sand.u32 %s29, 1
        %s201 = smul.addr %s200, 20
        %s202 = scalar_lea.vmem [#allocation2], %s201
        %p203 = pneg %p42
        %p204 = pneg %p39
        %p205 = pneg %p63
        %p206 = pneg %p60
        %p207 = pneg %p84
        %p208 = pneg %p81
        %p209 = pneg %p110
        %p210 = pneg %p107
        %s211 = sand.u32 %s97, 1
        %s212 = scalar_lea.sflag [#allocation4], %s211
        %s213 = sand.u32 %s97, 1
        %s214 = smul.addr %s213, 8
        %s215 = scalar_lea.vmem [#allocation8], %s214
        %v217 = vld [vmem:[%s185] sm:$0xf]
        %v218 = vld [vmem:[%s185 + $0x4] sm:$0xf]
        %v219 = vld [vmem:[#allocation5] sm:$0xf]
        %v220 = vld [vmem:[#allocation5 + $0x4] sm:$0xf]
        %v221 = vld [vmem:[#allocation5 + $0x8] sm:$0xf]
        %v222 = vld [vmem:[#allocation5 + $0xc] sm:$0xf]
        %v223 = vld [vmem:[#allocation5 + $0x10] sm:$0xf]
        %v224 = vld [vmem:[#allocation5 + $0x14] sm:$0xf]
        %v225 = vld [vmem:[#allocation5 + $0x18] sm:$0xf]
        %v226 = vld [vmem:[#allocation5 + $0x1c] sm:$0xf]
        %v227 = vld [vmem:[#allocation5 + $0x20] sm:$0xf]
        %v228 = vld [vmem:[#allocation5 + $0x24] sm:$0xf]
        %v229 = vld [vmem:[#allocation5 + $0x28] sm:$0xf]
        %v230 = vld [vmem:[#allocation5 + $0x2c] sm:$0xf]
        %v231 = vld [vmem:[#allocation5 + $0x30] sm:$0xf]
        %v232 = vld [vmem:[#allocation5 + $0x34] sm:$0xf]
        %v233 = vld [vmem:[#allocation5 + $0x38] sm:$0xf]
        %v234 = vld [vmem:[#allocation5 + $0x3c] sm:$0xf]
        %v235 = vld [vmem:[%s185 + $0x8] sm:$0x1]
        %s236 = scalar_lea.vmem [#allocation5], 64
        %v237 = vld [vmem:[%s236] sm:$0xf]
        %v238 = vld [vmem:[%s236 + $0x4] sm:$0xf]
        %v239 = vld [vmem:[%s236 + $0x8] sm:$0xf]
        %v240 = vld [vmem:[%s236 + $0xc] sm:$0xf]
        %v241 = vld [vmem:[%s236 + $0x10] sm:$0xf]
        %v242 = vld [vmem:[%s236 + $0x14] sm:$0xf]
        %v243 = vld [vmem:[%s236 + $0x18] sm:$0xf]
        %v244 = vld [vmem:[%s236 + $0x1c] sm:$0xf]
        %v245 = vld [vmem:[%s236 + $0x20] sm:$0xf]
        %v246 = vld [vmem:[%s236 + $0x24] sm:$0xf]
        %v247 = vld [vmem:[%s236 + $0x28] sm:$0xf]
        %v248 = vld [vmem:[%s236 + $0x2c] sm:$0xf]
        %v249 = vld [vmem:[%s236 + $0x30] sm:$0xf]
        %v250 = vld [vmem:[%s236 + $0x34] sm:$0xf]
        %v251 = vld [vmem:[%s236 + $0x38] sm:$0xf]
        %v252 = vld [vmem:[%s236 + $0x3c] sm:$0xf]
        %v256 = vunpack.c.l.b16 %v217
        %v257 = vunpack.c.l.b16 %v218
        %v258 = vunpack.c.l.b16 %v235
        %v259 = vpack.c.b16 %v257, %v256
        %v260 = vpack.c.b16 %v258, %v258
        %vm261 = vsmask.f32 7424
        %v263 = vshrl.u32 %v259, 16
        %v265 = vshll.u32 %v259, 16
        %v267 = vrot.slane %v265, 1
        %v268 = vor.u32 %v263, %v267
        %v270 = vshll.u32 %v260, 16
        %v272 = vrot.slane %v270, 1
        %v273 = vsel %vm261, %v268, %v272
        %v291 = vunpack.c.l.b16 %v237
        %v292 = vunpack.c.l.b16 %v238
        %v293 = vunpack.c.l.b16 %v239
        %v294 = vunpack.c.l.b16 %v240
        %v295 = vunpack.c.l.b16 %v241
        %v296 = vunpack.c.l.b16 %v242
        %v297 = vunpack.c.l.b16 %v243
        %v298 = vunpack.c.l.b16 %v244
        %v299 = vunpack.c.l.b16 %v245
        %v300 = vunpack.c.l.b16 %v246
        %v301 = vunpack.c.l.b16 %v247
        %v302 = vunpack.c.l.b16 %v248
        %v303 = vunpack.c.l.b16 %v249
        %v304 = vunpack.c.l.b16 %v250
        %v305 = vunpack.c.l.b16 %v251
        %v306 = vunpack.c.l.b16 %v252
        %v307 = vpack.c.b16 %v292, %v291
        %v308 = vpack.c.b16 %v294, %v293
        %v309 = vpack.c.b16 %v296, %v295
        %v310 = vpack.c.b16 %v298, %v297
        %v311 = vpack.c.b16 %v300, %v299
        %v312 = vpack.c.b16 %v302, %v301
        %v313 = vpack.c.b16 %v304, %v303
        %v314 = vpack.c.b16 %v306, %v305
        %323 = vmatprep.subr.bf16.mxu0 0
        %324 = vmatpush1.bf16.msra.mxu0 %v307
        %325 = vmatprep.subr.bf16.mxu0 0
        %326 = vmatpush1.bf16.msra.mxu0 %v308
        %327 = vmatprep.subr.bf16.mxu0 0
        %328 = vmatpush1.bf16.msra.mxu0 %v309
        %329 = vmatprep.subr.bf16.mxu0 0
        %330 = vmatpush1.bf16.msra.mxu0 %v310
        %331 = vmatprep.subr.bf16.mxu0 0
        %332 = vmatpush1.bf16.msra.mxu0 %v311
        %333 = vmatprep.subr.bf16.mxu0 0
        %334 = vmatpush1.bf16.msra.mxu0 %v312
        %335 = vmatprep.subr.bf16.mxu0 0
        %336 = vmatpush1.bf16.msra.mxu0 %v313
        %337 = vmatprep.subr.bf16.mxu0 0
        %338 = vmatpush1.bf16.msra.mxu0 %v314
        %339 = vmatprep.subr.bf16.mxu0 0
        %340 = vmatpush1.bf16.msra.mxu0 0
        %341 = vmatprep.subr.bf16.mxu0 0
        %342 = vmatpush1.bf16.msra.mxu0 0
        %343 = vmatprep.subr.bf16.mxu0 0
        %344 = vmatpush1.bf16.msra.mxu0 0
        %345 = vmatprep.subr.bf16.mxu0 0
        %346 = vmatpush1.bf16.msra.mxu0 0
        %347 = vmatprep.subr.bf16.mxu0 0
        %348 = vmatpush1.bf16.msra.mxu0 0
        %349 = vmatprep.subr.bf16.mxu0 0
        %350 = vmatpush1.bf16.msra.mxu0 0
        %351 = vmatprep.subr.bf16.mxu0 0
        %352 = vmatpush1.bf16.msra.mxu0 0
        %353 = vmatprep.subr.bf16.mxu0 0
        %354 = vmatpush1.bf16.msra.mxu0 0
        %355 = vmatprep.mubr.bf16.mxu0 0
        %356 = vmatmul.mubr.bf16.gmra.mrb[0].mxu0 %v273
        %v357 = vpop.f32.mrb[0].mxu0
        %v358 = vadd.f32 0.0, %v357
        %v359 = vpop.f32.mrb[0].mxu0
        %v360 = vpop.f32.mrb[0].mxu0
        %v361 = vadd.f32 0.0, %v360
        %v362 = vpop.f32.mrb[0].mxu0
        %363 = vdwg.mxu0
        %v381 = vunpack.c.l.b16 %v219
        %v382 = vunpack.c.l.b16 %v220
        %v383 = vunpack.c.l.b16 %v221
        %v384 = vunpack.c.l.b16 %v222
        %v385 = vunpack.c.l.b16 %v223
        %v386 = vunpack.c.l.b16 %v224
        %v387 = vunpack.c.l.b16 %v225
        %v388 = vunpack.c.l.b16 %v226
        %v389 = vunpack.c.l.b16 %v227
        %v390 = vunpack.c.l.b16 %v228
        %v391 = vunpack.c.l.b16 %v229
        %v392 = vunpack.c.l.b16 %v230
        %v393 = vunpack.c.l.b16 %v231
        %v394 = vunpack.c.l.b16 %v232
        %v395 = vunpack.c.l.b16 %v233
        %v396 = vunpack.c.l.b16 %v234
        %v397 = vpack.c.b16 %v382, %v381
        %v398 = vpack.c.b16 %v384, %v383
        %v399 = vpack.c.b16 %v386, %v385
        %v400 = vpack.c.b16 %v388, %v387
        %v401 = vpack.c.b16 %v390, %v389
        %v402 = vpack.c.b16 %v392, %v391
        %v403 = vpack.c.b16 %v394, %v393
        %v404 = vpack.c.b16 %v396, %v395
        %413 = vmatprep.subr.bf16.mxu0 0
        %414 = vmatpush1.bf16.msra.mxu0 %v397
        %415 = vmatprep.subr.bf16.mxu0 0
        %416 = vmatpush1.bf16.msra.mxu0 %v398
        %417 = vmatprep.subr.bf16.mxu0 0
        %418 = vmatpush1.bf16.msra.mxu0 %v399
        %419 = vmatprep.subr.bf16.mxu0 0
        %420 = vmatpush1.bf16.msra.mxu0 %v400
        %421 = vmatprep.subr.bf16.mxu0 0
        %422 = vmatpush1.bf16.msra.mxu0 %v401
        %423 = vmatprep.subr.bf16.mxu0 0
        %424 = vmatpush1.bf16.msra.mxu0 %v402
        %425 = vmatprep.subr.bf16.mxu0 0
        %426 = vmatpush1.bf16.msra.mxu0 %v403
        %427 = vmatprep.subr.bf16.mxu0 0
        %428 = vmatpush1.bf16.msra.mxu0 %v404
        %429 = vmatprep.subr.bf16.mxu0 0
        %430 = vmatpush1.bf16.msra.mxu0 0
        %431 = vmatprep.subr.bf16.mxu0 0
        %432 = vmatpush1.bf16.msra.mxu0 0
        %433 = vmatprep.subr.bf16.mxu0 0
        %434 = vmatpush1.bf16.msra.mxu0 0
        %435 = vmatprep.subr.bf16.mxu0 0
        %436 = vmatpush1.bf16.msra.mxu0 0
        %437 = vmatprep.subr.bf16.mxu0 0
        %438 = vmatpush1.bf16.msra.mxu0 0
        %439 = vmatprep.subr.bf16.mxu0 0
        %440 = vmatpush1.bf16.msra.mxu0 0
        %441 = vmatprep.subr.bf16.mxu0 0
        %442 = vmatpush1.bf16.msra.mxu0 0
        %443 = vmatprep.subr.bf16.mxu0 0
        %444 = vmatpush1.bf16.msra.mxu0 0
        %445 = vmatprep.mubr.bf16.mxu0 0
        %446 = vmatmul.mubr.bf16.gmra.mrb[0].mxu0 %v259
        %v447 = vpop.f32.mrb[0].mxu0
        %v448 = vadd.f32 %v358, %v447
        %v449 = vpop.f32.mrb[0].mxu0
        %v450 = vpop.f32.mrb[0].mxu0
        %v451 = vadd.f32 %v361, %v450
        %v452 = vpop.f32.mrb[0].mxu0
        %453 = vdwg.mxu0
        %v454 = vld [vmem:[%s185] sm:$0xe]
        %s455 = scalar_lea.vmem [#allocation5], 128
        %v456 = vld [vmem:[%s455] sm:$0xf]
        %v457 = vld [vmem:[%s455 + $0x4] sm:$0xf]
        %v458 = vld [vmem:[%s455 + $0x8] sm:$0xf]
        %v459 = vld [vmem:[%s455 + $0xc] sm:$0xf]
        %v460 = vld [vmem:[%s455 + $0x10] sm:$0xf]
        %v461 = vld [vmem:[%s455 + $0x14] sm:$0xf]
        %v462 = vld [vmem:[%s455 + $0x18] sm:$0xf]
        %v463 = vld [vmem:[%s455 + $0x1c] sm:$0xf]
        %v464 = vld [vmem:[%s455 + $0x20] sm:$0xf]
        %v465 = vld [vmem:[%s455 + $0x24] sm:$0xf]
        %v466 = vld [vmem:[%s455 + $0x28] sm:$0xf]
        %v467 = vld [vmem:[%s455 + $0x2c] sm:$0xf]
        %v468 = vld [vmem:[%s455 + $0x30] sm:$0xf]
        %v469 = vld [vmem:[%s455 + $0x34] sm:$0xf]
        %v470 = vld [vmem:[%s455 + $0x38] sm:$0xf]
        %v471 = vld [vmem:[%s455 + $0x3c] sm:$0xf]
        %v473 = vunpack.c.l.b16 %v454
        %v474 = vpack.c.b16 %v257, %v473
        %vm475 = vcmask 1046528
        %v476 = vrot.slane %v474, 1
        %v477 = vrot.slane %v260, 1
        %v478 = vsel %vm475, %v476, %v477
        %v496 = vunpack.c.l.b16 %v456
        %v497 = vunpack.c.l.b16 %v457
        %v498 = vunpack.c.l.b16 %v458
        %v499 = vunpack.c.l.b16 %v459
        %v500 = vunpack.c.l.b16 %v460
        %v501 = vunpack.c.l.b16 %v461
        %v502 = vunpack.c.l.b16 %v462
        %v503 = vunpack.c.l.b16 %v463
        %v504 = vunpack.c.l.b16 %v464
        %v505 = vunpack.c.l.b16 %v465
        %v506 = vunpack.c.l.b16 %v466
        %v507 = vunpack.c.l.b16 %v467
        %v508 = vunpack.c.l.b16 %v468
        %v509 = vunpack.c.l.b16 %v469
        %v510 = vunpack.c.l.b16 %v470
        %v511 = vunpack.c.l.b16 %v471
        %v512 = vpack.c.b16 %v497, %v496
        %v513 = vpack.c.b16 %v499, %v498
        %v514 = vpack.c.b16 %v501, %v500
        %v515 = vpack.c.b16 %v503, %v502
        %v516 = vpack.c.b16 %v505, %v504
        %v517 = vpack.c.b16 %v507, %v506
        %v518 = vpack.c.b16 %v509, %v508
        %v519 = vpack.c.b16 %v511, %v510
        %528 = vmatprep.subr.bf16.mxu0 0
        %529 = vmatpush1.bf16.msra.mxu0 %v512
        %530 = vmatprep.subr.bf16.mxu0 0
        %531 = vmatpush1.bf16.msra.mxu0 %v513
        %532 = vmatprep.subr.bf16.mxu0 0
        %533 = vmatpush1.bf16.msra.mxu0 %v514
        %534 = vmatprep.subr.bf16.mxu0 0
        %535 = vmatpush1.bf16.msra.mxu0 %v515
        %536 = vmatprep.subr.bf16.mxu0 0
        %537 = vmatpush1.bf16.msra.mxu0 %v516
        %538 = vmatprep.subr.bf16.mxu0 0
        %539 = vmatpush1.bf16.msra.mxu0 %v517
        %540 = vmatprep.subr.bf16.mxu0 0
        %541 = vmatpush1.bf16.msra.mxu0 %v518
        %542 = vmatprep.subr.bf16.mxu0 0
        %543 = vmatpush1.bf16.msra.mxu0 %v519
        %544 = vmatprep.subr.bf16.mxu0 0
        %545 = vmatpush1.bf16.msra.mxu0 0
        %546 = vmatprep.subr.bf16.mxu0 0
        %547 = vmatpush1.bf16.msra.mxu0 0
        %548 = vmatprep.subr.bf16.mxu0 0
        %549 = vmatpush1.bf16.msra.mxu0 0
        %550 = vmatprep.subr.bf16.mxu0 0
        %551 = vmatpush1.bf16.msra.mxu0 0
        %552 = vmatprep.subr.bf16.mxu0 0
        %553 = vmatpush1.bf16.msra.mxu0 0
        %554 = vmatprep.subr.bf16.mxu0 0
        %555 = vmatpush1.bf16.msra.mxu0 0
        %556 = vmatprep.subr.bf16.mxu0 0
        %557 = vmatpush1.bf16.msra.mxu0 0
        %558 = vmatprep.subr.bf16.mxu0 0
        %559 = vmatpush1.bf16.msra.mxu0 0
        %560 = vmatprep.mubr.bf16.mxu0 0
        %561 = vmatmul.mubr.bf16.gmra.mrb[0].mxu0 %v478
        %v562 = vpop.f32.mrb[0].mxu0
        %v563 = vadd.f32 0.0, %v562
        %v564 = vpop.f32.mrb[0].mxu0
        %v565 = vpop.f32.mrb[0].mxu0
        %v566 = vadd.f32 0.0, %v565
        %v567 = vpop.f32.mrb[0].mxu0
        %568 = vdwg.mxu0
        %v569 = vadd.f32 %v448, %v563
        %v570 = vadd.f32 %v451, %v566
        %v571 = vld [vmem:[%s185 + $0x8] sm:$0x3]
        %s572 = scalar_lea.vmem [#allocation5], 192
        %v573 = vld [vmem:[%s572] sm:$0xf]
        %v574 = vld [vmem:[%s572 + $0x4] sm:$0xf]
        %v575 = vld [vmem:[%s572 + $0x8] sm:$0xf]
        %v576 = vld [vmem:[%s572 + $0xc] sm:$0xf]
        %v577 = vld [vmem:[%s572 + $0x10] sm:$0xf]
        %v578 = vld [vmem:[%s572 + $0x14] sm:$0xf]
        %v579 = vld [vmem:[%s572 + $0x18] sm:$0xf]
        %v580 = vld [vmem:[%s572 + $0x1c] sm:$0xf]
        %v581 = vld [vmem:[%s572 + $0x20] sm:$0xf]
        %v582 = vld [vmem:[%s572 + $0x24] sm:$0xf]
        %v583 = vld [vmem:[%s572 + $0x28] sm:$0xf]
        %v584 = vld [vmem:[%s572 + $0x2c] sm:$0xf]
        %v585 = vld [vmem:[%s572 + $0x30] sm:$0xf]
        %v586 = vld [vmem:[%s572 + $0x34] sm:$0xf]
        %v587 = vld [vmem:[%s572 + $0x38] sm:$0xf]
        %v588 = vld [vmem:[%s572 + $0x3c] sm:$0xf]
        %v590 = vunpack.c.l.b16 %v571
        %v591 = vpack.c.b16 %v590, %v590
        %vm592 = vsmask.f32 6400
        %v594 = vshrl.u32 %v474, 16
        %v596 = vrot.slane %v594, 1
        %v597 = vshll.u32 %v474, 16
        %v599 = vrot.slane %v597, 2
        %v600 = vor.u32 %v596, %v599
        %v602 = vshrl.u32 %v591, 16
        %v604 = vrot.slane %v602, 1
        %v605 = vshll.u32 %v591, 16
        %v607 = vrot.slane %v605, 2
        %v608 = vor.u32 %v604, %v607
        %v609 = vsel %vm592, %v600, %v608
        %v627 = vunpack.c.l.b16 %v573
        %v628 = vunpack.c.l.b16 %v574
        %v629 = vunpack.c.l.b16 %v575
        %v630 = vunpack.c.l.b16 %v576
        %v631 = vunpack.c.l.b16 %v577
        %v632 = vunpack.c.l.b16 %v578
        %v633 = vunpack.c.l.b16 %v579
        %v634 = vunpack.c.l.b16 %v580
        %v635 = vunpack.c.l.b16 %v581
        %v636 = vunpack.c.l.b16 %v582
        %v637 = vunpack.c.l.b16 %v583
        %v638 = vunpack.c.l.b16 %v584
        %v639 = vunpack.c.l.b16 %v585
        %v640 = vunpack.c.l.b16 %v586
        %v641 = vunpack.c.l.b16 %v587
        %v642 = vunpack.c.l.b16 %v588
        %v643 = vpack.c.b16 %v628, %v627
        %v644 = vpack.c.b16 %v630, %v629
        %v645 = vpack.c.b16 %v632, %v631
        %v646 = vpack.c.b16 %v634, %v633
        %v647 = vpack.c.b16 %v636, %v635
        %v648 = vpack.c.b16 %v638, %v637
        %v649 = vpack.c.b16 %v640, %v639
        %v650 = vpack.c.b16 %v642, %v641
        %659 = vmatprep.subr.bf16.mxu0 0
        %660 = vmatpush1.bf16.msra.mxu0 %v643
        %661 = vmatprep.subr.bf16.mxu0 0
        %662 = vmatpush1.bf16.msra.mxu0 %v644
        %663 = vmatprep.subr.bf16.mxu0 0
        %664 = vmatpush1.bf16.msra.mxu0 %v645
        %665 = vmatprep.subr.bf16.mxu0 0
        %666 = vmatpush1.bf16.msra.mxu0 %v646
        %667 = vmatprep.subr.bf16.mxu0 0
        %668 = vmatpush1.bf16.msra.mxu0 %v647
        %669 = vmatprep.subr.bf16.mxu0 0
        %670 = vmatpush1.bf16.msra.mxu0 %v648
        %671 = vmatprep.subr.bf16.mxu0 0
        %672 = vmatpush1.bf16.msra.mxu0 %v649
        %673 = vmatprep.subr.bf16.mxu0 0
        %674 = vmatpush1.bf16.msra.mxu0 %v650
        %675 = vmatprep.subr.bf16.mxu0 0
        %676 = vmatpush1.bf16.msra.mxu0 0
        %677 = vmatprep.subr.bf16.mxu0 0
        %678 = vmatpush1.bf16.msra.mxu0 0
        %679 = vmatprep.subr.bf16.mxu0 0
        %680 = vmatpush1.bf16.msra.mxu0 0
        %681 = vmatprep.subr.bf16.mxu0 0
        %682 = vmatpush1.bf16.msra.mxu0 0
        %683 = vmatprep.subr.bf16.mxu0 0
        %684 = vmatpush1.bf16.msra.mxu0 0
        %685 = vmatprep.subr.bf16.mxu0 0
        %686 = vmatpush1.bf16.msra.mxu0 0
        %687 = vmatprep.subr.bf16.mxu0 0
        %688 = vmatpush1.bf16.msra.mxu0 0
        %689 = vmatprep.subr.bf16.mxu0 0
        %690 = vmatpush1.bf16.msra.mxu0 0
        %691 = vmatprep.mubr.bf16.mxu0 0
        %692 = vmatmul.mubr.bf16.gmra.mrb[0].mxu0 %v609
        %v693 = vpop.f32.mrb[0].mxu0
        %v694 = vadd.f32 0.0, %v693
        %v695 = vpop.f32.mrb[0].mxu0
        %v696 = vpop.f32.mrb[0].mxu0
        %v697 = vadd.f32 0.0, %v696
        %v698 = vpop.f32.mrb[0].mxu0
        %699 = vdwg.mxu0
        %v700 = vadd.f32 %v569, %v694
        %v701 = vadd.f32 %v570, %v697
        %v702 = vld [vmem:[%s185] sm:$0xc]
        %v703 = vld [vmem:[%s185 + $0x8] sm:$0x7]
        %s704 = scalar_lea.vmem [#allocation5], 256
        %v705 = vld [vmem:[%s704] sm:$0xf]
        %v706 = vld [vmem:[%s704 + $0x4] sm:$0xf]
        %v707 = vld [vmem:[%s704 + $0x8] sm:$0xf]
        %v708 = vld [vmem:[%s704 + $0xc] sm:$0xf]
        %v709 = vld [vmem:[%s704 + $0x10] sm:$0xf]
        %v710 = vld [vmem:[%s704 + $0x14] sm:$0xf]
        %v711 = vld [vmem:[%s704 + $0x18] sm:$0xf]
        %v712 = vld [vmem:[%s704 + $0x1c] sm:$0xf]
        %v713 = vld [vmem:[%s704 + $0x20] sm:$0xf]
        %v714 = vld [vmem:[%s704 + $0x24] sm:$0xf]
        %v715 = vld [vmem:[%s704 + $0x28] sm:$0xf]
        %v716 = vld [vmem:[%s704 + $0x2c] sm:$0xf]
        %v717 = vld [vmem:[%s704 + $0x30] sm:$0xf]
        %v718 = vld [vmem:[%s704 + $0x34] sm:$0xf]
        %v719 = vld [vmem:[%s704 + $0x38] sm:$0xf]
        %v720 = vld [vmem:[%s704 + $0x3c] sm:$0xf]
        %v723 = vunpack.c.l.b16 %v702
        %v724 = vunpack.c.l.b16 %v703
        %v725 = vpack.c.b16 %v257, %v723
        %v726 = vpack.c.b16 %v724, %v724
        %vm727 = vsmask.f32 5376
        %v729 = vshrl.u32 %v725, 16
        %v731 = vrot.slane %v729, 2
        %v732 = vshll.u32 %v725, 16
        %v734 = vrot.slane %v732, 3
        %v735 = vor.u32 %v731, %v734
        %v737 = vshrl.u32 %v726, 16
        %v739 = vrot.slane %v737, 2
        %v740 = vshll.u32 %v726, 16
        %v742 = vrot.slane %v740, 3
        %v743 = vor.u32 %v739, %v742
        %v744 = vsel %vm727, %v735, %v743
        %v762 = vunpack.c.l.b16 %v705
        %v763 = vunpack.c.l.b16 %v706
        %v764 = vunpack.c.l.b16 %v707
        %v765 = vunpack.c.l.b16 %v708
        %v766 = vunpack.c.l.b16 %v709
        %v767 = vunpack.c.l.b16 %v710
        %v768 = vunpack.c.l.b16 %v711
        %v769 = vunpack.c.l.b16 %v712
        %v770 = vunpack.c.l.b16 %v713
        %v771 = vunpack.c.l.b16 %v714
        %v772 = vunpack.c.l.b16 %v715
        %v773 = vunpack.c.l.b16 %v716
        %v774 = vunpack.c.l.b16 %v717
        %v775 = vunpack.c.l.b16 %v718
        %v776 = vunpack.c.l.b16 %v719
        %v777 = vunpack.c.l.b16 %v720
        %v778 = vpack.c.b16 %v763, %v762
        %v779 = vpack.c.b16 %v765, %v764
        %v780 = vpack.c.b16 %v767, %v766
        %v781 = vpack.c.b16 %v769, %v768
        %v782 = vpack.c.b16 %v771, %v770
        %v783 = vpack.c.b16 %v773, %v772
        %v784 = vpack.c.b16 %v775, %v774
        %v785 = vpack.c.b16 %v777, %v776
        %794 = vmatprep.subr.bf16.mxu0 0
        %795 = vmatpush1.bf16.msra.mxu0 %v778
        %796 = vmatprep.subr.bf16.mxu0 0
        %797 = vmatpush1.bf16.msra.mxu0 %v779
        %798 = vmatprep.subr.bf16.mxu0 0
        %799 = vmatpush1.bf16.msra.mxu0 %v780
        %800 = vmatprep.subr.bf16.mxu0 0
        %801 = vmatpush1.bf16.msra.mxu0 %v781
        %802 = vmatprep.subr.bf16.mxu0 0
        %803 = vmatpush1.bf16.msra.mxu0 %v782
        %804 = vmatprep.subr.bf16.mxu0 0
        %805 = vmatpush1.bf16.msra.mxu0 %v783
        %806 = vmatprep.subr.bf16.mxu0 0
        %807 = vmatpush1.bf16.msra.mxu0 %v784
        %808 = vmatprep.subr.bf16.mxu0 0
        %809 = vmatpush1.bf16.msra.mxu0 %v785
        %810 = vmatprep.subr.bf16.mxu0 0
        %811 = vmatpush1.bf16.msra.mxu0 0
        %812 = vmatprep.subr.bf16.mxu0 0
        %813 = vmatpush1.bf16.msra.mxu0 0
        %814 = vmatprep.subr.bf16.mxu0 0
        %815 = vmatpush1.bf16.msra.mxu0 0
        %816 = vmatprep.subr.bf16.mxu0 0
        %817 = vmatpush1.bf16.msra.mxu0 0
        %818 = vmatprep.subr.bf16.mxu0 0
        %819 = vmatpush1.bf16.msra.mxu0 0
        %820 = vmatprep.subr.bf16.mxu0 0
        %821 = vmatpush1.bf16.msra.mxu0 0
        %822 = vmatprep.subr.bf16.mxu0 0
        %823 = vmatpush1.bf16.msra.mxu0 0
        %824 = vmatprep.subr.bf16.mxu0 0
        %825 = vmatpush1.bf16.msra.mxu0 0
        %826 = vmatprep.mubr.bf16.mxu0 0
        %827 = vmatmul.mubr.bf16.gmra.mrb[0].mxu0 %v744
        %v828 = vpop.f32.mrb[0].mxu0
        %v829 = vadd.f32 0.0, %v828
        %v830 = vpop.f32.mrb[0].mxu0
        %v831 = vpop.f32.mrb[0].mxu0
        %v832 = vadd.f32 0.0, %v831
        %v833 = vpop.f32.mrb[0].mxu0
        %834 = vdwg.mxu0
        %v835 = vadd.f32 %v700, %v829
        %v836 = vadd.f32 %v701, %v832
        %v837 = vld [vmem:[%s185] sm:$0x8]
        %s838 = scalar_lea.vmem [#allocation5], 320
        %v839 = vld [vmem:[%s838] sm:$0xf]
        %v840 = vld [vmem:[%s838 + $0x4] sm:$0xf]
        %v841 = vld [vmem:[%s838 + $0x8] sm:$0xf]
        %v842 = vld [vmem:[%s838 + $0xc] sm:$0xf]
        %v843 = vld [vmem:[%s838 + $0x10] sm:$0xf]
        %v844 = vld [vmem:[%s838 + $0x14] sm:$0xf]
        %v845 = vld [vmem:[%s838 + $0x18] sm:$0xf]
        %v846 = vld [vmem:[%s838 + $0x1c] sm:$0xf]
        %v847 = vld [vmem:[%s838 + $0x20] sm:$0xf]
        %v848 = vld [vmem:[%s838 + $0x24] sm:$0xf]
        %v849 = vld [vmem:[%s838 + $0x28] sm:$0xf]
        %v850 = vld [vmem:[%s838 + $0x2c] sm:$0xf]
        %v851 = vld [vmem:[%s838 + $0x30] sm:$0xf]
        %v852 = vld [vmem:[%s838 + $0x34] sm:$0xf]
        %v853 = vld [vmem:[%s838 + $0x38] sm:$0xf]
        %v854 = vld [vmem:[%s838 + $0x3c] sm:$0xf]
        %v856 = vunpack.c.l.b16 %v837
        %v857 = vpack.c.b16 %v257, %v856
        %vm858 = vcmask 1044480
        %v859 = vrot.slane %v857, 3
        %v860 = vrot.slane %v726, 3
        %v861 = vsel %vm858, %v859, %v860
        %v879 = vunpack.c.l.b16 %v839
        %v880 = vunpack.c.l.b16 %v840
        %v881 = vunpack.c.l.b16 %v841
        %v882 = vunpack.c.l.b16 %v842
        %v883 = vunpack.c.l.b16 %v843
        %v884 = vunpack.c.l.b16 %v844
        %v885 = vunpack.c.l.b16 %v845
        %v886 = vunpack.c.l.b16 %v846
        %v887 = vunpack.c.l.b16 %v847
        %v888 = vunpack.c.l.b16 %v848
        %v889 = vunpack.c.l.b16 %v849
        %v890 = vunpack.c.l.b16 %v850
        %v891 = vunpack.c.l.b16 %v851
        %v892 = vunpack.c.l.b16 %v852
        %v893 = vunpack.c.l.b16 %v853
        %v894 = vunpack.c.l.b16 %v854
        %v895 = vpack.c.b16 %v880, %v879
        %v896 = vpack.c.b16 %v882, %v881
        %v897 = vpack.c.b16 %v884, %v883
        %v898 = vpack.c.b16 %v886, %v885
        %v899 = vpack.c.b16 %v888, %v887
        %v900 = vpack.c.b16 %v890, %v889
        %v901 = vpack.c.b16 %v892, %v891
        %v902 = vpack.c.b16 %v894, %v893
        %911 = vmatprep.subr.bf16.mxu0 0
        %912 = vmatpush1.bf16.msra.mxu0 %v895
        %913 = vmatprep.subr.bf16.mxu0 0
        %914 = vmatpush1.bf16.msra.mxu0 %v896
        %915 = vmatprep.subr.bf16.mxu0 0
        %916 = vmatpush1.bf16.msra.mxu0 %v897
        %917 = vmatprep.subr.bf16.mxu0 0
        %918 = vmatpush1.bf16.msra.mxu0 %v898
        %919 = vmatprep.subr.bf16.mxu0 0
        %920 = vmatpush1.bf16.msra.mxu0 %v899
        %921 = vmatprep.subr.bf16.mxu0 0
        %922 = vmatpush1.bf16.msra.mxu0 %v900
        %923 = vmatprep.subr.bf16.mxu0 0
        %924 = vmatpush1.bf16.msra.mxu0 %v901
        %925 = vmatprep.subr.bf16.mxu0 0
        %926 = vmatpush1.bf16.msra.mxu0 %v902
        %927 = vmatprep.subr.bf16.mxu0 0
        %928 = vmatpush1.bf16.msra.mxu0 0
        %929 = vmatprep.subr.bf16.mxu0 0
        %930 = vmatpush1.bf16.msra.mxu0 0
        %931 = vmatprep.subr.bf16.mxu0 0
        %932 = vmatpush1.bf16.msra.mxu0 0
        %933 = vmatprep.subr.bf16.mxu0 0
        %934 = vmatpush1.bf16.msra.mxu0 0
        %935 = vmatprep.subr.bf16.mxu0 0
        %936 = vmatpush1.bf16.msra.mxu0 0
        %937 = vmatprep.subr.bf16.mxu0 0
        %938 = vmatpush1.bf16.msra.mxu0 0
        %939 = vmatprep.subr.bf16.mxu0 0
        %940 = vmatpush1.bf16.msra.mxu0 0
        %941 = vmatprep.subr.bf16.mxu0 0
        %942 = vmatpush1.bf16.msra.mxu0 0
        %943 = vmatprep.mubr.bf16.mxu0 0
        %944 = vmatmul.mubr.bf16.gmra.mrb[0].mxu0 %v861
        %v945 = vpop.f32.mrb[0].mxu0
        %v946 = vadd.f32 0.0, %v945
        %v947 = vpop.f32.mrb[0].mxu0
        %v948 = vpop.f32.mrb[0].mxu0
        %v949 = vadd.f32 0.0, %v948
        %v950 = vpop.f32.mrb[0].mxu0
        %951 = vdwg.mxu0
        %v952 = vadd.f32 %v835, %v946
        %v953 = vadd.f32 %v836, %v949
        %v954 = vld [vmem:[%s185 + $0x8] sm:$0xf]
        %s955 = scalar_lea.vmem [#allocation5], 384
        %v956 = vld [vmem:[%s955] sm:$0xf]
        %v957 = vld [vmem:[%s955 + $0x4] sm:$0xf]
        %v958 = vld [vmem:[%s955 + $0x8] sm:$0xf]
        %v959 = vld [vmem:[%s955 + $0xc] sm:$0xf]
        %v960 = vld [vmem:[%s955 + $0x10] sm:$0xf]
        %v961 = vld [vmem:[%s955 + $0x14] sm:$0xf]
        %v962 = vld [vmem:[%s955 + $0x18] sm:$0xf]
        %v963 = vld [vmem:[%s955 + $0x1c] sm:$0xf]
        %v964 = vld [vmem:[%s955 + $0x20] sm:$0xf]
        %v965 = vld [vmem:[%s955 + $0x24] sm:$0xf]
        %v966 = vld [vmem:[%s955 + $0x28] sm:$0xf]
        %v967 = vld [vmem:[%s955 + $0x2c] sm:$0xf]
        %v968 = vld [vmem:[%s955 + $0x30] sm:$0xf]
        %v969 = vld [vmem:[%s955 + $0x34] sm:$0xf]
        %v970 = vld [vmem:[%s955 + $0x38] sm:$0xf]
        %v971 = vld [vmem:[%s955 + $0x3c] sm:$0xf]
        %v973 = vunpack.c.l.b16 %v954
        %v974 = vpack.c.b16 %v973, %v973
        %vm975 = vsmask.f32 4352
        %v977 = vshrl.u32 %v857, 16
        %v979 = vrot.slane %v977, 3
        %v980 = vshll.u32 %v857, 16
        %v982 = vrot.slane %v980, 4
        %v983 = vor.u32 %v979, %v982
        %v985 = vshrl.u32 %v974, 16
        %v987 = vrot.slane %v985, 3
        %v988 = vshll.u32 %v974, 16
        %v990 = vrot.slane %v988, 4
        %v991 = vor.u32 %v987, %v990
        %v992 = vsel %vm975, %v983, %v991
        %v1010 = vunpack.c.l.b16 %v956
        %v1011 = vunpack.c.l.b16 %v957
        %v1012 = vunpack.c.l.b16 %v958
        %v1013 = vunpack.c.l.b16 %v959
        %v1014 = vunpack.c.l.b16 %v960
        %v1015 = vunpack.c.l.b16 %v961
        %v1016 = vunpack.c.l.b16 %v962
        %v1017 = vunpack.c.l.b16 %v963
        %v1018 = vunpack.c.l.b16 %v964
        %v1019 = vunpack.c.l.b16 %v965
        %v1020 = vunpack.c.l.b16 %v966
        %v1021 = vunpack.c.l.b16 %v967
        %v1022 = vunpack.c.l.b16 %v968
        %v1023 = vunpack.c.l.b16 %v969
        %v1024 = vunpack.c.l.b16 %v970
        %v1025 = vunpack.c.l.b16 %v971
        %v1026 = vpack.c.b16 %v1011, %v1010
        %v1027 = vpack.c.b16 %v1013, %v1012
        %v1028 = vpack.c.b16 %v1015, %v1014
        %v1029 = vpack.c.b16 %v1017, %v1016
        %v1030 = vpack.c.b16 %v1019, %v1018
        %v1031 = vpack.c.b16 %v1021, %v1020
        %v1032 = vpack.c.b16 %v1023, %v1022
        %v1033 = vpack.c.b16 %v1025, %v1024
        %1042 = vmatprep.subr.bf16.mxu0 0
        %1043 = vmatpush1.bf16.msra.mxu0 %v1026
        %1044 = vmatprep.subr.bf16.mxu0 0
        %1045 = vmatpush1.bf16.msra.mxu0 %v1027
        %1046 = vmatprep.subr.bf16.mxu0 0
        %1047 = vmatpush1.bf16.msra.mxu0 %v1028
        %1048 = vmatprep.subr.bf16.mxu0 0
        %1049 = vmatpush1.bf16.msra.mxu0 %v1029
        %1050 = vmatprep.subr.bf16.mxu0 0
        %1051 = vmatpush1.bf16.msra.mxu0 %v1030
        %1052 = vmatprep.subr.bf16.mxu0 0
        %1053 = vmatpush1.bf16.msra.mxu0 %v1031
        %1054 = vmatprep.subr.bf16.mxu0 0
        %1055 = vmatpush1.bf16.msra.mxu0 %v1032
        %1056 = vmatprep.subr.bf16.mxu0 0
        %1057 = vmatpush1.bf16.msra.mxu0 %v1033
        %1058 = vmatprep.subr.bf16.mxu0 0
        %1059 = vmatpush1.bf16.msra.mxu0 0
        %1060 = vmatprep.subr.bf16.mxu0 0
        %1061 = vmatpush1.bf16.msra.mxu0 0
        %1062 = vmatprep.subr.bf16.mxu0 0
        %1063 = vmatpush1.bf16.msra.mxu0 0
        %1064 = vmatprep.subr.bf16.mxu0 0
        %1065 = vmatpush1.bf16.msra.mxu0 0
        %1066 = vmatprep.subr.bf16.mxu0 0
        %1067 = vmatpush1.bf16.msra.mxu0 0
        %1068 = vmatprep.subr.bf16.mxu0 0
        %1069 = vmatpush1.bf16.msra.mxu0 0
        %1070 = vmatprep.subr.bf16.mxu0 0
        %1071 = vmatpush1.bf16.msra.mxu0 0
        %1072 = vmatprep.subr.bf16.mxu0 0
        %1073 = vmatpush1.bf16.msra.mxu0 0
        %1074 = vmatprep.mubr.bf16.mxu0 0
        %1075 = vmatmul.mubr.bf16.gmra.mrb[0].mxu0 %v992
        %v1076 = vpop.f32.mrb[0].mxu0
        %v1077 = vadd.f32 0.0, %v1076
        %v1078 = vpop.f32.mrb[0].mxu0
        %v1079 = vpop.f32.mrb[0].mxu0
        %v1080 = vadd.f32 0.0, %v1079
        %v1081 = vpop.f32.mrb[0].mxu0
        %1082 = vdwg.mxu0
        %v1083 = vadd.f32 %v952, %v1077
        %v1084 = vadd.f32 %v953, %v1080
        %s1085 = scalar_lea.vmem [#allocation5], 448
        %v1086 = vld [vmem:[%s1085] sm:$0xf]
        %v1087 = vld [vmem:[%s1085 + $0x4] sm:$0xf]
        %v1088 = vld [vmem:[%s1085 + $0x8] sm:$0xf]
        %v1089 = vld [vmem:[%s1085 + $0xc] sm:$0xf]
        %v1090 = vld [vmem:[%s1085 + $0x10] sm:$0xf]
        %v1091 = vld [vmem:[%s1085 + $0x14] sm:$0xf]
        %v1092 = vld [vmem:[%s1085 + $0x18] sm:$0xf]
        %v1093 = vld [vmem:[%s1085 + $0x1c] sm:$0xf]
        %v1094 = vld [vmem:[%s1085 + $0x20] sm:$0xf]
        %v1095 = vld [vmem:[%s1085 + $0x24] sm:$0xf]
        %v1096 = vld [vmem:[%s1085 + $0x28] sm:$0xf]
        %v1097 = vld [vmem:[%s1085 + $0x2c] sm:$0xf]
        %v1098 = vld [vmem:[%s1085 + $0x30] sm:$0xf]
        %v1099 = vld [vmem:[%s1085 + $0x34] sm:$0xf]
        %v1100 = vld [vmem:[%s1085 + $0x38] sm:$0xf]
        %v1101 = vld [vmem:[%s1085 + $0x3c] sm:$0xf]
        %v1102 = vpack.c.b16 %v973, %v257
        %v1120 = vunpack.c.l.b16 %v1086
        %v1121 = vunpack.c.l.b16 %v1087
        %v1122 = vunpack.c.l.b16 %v1088
        %v1123 = vunpack.c.l.b16 %v1089
        %v1124 = vunpack.c.l.b16 %v1090
        %v1125 = vunpack.c.l.b16 %v1091
        %v1126 = vunpack.c.l.b16 %v1092
        %v1127 = vunpack.c.l.b16 %v1093
        %v1128 = vunpack.c.l.b16 %v1094
        %v1129 = vunpack.c.l.b16 %v1095
        %v1130 = vunpack.c.l.b16 %v1096
        %v1131 = vunpack.c.l.b16 %v1097
        %v1132 = vunpack.c.l.b16 %v1098
        %v1133 = vunpack.c.l.b16 %v1099
        %v1134 = vunpack.c.l.b16 %v1100
        %v1135 = vunpack.c.l.b16 %v1101
        %v1136 = vpack.c.b16 %v1121, %v1120
        %v1137 = vpack.c.b16 %v1123, %v1122
        %v1138 = vpack.c.b16 %v1125, %v1124
        %v1139 = vpack.c.b16 %v1127, %v1126
        %v1140 = vpack.c.b16 %v1129, %v1128
        %v1141 = vpack.c.b16 %v1131, %v1130
        %v1142 = vpack.c.b16 %v1133, %v1132
        %v1143 = vpack.c.b16 %v1135, %v1134
        %1152 = vmatprep.subr.bf16.mxu0 0
        %1153 = vmatpush1.bf16.msra.mxu0 %v1136
        %1154 = vmatprep.subr.bf16.mxu0 0
        %1155 = vmatpush1.bf16.msra.mxu0 %v1137
        %1156 = vmatprep.subr.bf16.mxu0 0
        %1157 = vmatpush1.bf16.msra.mxu0 %v1138
        %1158 = vmatprep.subr.bf16.mxu0 0
        %1159 = vmatpush1.bf16.msra.mxu0 %v1139
        %1160 = vmatprep.subr.bf16.mxu0 0
        %1161 = vmatpush1.bf16.msra.mxu0 %v1140
        %1162 = vmatprep.subr.bf16.mxu0 0
        %1163 = vmatpush1.bf16.msra.mxu0 %v1141
        %1164 = vmatprep.subr.bf16.mxu0 0
        %1165 = vmatpush1.bf16.msra.mxu0 %v1142
        %1166 = vmatprep.subr.bf16.mxu0 0
        %1167 = vmatpush1.bf16.msra.mxu0 %v1143
        %1168 = vmatprep.subr.bf16.mxu0 0
        %1169 = vmatpush1.bf16.msra.mxu0 0
        %1170 = vmatprep.subr.bf16.mxu0 0
        %1171 = vmatpush1.bf16.msra.mxu0 0
        %1172 = vmatprep.subr.bf16.mxu0 0
        %1173 = vmatpush1.bf16.msra.mxu0 0
        %1174 = vmatprep.subr.bf16.mxu0 0
        %1175 = vmatpush1.bf16.msra.mxu0 0
        %1176 = vmatprep.subr.bf16.mxu0 0
        %1177 = vmatpush1.bf16.msra.mxu0 0
        %1178 = vmatprep.subr.bf16.mxu0 0
        %1179 = vmatpush1.bf16.msra.mxu0 0
        %1180 = vmatprep.subr.bf16.mxu0 0
        %1181 = vmatpush1.bf16.msra.mxu0 0
        %1182 = vmatprep.subr.bf16.mxu0 0
        %1183 = vmatpush1.bf16.msra.mxu0 0
        %1184 = vmatprep.mubr.bf16.mxu0 0
        %1185 = vmatmul.mubr.bf16.gmra.mrb[0].mxu0 %v1102
        %v1186 = vpop.f32.mrb[0].mxu0
        %v1187 = vadd.f32 0.0, %v1186
        %v1188 = vpop.f32.mrb[0].mxu0
        %v1189 = vpop.f32.mrb[0].mxu0
        %v1190 = vadd.f32 0.0, %v1189
        %v1191 = vpop.f32.mrb[0].mxu0
        %1192 = vdwg.mxu0
        %v1193 = vadd.f32 %v1083, %v1187
        %v1194 = vadd.f32 %v1084, %v1190
        %v1195 = vld [vmem:[%s185 + $0x4] sm:$0xe]
        %v1196 = vld [vmem:[%s185 + $0x8] sm:$0xf]
        %v1197 = vld [vmem:[%s185 + $0xc] sm:$0x1]
        %s1198 = scalar_lea.vmem [#allocation5], 512
        %v1199 = vld [vmem:[%s1198] sm:$0xf]
        %v1200 = vld [vmem:[%s1198 + $0x4] sm:$0xf]
        %v1201 = vld [vmem:[%s1198 + $0x8] sm:$0xf]
        %v1202 = vld [vmem:[%s1198 + $0xc] sm:$0xf]
        %v1203 = vld [vmem:[%s1198 + $0x10] sm:$0xf]
        %v1204 = vld [vmem:[%s1198 + $0x14] sm:$0xf]
        %v1205 = vld [vmem:[%s1198 + $0x18] sm:$0xf]
        %v1206 = vld [vmem:[%s1198 + $0x1c] sm:$0xf]
        %v1207 = vld [vmem:[%s1198 + $0x20] sm:$0xf]
        %v1208 = vld [vmem:[%s1198 + $0x24] sm:$0xf]
        %v1209 = vld [vmem:[%s1198 + $0x28] sm:$0xf]
        %v1210 = vld [vmem:[%s1198 + $0x2c] sm:$0xf]
        %v1211 = vld [vmem:[%s1198 + $0x30] sm:$0xf]
        %v1212 = vld [vmem:[%s1198 + $0x34] sm:$0xf]
        %v1213 = vld [vmem:[%s1198 + $0x38] sm:$0xf]
        %v1214 = vld [vmem:[%s1198 + $0x3c] sm:$0xf]
        %v1218 = vunpack.c.l.b16 %v1195
        %v1219 = vunpack.c.l.b16 %v1196
        %v1220 = vunpack.c.l.b16 %v1197
        %v1221 = vpack.c.b16 %v1219, %v1218
        %v1222 = vpack.c.b16 %v1220, %v1220
        %v1223 = vrot.slane %v1221, 1
        %v1224 = vrot.slane %v1222, 1
        %v1225 = vsel %vm475, %v1223, %v1224
        %v1243 = vunpack.c.l.b16 %v1199
        %v1244 = vunpack.c.l.b16 %v1200
        %v1245 = vunpack.c.l.b16 %v1201
        %v1246 = vunpack.c.l.b16 %v1202
        %v1247 = vunpack.c.l.b16 %v1203
        %v1248 = vunpack.c.l.b16 %v1204
        %v1249 = vunpack.c.l.b16 %v1205
        %v1250 = vunpack.c.l.b16 %v1206
        %v1251 = vunpack.c.l.b16 %v1207
        %v1252 = vunpack.c.l.b16 %v1208
        %v1253 = vunpack.c.l.b16 %v1209
        %v1254 = vunpack.c.l.b16 %v1210
        %v1255 = vunpack.c.l.b16 %v1211
        %v1256 = vunpack.c.l.b16 %v1212
        %v1257 = vunpack.c.l.b16 %v1213
        %v1258 = vunpack.c.l.b16 %v1214
        %v1259 = vpack.c.b16 %v1244, %v1243
        %v1260 = vpack.c.b16 %v1246, %v1245
        %v1261 = vpack.c.b16 %v1248, %v1247
        %v1262 = vpack.c.b16 %v1250, %v1249
        %v1263 = vpack.c.b16 %v1252, %v1251
        %v1264 = vpack.c.b16 %v1254, %v1253
        %v1265 = vpack.c.b16 %v1256, %v1255
        %v1266 = vpack.c.b16 %v1258, %v1257
        %1275 = vmatprep.subr.bf16.mxu0 0
        %1276 = vmatpush1.bf16.msra.mxu0 %v1259
        %1277 = vmatprep.subr.bf16.mxu0 0
        %1278 = vmatpush1.bf16.msra.mxu0 %v1260
        %1279 = vmatprep.subr.bf16.mxu0 0
        %1280 = vmatpush1.bf16.msra.mxu0 %v1261
        %1281 = vmatprep.subr.bf16.mxu0 0
        %1282 = vmatpush1.bf16.msra.mxu0 %v1262
        %1283 = vmatprep.subr.bf16.mxu0 0
        %1284 = vmatpush1.bf16.msra.mxu0 %v1263
        %1285 = vmatprep.subr.bf16.mxu0 0
        %1286 = vmatpush1.bf16.msra.mxu0 %v1264
        %1287 = vmatprep.subr.bf16.mxu0 0
        %1288 = vmatpush1.bf16.msra.mxu0 %v1265
        %1289 = vmatprep.subr.bf16.mxu0 0
        %1290 = vmatpush1.bf16.msra.mxu0 %v1266
        %1291 = vmatprep.subr.bf16.mxu0 0
        %1292 = vmatpush1.bf16.msra.mxu0 0
        %1293 = vmatprep.subr.bf16.mxu0 0
        %1294 = vmatpush1.bf16.msra.mxu0 0
        %1295 = vmatprep.subr.bf16.mxu0 0
        %1296 = vmatpush1.bf16.msra.mxu0 0
        %1297 = vmatprep.subr.bf16.mxu0 0
        %1298 = vmatpush1.bf16.msra.mxu0 0
        %1299 = vmatprep.subr.bf16.mxu0 0
        %1300 = vmatpush1.bf16.msra.mxu0 0
        %1301 = vmatprep.subr.bf16.mxu0 0
        %1302 = vmatpush1.bf16.msra.mxu0 0
        %1303 = vmatprep.subr.bf16.mxu0 0
        %1304 = vmatpush1.bf16.msra.mxu0 0
        %1305 = vmatprep.subr.bf16.mxu0 0
        %1306 = vmatpush1.bf16.msra.mxu0 0
        %1307 = vmatprep.mubr.bf16.mxu0 0
        %1308 = vmatmul.mubr.bf16.gmra.mrb[0].mxu0 %v1225
        %v1309 = vpop.f32.mrb[0].mxu0
        %v1310 = vadd.f32 0.0, %v1309
        %v1311 = vpop.f32.mrb[0].mxu0
        %v1312 = vpop.f32.mrb[0].mxu0
        %v1313 = vadd.f32 0.0, %v1312
        %v1314 = vpop.f32.mrb[0].mxu0
        %1315 = vdwg.mxu0
        %v1316 = vadd.f32 %v1193, %v1310
        %v1317 = vadd.f32 %v1194, %v1313
        %v1318 = vld [vmem:[%s185 + $0xc] sm:$0x3]
        %s1319 = scalar_lea.vmem [#allocation5], 576
        %v1320 = vld [vmem:[%s1319] sm:$0xf]
        %v1321 = vld [vmem:[%s1319 + $0x4] sm:$0xf]
        %v1322 = vld [vmem:[%s1319 + $0x8] sm:$0xf]
        %v1323 = vld [vmem:[%s1319 + $0xc] sm:$0xf]
        %v1324 = vld [vmem:[%s1319 + $0x10] sm:$0xf]
        %v1325 = vld [vmem:[%s1319 + $0x14] sm:$0xf]
        %v1326 = vld [vmem:[%s1319 + $0x18] sm:$0xf]
        %v1327 = vld [vmem:[%s1319 + $0x1c] sm:$0xf]
        %v1328 = vld [vmem:[%s1319 + $0x20] sm:$0xf]
        %v1329 = vld [vmem:[%s1319 + $0x24] sm:$0xf]
        %v1330 = vld [vmem:[%s1319 + $0x28] sm:$0xf]
        %v1331 = vld [vmem:[%s1319 + $0x2c] sm:$0xf]
        %v1332 = vld [vmem:[%s1319 + $0x30] sm:$0xf]
        %v1333 = vld [vmem:[%s1319 + $0x34] sm:$0xf]
        %v1334 = vld [vmem:[%s1319 + $0x38] sm:$0xf]
        %v1335 = vld [vmem:[%s1319 + $0x3c] sm:$0xf]
        %v1337 = vunpack.c.l.b16 %v1318
        %v1338 = vpack.c.b16 %v1337, %v1337
        %v1340 = vshrl.u32 %v1221, 16
        %v1342 = vrot.slane %v1340, 1
        %v1343 = vshll.u32 %v1221, 16
        %v1345 = vrot.slane %v1343, 2
        %v1346 = vor.u32 %v1342, %v1345
        %v1348 = vshrl.u32 %v1338, 16
        %v1350 = vrot.slane %v1348, 1
        %v1351 = vshll.u32 %v1338, 16
        %v1353 = vrot.slane %v1351, 2
        %v1354 = vor.u32 %v1350, %v1353
        %v1355 = vsel %vm592, %v1346, %v1354
        %v1373 = vunpack.c.l.b16 %v1320
        %v1374 = vunpack.c.l.b16 %v1321
        %v1375 = vunpack.c.l.b16 %v1322
        %v1376 = vunpack.c.l.b16 %v1323
        %v1377 = vunpack.c.l.b16 %v1324
        %v1378 = vunpack.c.l.b16 %v1325
        %v1379 = vunpack.c.l.b16 %v1326
        %v1380 = vunpack.c.l.b16 %v1327
        %v1381 = vunpack.c.l.b16 %v1328
        %v1382 = vunpack.c.l.b16 %v1329
        %v1383 = vunpack.c.l.b16 %v1330
        %v1384 = vunpack.c.l.b16 %v1331
        %v1385 = vunpack.c.l.b16 %v1332
        %v1386 = vunpack.c.l.b16 %v1333
        %v1387 = vunpack.c.l.b16 %v1334
        %v1388 = vunpack.c.l.b16 %v1335
        %v1389 = vpack.c.b16 %v1374, %v1373
        %v1390 = vpack.c.b16 %v1376, %v1375
        %v1391 = vpack.c.b16 %v1378, %v1377
        %v1392 = vpack.c.b16 %v1380, %v1379
        %v1393 = vpack.c.b16 %v1382, %v1381
        %v1394 = vpack.c.b16 %v1384, %v1383
        %v1395 = vpack.c.b16 %v1386, %v1385
        %v1396 = vpack.c.b16 %v1388, %v1387
        %1405 = vmatprep.subr.bf16.mxu0 0
        %1406 = vmatpush1.bf16.msra.mxu0 %v1389
        %1407 = vmatprep.subr.bf16.mxu0 0
        %1408 = vmatpush1.bf16.msra.mxu0 %v1390
        %1409 = vmatprep.subr.bf16.mxu0 0
        %1410 = vmatpush1.bf16.msra.mxu0 %v1391
        %1411 = vmatprep.subr.bf16.mxu0 0
        %1412 = vmatpush1.bf16.msra.mxu0 %v1392
        %1413 = vmatprep.subr.bf16.mxu0 0
        %1414 = vmatpush1.bf16.msra.mxu0 %v1393
        %1415 = vmatprep.subr.bf16.mxu0 0
        %1416 = vmatpush1.bf16.msra.mxu0 %v1394
        %1417 = vmatprep.subr.bf16.mxu0 0
        %1418 = vmatpush1.bf16.msra.mxu0 %v1395
        %1419 = vmatprep.subr.bf16.mxu0 0
        %1420 = vmatpush1.bf16.msra.mxu0 %v1396
        %1421 = vmatprep.subr.bf16.mxu0 0
        %1422 = vmatpush1.bf16.msra.mxu0 0
        %1423 = vmatprep.subr.bf16.mxu0 0
        %1424 = vmatpush1.bf16.msra.mxu0 0
        %1425 = vmatprep.subr.bf16.mxu0 0
        %1426 = vmatpush1.bf16.msra.mxu0 0
        %1427 = vmatprep.subr.bf16.mxu0 0
        %1428 = vmatpush1.bf16.msra.mxu0 0
        %1429 = vmatprep.subr.bf16.mxu0 0
        %1430 = vmatpush1.bf16.msra.mxu0 0
        %1431 = vmatprep.subr.bf16.mxu0 0
        %1432 = vmatpush1.bf16.msra.mxu0 0
        %1433 = vmatprep.subr.bf16.mxu0 0
        %1434 = vmatpush1.bf16.msra.mxu0 0
        %1435 = vmatprep.subr.bf16.mxu0 0
        %1436 = vmatpush1.bf16.msra.mxu0 0
        %1437 = vmatprep.mubr.bf16.mxu0 0
        %1438 = vmatmul.mubr.bf16.gmra.mrb[0].mxu0 %v1355
        %v1439 = vpop.f32.mrb[0].mxu0
        %v1440 = vadd.f32 0.0, %v1439
        %v1441 = vpop.f32.mrb[0].mxu0
        %v1442 = vpop.f32.mrb[0].mxu0
        %v1443 = vadd.f32 0.0, %v1442
        %v1444 = vpop.f32.mrb[0].mxu0
        %1445 = vdwg.mxu0
        %v1446 = vadd.f32 %v1316, %v1440
        %v1447 = vadd.f32 %v1317, %v1443
        %v1448 = vld [vmem:[%s185 + $0x4] sm:$0xc]
        %s1449 = scalar_lea.vmem [#allocation5], 640
        %v1450 = vld [vmem:[%s1449] sm:$0xf]
        %v1451 = vld [vmem:[%s1449 + $0x4] sm:$0xf]
        %v1452 = vld [vmem:[%s1449 + $0x8] sm:$0xf]
        %v1453 = vld [vmem:[%s1449 + $0xc] sm:$0xf]
        %v1454 = vld [vmem:[%s1449 + $0x10] sm:$0xf]
        %v1455 = vld [vmem:[%s1449 + $0x14] sm:$0xf]
        %v1456 = vld [vmem:[%s1449 + $0x18] sm:$0xf]
        %v1457 = vld [vmem:[%s1449 + $0x1c] sm:$0xf]
        %v1458 = vld [vmem:[%s1449 + $0x20] sm:$0xf]
        %v1459 = vld [vmem:[%s1449 + $0x24] sm:$0xf]
        %v1460 = vld [vmem:[%s1449 + $0x28] sm:$0xf]
        %v1461 = vld [vmem:[%s1449 + $0x2c] sm:$0xf]
        %v1462 = vld [vmem:[%s1449 + $0x30] sm:$0xf]
        %v1463 = vld [vmem:[%s1449 + $0x34] sm:$0xf]
        %v1464 = vld [vmem:[%s1449 + $0x38] sm:$0xf]
        %v1465 = vld [vmem:[%s1449 + $0x3c] sm:$0xf]
        %v1467 = vunpack.c.l.b16 %v1448
        %v1468 = vpack.c.b16 %v1219, %v1467
        %vm1469 = vcmask 1045504
        %v1470 = vrot.slane %v1468, 2
        %v1471 = vrot.slane %v1338, 2
        %v1472 = vsel %vm1469, %v1470, %v1471
        %v1490 = vunpack.c.l.b16 %v1450
        %v1491 = vunpack.c.l.b16 %v1451
        %v1492 = vunpack.c.l.b16 %v1452
        %v1493 = vunpack.c.l.b16 %v1453
        %v1494 = vunpack.c.l.b16 %v1454
        %v1495 = vunpack.c.l.b16 %v1455
        %v1496 = vunpack.c.l.b16 %v1456
        %v1497 = vunpack.c.l.b16 %v1457
        %v1498 = vunpack.c.l.b16 %v1458
        %v1499 = vunpack.c.l.b16 %v1459
        %v1500 = vunpack.c.l.b16 %v1460
        %v1501 = vunpack.c.l.b16 %v1461
        %v1502 = vunpack.c.l.b16 %v1462
        %v1503 = vunpack.c.l.b16 %v1463
        %v1504 = vunpack.c.l.b16 %v1464
        %v1505 = vunpack.c.l.b16 %v1465
        %v1506 = vpack.c.b16 %v1491, %v1490
        %v1507 = vpack.c.b16 %v1493, %v1492
        %v1508 = vpack.c.b16 %v1495, %v1494
        %v1509 = vpack.c.b16 %v1497, %v1496
        %v1510 = vpack.c.b16 %v1499, %v1498
        %v1511 = vpack.c.b16 %v1501, %v1500
        %v1512 = vpack.c.b16 %v1503, %v1502
        %v1513 = vpack.c.b16 %v1505, %v1504
        %1522 = vmatprep.subr.bf16.mxu0 0
        %1523 = vmatpush1.bf16.msra.mxu0 %v1506
        %1524 = vmatprep.subr.bf16.mxu0 0
        %1525 = vmatpush1.bf16.msra.mxu0 %v1507
        %1526 = vmatprep.subr.bf16.mxu0 0
        %1527 = vmatpush1.bf16.msra.mxu0 %v1508
        %1528 = vmatprep.subr.bf16.mxu0 0
        %1529 = vmatpush1.bf16.msra.mxu0 %v1509
        %1530 = vmatprep.subr.bf16.mxu0 0
        %1531 = vmatpush1.bf16.msra.mxu0 %v1510
        %1532 = vmatprep.subr.bf16.mxu0 0
        %1533 = vmatpush1.bf16.msra.mxu0 %v1511
        %1534 = vmatprep.subr.bf16.mxu0 0
        %1535 = vmatpush1.bf16.msra.mxu0 %v1512
        %1536 = vmatprep.subr.bf16.mxu0 0
        %1537 = vmatpush1.bf16.msra.mxu0 %v1513
        %1538 = vmatprep.subr.bf16.mxu0 0
        %1539 = vmatpush1.bf16.msra.mxu0 0
        %1540 = vmatprep.subr.bf16.mxu0 0
        %1541 = vmatpush1.bf16.msra.mxu0 0
        %1542 = vmatprep.subr.bf16.mxu0 0
        %1543 = vmatpush1.bf16.msra.mxu0 0
        %1544 = vmatprep.subr.bf16.mxu0 0
        %1545 = vmatpush1.bf16.msra.mxu0 0
        %1546 = vmatprep.subr.bf16.mxu0 0
        %1547 = vmatpush1.bf16.msra.mxu0 0
        %1548 = vmatprep.subr.bf16.mxu0 0
        %1549 = vmatpush1.bf16.msra.mxu0 0
        %1550 = vmatprep.subr.bf16.mxu0 0
        %1551 = vmatpush1.bf16.msra.mxu0 0
        %1552 = vmatprep.subr.bf16.mxu0 0
        %1553 = vmatpush1.bf16.msra.mxu0 0
        %1554 = vmatprep.mubr.bf16.mxu0 0
        %1555 = vmatmul.mubr.bf16.gmra.mrb[0].mxu0 %v1472
        %v1556 = vpop.f32.mrb[0].mxu0
        %v1557 = vadd.f32 0.0, %v1556
        %v1558 = vpop.f32.mrb[0].mxu0
        %v1559 = vpop.f32.mrb[0].mxu0
        %v1560 = vadd.f32 0.0, %v1559
        %v1561 = vpop.f32.mrb[0].mxu0
        %1562 = vdwg.mxu0
        %v1563 = vadd.f32 %v1446, %v1557
        %v1564 = vadd.f32 %v1447, %v1560
        %v1565 = vld [vmem:[%s185 + $0xc] sm:$0x7]
        %s1566 = scalar_lea.vmem [#allocation5], 704
        %v1567 = vld [vmem:[%s1566] sm:$0xf]
        %v1568 = vld [vmem:[%s1566 + $0x4] sm:$0xf]
        %v1569 = vld [vmem:[%s1566 + $0x8] sm:$0xf]
        %v1570 = vld [vmem:[%s1566 + $0xc] sm:$0xf]
        %v1571 = vld [vmem:[%s1566 + $0x10] sm:$0xf]
        %v1572 = vld [vmem:[%s1566 + $0x14] sm:$0xf]
        %v1573 = vld [vmem:[%s1566 + $0x18] sm:$0xf]
        %v1574 = vld [vmem:[%s1566 + $0x1c] sm:$0xf]
        %v1575 = vld [vmem:[%s1566 + $0x20] sm:$0xf]
        %v1576 = vld [vmem:[%s1566 + $0x24] sm:$0xf]
        %v1577 = vld [vmem:[%s1566 + $0x28] sm:$0xf]
        %v1578 = vld [vmem:[%s1566 + $0x2c] sm:$0xf]
        %v1579 = vld [vmem:[%s1566 + $0x30] sm:$0xf]
        %v1580 = vld [vmem:[%s1566 + $0x34] sm:$0xf]
        %v1581 = vld [vmem:[%s1566 + $0x38] sm:$0xf]
        %v1582 = vld [vmem:[%s1566 + $0x3c] sm:$0xf]
        %v1584 = vunpack.c.l.b16 %v1565
        %v1585 = vpack.c.b16 %v1584, %v1584
        %v1587 = vshrl.u32 %v1468, 16
        %v1589 = vrot.slane %v1587, 2
        %v1590 = vshll.u32 %v1468, 16
        %v1592 = vrot.slane %v1590, 3
        %v1593 = vor.u32 %v1589, %v1592
        %v1595 = vshrl.u32 %v1585, 16
        %v1597 = vrot.slane %v1595, 2
        %v1598 = vshll.u32 %v1585, 16
        %v1600 = vrot.slane %v1598, 3
        %v1601 = vor.u32 %v1597, %v1600
        %v1602 = vsel %vm727, %v1593, %v1601
        %v1620 = vunpack.c.l.b16 %v1567
        %v1621 = vunpack.c.l.b16 %v1568
        %v1622 = vunpack.c.l.b16 %v1569
        %v1623 = vunpack.c.l.b16 %v1570
        %v1624 = vunpack.c.l.b16 %v1571
        %v1625 = vunpack.c.l.b16 %v1572
        %v1626 = vunpack.c.l.b16 %v1573
        %v1627 = vunpack.c.l.b16 %v1574
        %v1628 = vunpack.c.l.b16 %v1575
        %v1629 = vunpack.c.l.b16 %v1576
        %v1630 = vunpack.c.l.b16 %v1577
        %v1631 = vunpack.c.l.b16 %v1578
        %v1632 = vunpack.c.l.b16 %v1579
        %v1633 = vunpack.c.l.b16 %v1580
        %v1634 = vunpack.c.l.b16 %v1581
        %v1635 = vunpack.c.l.b16 %v1582
        %v1636 = vpack.c.b16 %v1621, %v1620
        %v1637 = vpack.c.b16 %v1623, %v1622
        %v1638 = vpack.c.b16 %v1625, %v1624
        %v1639 = vpack.c.b16 %v1627, %v1626
        %v1640 = vpack.c.b16 %v1629, %v1628
        %v1641 = vpack.c.b16 %v1631, %v1630
        %v1642 = vpack.c.b16 %v1633, %v1632
        %v1643 = vpack.c.b16 %v1635, %v1634
        %1652 = vmatprep.subr.bf16.mxu0 0
        %1653 = vmatpush1.bf16.msra.mxu0 %v1636
        %1654 = vmatprep.subr.bf16.mxu0 0
        %1655 = vmatpush1.bf16.msra.mxu0 %v1637
        %1656 = vmatprep.subr.bf16.mxu0 0
        %1657 = vmatpush1.bf16.msra.mxu0 %v1638
        %1658 = vmatprep.subr.bf16.mxu0 0
        %1659 = vmatpush1.bf16.msra.mxu0 %v1639
        %1660 = vmatprep.subr.bf16.mxu0 0
        %1661 = vmatpush1.bf16.msra.mxu0 %v1640
        %1662 = vmatprep.subr.bf16.mxu0 0
        %1663 = vmatpush1.bf16.msra.mxu0 %v1641
        %1664 = vmatprep.subr.bf16.mxu0 0
        %1665 = vmatpush1.bf16.msra.mxu0 %v1642
        %1666 = vmatprep.subr.bf16.mxu0 0
        %1667 = vmatpush1.bf16.msra.mxu0 %v1643
        %1668 = vmatprep.subr.bf16.mxu0 0
        %1669 = vmatpush1.bf16.msra.mxu0 0
        %1670 = vmatprep.subr.bf16.mxu0 0
        %1671 = vmatpush1.bf16.msra.mxu0 0
        %1672 = vmatprep.subr.bf16.mxu0 0
        %1673 = vmatpush1.bf16.msra.mxu0 0
        %1674 = vmatprep.subr.bf16.mxu0 0
        %1675 = vmatpush1.bf16.msra.mxu0 0
        %1676 = vmatprep.subr.bf16.mxu0 0
        %1677 = vmatpush1.bf16.msra.mxu0 0
        %1678 = vmatprep.subr.bf16.mxu0 0
        %1679 = vmatpush1.bf16.msra.mxu0 0
        %1680 = vmatprep.subr.bf16.mxu0 0
        %1681 = vmatpush1.bf16.msra.mxu0 0
        %1682 = vmatprep.subr.bf16.mxu0 0
        %1683 = vmatpush1.bf16.msra.mxu0 0
        %1684 = vmatprep.mubr.bf16.mxu0 0
        %1685 = vmatmul.mubr.bf16.gmra.mrb[0].mxu0 %v1602
        %v1686 = vpop.f32.mrb[0].mxu0
        %v1687 = vadd.f32 0.0, %v1686
        %v1688 = vpop.f32.mrb[0].mxu0
        %v1689 = vpop.f32.mrb[0].mxu0
        %v1690 = vadd.f32 0.0, %v1689
        %v1691 = vpop.f32.mrb[0].mxu0
        %1692 = vdwg.mxu0
        %v1693 = vadd.f32 %v1563, %v1687
        %v1694 = vadd.f32 %v1564, %v1690
        %v1695 = vld [vmem:[%s185 + $0x4] sm:$0x8]
        %v1696 = vld [vmem:[%s185 + $0xc] sm:$0xf]
        %s1697 = scalar_lea.vmem [#allocation5], 768
        %v1698 = vld [vmem:[%s1697] sm:$0xf]
        %v1699 = vld [vmem:[%s1697 + $0x4] sm:$0xf]
        %v1700 = vld [vmem:[%s1697 + $0x8] sm:$0xf]
        %v1701 = vld [vmem:[%s1697 + $0xc] sm:$0xf]
        %v1702 = vld [vmem:[%s1697 + $0x10] sm:$0xf]
        %v1703 = vld [vmem:[%s1697 + $0x14] sm:$0xf]
        %v1704 = vld [vmem:[%s1697 + $0x18] sm:$0xf]
        %v1705 = vld [vmem:[%s1697 + $0x1c] sm:$0xf]
        %v1706 = vld [vmem:[%s1697 + $0x20] sm:$0xf]
        %v1707 = vld [vmem:[%s1697 + $0x24] sm:$0xf]
        %v1708 = vld [vmem:[%s1697 + $0x28] sm:$0xf]
        %v1709 = vld [vmem:[%s1697 + $0x2c] sm:$0xf]
        %v1710 = vld [vmem:[%s1697 + $0x30] sm:$0xf]
        %v1711 = vld [vmem:[%s1697 + $0x34] sm:$0xf]
        %v1712 = vld [vmem:[%s1697 + $0x38] sm:$0xf]
        %v1713 = vld [vmem:[%s1697 + $0x3c] sm:$0xf]
        %v1716 = vunpack.c.l.b16 %v1695
        %v1717 = vunpack.c.l.b16 %v1696
        %v1718 = vpack.c.b16 %v1219, %v1716
        %v1719 = vpack.c.b16 %v1717, %v1717
        %v1721 = vshrl.u32 %v1718, 16
        %v1723 = vrot.slane %v1721, 3
        %v1724 = vshll.u32 %v1718, 16
        %v1726 = vrot.slane %v1724, 4
        %v1727 = vor.u32 %v1723, %v1726
        %v1729 = vshrl.u32 %v1719, 16
        %v1731 = vrot.slane %v1729, 3
        %v1732 = vshll.u32 %v1719, 16
        %v1734 = vrot.slane %v1732, 4
        %v1735 = vor.u32 %v1731, %v1734
        %v1736 = vsel %vm975, %v1727, %v1735
        %v1754 = vunpack.c.l.b16 %v1698
        %v1755 = vunpack.c.l.b16 %v1699
        %v1756 = vunpack.c.l.b16 %v1700
        %v1757 = vunpack.c.l.b16 %v1701
        %v1758 = vunpack.c.l.b16 %v1702
        %v1759 = vunpack.c.l.b16 %v1703
        %v1760 = vunpack.c.l.b16 %v1704
        %v1761 = vunpack.c.l.b16 %v1705
        %v1762 = vunpack.c.l.b16 %v1706
        %v1763 = vunpack.c.l.b16 %v1707
        %v1764 = vunpack.c.l.b16 %v1708
        %v1765 = vunpack.c.l.b16 %v1709
        %v1766 = vunpack.c.l.b16 %v1710
        %v1767 = vunpack.c.l.b16 %v1711
        %v1768 = vunpack.c.l.b16 %v1712
        %v1769 = vunpack.c.l.b16 %v1713
        %v1770 = vpack.c.b16 %v1755, %v1754
        %v1771 = vpack.c.b16 %v1757, %v1756
        %v1772 = vpack.c.b16 %v1759, %v1758
        %v1773 = vpack.c.b16 %v1761, %v1760
        %v1774 = vpack.c.b16 %v1763, %v1762
        %v1775 = vpack.c.b16 %v1765, %v1764
        %v1776 = vpack.c.b16 %v1767, %v1766
        %v1777 = vpack.c.b16 %v1769, %v1768
        %1786 = vmatprep.subr.bf16.mxu0 0
        %1787 = vmatpush1.bf16.msra.mxu0 %v1770
        %1788 = vmatprep.subr.bf16.mxu0 0
        %1789 = vmatpush1.bf16.msra.mxu0 %v1771
        %1790 = vmatprep.subr.bf16.mxu0 0
        %1791 = vmatpush1.bf16.msra.mxu0 %v1772
        %1792 = vmatprep.subr.bf16.mxu0 0
        %1793 = vmatpush1.bf16.msra.mxu0 %v1773
        %1794 = vmatprep.subr.bf16.mxu0 0
        %1795 = vmatpush1.bf16.msra.mxu0 %v1774
        %1796 = vmatprep.subr.bf16.mxu0 0
        %1797 = vmatpush1.bf16.msra.mxu0 %v1775
        %1798 = vmatprep.subr.bf16.mxu0 0
        %1799 = vmatpush1.bf16.msra.mxu0 %v1776
        %1800 = vmatprep.subr.bf16.mxu0 0
        %1801 = vmatpush1.bf16.msra.mxu0 %v1777
        %1802 = vmatprep.subr.bf16.mxu0 0
        %1803 = vmatpush1.bf16.msra.mxu0 0
        %1804 = vmatprep.subr.bf16.mxu0 0
        %1805 = vmatpush1.bf16.msra.mxu0 0
        %1806 = vmatprep.subr.bf16.mxu0 0
        %1807 = vmatpush1.bf16.msra.mxu0 0
        %1808 = vmatprep.subr.bf16.mxu0 0
        %1809 = vmatpush1.bf16.msra.mxu0 0
        %1810 = vmatprep.subr.bf16.mxu0 0
        %1811 = vmatpush1.bf16.msra.mxu0 0
        %1812 = vmatprep.subr.bf16.mxu0 0
        %1813 = vmatpush1.bf16.msra.mxu0 0
        %1814 = vmatprep.subr.bf16.mxu0 0
        %1815 = vmatpush1.bf16.msra.mxu0 0
        %1816 = vmatprep.subr.bf16.mxu0 0
        %1817 = vmatpush1.bf16.msra.mxu0 0
        %1818 = vmatprep.mubr.bf16.mxu0 0
        %1819 = vmatmul.mubr.bf16.gmra.mrb[0].mxu0 %v1736
        %v1820 = vpop.f32.mrb[0].mxu0
        %v1821 = vadd.f32 0.0, %v1820
        %v1822 = vpop.f32.mrb[0].mxu0
        %v1823 = vpop.f32.mrb[0].mxu0
        %v1824 = vadd.f32 0.0, %v1823
        %v1825 = vpop.f32.mrb[0].mxu0
        %1826 = vdwg.mxu0
        %v1827 = vadd.f32 %v1693, %v1821
        %v1828 = vadd.f32 %v1694, %v1824
        %s1829 = scalar_lea.vmem [#allocation5], 832
        %v1830 = vld [vmem:[%s1829] sm:$0xf]
        %v1831 = vld [vmem:[%s1829 + $0x4] sm:$0xf]
        %v1832 = vld [vmem:[%s1829 + $0x8] sm:$0xf]
        %v1833 = vld [vmem:[%s1829 + $0xc] sm:$0xf]
        %v1834 = vld [vmem:[%s1829 + $0x10] sm:$0xf]
        %v1835 = vld [vmem:[%s1829 + $0x14] sm:$0xf]
        %v1836 = vld [vmem:[%s1829 + $0x18] sm:$0xf]
        %v1837 = vld [vmem:[%s1829 + $0x1c] sm:$0xf]
        %v1838 = vld [vmem:[%s1829 + $0x20] sm:$0xf]
        %v1839 = vld [vmem:[%s1829 + $0x24] sm:$0xf]
        %v1840 = vld [vmem:[%s1829 + $0x28] sm:$0xf]
        %v1841 = vld [vmem:[%s1829 + $0x2c] sm:$0xf]
        %v1842 = vld [vmem:[%s1829 + $0x30] sm:$0xf]
        %v1843 = vld [vmem:[%s1829 + $0x34] sm:$0xf]
        %v1844 = vld [vmem:[%s1829 + $0x38] sm:$0xf]
        %v1845 = vld [vmem:[%s1829 + $0x3c] sm:$0xf]
        %v1846 = vpack.c.b16 %v1717, %v1219
        %v1864 = vunpack.c.l.b16 %v1830
        %v1865 = vunpack.c.l.b16 %v1831
        %v1866 = vunpack.c.l.b16 %v1832
        %v1867 = vunpack.c.l.b16 %v1833
        %v1868 = vunpack.c.l.b16 %v1834
        %v1869 = vunpack.c.l.b16 %v1835
        %v1870 = vunpack.c.l.b16 %v1836
        %v1871 = vunpack.c.l.b16 %v1837
        %v1872 = vunpack.c.l.b16 %v1838
        %v1873 = vunpack.c.l.b16 %v1839
        %v1874 = vunpack.c.l.b16 %v1840
        %v1875 = vunpack.c.l.b16 %v1841
        %v1876 = vunpack.c.l.b16 %v1842
        %v1877 = vunpack.c.l.b16 %v1843
        %v1878 = vunpack.c.l.b16 %v1844
        %v1879 = vunpack.c.l.b16 %v1845
        %v1880 = vpack.c.b16 %v1865, %v1864
        %v1881 = vpack.c.b16 %v1867, %v1866
        %v1882 = vpack.c.b16 %v1869, %v1868
        %v1883 = vpack.c.b16 %v1871, %v1870
        %v1884 = vpack.c.b16 %v1873, %v1872
        %v1885 = vpack.c.b16 %v1875, %v1874
        %v1886 = vpack.c.b16 %v1877, %v1876
        %v1887 = vpack.c.b16 %v1879, %v1878
        %1896 = vmatprep.subr.bf16.mxu0 0
        %1897 = vmatpush1.bf16.msra.mxu0 %v1880
        %1898 = vmatprep.subr.bf16.mxu0 0
        %1899 = vmatpush1.bf16.msra.mxu0 %v1881
        %1900 = vmatprep.subr.bf16.mxu0 0
        %1901 = vmatpush1.bf16.msra.mxu0 %v1882
        %1902 = vmatprep.subr.bf16.mxu0 0
        %1903 = vmatpush1.bf16.msra.mxu0 %v1883
        %1904 = vmatprep.subr.bf16.mxu0 0
        %1905 = vmatpush1.bf16.msra.mxu0 %v1884
        %1906 = vmatprep.subr.bf16.mxu0 0
        %1907 = vmatpush1.bf16.msra.mxu0 %v1885
        %1908 = vmatprep.subr.bf16.mxu0 0
        %1909 = vmatpush1.bf16.msra.mxu0 %v1886
        %1910 = vmatprep.subr.bf16.mxu0 0
        %1911 = vmatpush1.bf16.msra.mxu0 %v1887
        %1912 = vmatprep.subr.bf16.mxu0 0
        %1913 = vmatpush1.bf16.msra.mxu0 0
        %1914 = vmatprep.subr.bf16.mxu0 0
        %1915 = vmatpush1.bf16.msra.mxu0 0
        %1916 = vmatprep.subr.bf16.mxu0 0
        %1917 = vmatpush1.bf16.msra.mxu0 0
        %1918 = vmatprep.subr.bf16.mxu0 0
        %1919 = vmatpush1.bf16.msra.mxu0 0
        %1920 = vmatprep.subr.bf16.mxu0 0
        %1921 = vmatpush1.bf16.msra.mxu0 0
        %1922 = vmatprep.subr.bf16.mxu0 0
        %1923 = vmatpush1.bf16.msra.mxu0 0
        %1924 = vmatprep.subr.bf16.mxu0 0
        %1925 = vmatpush1.bf16.msra.mxu0 0
        %1926 = vmatprep.subr.bf16.mxu0 0
        %1927 = vmatpush1.bf16.msra.mxu0 0
        %1928 = vmatprep.mubr.bf16.mxu0 0
        %1929 = vmatmul.mubr.bf16.gmra.mrb[0].mxu0 %v1846
        %v1930 = vpop.f32.mrb[0].mxu0
        %v1931 = vadd.f32 0.0, %v1930
        %v1932 = vpop.f32.mrb[0].mxu0
        %v1933 = vpop.f32.mrb[0].mxu0
        %v1934 = vadd.f32 0.0, %v1933
        %v1935 = vpop.f32.mrb[0].mxu0
        %1936 = vdwg.mxu0
        %v1937 = vadd.f32 %v1827, %v1931
        %v1938 = vadd.f32 %v1828, %v1934
        %v1939 = vld [vmem:[%s185 + $0x8] sm:$0xf]
        %v1940 = vld [vmem:[%s185 + $0xc] sm:$0xf]
        %v1941 = vld [vmem:[%s185 + $0x10] sm:$0x1]
        %s1942 = scalar_lea.vmem [#allocation5], 896
        %v1943 = vld [vmem:[%s1942] sm:$0xf]
        %v1944 = vld [vmem:[%s1942 + $0x4] sm:$0xf]
        %v1945 = vld [vmem:[%s1942 + $0x8] sm:$0xf]
        %v1946 = vld [vmem:[%s1942 + $0xc] sm:$0xf]
        %v1947 = vld [vmem:[%s1942 + $0x10] sm:$0xf]
        %v1948 = vld [vmem:[%s1942 + $0x14] sm:$0xf]
        %v1949 = vld [vmem:[%s1942 + $0x18] sm:$0xf]
        %v1950 = vld [vmem:[%s1942 + $0x1c] sm:$0xf]
        %v1951 = vld [vmem:[%s1942 + $0x20] sm:$0xf]
        %v1952 = vld [vmem:[%s1942 + $0x24] sm:$0xf]
        %v1953 = vld [vmem:[%s1942 + $0x28] sm:$0xf]
        %v1954 = vld [vmem:[%s1942 + $0x2c] sm:$0xf]
        %v1955 = vld [vmem:[%s1942 + $0x30] sm:$0xf]
        %v1956 = vld [vmem:[%s1942 + $0x34] sm:$0xf]
        %v1957 = vld [vmem:[%s1942 + $0x38] sm:$0xf]
        %v1958 = vld [vmem:[%s1942 + $0x3c] sm:$0xf]
        %v1962 = vunpack.c.l.b16 %v1939
        %v1963 = vunpack.c.l.b16 %v1940
        %v1964 = vunpack.c.l.b16 %v1941
        %v1965 = vpack.c.b16 %v1963, %v1962
        %v1966 = vpack.c.b16 %v1964, %v1964
        %v1968 = vshrl.u32 %v1965, 16
        %v1970 = vshll.u32 %v1965, 16
        %v1972 = vrot.slane %v1970, 1
        %v1973 = vor.u32 %v1968, %v1972
        %v1975 = vshll.u32 %v1966, 16
        %v1977 = vrot.slane %v1975, 1
        %v1978 = vsel %vm261, %v1973, %v1977
        %v1996 = vunpack.c.l.b16 %v1943
        %v1997 = vunpack.c.l.b16 %v1944
        %v1998 = vunpack.c.l.b16 %v1945
        %v1999 = vunpack.c.l.b16 %v1946
        %v2000 = vunpack.c.l.b16 %v1947
        %v2001 = vunpack.c.l.b16 %v1948
        %v2002 = vunpack.c.l.b16 %v1949
        %v2003 = vunpack.c.l.b16 %v1950
        %v2004 = vunpack.c.l.b16 %v1951
        %v2005 = vunpack.c.l.b16 %v1952
        %v2006 = vunpack.c.l.b16 %v1953
        %v2007 = vunpack.c.l.b16 %v1954
        %v2008 = vunpack.c.l.b16 %v1955
        %v2009 = vunpack.c.l.b16 %v1956
        %v2010 = vunpack.c.l.b16 %v1957
        %v2011 = vunpack.c.l.b16 %v1958
        %v2012 = vpack.c.b16 %v1997, %v1996
        %v2013 = vpack.c.b16 %v1999, %v1998
        %v2014 = vpack.c.b16 %v2001, %v2000
        %v2015 = vpack.c.b16 %v2003, %v2002
        %v2016 = vpack.c.b16 %v2005, %v2004
        %v2017 = vpack.c.b16 %v2007, %v2006
        %v2018 = vpack.c.b16 %v2009, %v2008
        %v2019 = vpack.c.b16 %v2011, %v2010
        %2028 = vmatprep.subr.bf16.mxu0 0
        %2029 = vmatpush1.bf16.msra.mxu0 %v2012
        %2030 = vmatprep.subr.bf16.mxu0 0
        %2031 = vmatpush1.bf16.msra.mxu0 %v2013
        %2032 = vmatprep.subr.bf16.mxu0 0
        %2033 = vmatpush1.bf16.msra.mxu0 %v2014
        %2034 = vmatprep.subr.bf16.mxu0 0
        %2035 = vmatpush1.bf16.msra.mxu0 %v2015
        %2036 = vmatprep.subr.bf16.mxu0 0
        %2037 = vmatpush1.bf16.msra.mxu0 %v2016
        %2038 = vmatprep.subr.bf16.mxu0 0
        %2039 = vmatpush1.bf16.msra.mxu0 %v2017
        %2040 = vmatprep.subr.bf16.mxu0 0
        %2041 = vmatpush1.bf16.msra.mxu0 %v2018
        %2042 = vmatprep.subr.bf16.mxu0 0
        %2043 = vmatpush1.bf16.msra.mxu0 %v2019
        %2044 = vmatprep.subr.bf16.mxu0 0
        %2045 = vmatpush1.bf16.msra.mxu0 0
        %2046 = vmatprep.subr.bf16.mxu0 0
        %2047 = vmatpush1.bf16.msra.mxu0 0
        %2048 = vmatprep.subr.bf16.mxu0 0
        %2049 = vmatpush1.bf16.msra.mxu0 0
        %2050 = vmatprep.subr.bf16.mxu0 0
        %2051 = vmatpush1.bf16.msra.mxu0 0
        %2052 = vmatprep.subr.bf16.mxu0 0
        %2053 = vmatpush1.bf16.msra.mxu0 0
        %2054 = vmatprep.subr.bf16.mxu0 0
        %2055 = vmatpush1.bf16.msra.mxu0 0
        %2056 = vmatprep.subr.bf16.mxu0 0
        %2057 = vmatpush1.bf16.msra.mxu0 0
        %2058 = vmatprep.subr.bf16.mxu0 0
        %2059 = vmatpush1.bf16.msra.mxu0 0
        %2060 = vmatprep.mubr.bf16.mxu0 0
        %2061 = vmatmul.mubr.bf16.gmra.mrb[0].mxu0 %v1978
        %v2062 = vpop.f32.mrb[0].mxu0
        %v2063 = vadd.f32 0.0, %v2062
        %v2064 = vpop.f32.mrb[0].mxu0
        %v2065 = vpop.f32.mrb[0].mxu0
        %v2066 = vadd.f32 0.0, %v2065
        %v2067 = vpop.f32.mrb[0].mxu0
        %2068 = vdwg.mxu0
        %v2069 = vadd.f32 %v1937, %v2063
        %v2070 = vadd.f32 %v1938, %v2066
        %v2071 = vld [vmem:[%s185 + $0x8] sm:$0xe]
        %s2072 = scalar_lea.vmem [#allocation5], 960
        %v2073 = vld [vmem:[%s2072] sm:$0xf]
        %v2074 = vld [vmem:[%s2072 + $0x4] sm:$0xf]
        %v2075 = vld [vmem:[%s2072 + $0x8] sm:$0xf]
        %v2076 = vld [vmem:[%s2072 + $0xc] sm:$0xf]
        %v2077 = vld [vmem:[%s2072 + $0x10] sm:$0xf]
        %v2078 = vld [vmem:[%s2072 + $0x14] sm:$0xf]
        %v2079 = vld [vmem:[%s2072 + $0x18] sm:$0xf]
        %v2080 = vld [vmem:[%s2072 + $0x1c] sm:$0xf]
        %v2081 = vld [vmem:[%s2072 + $0x20] sm:$0xf]
        %v2082 = vld [vmem:[%s2072 + $0x24] sm:$0xf]
        %v2083 = vld [vmem:[%s2072 + $0x28] sm:$0xf]
        %v2084 = vld [vmem:[%s2072 + $0x2c] sm:$0xf]
        %v2085 = vld [vmem:[%s2072 + $0x30] sm:$0xf]
        %v2086 = vld [vmem:[%s2072 + $0x34] sm:$0xf]
        %v2087 = vld [vmem:[%s2072 + $0x38] sm:$0xf]
        %v2088 = vld [vmem:[%s2072 + $0x3c] sm:$0xf]
        %v2090 = vunpack.c.l.b16 %v2071
        %v2091 = vpack.c.b16 %v1963, %v2090
        %v2092 = vrot.slane %v2091, 1
        %v2093 = vrot.slane %v1966, 1
        %v2094 = vsel %vm475, %v2092, %v2093
        %v2112 = vunpack.c.l.b16 %v2073
        %v2113 = vunpack.c.l.b16 %v2074
        %v2114 = vunpack.c.l.b16 %v2075
        %v2115 = vunpack.c.l.b16 %v2076
        %v2116 = vunpack.c.l.b16 %v2077
        %v2117 = vunpack.c.l.b16 %v2078
        %v2118 = vunpack.c.l.b16 %v2079
        %v2119 = vunpack.c.l.b16 %v2080
        %v2120 = vunpack.c.l.b16 %v2081
        %v2121 = vunpack.c.l.b16 %v2082
        %v2122 = vunpack.c.l.b16 %v2083
        %v2123 = vunpack.c.l.b16 %v2084
        %v2124 = vunpack.c.l.b16 %v2085
        %v2125 = vunpack.c.l.b16 %v2086
        %v2126 = vunpack.c.l.b16 %v2087
        %v2127 = vunpack.c.l.b16 %v2088
        %v2128 = vpack.c.b16 %v2113, %v2112
        %v2129 = vpack.c.b16 %v2115, %v2114
        %v2130 = vpack.c.b16 %v2117, %v2116
        %v2131 = vpack.c.b16 %v2119, %v2118
        %v2132 = vpack.c.b16 %v2121, %v2120
        %v2133 = vpack.c.b16 %v2123, %v2122
        %v2134 = vpack.c.b16 %v2125, %v2124
        %v2135 = vpack.c.b16 %v2127, %v2126
        %2144 = vmatprep.subr.bf16.mxu0 0
        %2145 = vmatpush1.bf16.msra.mxu0 %v2128
        %2146 = vmatprep.subr.bf16.mxu0 0
        %2147 = vmatpush1.bf16.msra.mxu0 %v2129
        %2148 = vmatprep.subr.bf16.mxu0 0
        %2149 = vmatpush1.bf16.msra.mxu0 %v2130
        %2150 = vmatprep.subr.bf16.mxu0 0
        %2151 = vmatpush1.bf16.msra.mxu0 %v2131
        %2152 = vmatprep.subr.bf16.mxu0 0
        %2153 = vmatpush1.bf16.msra.mxu0 %v2132
        %2154 = vmatprep.subr.bf16.mxu0 0
        %2155 = vmatpush1.bf16.msra.mxu0 %v2133
        %2156 = vmatprep.subr.bf16.mxu0 0
        %2157 = vmatpush1.bf16.msra.mxu0 %v2134
        %2158 = vmatprep.subr.bf16.mxu0 0
        %2159 = vmatpush1.bf16.msra.mxu0 %v2135
        %2160 = vmatprep.subr.bf16.mxu0 0
        %2161 = vmatpush1.bf16.msra.mxu0 0
        %2162 = vmatprep.subr.bf16.mxu0 0
        %2163 = vmatpush1.bf16.msra.mxu0 0
        %2164 = vmatprep.subr.bf16.mxu0 0
        %2165 = vmatpush1.bf16.msra.mxu0 0
        %2166 = vmatprep.subr.bf16.mxu0 0
        %2167 = vmatpush1.bf16.msra.mxu0 0
        %2168 = vmatprep.subr.bf16.mxu0 0
        %2169 = vmatpush1.bf16.msra.mxu0 0
        %2170 = vmatprep.subr.bf16.mxu0 0
        %2171 = vmatpush1.bf16.msra.mxu0 0
        %2172 = vmatprep.subr.bf16.mxu0 0
        %2173 = vmatpush1.bf16.msra.mxu0 0
        %2174 = vmatprep.subr.bf16.mxu0 0
        %2175 = vmatpush1.bf16.msra.mxu0 0
        %2176 = vmatprep.mubr.bf16.mxu0 0
        %2177 = vmatmul.mubr.bf16.gmra.mrb[0].mxu0 %v2094
        %v2178 = vpop.f32.mrb[0].mxu0
        %v2179 = vadd.f32 0.0, %v2178
        %v2180 = vpop.f32.mrb[0].mxu0
        %v2181 = vpop.f32.mrb[0].mxu0
        %v2182 = vadd.f32 0.0, %v2181
        %v2183 = vpop.f32.mrb[0].mxu0
        %2184 = vdwg.mxu0
        %v2185 = vadd.f32 %v2069, %v2179
        %v2186 = vadd.f32 %v2070, %v2182
        %v2187 = vld [vmem:[#allocation7] sm:$0x1]
        %v2189 = vlaneseq
        %v2190 = vshrl.u32 %v2189, 7
        %v2191 = vsub.s32 0, %v2190
        %v2192 = vrot.slane %v2187, %v2191
        %v2194 = vadd.f32 %v2185, %v2192
        %v2195 = vadd.f32 %v2186, %v2192
        %v2196 = vmul.f32 %v2194, 0.2
        %v2197 = vmul.f32 %v2195, 0.2
        %v2198 = vmax.f32 %v2194, %v2196
        %v2199 = vmax.f32 %v2195, %v2197
        %v2200 = vpack.c.bf16 %v2199, %v2198
        %v2202 = vunpack.c.l.b16 %v2200
        %v2203 = vunpack.c.h.b16 %v2200
        %v2204 = vpack.c.b16 %v2202, %v2202
        %v2205 = vpack.c.b16 %v2203, %v2203
        %2208 = vst [vmem:[%s215] sm:$0xf] %v2204
        %2209 = vst [vmem:[%s215 + $0x4] sm:$0xf] %v2205
        %s2210 = sand.u32 %s97, 1
        %s2211 = scalar_lea.sflag [#allocation4], %s2210
        %s2212 = sand.u32 %s97, 1
        %s2213 = smul.addr %s2212, 8
        %s2214 = scalar_lea.vmem [#allocation8], %s2213
        // Predicated region
        $region45: #{fc_discriminator_forward.8} parent=31 // pred_check
          %p2215 = pneg %p107
        $region46: #{fc_discriminator_forward.8} parent=31 // pred_check_branch
          %2217 = sbr.rel (%p2215) target = $region48
        $region47: #{fc_discriminator_forward.8} parent=31 // pred_region
          %s2219 = ssub.s32 128, 128
          %2220 = vsyncadd %s2211, %s2219
          %s2221 = smul.addr %s21, 2
          %s2222 = smul.addr %s2221, 64
          %s2223 = scalar_lea.hbm %s3, %s2222
          %s2224 = sshll.u32 %s2214, 4
          %s2225 = int_to_ptr.vmem [resolvable:$true] %s2224
          %2230 = dma.vmem_to_hbm [thread:$0]  %s2225, 128, %s2223, %s2211, 64, 64, 4
        $region48: #{fc_discriminator_forward.8} parent=31 // pred_fallthru
          _
      $region32: #{fc_discriminator_forward.8} parent=5 // pred_fallthru
        _
      %p2231 = scmp.le.s32.totalorder 2, %s16
      // Predicated region
      $region49: #{fc_discriminator_forward.8} parent=5 // pred_check
        %p2232 = pneg %p2231
      $region50: #{fc_discriminator_forward.8} parent=5 // pred_check_branch
        %2234 = sbr.rel (%p2232) target = $region52
      $region51: #{fc_discriminator_forward.8} parent=5 // pred_region
        %s2235 = ssub.s32 %s16, 2
        // Predicated region
        $region53: #{fc_discriminator_forward.8} parent=51 // pred_check
          %p2236 = pneg %p113
        $region54: #{fc_discriminator_forward.8} parent=51 // pred_check_branch
          %2238 = sbr.rel (%p2236) target = $region56
        $region55: #{fc_discriminator_forward.8} parent=51 // pred_region
          %s2239 = sand.u32 %s98, 1
          %s2240 = scalar_lea.sflag [#allocation4], %s2239
          %s2241 = sand.u32 %s98, 1
          %s2242 = smul.addr %s2241, 8
          %s2243 = scalar_lea.vmem [#allocation8], %s2242
          %2244 = dma.done %s2240, 128
        $region56: #{fc_discriminator_forward.8} parent=51 // pred_fallthru
          _
      $region52: #{fc_discriminator_forward.8} parent=5 // pred_fallthru
        _
    $region6: #{fc_discriminator_forward.8} parent=1 // loop_footer
      %s20 = sadd.s32 1, %s16
    $region7: #{fc_discriminator_forward.8} parent=1 // loop_footer_branch
      %15 = sbr.rel target = $region3
    $region8: #{fc_discriminator_forward.8} parent=1 // loop_exit
      _
    %2245 = vsyncpa [#allocation3], 1
    %s2246 = scalar_lea.sflag [#allocation3], 1
    %2247 = vsyncpa %s2246, 1
    %2248 = vsyncpa [#allocation6], 1
    %2249 = vsyncpa [#allocation4], 1
    %s2250 = scalar_lea.sflag [#allocation4], 1
    %2251 = vsyncpa %s2250, 1

// kernel: fc_discriminator_forward.9
$region0: #{fc_discriminator_forward.9}
  #allocation0 [shape = 'u32[]', space=smem, size = 0x4, offset = 0x4, fixed_abs, tag = 'smem constant byte address 0x4 - core index']
  #allocation1 [shape = 'u32[144,128]{1,0:T(1,128)}', space=vmem, size = 0x12000, scoped, tag = 'internal scratch']
  %s0 = inlined_call_operand.hbm [shape: bf16[2,23,128], index: 0, kind: input, shape index: {}]
  %s1 = inlined_call_operand.hbm [shape: bf16[16,128,128], index: 1, kind: input, shape index: {}]
  %s2 = inlined_call_operand.hbm [shape: f32[1,128], index: 2, kind: input, shape index: {}]
  %s3 = inlined_call_operand.hbm [shape: f32[2,8,128], index: 3, kind: output, shape index: {}]
  %s4 = sld [smem:[#allocation0]]
  $region57: #{fc_discriminator_forward.9} parent=0
    _
  %s6 = ssub.s32 1, %s4
  %s7 = scalar_select 0, %s6, %s4
  $region1: #{fc_discriminator_forward.9} parent=0
    #allocation2 [shape = 'u8[12288]{0}', space=vmem, size = 0x3000, scoped, tag = 'input window, operand 0']
    #allocation3 [shape = 's32[2]{0}', space=sflag, size = 0x8, scoped, tag = 'scoped memory for fc_discriminator_forward.9']
    #allocation4 [shape = 's32[2]{0}', space=sflag, size = 0x8, scoped, tag = 'scoped memory for fc_discriminator_forward.9']
    #allocation5 [shape = 'u8[524288]{0}', space=vmem, size = 0x80000, scoped, tag = 'input window, operand 1, single buffered']
    #allocation6 [shape = 's32[1]{0}', space=sflag, size = 0x4, scoped, tag = 'scoped memory for fc_discriminator_forward.9']
    #allocation7 [shape = 'u8[512]{0}', space=vmem, size = 0x400, scoped, tag = 'input window, operand 2, single buffered']
    #allocation8 [shape = 'u8[8192]{0}', space=vmem, size = 0x2000, scoped, tag = 'output window, operand 0']
    %8 = vsyncpa [#allocation3], 0
    %s9 = scalar_lea.sflag [#allocation3], 1
    %10 = vsyncpa %s9, 0
    %11 = vsyncpa [#allocation6], 0
    %12 = vsyncpa [#allocation4], 0
    %s13 = scalar_lea.sflag [#allocation4], 1
    %14 = vsyncpa %s13, 0
    loop: start=0, step=1, limit=4
    $region2: #{fc_discriminator_forward.9} parent=1 // loop_pre_header
      _
    $region3: #{fc_discriminator_forward.9} parent=1 // loop_header
      %s16 = sphi 0, %s20
      %p17 = scmp.ge.s32.totalorder %s16, 4
      %s26 = sphi 0, %s28
      %s29 = sphi 0, %s26
      %s30 = sphi 0, %s29
      %s46 = sphi 0, %s30
      %s50 = sphi 0, %s50
      %s52 = sphi 0, %s50
      %s53 = sphi 0, %s52
      %s67 = sphi 0, %s53
      %s71 = sphi 0, %s71
      %s73 = sphi 0, %s71
      %s74 = sphi 0, %s73
      %s88 = sphi 0, %s74
      %s94 = sphi 0, %s96
      %s97 = sphi 0, %s94
      %s98 = sphi 0, %s97
      %s114 = sphi 0, %s98
    $region4: #{fc_discriminator_forward.9} parent=1 // loop_header_branch
      %19 = sbr.rel (%p17) target = $region8
    $region5: #{fc_discriminator_forward.9} parent=1 // loop_body
      %s21 = ssub.s32 %s16, 1
      %s22 = ssub.s32 %s16, 2
      %s23 = sadd.s32 %s16, 1
      %s24 = ssub.s32 %s16, %s23
      %p25 = scmp.eq.s32.totalorder %s24, 0
      %s27 = sadd.s32 %s26, 1
      %s28 = scalar_select %p25, %s26, %s27
      %p31 = pneg %p25
      %p32 = scmp.eq.s32.totalorder %s16, 1
      %p33 = por %p31, %p32
      %p34 = scmp.ne.s32.totalorder %s26, %s29
      %p35 = scmp.eq.s32.totalorder %s16, 0
      %p36 = por %p34, %p35
      %p37 = scmp.ne.s32.totalorder %s26, %s29
      %p38 = scmp.eq.s32.totalorder %s21, 1
      %p39 = por %p37, %p38
      %p40 = scmp.ne.s32.totalorder %s29, %s30
      %p41 = scmp.eq.s32.totalorder %s21, 0
      %p42 = por %p40, %p41
      %p43 = scmp.ne.s32.totalorder %s29, %s30
      %p44 = scmp.eq.s32.totalorder %s22, 1
      %p45 = por %p43, %p44
      %p47 = scmp.ne.s32.totalorder %s30, %s46
      %p48 = scmp.eq.s32.totalorder %s22, 0
      %p49 = por %p47, %p48
      %s51 = sadd.s32 %s50, 1
      %p54 = scmp.eq.s32.totalorder %s16, 1
      %p55 = scmp.ne.s32.totalorder %s50, %s52
      %p56 = scmp.eq.s32.totalorder %s16, 0
      %p57 = por %p55, %p56
      %p58 = scmp.ne.s32.totalorder %s50, %s52
      %p59 = scmp.eq.s32.totalorder %s21, 1
      %p60 = por %p58, %p59
      %p61 = scmp.ne.s32.totalorder %s52, %s53
      %p62 = scmp.eq.s32.totalorder %s21, 0
      %p63 = por %p61, %p62
      %p64 = scmp.ne.s32.totalorder %s52, %s53
      %p65 = scmp.eq.s32.totalorder %s22, 1
      %p66 = por %p64, %p65
      %p68 = scmp.ne.s32.totalorder %s53, %s67
      %p69 = scmp.eq.s32.totalorder %s22, 0
      %p70 = por %p68, %p69
      %s72 = sadd.s32 %s71, 1
      %p75 = scmp.eq.s32.totalorder %s16, 1
      %p76 = scmp.ne.s32.totalorder %s71, %s73
      %p77 = scmp.eq.s32.totalorder %s16, 0
      %p78 = por %p76, %p77
      %p79 = scmp.ne.s32.totalorder %s71, %s73
      %p80 = scmp.eq.s32.totalorder %s21, 1
      %p81 = por %p79, %p80
      %p82 = scmp.ne.s32.totalorder %s73, %s74
      %p83 = scmp.eq.s32.totalorder %s21, 0
      %p84 = por %p82, %p83
      %p85 = scmp.ne.s32.totalorder %s73, %s74
      %p86 = scmp.eq.s32.totalorder %s22, 1
      %p87 = por %p85, %p86
      %p89 = scmp.ne.s32.totalorder %s74, %s88
      %p90 = scmp.eq.s32.totalorder %s22, 0
      %p91 = por %p89, %p90
      %s92 = ssub.s32 %s16, %s23
      %p93 = scmp.eq.s32.totalorder %s92, 0
      %s95 = sadd.s32 %s94, 1
      %s96 = scalar_select %p93, %s94, %s95
      %p99 = pneg %p93
      %p100 = scmp.eq.s32.totalorder %s16, 1
      %p101 = por %p99, %p100
      %p102 = scmp.ne.s32.totalorder %s94, %s97
      %p103 = scmp.eq.s32.totalorder %s16, 0
      %p104 = por %p102, %p103
      %p105 = scmp.ne.s32.totalorder %s94, %s97
      %p106 = scmp.eq.s32.totalorder %s21, 1
      %p107 = por %p105, %p106
      %p108 = scmp.ne.s32.totalorder %s97, %s98
      %p109 = scmp.eq.s32.totalorder %s21, 0
      %p110 = por %p108, %p109
      %p111 = scmp.ne.s32.totalorder %s97, %s98
      %p112 = scmp.eq.s32.totalorder %s22, 1
      %p113 = por %p111, %p112
      %p115 = scmp.ne.s32.totalorder %s98, %s114
      %p116 = scmp.eq.s32.totalorder %s22, 0
      %p117 = por %p115, %p116
      %p118 = scmp.le.s32.totalorder 1, %s16
      %p119 = scmp.lt.s32.totalorder %s16, 3
      %p120 = pnand %p118, %p119
      %p121 = pneg %p120
      // Predicated region
      $region9: #{fc_discriminator_forward.9} parent=5 // pred_check
        _
      $region10: #{fc_discriminator_forward.9} parent=5 // pred_check_branch
        %123 = sbr.rel (%p120) target = $region12
      $region11: #{fc_discriminator_forward.9} parent=5 // pred_region
        %s124 = ssub.s32 %s16, 1
        // Predicated region
        $region13: #{fc_discriminator_forward.9} parent=11 // pred_check
          %p125 = pneg %p63
        $region14: #{fc_discriminator_forward.9} parent=11 // pred_check_branch
          %127 = sbr.rel (%p125) target = $region16
        $region15: #{fc_discriminator_forward.9} parent=11 // pred_region
          %s129 = ssub.s32 16384, 16384
          %130 = vsyncadd [#allocation6], %s129
          %s131 = sshll.u32 [#allocation5], 4
          %s132 = int_to_ptr.vmem [resolvable:$true] %s131
          %137 = dma.hbm_to_vmem [thread:$0]  %s1, 16384, %s132, [#allocation6], 64, 64, 4
        $region16: #{fc_discriminator_forward.9} parent=11 // pred_fallthru
          _
        // Predicated region
        $region17: #{fc_discriminator_forward.9} parent=11 // pred_check
          %p138 = pneg %p84
        $region18: #{fc_discriminator_forward.9} parent=11 // pred_check_branch
          %140 = sbr.rel (%p138) target = $region20
        $region19: #{fc_discriminator_forward.9} parent=11 // pred_region
          %s142 = ssub.s32 16, 16
          %143 = vsyncadd [#allocation6], %s142
          %s145 = sshll.u32 [#allocation7], 4
          %s146 = int_to_ptr.vmem [resolvable:$true] %s145
          %148 = dma.hbm_to_vmem [thread:$0]  %s2, 16, %s146, [#allocation6]
        $region20: #{fc_discriminator_forward.9} parent=11 // pred_fallthru
          _
      $region12: #{fc_discriminator_forward.9} parent=5 // pred_fallthru
        _
      %p149 = scmp.lt.s32.totalorder %s16, 2
      // Predicated region
      $region21: #{fc_discriminator_forward.9} parent=5 // pred_check
        %p150 = pneg %p149
      $region22: #{fc_discriminator_forward.9} parent=5 // pred_check_branch
        %152 = sbr.rel (%p150) target = $region24
      $region23: #{fc_discriminator_forward.9} parent=5 // pred_region
        // Predicated region
        $region25: #{fc_discriminator_forward.9} parent=23 // pred_check
          %p153 = pneg %p36
        $region26: #{fc_discriminator_forward.9} parent=23 // pred_check_branch
          %155 = sbr.rel (%p153) target = $region28
        $region27: #{fc_discriminator_forward.9} parent=23 // pred_region
          %s156 = sand.u32 %s26, 1
          %s157 = scalar_lea.sflag [#allocation3], %s156
          %s158 = sand.u32 %s26, 1
          %s159 = smul.addr %s158, 12
          %s160 = scalar_lea.vmem [#allocation2], %s159
          %s162 = ssub.s32 192, 192
          %163 = vsyncadd %s157, %s162
          %s164 = smul.addr %s16, 3
          %s165 = smul.addr %s164, 64
          %s166 = scalar_lea.hbm %s0, %s165
          %s167 = sshll.u32 %s160, 4
          %s168 = int_to_ptr.vmem [resolvable:$true] %s167
          %173 = dma.hbm_to_vmem [thread:$0]  %s166, 192, %s168, %s157, 64, 64, 4
        $region28: #{fc_discriminator_forward.9} parent=23 // pred_fallthru
          _
      $region24: #{fc_discriminator_forward.9} parent=5 // pred_fallthru
        _
      %p174 = scmp.le.s32.totalorder 1, %s16
      %p175 = scmp.lt.s32.totalorder %s16, 3
      %p176 = pnand %p174, %p175
      %p177 = pneg %p176
      // Predicated region
      $region29: #{fc_discriminator_forward.9} parent=5 // pred_check
        _
      $region30: #{fc_discriminator_forward.9} parent=5 // pred_check_branch
        %179 = sbr.rel (%p176) target = $region32
      $region31: #{fc_discriminator_forward.9} parent=5 // pred_region
        %s180 = ssub.s32 %s16, 1
        %s181 = sand.u32 %s29, 1
        %s182 = scalar_lea.sflag [#allocation3], %s181
        %s183 = sand.u32 %s29, 1
        %s184 = smul.addr %s183, 12
        %s185 = scalar_lea.vmem [#allocation2], %s184
        // Predicated region
        $region33: #{fc_discriminator_forward.9} parent=31 // pred_check
          %p186 = pneg %p42
        $region34: #{fc_discriminator_forward.9} parent=31 // pred_check_branch
          %188 = sbr.rel (%p186) target = $region36
        $region35: #{fc_discriminator_forward.9} parent=31 // pred_region
          %189 = dma.done %s182, 192
        $region36: #{fc_discriminator_forward.9} parent=31 // pred_fallthru
          _
        // Predicated region
        $region37: #{fc_discriminator_forward.9} parent=31 // pred_check
          %p190 = pneg %p63
        $region38: #{fc_discriminator_forward.9} parent=31 // pred_check_branch
          %192 = sbr.rel (%p190) target = $region40
        $region39: #{fc_discriminator_forward.9} parent=31 // pred_region
          %193 = dma.done [#allocation6], 16384
        $region40: #{fc_discriminator_forward.9} parent=31 // pred_fallthru
          _
        // Predicated region
        $region41: #{fc_discriminator_forward.9} parent=31 // pred_check
          %p194 = pneg %p84
        $region42: #{fc_discriminator_forward.9} parent=31 // pred_check_branch
          %196 = sbr.rel (%p194) target = $region44
        $region43: #{fc_discriminator_forward.9} parent=31 // pred_region
          %197 = dma.done [#allocation6], 16
        $region44: #{fc_discriminator_forward.9} parent=31 // pred_fallthru
          _
        %s198 = sand.u32 %s29, 1
        %s199 = scalar_lea.sflag [#allocation3], %s198
        %s200 = sand.u32 %s29, 1
        %s201 = smul.addr %s200, 12
        %s202 = scalar_lea.vmem [#allocation2], %s201
        %p203 = pneg %p42
        %p204 = pneg %p39
        %p205 = pneg %p63
        %p206 = pneg %p60
        %p207 = pneg %p84
        %p208 = pneg %p81
        %p209 = pneg %p110
        %p210 = pneg %p107
        %s211 = sand.u32 %s97, 1
        %s212 = scalar_lea.sflag [#allocation4], %s211
        %s213 = sand.u32 %s97, 1
        %s214 = smul.addr %s213, 8
        %s215 = scalar_lea.vmem [#allocation8], %s214
        %v217 = vld [vmem:[%s185] sm:$0xf]
        %v218 = vld [vmem:[#allocation5] sm:$0xf]
        %v219 = vld [vmem:[#allocation5 + $0x4] sm:$0xf]
        %v220 = vld [vmem:[#allocation5 + $0x8] sm:$0xf]
        %v221 = vld [vmem:[#allocation5 + $0xc] sm:$0xf]
        %v222 = vld [vmem:[#allocation5 + $0x10] sm:$0xf]
        %v223 = vld [vmem:[#allocation5 + $0x14] sm:$0xf]
        %v224 = vld [vmem:[#allocation5 + $0x18] sm:$0xf]
        %v225 = vld [vmem:[#allocation5 + $0x1c] sm:$0xf]
        %v226 = vld [vmem:[#allocation5 + $0x20] sm:$0xf]
        %v227 = vld [vmem:[#allocation5 + $0x24] sm:$0xf]
        %v228 = vld [vmem:[#allocation5 + $0x28] sm:$0xf]
        %v229 = vld [vmem:[#allocation5 + $0x2c] sm:$0xf]
        %v230 = vld [vmem:[#allocation5 + $0x30] sm:$0xf]
        %v231 = vld [vmem:[#allocation5 + $0x34] sm:$0xf]
        %v232 = vld [vmem:[#allocation5 + $0x38] sm:$0xf]
        %v233 = vld [vmem:[#allocation5 + $0x3c] sm:$0xf]
        %v234 = vld [vmem:[%s185 + $0x4] sm:$0x1]
        %s235 = scalar_lea.vmem [#allocation5], 64
        %v236 = vld [vmem:[%s235] sm:$0xf]
        %v237 = vld [vmem:[%s235 + $0x4] sm:$0xf]
        %v238 = vld [vmem:[%s235 + $0x8] sm:$0xf]
        %v239 = vld [vmem:[%s235 + $0xc] sm:$0xf]
        %v240 = vld [vmem:[%s235 + $0x10] sm:$0xf]
        %v241 = vld [vmem:[%s235 + $0x14] sm:$0xf]
        %v242 = vld [vmem:[%s235 + $0x18] sm:$0xf]
        %v243 = vld [vmem:[%s235 + $0x1c] sm:$0xf]
        %v244 = vld [vmem:[%s235 + $0x20] sm:$0xf]
        %v245 = vld [vmem:[%s235 + $0x24] sm:$0xf]
        %v246 = vld [vmem:[%s235 + $0x28] sm:$0xf]
        %v247 = vld [vmem:[%s235 + $0x2c] sm:$0xf]
        %v248 = vld [vmem:[%s235 + $0x30] sm:$0xf]
        %v249 = vld [vmem:[%s235 + $0x34] sm:$0xf]
        %v250 = vld [vmem:[%s235 + $0x38] sm:$0xf]
        %v251 = vld [vmem:[%s235 + $0x3c] sm:$0xf]
        %v254 = vunpack.c.l.b16 %v217
        %v255 = vunpack.c.l.b16 %v234
        %v256 = vpack.c.b16 %v255, %v254
        %v258 = vshrl.u32 %v256, 16
        %v260 = vshll.u32 %v256, 16
        %v262 = vrot.slane %v260, 1
        %v263 = vor.u32 %v258, %v262
        %v281 = vunpack.c.l.b16 %v236
        %v282 = vunpack.c.l.b16 %v237
        %v283 = vunpack.c.l.b16 %v238
        %v284 = vunpack.c.l.b16 %v239
        %v285 = vunpack.c.l.b16 %v240
        %v286 = vunpack.c.l.b16 %v241
        %v287 = vunpack.c.l.b16 %v242
        %v288 = vunpack.c.l.b16 %v243
        %v289 = vunpack.c.l.b16 %v244
        %v290 = vunpack.c.l.b16 %v245
        %v291 = vunpack.c.l.b16 %v246
        %v292 = vunpack.c.l.b16 %v247
        %v293 = vunpack.c.l.b16 %v248
        %v294 = vunpack.c.l.b16 %v249
        %v295 = vunpack.c.l.b16 %v250
        %v296 = vunpack.c.l.b16 %v251
        %v297 = vpack.c.b16 %v282, %v281
        %v298 = vpack.c.b16 %v284, %v283
        %v299 = vpack.c.b16 %v286, %v285
        %v300 = vpack.c.b16 %v288, %v287
        %v301 = vpack.c.b16 %v290, %v289
        %v302 = vpack.c.b16 %v292, %v291
        %v303 = vpack.c.b16 %v294, %v293
        %v304 = vpack.c.b16 %v296, %v295
        %313 = vmatprep.subr.bf16.mxu0 0
        %314 = vmatpush1.bf16.msra.mxu0 %v297
        %315 = vmatprep.subr.bf16.mxu0 0
        %316 = vmatpush1.bf16.msra.mxu0 %v298
        %317 = vmatprep.subr.bf16.mxu0 0
        %318 = vmatpush1.bf16.msra.mxu0 %v299
        %319 = vmatprep.subr.bf16.mxu0 0
        %320 = vmatpush1.bf16.msra.mxu0 %v300
        %321 = vmatprep.subr.bf16.mxu0 0
        %322 = vmatpush1.bf16.msra.mxu0 %v301
        %323 = vmatprep.subr.bf16.mxu0 0
        %324 = vmatpush1.bf16.msra.mxu0 %v302
        %325 = vmatprep.subr.bf16.mxu0 0
        %326 = vmatpush1.bf16.msra.mxu0 %v303
        %327 = vmatprep.subr.bf16.mxu0 0
        %328 = vmatpush1.bf16.msra.mxu0 %v304
        %329 = vmatprep.subr.bf16.mxu0 0
        %330 = vmatpush1.bf16.msra.mxu0 0
        %331 = vmatprep.subr.bf16.mxu0 0
        %332 = vmatpush1.bf16.msra.mxu0 0
        %333 = vmatprep.subr.bf16.mxu0 0
        %334 = vmatpush1.bf16.msra.mxu0 0
        %335 = vmatprep.subr.bf16.mxu0 0
        %336 = vmatpush1.bf16.msra.mxu0 0
        %337 = vmatprep.subr.bf16.mxu0 0
        %338 = vmatpush1.bf16.msra.mxu0 0
        %339 = vmatprep.subr.bf16.mxu0 0
        %340 = vmatpush1.bf16.msra.mxu0 0
        %341 = vmatprep.subr.bf16.mxu0 0
        %342 = vmatpush1.bf16.msra.mxu0 0
        %343 = vmatprep.subr.bf16.mxu0 0
        %344 = vmatpush1.bf16.msra.mxu0 0
        %345 = vmatprep.mubr.bf16.mxu0 0
        %346 = vmatmul.mubr.bf16.gmra.mrb[0].mxu0 %v263
        %v347 = vpop.f32.mrb[0].mxu0
        %v348 = vadd.f32 0.0, %v347
        %v349 = vpop.f32.mrb[0].mxu0
        %v350 = vpop.f32.mrb[0].mxu0
        %v351 = vpop.f32.mrb[0].mxu0
        %352 = vdwg.mxu0
        %v369 = vunpack.c.l.b16 %v218
        %v370 = vunpack.c.l.b16 %v219
        %v371 = vunpack.c.l.b16 %v220
        %v372 = vunpack.c.l.b16 %v221
        %v373 = vunpack.c.l.b16 %v222
        %v374 = vunpack.c.l.b16 %v223
        %v375 = vunpack.c.l.b16 %v224
        %v376 = vunpack.c.l.b16 %v225
        %v377 = vunpack.c.l.b16 %v226
        %v378 = vunpack.c.l.b16 %v227
        %v379 = vunpack.c.l.b16 %v228
        %v380 = vunpack.c.l.b16 %v229
        %v381 = vunpack.c.l.b16 %v230
        %v382 = vunpack.c.l.b16 %v231
        %v383 = vunpack.c.l.b16 %v232
        %v384 = vunpack.c.l.b16 %v233
        %v385 = vpack.c.b16 %v370, %v369
        %v386 = vpack.c.b16 %v372, %v371
        %v387 = vpack.c.b16 %v374, %v373
        %v388 = vpack.c.b16 %v376, %v375
        %v389 = vpack.c.b16 %v378, %v377
        %v390 = vpack.c.b16 %v380, %v379
        %v391 = vpack.c.b16 %v382, %v381
        %v392 = vpack.c.b16 %v384, %v383
        %401 = vmatprep.subr.bf16.mxu0 0
        %402 = vmatpush1.bf16.msra.mxu0 %v385
        %403 = vmatprep.subr.bf16.mxu0 0
        %404 = vmatpush1.bf16.msra.mxu0 %v386
        %405 = vmatprep.subr.bf16.mxu0 0
        %406 = vmatpush1.bf16.msra.mxu0 %v387
        %407 = vmatprep.subr.bf16.mxu0 0
        %408 = vmatpush1.bf16.msra.mxu0 %v388
        %409 = vmatprep.subr.bf16.mxu0 0
        %410 = vmatpush1.bf16.msra.mxu0 %v389
        %411 = vmatprep.subr.bf16.mxu0 0
        %412 = vmatpush1.bf16.msra.mxu0 %v390
        %413 = vmatprep.subr.bf16.mxu0 0
        %414 = vmatpush1.bf16.msra.mxu0 %v391
        %415 = vmatprep.subr.bf16.mxu0 0
        %416 = vmatpush1.bf16.msra.mxu0 %v392
        %417 = vmatprep.subr.bf16.mxu0 0
        %418 = vmatpush1.bf16.msra.mxu0 0
        %419 = vmatprep.subr.bf16.mxu0 0
        %420 = vmatpush1.bf16.msra.mxu0 0
        %421 = vmatprep.subr.bf16.mxu0 0
        %422 = vmatpush1.bf16.msra.mxu0 0
        %423 = vmatprep.subr.bf16.mxu0 0
        %424 = vmatpush1.bf16.msra.mxu0 0
        %425 = vmatprep.subr.bf16.mxu0 0
        %426 = vmatpush1.bf16.msra.mxu0 0
        %427 = vmatprep.subr.bf16.mxu0 0
        %428 = vmatpush1.bf16.msra.mxu0 0
        %429 = vmatprep.subr.bf16.mxu0 0
        %430 = vmatpush1.bf16.msra.mxu0 0
        %431 = vmatprep.subr.bf16.mxu0 0
        %432 = vmatpush1.bf16.msra.mxu0 0
        %433 = vmatprep.mubr.bf16.mxu0 0
        %434 = vmatmul.mubr.bf16.gmra.mrb[0].mxu0 %v217
        %v435 = vpop.f32.mrb[0].mxu0
        %v436 = vadd.f32 %v348, %v435
        %v437 = vpop.f32.mrb[0].mxu0
        %v438 = vpop.f32.mrb[0].mxu0
        %v439 = vpop.f32.mrb[0].mxu0
        %440 = vdwg.mxu0
        %v441 = vld [vmem:[%s185] sm:$0xe]
        %s442 = scalar_lea.vmem [#allocation5], 128
        %v443 = vld [vmem:[%s442] sm:$0xf]
        %v444 = vld [vmem:[%s442 + $0x4] sm:$0xf]
        %v445 = vld [vmem:[%s442 + $0x8] sm:$0xf]
        %v446 = vld [vmem:[%s442 + $0xc] sm:$0xf]
        %v447 = vld [vmem:[%s442 + $0x10] sm:$0xf]
        %v448 = vld [vmem:[%s442 + $0x14] sm:$0xf]
        %v449 = vld [vmem:[%s442 + $0x18] sm:$0xf]
        %v450 = vld [vmem:[%s442 + $0x1c] sm:$0xf]
        %v451 = vld [vmem:[%s442 + $0x20] sm:$0xf]
        %v452 = vld [vmem:[%s442 + $0x24] sm:$0xf]
        %v453 = vld [vmem:[%s442 + $0x28] sm:$0xf]
        %v454 = vld [vmem:[%s442 + $0x2c] sm:$0xf]
        %v455 = vld [vmem:[%s442 + $0x30] sm:$0xf]
        %v456 = vld [vmem:[%s442 + $0x34] sm:$0xf]
        %v457 = vld [vmem:[%s442 + $0x38] sm:$0xf]
        %v458 = vld [vmem:[%s442 + $0x3c] sm:$0xf]
        %v460 = vunpack.c.l.b16 %v441
        %v461 = vpack.c.b16 %v255, %v460
        %v462 = vrot.slane %v461, 1
        %v480 = vunpack.c.l.b16 %v443
        %v481 = vunpack.c.l.b16 %v444
        %v482 = vunpack.c.l.b16 %v445
        %v483 = vunpack.c.l.b16 %v446
        %v484 = vunpack.c.l.b16 %v447
        %v485 = vunpack.c.l.b16 %v448
        %v486 = vunpack.c.l.b16 %v449
        %v487 = vunpack.c.l.b16 %v450
        %v488 = vunpack.c.l.b16 %v451
        %v489 = vunpack.c.l.b16 %v452
        %v490 = vunpack.c.l.b16 %v453
        %v491 = vunpack.c.l.b16 %v454
        %v492 = vunpack.c.l.b16 %v455
        %v493 = vunpack.c.l.b16 %v456
        %v494 = vunpack.c.l.b16 %v457
        %v495 = vunpack.c.l.b16 %v458
        %v496 = vpack.c.b16 %v481, %v480
        %v497 = vpack.c.b16 %v483, %v482
        %v498 = vpack.c.b16 %v485, %v484
        %v499 = vpack.c.b16 %v487, %v486
        %v500 = vpack.c.b16 %v489, %v488
        %v501 = vpack.c.b16 %v491, %v490
        %v502 = vpack.c.b16 %v493, %v492
        %v503 = vpack.c.b16 %v495, %v494
        %512 = vmatprep.subr.bf16.mxu0 0
        %513 = vmatpush1.bf16.msra.mxu0 %v496
        %514 = vmatprep.subr.bf16.mxu0 0
        %515 = vmatpush1.bf16.msra.mxu0 %v497
        %516 = vmatprep.subr.bf16.mxu0 0
        %517 = vmatpush1.bf16.msra.mxu0 %v498
        %518 = vmatprep.subr.bf16.mxu0 0
        %519 = vmatpush1.bf16.msra.mxu0 %v499
        %520 = vmatprep.subr.bf16.mxu0 0
        %521 = vmatpush1.bf16.msra.mxu0 %v500
        %522 = vmatprep.subr.bf16.mxu0 0
        %523 = vmatpush1.bf16.msra.mxu0 %v501
        %524 = vmatprep.subr.bf16.mxu0 0
        %525 = vmatpush1.bf16.msra.mxu0 %v502
        %526 = vmatprep.subr.bf16.mxu0 0
        %527 = vmatpush1.bf16.msra.mxu0 %v503
        %528 = vmatprep.subr.bf16.mxu0 0
        %529 = vmatpush1.bf16.msra.mxu0 0
        %530 = vmatprep.subr.bf16.mxu0 0
        %531 = vmatpush1.bf16.msra.mxu0 0
        %532 = vmatprep.subr.bf16.mxu0 0
        %533 = vmatpush1.bf16.msra.mxu0 0
        %534 = vmatprep.subr.bf16.mxu0 0
        %535 = vmatpush1.bf16.msra.mxu0 0
        %536 = vmatprep.subr.bf16.mxu0 0
        %537 = vmatpush1.bf16.msra.mxu0 0
        %538 = vmatprep.subr.bf16.mxu0 0
        %539 = vmatpush1.bf16.msra.mxu0 0
        %540 = vmatprep.subr.bf16.mxu0 0
        %541 = vmatpush1.bf16.msra.mxu0 0
        %542 = vmatprep.subr.bf16.mxu0 0
        %543 = vmatpush1.bf16.msra.mxu0 0
        %544 = vmatprep.mubr.bf16.mxu0 0
        %545 = vmatmul.mubr.bf16.gmra.mrb[0].mxu0 %v462
        %v546 = vpop.f32.mrb[0].mxu0
        %v547 = vadd.f32 0.0, %v546
        %v548 = vpop.f32.mrb[0].mxu0
        %v549 = vpop.f32.mrb[0].mxu0
        %v550 = vpop.f32.mrb[0].mxu0
        %551 = vdwg.mxu0
        %v552 = vadd.f32 %v436, %v547
        %v553 = vld [vmem:[%s185 + $0x4] sm:$0x3]
        %s554 = scalar_lea.vmem [#allocation5], 192
        %v555 = vld [vmem:[%s554] sm:$0xf]
        %v556 = vld [vmem:[%s554 + $0x4] sm:$0xf]
        %v557 = vld [vmem:[%s554 + $0x8] sm:$0xf]
        %v558 = vld [vmem:[%s554 + $0xc] sm:$0xf]
        %v559 = vld [vmem:[%s554 + $0x10] sm:$0xf]
        %v560 = vld [vmem:[%s554 + $0x14] sm:$0xf]
        %v561 = vld [vmem:[%s554 + $0x18] sm:$0xf]
        %v562 = vld [vmem:[%s554 + $0x1c] sm:$0xf]
        %v563 = vld [vmem:[%s554 + $0x20] sm:$0xf]
        %v564 = vld [vmem:[%s554 + $0x24] sm:$0xf]
        %v565 = vld [vmem:[%s554 + $0x28] sm:$0xf]
        %v566 = vld [vmem:[%s554 + $0x2c] sm:$0xf]
        %v567 = vld [vmem:[%s554 + $0x30] sm:$0xf]
        %v568 = vld [vmem:[%s554 + $0x34] sm:$0xf]
        %v569 = vld [vmem:[%s554 + $0x38] sm:$0xf]
        %v570 = vld [vmem:[%s554 + $0x3c] sm:$0xf]
        %v572 = vunpack.c.l.b16 %v553
        %v573 = vpack.c.b16 %v572, %v460
        %v575 = vshrl.u32 %v573, 16
        %v577 = vrot.slane %v575, 1
        %v578 = vshll.u32 %v573, 16
        %v580 = vrot.slane %v578, 2
        %v581 = vor.u32 %v577, %v580
        %v599 = vunpack.c.l.b16 %v555
        %v600 = vunpack.c.l.b16 %v556
        %v601 = vunpack.c.l.b16 %v557
        %v602 = vunpack.c.l.b16 %v558
        %v603 = vunpack.c.l.b16 %v559
        %v604 = vunpack.c.l.b16 %v560
        %v605 = vunpack.c.l.b16 %v561
        %v606 = vunpack.c.l.b16 %v562
        %v607 = vunpack.c.l.b16 %v563
        %v608 = vunpack.c.l.b16 %v564
        %v609 = vunpack.c.l.b16 %v565
        %v610 = vunpack.c.l.b16 %v566
        %v611 = vunpack.c.l.b16 %v567
        %v612 = vunpack.c.l.b16 %v568
        %v613 = vunpack.c.l.b16 %v569
        %v614 = vunpack.c.l.b16 %v570
        %v615 = vpack.c.b16 %v600, %v599
        %v616 = vpack.c.b16 %v602, %v601
        %v617 = vpack.c.b16 %v604, %v603
        %v618 = vpack.c.b16 %v606, %v605
        %v619 = vpack.c.b16 %v608, %v607
        %v620 = vpack.c.b16 %v610, %v609
        %v621 = vpack.c.b16 %v612, %v611
        %v622 = vpack.c.b16 %v614, %v613
        %631 = vmatprep.subr.bf16.mxu0 0
        %632 = vmatpush1.bf16.msra.mxu0 %v615
        %633 = vmatprep.subr.bf16.mxu0 0
        %634 = vmatpush1.bf16.msra.mxu0 %v616
        %635 = vmatprep.subr.bf16.mxu0 0
        %636 = vmatpush1.bf16.msra.mxu0 %v617
        %637 = vmatprep.subr.bf16.mxu0 0
        %638 = vmatpush1.bf16.msra.mxu0 %v618
        %639 = vmatprep.subr.bf16.mxu0 0
        %640 = vmatpush1.bf16.msra.mxu0 %v619
        %641 = vmatprep.subr.bf16.mxu0 0
        %642 = vmatpush1.bf16.msra.mxu0 %v620
        %643 = vmatprep.subr.bf16.mxu0 0
        %644 = vmatpush1.bf16.msra.mxu0 %v621
        %645 = vmatprep.subr.bf16.mxu0 0
        %646 = vmatpush1.bf16.msra.mxu0 %v622
        %647 = vmatprep.subr.bf16.mxu0 0
        %648 = vmatpush1.bf16.msra.mxu0 0
        %649 = vmatprep.subr.bf16.mxu0 0
        %650 = vmatpush1.bf16.msra.mxu0 0
        %651 = vmatprep.subr.bf16.mxu0 0
        %652 = vmatpush1.bf16.msra.mxu0 0
        %653 = vmatprep.subr.bf16.mxu0 0
        %654 = vmatpush1.bf16.msra.mxu0 0
        %655 = vmatprep.subr.bf16.mxu0 0
        %656 = vmatpush1.bf16.msra.mxu0 0
        %657 = vmatprep.subr.bf16.mxu0 0
        %658 = vmatpush1.bf16.msra.mxu0 0
        %659 = vmatprep.subr.bf16.mxu0 0
        %660 = vmatpush1.bf16.msra.mxu0 0
        %661 = vmatprep.subr.bf16.mxu0 0
        %662 = vmatpush1.bf16.msra.mxu0 0
        %663 = vmatprep.mubr.bf16.mxu0 0
        %664 = vmatmul.mubr.bf16.gmra.mrb[0].mxu0 %v581
        %v665 = vpop.f32.mrb[0].mxu0
        %v666 = vadd.f32 0.0, %v665
        %v667 = vpop.f32.mrb[0].mxu0
        %v668 = vpop.f32.mrb[0].mxu0
        %v669 = vpop.f32.mrb[0].mxu0
        %670 = vdwg.mxu0
        %v671 = vadd.f32 %v552, %v666
        %v672 = vld [vmem:[%s185] sm:$0xc]
        %s673 = scalar_lea.vmem [#allocation5], 256
        %v674 = vld [vmem:[%s673] sm:$0xf]
        %v675 = vld [vmem:[%s673 + $0x4] sm:$0xf]
        %v676 = vld [vmem:[%s673 + $0x8] sm:$0xf]
        %v677 = vld [vmem:[%s673 + $0xc] sm:$0xf]
        %v678 = vld [vmem:[%s673 + $0x10] sm:$0xf]
        %v679 = vld [vmem:[%s673 + $0x14] sm:$0xf]
        %v680 = vld [vmem:[%s673 + $0x18] sm:$0xf]
        %v681 = vld [vmem:[%s673 + $0x1c] sm:$0xf]
        %v682 = vld [vmem:[%s673 + $0x20] sm:$0xf]
        %v683 = vld [vmem:[%s673 + $0x24] sm:$0xf]
        %v684 = vld [vmem:[%s673 + $0x28] sm:$0xf]
        %v685 = vld [vmem:[%s673 + $0x2c] sm:$0xf]
        %v686 = vld [vmem:[%s673 + $0x30] sm:$0xf]
        %v687 = vld [vmem:[%s673 + $0x34] sm:$0xf]
        %v688 = vld [vmem:[%s673 + $0x38] sm:$0xf]
        %v689 = vld [vmem:[%s673 + $0x3c] sm:$0xf]
        %v691 = vunpack.c.l.b16 %v672
        %v692 = vpack.c.b16 %v572, %v691
        %v693 = vrot.slane %v692, 2
        %v711 = vunpack.c.l.b16 %v674
        %v712 = vunpack.c.l.b16 %v675
        %v713 = vunpack.c.l.b16 %v676
        %v714 = vunpack.c.l.b16 %v677
        %v715 = vunpack.c.l.b16 %v678
        %v716 = vunpack.c.l.b16 %v679
        %v717 = vunpack.c.l.b16 %v680
        %v718 = vunpack.c.l.b16 %v681
        %v719 = vunpack.c.l.b16 %v682
        %v720 = vunpack.c.l.b16 %v683
        %v721 = vunpack.c.l.b16 %v684
        %v722 = vunpack.c.l.b16 %v685
        %v723 = vunpack.c.l.b16 %v686
        %v724 = vunpack.c.l.b16 %v687
        %v725 = vunpack.c.l.b16 %v688
        %v726 = vunpack.c.l.b16 %v689
        %v727 = vpack.c.b16 %v712, %v711
        %v728 = vpack.c.b16 %v714, %v713
        %v729 = vpack.c.b16 %v716, %v715
        %v730 = vpack.c.b16 %v718, %v717
        %v731 = vpack.c.b16 %v720, %v719
        %v732 = vpack.c.b16 %v722, %v721
        %v733 = vpack.c.b16 %v724, %v723
        %v734 = vpack.c.b16 %v726, %v725
        %743 = vmatprep.subr.bf16.mxu0 0
        %744 = vmatpush1.bf16.msra.mxu0 %v727
        %745 = vmatprep.subr.bf16.mxu0 0
        %746 = vmatpush1.bf16.msra.mxu0 %v728
        %747 = vmatprep.subr.bf16.mxu0 0
        %748 = vmatpush1.bf16.msra.mxu0 %v729
        %749 = vmatprep.subr.bf16.mxu0 0
        %750 = vmatpush1.bf16.msra.mxu0 %v730
        %751 = vmatprep.subr.bf16.mxu0 0
        %752 = vmatpush1.bf16.msra.mxu0 %v731
        %753 = vmatprep.subr.bf16.mxu0 0
        %754 = vmatpush1.bf16.msra.mxu0 %v732
        %755 = vmatprep.subr.bf16.mxu0 0
        %756 = vmatpush1.bf16.msra.mxu0 %v733
        %757 = vmatprep.subr.bf16.mxu0 0
        %758 = vmatpush1.bf16.msra.mxu0 %v734
        %759 = vmatprep.subr.bf16.mxu0 0
        %760 = vmatpush1.bf16.msra.mxu0 0
        %761 = vmatprep.subr.bf16.mxu0 0
        %762 = vmatpush1.bf16.msra.mxu0 0
        %763 = vmatprep.subr.bf16.mxu0 0
        %764 = vmatpush1.bf16.msra.mxu0 0
        %765 = vmatprep.subr.bf16.mxu0 0
        %766 = vmatpush1.bf16.msra.mxu0 0
        %767 = vmatprep.subr.bf16.mxu0 0
        %768 = vmatpush1.bf16.msra.mxu0 0
        %769 = vmatprep.subr.bf16.mxu0 0
        %770 = vmatpush1.bf16.msra.mxu0 0
        %771 = vmatprep.subr.bf16.mxu0 0
        %772 = vmatpush1.bf16.msra.mxu0 0
        %773 = vmatprep.subr.bf16.mxu0 0
        %774 = vmatpush1.bf16.msra.mxu0 0
        %775 = vmatprep.mubr.bf16.mxu0 0
        %776 = vmatmul.mubr.bf16.gmra.mrb[0].mxu0 %v693
        %v777 = vpop.f32.mrb[0].mxu0
        %v778 = vadd.f32 0.0, %v777
        %v779 = vpop.f32.mrb[0].mxu0
        %v780 = vpop.f32.mrb[0].mxu0
        %v781 = vpop.f32.mrb[0].mxu0
        %782 = vdwg.mxu0
        %v783 = vadd.f32 %v671, %v778
        %v784 = vld [vmem:[%s185 + $0x4] sm:$0x7]
        %s785 = scalar_lea.vmem [#allocation5], 320
        %v786 = vld [vmem:[%s785] sm:$0xf]
        %v787 = vld [vmem:[%s785 + $0x4] sm:$0xf]
        %v788 = vld [vmem:[%s785 + $0x8] sm:$0xf]
        %v789 = vld [vmem:[%s785 + $0xc] sm:$0xf]
        %v790 = vld [vmem:[%s785 + $0x10] sm:$0xf]
        %v791 = vld [vmem:[%s785 + $0x14] sm:$0xf]
        %v792 = vld [vmem:[%s785 + $0x18] sm:$0xf]
        %v793 = vld [vmem:[%s785 + $0x1c] sm:$0xf]
        %v794 = vld [vmem:[%s785 + $0x20] sm:$0xf]
        %v795 = vld [vmem:[%s785 + $0x24] sm:$0xf]
        %v796 = vld [vmem:[%s785 + $0x28] sm:$0xf]
        %v797 = vld [vmem:[%s785 + $0x2c] sm:$0xf]
        %v798 = vld [vmem:[%s785 + $0x30] sm:$0xf]
        %v799 = vld [vmem:[%s785 + $0x34] sm:$0xf]
        %v800 = vld [vmem:[%s785 + $0x38] sm:$0xf]
        %v801 = vld [vmem:[%s785 + $0x3c] sm:$0xf]
        %v803 = vunpack.c.l.b16 %v784
        %v804 = vpack.c.b16 %v803, %v691
        %v806 = vshrl.u32 %v804, 16
        %v808 = vrot.slane %v806, 2
        %v809 = vshll.u32 %v804, 16
        %v811 = vrot.slane %v809, 3
        %v812 = vor.u32 %v808, %v811
        %v830 = vunpack.c.l.b16 %v786
        %v831 = vunpack.c.l.b16 %v787
        %v832 = vunpack.c.l.b16 %v788
        %v833 = vunpack.c.l.b16 %v789
        %v834 = vunpack.c.l.b16 %v790
        %v835 = vunpack.c.l.b16 %v791
        %v836 = vunpack.c.l.b16 %v792
        %v837 = vunpack.c.l.b16 %v793
        %v838 = vunpack.c.l.b16 %v794
        %v839 = vunpack.c.l.b16 %v795
        %v840 = vunpack.c.l.b16 %v796
        %v841 = vunpack.c.l.b16 %v797
        %v842 = vunpack.c.l.b16 %v798
        %v843 = vunpack.c.l.b16 %v799
        %v844 = vunpack.c.l.b16 %v800
        %v845 = vunpack.c.l.b16 %v801
        %v846 = vpack.c.b16 %v831, %v830
        %v847 = vpack.c.b16 %v833, %v832
        %v848 = vpack.c.b16 %v835, %v834
        %v849 = vpack.c.b16 %v837, %v836
        %v850 = vpack.c.b16 %v839, %v838
        %v851 = vpack.c.b16 %v841, %v840
        %v852 = vpack.c.b16 %v843, %v842
        %v853 = vpack.c.b16 %v845, %v844
        %862 = vmatprep.subr.bf16.mxu0 0
        %863 = vmatpush1.bf16.msra.mxu0 %v846
        %864 = vmatprep.subr.bf16.mxu0 0
        %865 = vmatpush1.bf16.msra.mxu0 %v847
        %866 = vmatprep.subr.bf16.mxu0 0
        %867 = vmatpush1.bf16.msra.mxu0 %v848
        %868 = vmatprep.subr.bf16.mxu0 0
        %869 = vmatpush1.bf16.msra.mxu0 %v849
        %870 = vmatprep.subr.bf16.mxu0 0
        %871 = vmatpush1.bf16.msra.mxu0 %v850
        %872 = vmatprep.subr.bf16.mxu0 0
        %873 = vmatpush1.bf16.msra.mxu0 %v851
        %874 = vmatprep.subr.bf16.mxu0 0
        %875 = vmatpush1.bf16.msra.mxu0 %v852
        %876 = vmatprep.subr.bf16.mxu0 0
        %877 = vmatpush1.bf16.msra.mxu0 %v853
        %878 = vmatprep.subr.bf16.mxu0 0
        %879 = vmatpush1.bf16.msra.mxu0 0
        %880 = vmatprep.subr.bf16.mxu0 0
        %881 = vmatpush1.bf16.msra.mxu0 0
        %882 = vmatprep.subr.bf16.mxu0 0
        %883 = vmatpush1.bf16.msra.mxu0 0
        %884 = vmatprep.subr.bf16.mxu0 0
        %885 = vmatpush1.bf16.msra.mxu0 0
        %886 = vmatprep.subr.bf16.mxu0 0
        %887 = vmatpush1.bf16.msra.mxu0 0
        %888 = vmatprep.subr.bf16.mxu0 0
        %889 = vmatpush1.bf16.msra.mxu0 0
        %890 = vmatprep.subr.bf16.mxu0 0
        %891 = vmatpush1.bf16.msra.mxu0 0
        %892 = vmatprep.subr.bf16.mxu0 0
        %893 = vmatpush1.bf16.msra.mxu0 0
        %894 = vmatprep.mubr.bf16.mxu0 0
        %895 = vmatmul.mubr.bf16.gmra.mrb[0].mxu0 %v812
        %v896 = vpop.f32.mrb[0].mxu0
        %v897 = vadd.f32 0.0, %v896
        %v898 = vpop.f32.mrb[0].mxu0
        %v899 = vpop.f32.mrb[0].mxu0
        %v900 = vpop.f32.mrb[0].mxu0
        %901 = vdwg.mxu0
        %v902 = vadd.f32 %v783, %v897
        %v903 = vld [vmem:[%s185] sm:$0x8]
        %s904 = scalar_lea.vmem [#allocation5], 384
        %v905 = vld [vmem:[%s904] sm:$0xf]
        %v906 = vld [vmem:[%s904 + $0x4] sm:$0xf]
        %v907 = vld [vmem:[%s904 + $0x8] sm:$0xf]
        %v908 = vld [vmem:[%s904 + $0xc] sm:$0xf]
        %v909 = vld [vmem:[%s904 + $0x10] sm:$0xf]
        %v910 = vld [vmem:[%s904 + $0x14] sm:$0xf]
        %v911 = vld [vmem:[%s904 + $0x18] sm:$0xf]
        %v912 = vld [vmem:[%s904 + $0x1c] sm:$0xf]
        %v913 = vld [vmem:[%s904 + $0x20] sm:$0xf]
        %v914 = vld [vmem:[%s904 + $0x24] sm:$0xf]
        %v915 = vld [vmem:[%s904 + $0x28] sm:$0xf]
        %v916 = vld [vmem:[%s904 + $0x2c] sm:$0xf]
        %v917 = vld [vmem:[%s904 + $0x30] sm:$0xf]
        %v918 = vld [vmem:[%s904 + $0x34] sm:$0xf]
        %v919 = vld [vmem:[%s904 + $0x38] sm:$0xf]
        %v920 = vld [vmem:[%s904 + $0x3c] sm:$0xf]
        %v922 = vunpack.c.l.b16 %v903
        %v923 = vpack.c.b16 %v803, %v922
        %v924 = vrot.slane %v923, 3
        %v942 = vunpack.c.l.b16 %v905
        %v943 = vunpack.c.l.b16 %v906
        %v944 = vunpack.c.l.b16 %v907
        %v945 = vunpack.c.l.b16 %v908
        %v946 = vunpack.c.l.b16 %v909
        %v947 = vunpack.c.l.b16 %v910
        %v948 = vunpack.c.l.b16 %v911
        %v949 = vunpack.c.l.b16 %v912
        %v950 = vunpack.c.l.b16 %v913
        %v951 = vunpack.c.l.b16 %v914
        %v952 = vunpack.c.l.b16 %v915
        %v953 = vunpack.c.l.b16 %v916
        %v954 = vunpack.c.l.b16 %v917
        %v955 = vunpack.c.l.b16 %v918
        %v956 = vunpack.c.l.b16 %v919
        %v957 = vunpack.c.l.b16 %v920
        %v958 = vpack.c.b16 %v943, %v942
        %v959 = vpack.c.b16 %v945, %v944
        %v960 = vpack.c.b16 %v947, %v946
        %v961 = vpack.c.b16 %v949, %v948
        %v962 = vpack.c.b16 %v951, %v950
        %v963 = vpack.c.b16 %v953, %v952
        %v964 = vpack.c.b16 %v955, %v954
        %v965 = vpack.c.b16 %v957, %v956
        %974 = vmatprep.subr.bf16.mxu0 0
        %975 = vmatpush1.bf16.msra.mxu0 %v958
        %976 = vmatprep.subr.bf16.mxu0 0
        %977 = vmatpush1.bf16.msra.mxu0 %v959
        %978 = vmatprep.subr.bf16.mxu0 0
        %979 = vmatpush1.bf16.msra.mxu0 %v960
        %980 = vmatprep.subr.bf16.mxu0 0
        %981 = vmatpush1.bf16.msra.mxu0 %v961
        %982 = vmatprep.subr.bf16.mxu0 0
        %983 = vmatpush1.bf16.msra.mxu0 %v962
        %984 = vmatprep.subr.bf16.mxu0 0
        %985 = vmatpush1.bf16.msra.mxu0 %v963
        %986 = vmatprep.subr.bf16.mxu0 0
        %987 = vmatpush1.bf16.msra.mxu0 %v964
        %988 = vmatprep.subr.bf16.mxu0 0
        %989 = vmatpush1.bf16.msra.mxu0 %v965
        %990 = vmatprep.subr.bf16.mxu0 0
        %991 = vmatpush1.bf16.msra.mxu0 0
        %992 = vmatprep.subr.bf16.mxu0 0
        %993 = vmatpush1.bf16.msra.mxu0 0
        %994 = vmatprep.subr.bf16.mxu0 0
        %995 = vmatpush1.bf16.msra.mxu0 0
        %996 = vmatprep.subr.bf16.mxu0 0
        %997 = vmatpush1.bf16.msra.mxu0 0
        %998 = vmatprep.subr.bf16.mxu0 0
        %999 = vmatpush1.bf16.msra.mxu0 0
        %1000 = vmatprep.subr.bf16.mxu0 0
        %1001 = vmatpush1.bf16.msra.mxu0 0
        %1002 = vmatprep.subr.bf16.mxu0 0
        %1003 = vmatpush1.bf16.msra.mxu0 0
        %1004 = vmatprep.subr.bf16.mxu0 0
        %1005 = vmatpush1.bf16.msra.mxu0 0
        %1006 = vmatprep.mubr.bf16.mxu0 0
        %1007 = vmatmul.mubr.bf16.gmra.mrb[0].mxu0 %v924
        %v1008 = vpop.f32.mrb[0].mxu0
        %v1009 = vadd.f32 0.0, %v1008
        %v1010 = vpop.f32.mrb[0].mxu0
        %v1011 = vpop.f32.mrb[0].mxu0
        %v1012 = vpop.f32.mrb[0].mxu0
        %1013 = vdwg.mxu0
        %v1014 = vadd.f32 %v902, %v1009
        %v1015 = vld [vmem:[%s185 + $0x4] sm:$0xf]
        %s1016 = scalar_lea.vmem [#allocation5], 448
        %v1017 = vld [vmem:[%s1016] sm:$0xf]
        %v1018 = vld [vmem:[%s1016 + $0x4] sm:$0xf]
        %v1019 = vld [vmem:[%s1016 + $0x8] sm:$0xf]
        %v1020 = vld [vmem:[%s1016 + $0xc] sm:$0xf]
        %v1021 = vld [vmem:[%s1016 + $0x10] sm:$0xf]
        %v1022 = vld [vmem:[%s1016 + $0x14] sm:$0xf]
        %v1023 = vld [vmem:[%s1016 + $0x18] sm:$0xf]
        %v1024 = vld [vmem:[%s1016 + $0x1c] sm:$0xf]
        %v1025 = vld [vmem:[%s1016 + $0x20] sm:$0xf]
        %v1026 = vld [vmem:[%s1016 + $0x24] sm:$0xf]
        %v1027 = vld [vmem:[%s1016 + $0x28] sm:$0xf]
        %v1028 = vld [vmem:[%s1016 + $0x2c] sm:$0xf]
        %v1029 = vld [vmem:[%s1016 + $0x30] sm:$0xf]
        %v1030 = vld [vmem:[%s1016 + $0x34] sm:$0xf]
        %v1031 = vld [vmem:[%s1016 + $0x38] sm:$0xf]
        %v1032 = vld [vmem:[%s1016 + $0x3c] sm:$0xf]
        %v1034 = vunpack.c.l.b16 %v1015
        %v1035 = vpack.c.b16 %v1034, %v922
        %v1037 = vshrl.u32 %v1035, 16
        %v1039 = vrot.slane %v1037, 3
        %v1040 = vshll.u32 %v1035, 16
        %v1042 = vrot.slane %v1040, 4
        %v1043 = vor.u32 %v1039, %v1042
        %v1061 = vunpack.c.l.b16 %v1017
        %v1062 = vunpack.c.l.b16 %v1018
        %v1063 = vunpack.c.l.b16 %v1019
        %v1064 = vunpack.c.l.b16 %v1020
        %v1065 = vunpack.c.l.b16 %v1021
        %v1066 = vunpack.c.l.b16 %v1022
        %v1067 = vunpack.c.l.b16 %v1023
        %v1068 = vunpack.c.l.b16 %v1024
        %v1069 = vunpack.c.l.b16 %v1025
        %v1070 = vunpack.c.l.b16 %v1026
        %v1071 = vunpack.c.l.b16 %v1027
        %v1072 = vunpack.c.l.b16 %v1028
        %v1073 = vunpack.c.l.b16 %v1029
        %v1074 = vunpack.c.l.b16 %v1030
        %v1075 = vunpack.c.l.b16 %v1031
        %v1076 = vunpack.c.l.b16 %v1032
        %v1077 = vpack.c.b16 %v1062, %v1061
        %v1078 = vpack.c.b16 %v1064, %v1063
        %v1079 = vpack.c.b16 %v1066, %v1065
        %v1080 = vpack.c.b16 %v1068, %v1067
        %v1081 = vpack.c.b16 %v1070, %v1069
        %v1082 = vpack.c.b16 %v1072, %v1071
        %v1083 = vpack.c.b16 %v1074, %v1073
        %v1084 = vpack.c.b16 %v1076, %v1075
        %1093 = vmatprep.subr.bf16.mxu0 0
        %1094 = vmatpush1.bf16.msra.mxu0 %v1077
        %1095 = vmatprep.subr.bf16.mxu0 0
        %1096 = vmatpush1.bf16.msra.mxu0 %v1078
        %1097 = vmatprep.subr.bf16.mxu0 0
        %1098 = vmatpush1.bf16.msra.mxu0 %v1079
        %1099 = vmatprep.subr.bf16.mxu0 0
        %1100 = vmatpush1.bf16.msra.mxu0 %v1080
        %1101 = vmatprep.subr.bf16.mxu0 0
        %1102 = vmatpush1.bf16.msra.mxu0 %v1081
        %1103 = vmatprep.subr.bf16.mxu0 0
        %1104 = vmatpush1.bf16.msra.mxu0 %v1082
        %1105 = vmatprep.subr.bf16.mxu0 0
        %1106 = vmatpush1.bf16.msra.mxu0 %v1083
        %1107 = vmatprep.subr.bf16.mxu0 0
        %1108 = vmatpush1.bf16.msra.mxu0 %v1084
        %1109 = vmatprep.subr.bf16.mxu0 0
        %1110 = vmatpush1.bf16.msra.mxu0 0
        %1111 = vmatprep.subr.bf16.mxu0 0
        %1112 = vmatpush1.bf16.msra.mxu0 0
        %1113 = vmatprep.subr.bf16.mxu0 0
        %1114 = vmatpush1.bf16.msra.mxu0 0
        %1115 = vmatprep.subr.bf16.mxu0 0
        %1116 = vmatpush1.bf16.msra.mxu0 0
        %1117 = vmatprep.subr.bf16.mxu0 0
        %1118 = vmatpush1.bf16.msra.mxu0 0
        %1119 = vmatprep.subr.bf16.mxu0 0
        %1120 = vmatpush1.bf16.msra.mxu0 0
        %1121 = vmatprep.subr.bf16.mxu0 0
        %1122 = vmatpush1.bf16.msra.mxu0 0
        %1123 = vmatprep.subr.bf16.mxu0 0
        %1124 = vmatpush1.bf16.msra.mxu0 0
        %1125 = vmatprep.mubr.bf16.mxu0 0
        %1126 = vmatmul.mubr.bf16.gmra.mrb[0].mxu0 %v1043
        %v1127 = vpop.f32.mrb[0].mxu0
        %v1128 = vadd.f32 0.0, %v1127
        %v1129 = vpop.f32.mrb[0].mxu0
        %v1130 = vpop.f32.mrb[0].mxu0
        %v1131 = vpop.f32.mrb[0].mxu0
        %1132 = vdwg.mxu0
        %v1133 = vadd.f32 %v1014, %v1128
        %s1134 = scalar_lea.vmem [#allocation5], 512
        %v1135 = vld [vmem:[%s1134] sm:$0xf]
        %v1136 = vld [vmem:[%s1134 + $0x4] sm:$0xf]
        %v1137 = vld [vmem:[%s1134 + $0x8] sm:$0xf]
        %v1138 = vld [vmem:[%s1134 + $0xc] sm:$0xf]
        %v1139 = vld [vmem:[%s1134 + $0x10] sm:$0xf]
        %v1140 = vld [vmem:[%s1134 + $0x14] sm:$0xf]
        %v1141 = vld [vmem:[%s1134 + $0x18] sm:$0xf]
        %v1142 = vld [vmem:[%s1134 + $0x1c] sm:$0xf]
        %v1143 = vld [vmem:[%s1134 + $0x20] sm:$0xf]
        %v1144 = vld [vmem:[%s1134 + $0x24] sm:$0xf]
        %v1145 = vld [vmem:[%s1134 + $0x28] sm:$0xf]
        %v1146 = vld [vmem:[%s1134 + $0x2c] sm:$0xf]
        %v1147 = vld [vmem:[%s1134 + $0x30] sm:$0xf]
        %v1148 = vld [vmem:[%s1134 + $0x34] sm:$0xf]
        %v1149 = vld [vmem:[%s1134 + $0x38] sm:$0xf]
        %v1150 = vld [vmem:[%s1134 + $0x3c] sm:$0xf]
        %v1167 = vunpack.c.l.b16 %v1135
        %v1168 = vunpack.c.l.b16 %v1136
        %v1169 = vunpack.c.l.b16 %v1137
        %v1170 = vunpack.c.l.b16 %v1138
        %v1171 = vunpack.c.l.b16 %v1139
        %v1172 = vunpack.c.l.b16 %v1140
        %v1173 = vunpack.c.l.b16 %v1141
        %v1174 = vunpack.c.l.b16 %v1142
        %v1175 = vunpack.c.l.b16 %v1143
        %v1176 = vunpack.c.l.b16 %v1144
        %v1177 = vunpack.c.l.b16 %v1145
        %v1178 = vunpack.c.l.b16 %v1146
        %v1179 = vunpack.c.l.b16 %v1147
        %v1180 = vunpack.c.l.b16 %v1148
        %v1181 = vunpack.c.l.b16 %v1149
        %v1182 = vunpack.c.l.b16 %v1150
        %v1183 = vpack.c.b16 %v1168, %v1167
        %v1184 = vpack.c.b16 %v1170, %v1169
        %v1185 = vpack.c.b16 %v1172, %v1171
        %v1186 = vpack.c.b16 %v1174, %v1173
        %v1187 = vpack.c.b16 %v1176, %v1175
        %v1188 = vpack.c.b16 %v1178, %v1177
        %v1189 = vpack.c.b16 %v1180, %v1179
        %v1190 = vpack.c.b16 %v1182, %v1181
        %1199 = vmatprep.subr.bf16.mxu0 0
        %1200 = vmatpush1.bf16.msra.mxu0 %v1183
        %1201 = vmatprep.subr.bf16.mxu0 0
        %1202 = vmatpush1.bf16.msra.mxu0 %v1184
        %1203 = vmatprep.subr.bf16.mxu0 0
        %1204 = vmatpush1.bf16.msra.mxu0 %v1185
        %1205 = vmatprep.subr.bf16.mxu0 0
        %1206 = vmatpush1.bf16.msra.mxu0 %v1186
        %1207 = vmatprep.subr.bf16.mxu0 0
        %1208 = vmatpush1.bf16.msra.mxu0 %v1187
        %1209 = vmatprep.subr.bf16.mxu0 0
        %1210 = vmatpush1.bf16.msra.mxu0 %v1188
        %1211 = vmatprep.subr.bf16.mxu0 0
        %1212 = vmatpush1.bf16.msra.mxu0 %v1189
        %1213 = vmatprep.subr.bf16.mxu0 0
        %1214 = vmatpush1.bf16.msra.mxu0 %v1190
        %1215 = vmatprep.subr.bf16.mxu0 0
        %1216 = vmatpush1.bf16.msra.mxu0 0
        %1217 = vmatprep.subr.bf16.mxu0 0
        %1218 = vmatpush1.bf16.msra.mxu0 0
        %1219 = vmatprep.subr.bf16.mxu0 0
        %1220 = vmatpush1.bf16.msra.mxu0 0
        %1221 = vmatprep.subr.bf16.mxu0 0
        %1222 = vmatpush1.bf16.msra.mxu0 0
        %1223 = vmatprep.subr.bf16.mxu0 0
        %1224 = vmatpush1.bf16.msra.mxu0 0
        %1225 = vmatprep.subr.bf16.mxu0 0
        %1226 = vmatpush1.bf16.msra.mxu0 0
        %1227 = vmatprep.subr.bf16.mxu0 0
        %1228 = vmatpush1.bf16.msra.mxu0 0
        %1229 = vmatprep.subr.bf16.mxu0 0
        %1230 = vmatpush1.bf16.msra.mxu0 0
        %1231 = vmatprep.mubr.bf16.mxu0 0
        %1232 = vmatmul.mubr.bf16.gmra.mrb[0].mxu0 %v1015
        %v1233 = vpop.f32.mrb[0].mxu0
        %v1234 = vadd.f32 0.0, %v1233
        %v1235 = vpop.f32.mrb[0].mxu0
        %v1236 = vpop.f32.mrb[0].mxu0
        %v1237 = vpop.f32.mrb[0].mxu0
        %1238 = vdwg.mxu0
        %v1239 = vadd.f32 %v1133, %v1234
        %v1240 = vld [vmem:[%s185 + $0x4] sm:$0xf]
        %v1241 = vld [vmem:[%s185 + $0x8] sm:$0x1]
        %s1242 = scalar_lea.vmem [#allocation5], 576
        %v1243 = vld [vmem:[%s1242] sm:$0xf]
        %v1244 = vld [vmem:[%s1242 + $0x4] sm:$0xf]
        %v1245 = vld [vmem:[%s1242 + $0x8] sm:$0xf]
        %v1246 = vld [vmem:[%s1242 + $0xc] sm:$0xf]
        %v1247 = vld [vmem:[%s1242 + $0x10] sm:$0xf]
        %v1248 = vld [vmem:[%s1242 + $0x14] sm:$0xf]
        %v1249 = vld [vmem:[%s1242 + $0x18] sm:$0xf]
        %v1250 = vld [vmem:[%s1242 + $0x1c] sm:$0xf]
        %v1251 = vld [vmem:[%s1242 + $0x20] sm:$0xf]
        %v1252 = vld [vmem:[%s1242 + $0x24] sm:$0xf]
        %v1253 = vld [vmem:[%s1242 + $0x28] sm:$0xf]
        %v1254 = vld [vmem:[%s1242 + $0x2c] sm:$0xf]
        %v1255 = vld [vmem:[%s1242 + $0x30] sm:$0xf]
        %v1256 = vld [vmem:[%s1242 + $0x34] sm:$0xf]
        %v1257 = vld [vmem:[%s1242 + $0x38] sm:$0xf]
        %v1258 = vld [vmem:[%s1242 + $0x3c] sm:$0xf]
        %v1261 = vunpack.c.l.b16 %v1240
        %v1262 = vunpack.c.l.b16 %v1241
        %v1263 = vpack.c.b16 %v1262, %v1261
        %v1265 = vshrl.u32 %v1263, 16
        %v1267 = vshll.u32 %v1263, 16
        %v1269 = vrot.slane %v1267, 1
        %v1270 = vor.u32 %v1265, %v1269
        %v1288 = vunpack.c.l.b16 %v1243
        %v1289 = vunpack.c.l.b16 %v1244
        %v1290 = vunpack.c.l.b16 %v1245
        %v1291 = vunpack.c.l.b16 %v1246
        %v1292 = vunpack.c.l.b16 %v1247
        %v1293 = vunpack.c.l.b16 %v1248
        %v1294 = vunpack.c.l.b16 %v1249
        %v1295 = vunpack.c.l.b16 %v1250
        %v1296 = vunpack.c.l.b16 %v1251
        %v1297 = vunpack.c.l.b16 %v1252
        %v1298 = vunpack.c.l.b16 %v1253
        %v1299 = vunpack.c.l.b16 %v1254
        %v1300 = vunpack.c.l.b16 %v1255
        %v1301 = vunpack.c.l.b16 %v1256
        %v1302 = vunpack.c.l.b16 %v1257
        %v1303 = vunpack.c.l.b16 %v1258
        %v1304 = vpack.c.b16 %v1289, %v1288
        %v1305 = vpack.c.b16 %v1291, %v1290
        %v1306 = vpack.c.b16 %v1293, %v1292
        %v1307 = vpack.c.b16 %v1295, %v1294
        %v1308 = vpack.c.b16 %v1297, %v1296
        %v1309 = vpack.c.b16 %v1299, %v1298
        %v1310 = vpack.c.b16 %v1301, %v1300
        %v1311 = vpack.c.b16 %v1303, %v1302
        %1320 = vmatprep.subr.bf16.mxu0 0
        %1321 = vmatpush1.bf16.msra.mxu0 %v1304
        %1322 = vmatprep.subr.bf16.mxu0 0
        %1323 = vmatpush1.bf16.msra.mxu0 %v1305
        %1324 = vmatprep.subr.bf16.mxu0 0
        %1325 = vmatpush1.bf16.msra.mxu0 %v1306
        %1326 = vmatprep.subr.bf16.mxu0 0
        %1327 = vmatpush1.bf16.msra.mxu0 %v1307
        %1328 = vmatprep.subr.bf16.mxu0 0
        %1329 = vmatpush1.bf16.msra.mxu0 %v1308
        %1330 = vmatprep.subr.bf16.mxu0 0
        %1331 = vmatpush1.bf16.msra.mxu0 %v1309
        %1332 = vmatprep.subr.bf16.mxu0 0
        %1333 = vmatpush1.bf16.msra.mxu0 %v1310
        %1334 = vmatprep.subr.bf16.mxu0 0
        %1335 = vmatpush1.bf16.msra.mxu0 %v1311
        %1336 = vmatprep.subr.bf16.mxu0 0
        %1337 = vmatpush1.bf16.msra.mxu0 0
        %1338 = vmatprep.subr.bf16.mxu0 0
        %1339 = vmatpush1.bf16.msra.mxu0 0
        %1340 = vmatprep.subr.bf16.mxu0 0
        %1341 = vmatpush1.bf16.msra.mxu0 0
        %1342 = vmatprep.subr.bf16.mxu0 0
        %1343 = vmatpush1.bf16.msra.mxu0 0
        %1344 = vmatprep.subr.bf16.mxu0 0
        %1345 = vmatpush1.bf16.msra.mxu0 0
        %1346 = vmatprep.subr.bf16.mxu0 0
        %1347 = vmatpush1.bf16.msra.mxu0 0
        %1348 = vmatprep.subr.bf16.mxu0 0
        %1349 = vmatpush1.bf16.msra.mxu0 0
        %1350 = vmatprep.subr.bf16.mxu0 0
        %1351 = vmatpush1.bf16.msra.mxu0 0
        %1352 = vmatprep.mubr.bf16.mxu0 0
        %1353 = vmatmul.mubr.bf16.gmra.mrb[0].mxu0 %v1270
        %v1354 = vpop.f32.mrb[0].mxu0
        %v1355 = vadd.f32 0.0, %v1354
        %v1356 = vpop.f32.mrb[0].mxu0
        %v1357 = vpop.f32.mrb[0].mxu0
        %v1358 = vpop.f32.mrb[0].mxu0
        %1359 = vdwg.mxu0
        %v1360 = vadd.f32 %v1239, %v1355
        %v1361 = vld [vmem:[%s185 + $0x4] sm:$0xe]
        %s1362 = scalar_lea.vmem [#allocation5], 640
        %v1363 = vld [vmem:[%s1362] sm:$0xf]
        %v1364 = vld [vmem:[%s1362 + $0x4] sm:$0xf]
        %v1365 = vld [vmem:[%s1362 + $0x8] sm:$0xf]
        %v1366 = vld [vmem:[%s1362 + $0xc] sm:$0xf]
        %v1367 = vld [vmem:[%s1362 + $0x10] sm:$0xf]
        %v1368 = vld [vmem:[%s1362 + $0x14] sm:$0xf]
        %v1369 = vld [vmem:[%s1362 + $0x18] sm:$0xf]
        %v1370 = vld [vmem:[%s1362 + $0x1c] sm:$0xf]
        %v1371 = vld [vmem:[%s1362 + $0x20] sm:$0xf]
        %v1372 = vld [vmem:[%s1362 + $0x24] sm:$0xf]
        %v1373 = vld [vmem:[%s1362 + $0x28] sm:$0xf]
        %v1374 = vld [vmem:[%s1362 + $0x2c] sm:$0xf]
        %v1375 = vld [vmem:[%s1362 + $0x30] sm:$0xf]
        %v1376 = vld [vmem:[%s1362 + $0x34] sm:$0xf]
        %v1377 = vld [vmem:[%s1362 + $0x38] sm:$0xf]
        %v1378 = vld [vmem:[%s1362 + $0x3c] sm:$0xf]
        %v1380 = vunpack.c.l.b16 %v1361
        %v1381 = vpack.c.b16 %v1262, %v1380
        %v1382 = vrot.slane %v1381, 1
        %v1400 = vunpack.c.l.b16 %v1363
        %v1401 = vunpack.c.l.b16 %v1364
        %v1402 = vunpack.c.l.b16 %v1365
        %v1403 = vunpack.c.l.b16 %v1366
        %v1404 = vunpack.c.l.b16 %v1367
        %v1405 = vunpack.c.l.b16 %v1368
        %v1406 = vunpack.c.l.b16 %v1369
        %v1407 = vunpack.c.l.b16 %v1370
        %v1408 = vunpack.c.l.b16 %v1371
        %v1409 = vunpack.c.l.b16 %v1372
        %v1410 = vunpack.c.l.b16 %v1373
        %v1411 = vunpack.c.l.b16 %v1374
        %v1412 = vunpack.c.l.b16 %v1375
        %v1413 = vunpack.c.l.b16 %v1376
        %v1414 = vunpack.c.l.b16 %v1377
        %v1415 = vunpack.c.l.b16 %v1378
        %v1416 = vpack.c.b16 %v1401, %v1400
        %v1417 = vpack.c.b16 %v1403, %v1402
        %v1418 = vpack.c.b16 %v1405, %v1404
        %v1419 = vpack.c.b16 %v1407, %v1406
        %v1420 = vpack.c.b16 %v1409, %v1408
        %v1421 = vpack.c.b16 %v1411, %v1410
        %v1422 = vpack.c.b16 %v1413, %v1412
        %v1423 = vpack.c.b16 %v1415, %v1414
        %1432 = vmatprep.subr.bf16.mxu0 0
        %1433 = vmatpush1.bf16.msra.mxu0 %v1416
        %1434 = vmatprep.subr.bf16.mxu0 0
        %1435 = vmatpush1.bf16.msra.mxu0 %v1417
        %1436 = vmatprep.subr.bf16.mxu0 0
        %1437 = vmatpush1.bf16.msra.mxu0 %v1418
        %1438 = vmatprep.subr.bf16.mxu0 0
        %1439 = vmatpush1.bf16.msra.mxu0 %v1419
        %1440 = vmatprep.subr.bf16.mxu0 0
        %1441 = vmatpush1.bf16.msra.mxu0 %v1420
        %1442 = vmatprep.subr.bf16.mxu0 0
        %1443 = vmatpush1.bf16.msra.mxu0 %v1421
        %1444 = vmatprep.subr.bf16.mxu0 0
        %1445 = vmatpush1.bf16.msra.mxu0 %v1422
        %1446 = vmatprep.subr.bf16.mxu0 0
        %1447 = vmatpush1.bf16.msra.mxu0 %v1423
        %1448 = vmatprep.subr.bf16.mxu0 0
        %1449 = vmatpush1.bf16.msra.mxu0 0
        %1450 = vmatprep.subr.bf16.mxu0 0
        %1451 = vmatpush1.bf16.msra.mxu0 0
        %1452 = vmatprep.subr.bf16.mxu0 0
        %1453 = vmatpush1.bf16.msra.mxu0 0
        %1454 = vmatprep.subr.bf16.mxu0 0
        %1455 = vmatpush1.bf16.msra.mxu0 0
        %1456 = vmatprep.subr.bf16.mxu0 0
        %1457 = vmatpush1.bf16.msra.mxu0 0
        %1458 = vmatprep.subr.bf16.mxu0 0
        %1459 = vmatpush1.bf16.msra.mxu0 0
        %1460 = vmatprep.subr.bf16.mxu0 0
        %1461 = vmatpush1.bf16.msra.mxu0 0
        %1462 = vmatprep.subr.bf16.mxu0 0
        %1463 = vmatpush1.bf16.msra.mxu0 0
        %1464 = vmatprep.mubr.bf16.mxu0 0
        %1465 = vmatmul.mubr.bf16.gmra.mrb[0].mxu0 %v1382
        %v1466 = vpop.f32.mrb[0].mxu0
        %v1467 = vadd.f32 0.0, %v1466
        %v1468 = vpop.f32.mrb[0].mxu0
        %v1469 = vpop.f32.mrb[0].mxu0
        %v1470 = vpop.f32.mrb[0].mxu0
        %1471 = vdwg.mxu0
        %v1472 = vadd.f32 %v1360, %v1467
        %v1473 = vld [vmem:[%s185 + $0x8] sm:$0x3]
        %s1474 = scalar_lea.vmem [#allocation5], 704
        %v1475 = vld [vmem:[%s1474] sm:$0xf]
        %v1476 = vld [vmem:[%s1474 + $0x4] sm:$0xf]
        %v1477 = vld [vmem:[%s1474 + $0x8] sm:$0xf]
        %v1478 = vld [vmem:[%s1474 + $0xc] sm:$0xf]
        %v1479 = vld [vmem:[%s1474 + $0x10] sm:$0xf]
        %v1480 = vld [vmem:[%s1474 + $0x14] sm:$0xf]
        %v1481 = vld [vmem:[%s1474 + $0x18] sm:$0xf]
        %v1482 = vld [vmem:[%s1474 + $0x1c] sm:$0xf]
        %v1483 = vld [vmem:[%s1474 + $0x20] sm:$0xf]
        %v1484 = vld [vmem:[%s1474 + $0x24] sm:$0xf]
        %v1485 = vld [vmem:[%s1474 + $0x28] sm:$0xf]
        %v1486 = vld [vmem:[%s1474 + $0x2c] sm:$0xf]
        %v1487 = vld [vmem:[%s1474 + $0x30] sm:$0xf]
        %v1488 = vld [vmem:[%s1474 + $0x34] sm:$0xf]
        %v1489 = vld [vmem:[%s1474 + $0x38] sm:$0xf]
        %v1490 = vld [vmem:[%s1474 + $0x3c] sm:$0xf]
        %v1492 = vunpack.c.l.b16 %v1473
        %v1493 = vpack.c.b16 %v1492, %v1380
        %v1495 = vshrl.u32 %v1493, 16
        %v1497 = vrot.slane %v1495, 1
        %v1498 = vshll.u32 %v1493, 16
        %v1500 = vrot.slane %v1498, 2
        %v1501 = vor.u32 %v1497, %v1500
        %v1519 = vunpack.c.l.b16 %v1475
        %v1520 = vunpack.c.l.b16 %v1476
        %v1521 = vunpack.c.l.b16 %v1477
        %v1522 = vunpack.c.l.b16 %v1478
        %v1523 = vunpack.c.l.b16 %v1479
        %v1524 = vunpack.c.l.b16 %v1480
        %v1525 = vunpack.c.l.b16 %v1481
        %v1526 = vunpack.c.l.b16 %v1482
        %v1527 = vunpack.c.l.b16 %v1483
        %v1528 = vunpack.c.l.b16 %v1484
        %v1529 = vunpack.c.l.b16 %v1485
        %v1530 = vunpack.c.l.b16 %v1486
        %v1531 = vunpack.c.l.b16 %v1487
        %v1532 = vunpack.c.l.b16 %v1488
        %v1533 = vunpack.c.l.b16 %v1489
        %v1534 = vunpack.c.l.b16 %v1490
        %v1535 = vpack.c.b16 %v1520, %v1519
        %v1536 = vpack.c.b16 %v1522, %v1521
        %v1537 = vpack.c.b16 %v1524, %v1523
        %v1538 = vpack.c.b16 %v1526, %v1525
        %v1539 = vpack.c.b16 %v1528, %v1527
        %v1540 = vpack.c.b16 %v1530, %v1529
        %v1541 = vpack.c.b16 %v1532, %v1531
        %v1542 = vpack.c.b16 %v1534, %v1533
        %1551 = vmatprep.subr.bf16.mxu0 0
        %1552 = vmatpush1.bf16.msra.mxu0 %v1535
        %1553 = vmatprep.subr.bf16.mxu0 0
        %1554 = vmatpush1.bf16.msra.mxu0 %v1536
        %1555 = vmatprep.subr.bf16.mxu0 0
        %1556 = vmatpush1.bf16.msra.mxu0 %v1537
        %1557 = vmatprep.subr.bf16.mxu0 0
        %1558 = vmatpush1.bf16.msra.mxu0 %v1538
        %1559 = vmatprep.subr.bf16.mxu0 0
        %1560 = vmatpush1.bf16.msra.mxu0 %v1539
        %1561 = vmatprep.subr.bf16.mxu0 0
        %1562 = vmatpush1.bf16.msra.mxu0 %v1540
        %1563 = vmatprep.subr.bf16.mxu0 0
        %1564 = vmatpush1.bf16.msra.mxu0 %v1541
        %1565 = vmatprep.subr.bf16.mxu0 0
        %1566 = vmatpush1.bf16.msra.mxu0 %v1542
        %1567 = vmatprep.subr.bf16.mxu0 0
        %1568 = vmatpush1.bf16.msra.mxu0 0
        %1569 = vmatprep.subr.bf16.mxu0 0
        %1570 = vmatpush1.bf16.msra.mxu0 0
        %1571 = vmatprep.subr.bf16.mxu0 0
        %1572 = vmatpush1.bf16.msra.mxu0 0
        %1573 = vmatprep.subr.bf16.mxu0 0
        %1574 = vmatpush1.bf16.msra.mxu0 0
        %1575 = vmatprep.subr.bf16.mxu0 0
        %1576 = vmatpush1.bf16.msra.mxu0 0
        %1577 = vmatprep.subr.bf16.mxu0 0
        %1578 = vmatpush1.bf16.msra.mxu0 0
        %1579 = vmatprep.subr.bf16.mxu0 0
        %1580 = vmatpush1.bf16.msra.mxu0 0
        %1581 = vmatprep.subr.bf16.mxu0 0
        %1582 = vmatpush1.bf16.msra.mxu0 0
        %1583 = vmatprep.mubr.bf16.mxu0 0
        %1584 = vmatmul.mubr.bf16.gmra.mrb[0].mxu0 %v1501
        %v1585 = vpop.f32.mrb[0].mxu0
        %v1586 = vadd.f32 0.0, %v1585
        %v1587 = vpop.f32.mrb[0].mxu0
        %v1588 = vpop.f32.mrb[0].mxu0
        %v1589 = vpop.f32.mrb[0].mxu0
        %1590 = vdwg.mxu0
        %v1591 = vadd.f32 %v1472, %v1586
        %v1592 = vld [vmem:[%s185 + $0x4] sm:$0xc]
        %s1593 = scalar_lea.vmem [#allocation5], 768
        %v1594 = vld [vmem:[%s1593] sm:$0xf]
        %v1595 = vld [vmem:[%s1593 + $0x4] sm:$0xf]
        %v1596 = vld [vmem:[%s1593 + $0x8] sm:$0xf]
        %v1597 = vld [vmem:[%s1593 + $0xc] sm:$0xf]
        %v1598 = vld [vmem:[%s1593 + $0x10] sm:$0xf]
        %v1599 = vld [vmem:[%s1593 + $0x14] sm:$0xf]
        %v1600 = vld [vmem:[%s1593 + $0x18] sm:$0xf]
        %v1601 = vld [vmem:[%s1593 + $0x1c] sm:$0xf]
        %v1602 = vld [vmem:[%s1593 + $0x20] sm:$0xf]
        %v1603 = vld [vmem:[%s1593 + $0x24] sm:$0xf]
        %v1604 = vld [vmem:[%s1593 + $0x28] sm:$0xf]
        %v1605 = vld [vmem:[%s1593 + $0x2c] sm:$0xf]
        %v1606 = vld [vmem:[%s1593 + $0x30] sm:$0xf]
        %v1607 = vld [vmem:[%s1593 + $0x34] sm:$0xf]
        %v1608 = vld [vmem:[%s1593 + $0x38] sm:$0xf]
        %v1609 = vld [vmem:[%s1593 + $0x3c] sm:$0xf]
        %v1611 = vunpack.c.l.b16 %v1592
        %v1612 = vpack.c.b16 %v1492, %v1611
        %v1613 = vrot.slane %v1612, 2
        %v1631 = vunpack.c.l.b16 %v1594
        %v1632 = vunpack.c.l.b16 %v1595
        %v1633 = vunpack.c.l.b16 %v1596
        %v1634 = vunpack.c.l.b16 %v1597
        %v1635 = vunpack.c.l.b16 %v1598
        %v1636 = vunpack.c.l.b16 %v1599
        %v1637 = vunpack.c.l.b16 %v1600
        %v1638 = vunpack.c.l.b16 %v1601
        %v1639 = vunpack.c.l.b16 %v1602
        %v1640 = vunpack.c.l.b16 %v1603
        %v1641 = vunpack.c.l.b16 %v1604
        %v1642 = vunpack.c.l.b16 %v1605
        %v1643 = vunpack.c.l.b16 %v1606
        %v1644 = vunpack.c.l.b16 %v1607
        %v1645 = vunpack.c.l.b16 %v1608
        %v1646 = vunpack.c.l.b16 %v1609
        %v1647 = vpack.c.b16 %v1632, %v1631
        %v1648 = vpack.c.b16 %v1634, %v1633
        %v1649 = vpack.c.b16 %v1636, %v1635
        %v1650 = vpack.c.b16 %v1638, %v1637
        %v1651 = vpack.c.b16 %v1640, %v1639
        %v1652 = vpack.c.b16 %v1642, %v1641
        %v1653 = vpack.c.b16 %v1644, %v1643
        %v1654 = vpack.c.b16 %v1646, %v1645
        %1663 = vmatprep.subr.bf16.mxu0 0
        %1664 = vmatpush1.bf16.msra.mxu0 %v1647
        %1665 = vmatprep.subr.bf16.mxu0 0
        %1666 = vmatpush1.bf16.msra.mxu0 %v1648
        %1667 = vmatprep.subr.bf16.mxu0 0
        %1668 = vmatpush1.bf16.msra.mxu0 %v1649
        %1669 = vmatprep.subr.bf16.mxu0 0
        %1670 = vmatpush1.bf16.msra.mxu0 %v1650
        %1671 = vmatprep.subr.bf16.mxu0 0
        %1672 = vmatpush1.bf16.msra.mxu0 %v1651
        %1673 = vmatprep.subr.bf16.mxu0 0
        %1674 = vmatpush1.bf16.msra.mxu0 %v1652
        %1675 = vmatprep.subr.bf16.mxu0 0
        %1676 = vmatpush1.bf16.msra.mxu0 %v1653
        %1677 = vmatprep.subr.bf16.mxu0 0
        %1678 = vmatpush1.bf16.msra.mxu0 %v1654
        %1679 = vmatprep.subr.bf16.mxu0 0
        %1680 = vmatpush1.bf16.msra.mxu0 0
        %1681 = vmatprep.subr.bf16.mxu0 0
        %1682 = vmatpush1.bf16.msra.mxu0 0
        %1683 = vmatprep.subr.bf16.mxu0 0
        %1684 = vmatpush1.bf16.msra.mxu0 0
        %1685 = vmatprep.subr.bf16.mxu0 0
        %1686 = vmatpush1.bf16.msra.mxu0 0
        %1687 = vmatprep.subr.bf16.mxu0 0
        %1688 = vmatpush1.bf16.msra.mxu0 0
        %1689 = vmatprep.subr.bf16.mxu0 0
        %1690 = vmatpush1.bf16.msra.mxu0 0
        %1691 = vmatprep.subr.bf16.mxu0 0
        %1692 = vmatpush1.bf16.msra.mxu0 0
        %1693 = vmatprep.subr.bf16.mxu0 0
        %1694 = vmatpush1.bf16.msra.mxu0 0
        %1695 = vmatprep.mubr.bf16.mxu0 0
        %1696 = vmatmul.mubr.bf16.gmra.mrb[0].mxu0 %v1613
        %v1697 = vpop.f32.mrb[0].mxu0
        %v1698 = vadd.f32 0.0, %v1697
        %v1699 = vpop.f32.mrb[0].mxu0
        %v1700 = vpop.f32.mrb[0].mxu0
        %v1701 = vpop.f32.mrb[0].mxu0
        %1702 = vdwg.mxu0
        %v1703 = vadd.f32 %v1591, %v1698
        %v1704 = vld [vmem:[%s185 + $0x8] sm:$0x7]
        %s1705 = scalar_lea.vmem [#allocation5], 832
        %v1706 = vld [vmem:[%s1705] sm:$0xf]
        %v1707 = vld [vmem:[%s1705 + $0x4] sm:$0xf]
        %v1708 = vld [vmem:[%s1705 + $0x8] sm:$0xf]
        %v1709 = vld [vmem:[%s1705 + $0xc] sm:$0xf]
        %v1710 = vld [vmem:[%s1705 + $0x10] sm:$0xf]
        %v1711 = vld [vmem:[%s1705 + $0x14] sm:$0xf]
        %v1712 = vld [vmem:[%s1705 + $0x18] sm:$0xf]
        %v1713 = vld [vmem:[%s1705 + $0x1c] sm:$0xf]
        %v1714 = vld [vmem:[%s1705 + $0x20] sm:$0xf]
        %v1715 = vld [vmem:[%s1705 + $0x24] sm:$0xf]
        %v1716 = vld [vmem:[%s1705 + $0x28] sm:$0xf]
        %v1717 = vld [vmem:[%s1705 + $0x2c] sm:$0xf]
        %v1718 = vld [vmem:[%s1705 + $0x30] sm:$0xf]
        %v1719 = vld [vmem:[%s1705 + $0x34] sm:$0xf]
        %v1720 = vld [vmem:[%s1705 + $0x38] sm:$0xf]
        %v1721 = vld [vmem:[%s1705 + $0x3c] sm:$0xf]
        %v1723 = vunpack.c.l.b16 %v1704
        %v1724 = vpack.c.b16 %v1723, %v1611
        %v1726 = vshrl.u32 %v1724, 16
        %v1728 = vrot.slane %v1726, 2
        %v1729 = vshll.u32 %v1724, 16
        %v1731 = vrot.slane %v1729, 3
        %v1732 = vor.u32 %v1728, %v1731
        %v1750 = vunpack.c.l.b16 %v1706
        %v1751 = vunpack.c.l.b16 %v1707
        %v1752 = vunpack.c.l.b16 %v1708
        %v1753 = vunpack.c.l.b16 %v1709
        %v1754 = vunpack.c.l.b16 %v1710
        %v1755 = vunpack.c.l.b16 %v1711
        %v1756 = vunpack.c.l.b16 %v1712
        %v1757 = vunpack.c.l.b16 %v1713
        %v1758 = vunpack.c.l.b16 %v1714
        %v1759 = vunpack.c.l.b16 %v1715
        %v1760 = vunpack.c.l.b16 %v1716
        %v1761 = vunpack.c.l.b16 %v1717
        %v1762 = vunpack.c.l.b16 %v1718
        %v1763 = vunpack.c.l.b16 %v1719
        %v1764 = vunpack.c.l.b16 %v1720
        %v1765 = vunpack.c.l.b16 %v1721
        %v1766 = vpack.c.b16 %v1751, %v1750
        %v1767 = vpack.c.b16 %v1753, %v1752
        %v1768 = vpack.c.b16 %v1755, %v1754
        %v1769 = vpack.c.b16 %v1757, %v1756
        %v1770 = vpack.c.b16 %v1759, %v1758
        %v1771 = vpack.c.b16 %v1761, %v1760
        %v1772 = vpack.c.b16 %v1763, %v1762
        %v1773 = vpack.c.b16 %v1765, %v1764
        %1782 = vmatprep.subr.bf16.mxu0 0
        %1783 = vmatpush1.bf16.msra.mxu0 %v1766
        %1784 = vmatprep.subr.bf16.mxu0 0
        %1785 = vmatpush1.bf16.msra.mxu0 %v1767
        %1786 = vmatprep.subr.bf16.mxu0 0
        %1787 = vmatpush1.bf16.msra.mxu0 %v1768
        %1788 = vmatprep.subr.bf16.mxu0 0
        %1789 = vmatpush1.bf16.msra.mxu0 %v1769
        %1790 = vmatprep.subr.bf16.mxu0 0
        %1791 = vmatpush1.bf16.msra.mxu0 %v1770
        %1792 = vmatprep.subr.bf16.mxu0 0
        %1793 = vmatpush1.bf16.msra.mxu0 %v1771
        %1794 = vmatprep.subr.bf16.mxu0 0
        %1795 = vmatpush1.bf16.msra.mxu0 %v1772
        %1796 = vmatprep.subr.bf16.mxu0 0
        %1797 = vmatpush1.bf16.msra.mxu0 %v1773
        %1798 = vmatprep.subr.bf16.mxu0 0
        %1799 = vmatpush1.bf16.msra.mxu0 0
        %1800 = vmatprep.subr.bf16.mxu0 0
        %1801 = vmatpush1.bf16.msra.mxu0 0
        %1802 = vmatprep.subr.bf16.mxu0 0
        %1803 = vmatpush1.bf16.msra.mxu0 0
        %1804 = vmatprep.subr.bf16.mxu0 0
        %1805 = vmatpush1.bf16.msra.mxu0 0
        %1806 = vmatprep.subr.bf16.mxu0 0
        %1807 = vmatpush1.bf16.msra.mxu0 0
        %1808 = vmatprep.subr.bf16.mxu0 0
        %1809 = vmatpush1.bf16.msra.mxu0 0
        %1810 = vmatprep.subr.bf16.mxu0 0
        %1811 = vmatpush1.bf16.msra.mxu0 0
        %1812 = vmatprep.subr.bf16.mxu0 0
        %1813 = vmatpush1.bf16.msra.mxu0 0
        %1814 = vmatprep.mubr.bf16.mxu0 0
        %1815 = vmatmul.mubr.bf16.gmra.mrb[0].mxu0 %v1732
        %v1816 = vpop.f32.mrb[0].mxu0
        %v1817 = vadd.f32 0.0, %v1816
        %v1818 = vpop.f32.mrb[0].mxu0
        %v1819 = vpop.f32.mrb[0].mxu0
        %v1820 = vpop.f32.mrb[0].mxu0
        %1821 = vdwg.mxu0
        %v1822 = vadd.f32 %v1703, %v1817
        %v1823 = vld [vmem:[%s185 + $0x4] sm:$0x8]
        %s1824 = scalar_lea.vmem [#allocation5], 896
        %v1825 = vld [vmem:[%s1824] sm:$0xf]
        %v1826 = vld [vmem:[%s1824 + $0x4] sm:$0xf]
        %v1827 = vld [vmem:[%s1824 + $0x8] sm:$0xf]
        %v1828 = vld [vmem:[%s1824 + $0xc] sm:$0xf]
        %v1829 = vld [vmem:[%s1824 + $0x10] sm:$0xf]
        %v1830 = vld [vmem:[%s1824 + $0x14] sm:$0xf]
        %v1831 = vld [vmem:[%s1824 + $0x18] sm:$0xf]
        %v1832 = vld [vmem:[%s1824 + $0x1c] sm:$0xf]
        %v1833 = vld [vmem:[%s1824 + $0x20] sm:$0xf]
        %v1834 = vld [vmem:[%s1824 + $0x24] sm:$0xf]
        %v1835 = vld [vmem:[%s1824 + $0x28] sm:$0xf]
        %v1836 = vld [vmem:[%s1824 + $0x2c] sm:$0xf]
        %v1837 = vld [vmem:[%s1824 + $0x30] sm:$0xf]
        %v1838 = vld [vmem:[%s1824 + $0x34] sm:$0xf]
        %v1839 = vld [vmem:[%s1824 + $0x38] sm:$0xf]
        %v1840 = vld [vmem:[%s1824 + $0x3c] sm:$0xf]
        %v1842 = vunpack.c.l.b16 %v1823
        %v1843 = vpack.c.b16 %v1723, %v1842
        %v1844 = vrot.slane %v1843, 3
        %v1862 = vunpack.c.l.b16 %v1825
        %v1863 = vunpack.c.l.b16 %v1826
        %v1864 = vunpack.c.l.b16 %v1827
        %v1865 = vunpack.c.l.b16 %v1828
        %v1866 = vunpack.c.l.b16 %v1829
        %v1867 = vunpack.c.l.b16 %v1830
        %v1868 = vunpack.c.l.b16 %v1831
        %v1869 = vunpack.c.l.b16 %v1832
        %v1870 = vunpack.c.l.b16 %v1833
        %v1871 = vunpack.c.l.b16 %v1834
        %v1872 = vunpack.c.l.b16 %v1835
        %v1873 = vunpack.c.l.b16 %v1836
        %v1874 = vunpack.c.l.b16 %v1837
        %v1875 = vunpack.c.l.b16 %v1838
        %v1876 = vunpack.c.l.b16 %v1839
        %v1877 = vunpack.c.l.b16 %v1840
        %v1878 = vpack.c.b16 %v1863, %v1862
        %v1879 = vpack.c.b16 %v1865, %v1864
        %v1880 = vpack.c.b16 %v1867, %v1866
        %v1881 = vpack.c.b16 %v1869, %v1868
        %v1882 = vpack.c.b16 %v1871, %v1870
        %v1883 = vpack.c.b16 %v1873, %v1872
        %v1884 = vpack.c.b16 %v1875, %v1874
        %v1885 = vpack.c.b16 %v1877, %v1876
        %1894 = vmatprep.subr.bf16.mxu0 0
        %1895 = vmatpush1.bf16.msra.mxu0 %v1878
        %1896 = vmatprep.subr.bf16.mxu0 0
        %1897 = vmatpush1.bf16.msra.mxu0 %v1879
        %1898 = vmatprep.subr.bf16.mxu0 0
        %1899 = vmatpush1.bf16.msra.mxu0 %v1880
        %1900 = vmatprep.subr.bf16.mxu0 0
        %1901 = vmatpush1.bf16.msra.mxu0 %v1881
        %1902 = vmatprep.subr.bf16.mxu0 0
        %1903 = vmatpush1.bf16.msra.mxu0 %v1882
        %1904 = vmatprep.subr.bf16.mxu0 0
        %1905 = vmatpush1.bf16.msra.mxu0 %v1883
        %1906 = vmatprep.subr.bf16.mxu0 0
        %1907 = vmatpush1.bf16.msra.mxu0 %v1884
        %1908 = vmatprep.subr.bf16.mxu0 0
        %1909 = vmatpush1.bf16.msra.mxu0 %v1885
        %1910 = vmatprep.subr.bf16.mxu0 0
        %1911 = vmatpush1.bf16.msra.mxu0 0
        %1912 = vmatprep.subr.bf16.mxu0 0
        %1913 = vmatpush1.bf16.msra.mxu0 0
        %1914 = vmatprep.subr.bf16.mxu0 0
        %1915 = vmatpush1.bf16.msra.mxu0 0
        %1916 = vmatprep.subr.bf16.mxu0 0
        %1917 = vmatpush1.bf16.msra.mxu0 0
        %1918 = vmatprep.subr.bf16.mxu0 0
        %1919 = vmatpush1.bf16.msra.mxu0 0
        %1920 = vmatprep.subr.bf16.mxu0 0
        %1921 = vmatpush1.bf16.msra.mxu0 0
        %1922 = vmatprep.subr.bf16.mxu0 0
        %1923 = vmatpush1.bf16.msra.mxu0 0
        %1924 = vmatprep.subr.bf16.mxu0 0
        %1925 = vmatpush1.bf16.msra.mxu0 0
        %1926 = vmatprep.mubr.bf16.mxu0 0
        %1927 = vmatmul.mubr.bf16.gmra.mrb[0].mxu0 %v1844
        %v1928 = vpop.f32.mrb[0].mxu0
        %v1929 = vadd.f32 0.0, %v1928
        %v1930 = vpop.f32.mrb[0].mxu0
        %v1931 = vpop.f32.mrb[0].mxu0
        %v1932 = vpop.f32.mrb[0].mxu0
        %1933 = vdwg.mxu0
        %v1934 = vadd.f32 %v1822, %v1929
        %v1935 = vld [vmem:[%s185 + $0x8] sm:$0xf]
        %s1936 = scalar_lea.vmem [#allocation5], 960
        %v1937 = vld [vmem:[%s1936] sm:$0xf]
        %v1938 = vld [vmem:[%s1936 + $0x4] sm:$0xf]
        %v1939 = vld [vmem:[%s1936 + $0x8] sm:$0xf]
        %v1940 = vld [vmem:[%s1936 + $0xc] sm:$0xf]
        %v1941 = vld [vmem:[%s1936 + $0x10] sm:$0xf]
        %v1942 = vld [vmem:[%s1936 + $0x14] sm:$0xf]
        %v1943 = vld [vmem:[%s1936 + $0x18] sm:$0xf]
        %v1944 = vld [vmem:[%s1936 + $0x1c] sm:$0xf]
        %v1945 = vld [vmem:[%s1936 + $0x20] sm:$0xf]
        %v1946 = vld [vmem:[%s1936 + $0x24] sm:$0xf]
        %v1947 = vld [vmem:[%s1936 + $0x28] sm:$0xf]
        %v1948 = vld [vmem:[%s1936 + $0x2c] sm:$0xf]
        %v1949 = vld [vmem:[%s1936 + $0x30] sm:$0xf]
        %v1950 = vld [vmem:[%s1936 + $0x34] sm:$0xf]
        %v1951 = vld [vmem:[%s1936 + $0x38] sm:$0xf]
        %v1952 = vld [vmem:[%s1936 + $0x3c] sm:$0xf]
        %v1954 = vunpack.c.l.b16 %v1935
        %v1955 = vpack.c.b16 %v1954, %v1842
        %v1957 = vshrl.u32 %v1955, 16
        %v1959 = vrot.slane %v1957, 3
        %v1960 = vshll.u32 %v1955, 16
        %v1962 = vrot.slane %v1960, 4
        %v1963 = vor.u32 %v1959, %v1962
        %v1981 = vunpack.c.l.b16 %v1937
        %v1982 = vunpack.c.l.b16 %v1938
        %v1983 = vunpack.c.l.b16 %v1939
        %v1984 = vunpack.c.l.b16 %v1940
        %v1985 = vunpack.c.l.b16 %v1941
        %v1986 = vunpack.c.l.b16 %v1942
        %v1987 = vunpack.c.l.b16 %v1943
        %v1988 = vunpack.c.l.b16 %v1944
        %v1989 = vunpack.c.l.b16 %v1945
        %v1990 = vunpack.c.l.b16 %v1946
        %v1991 = vunpack.c.l.b16 %v1947
        %v1992 = vunpack.c.l.b16 %v1948
        %v1993 = vunpack.c.l.b16 %v1949
        %v1994 = vunpack.c.l.b16 %v1950
        %v1995 = vunpack.c.l.b16 %v1951
        %v1996 = vunpack.c.l.b16 %v1952
        %v1997 = vpack.c.b16 %v1982, %v1981
        %v1998 = vpack.c.b16 %v1984, %v1983
        %v1999 = vpack.c.b16 %v1986, %v1985
        %v2000 = vpack.c.b16 %v1988, %v1987
        %v2001 = vpack.c.b16 %v1990, %v1989
        %v2002 = vpack.c.b16 %v1992, %v1991
        %v2003 = vpack.c.b16 %v1994, %v1993
        %v2004 = vpack.c.b16 %v1996, %v1995
        %2013 = vmatprep.subr.bf16.mxu0 0
        %2014 = vmatpush1.bf16.msra.mxu0 %v1997
        %2015 = vmatprep.subr.bf16.mxu0 0
        %2016 = vmatpush1.bf16.msra.mxu0 %v1998
        %2017 = vmatprep.subr.bf16.mxu0 0
        %2018 = vmatpush1.bf16.msra.mxu0 %v1999
        %2019 = vmatprep.subr.bf16.mxu0 0
        %2020 = vmatpush1.bf16.msra.mxu0 %v2000
        %2021 = vmatprep.subr.bf16.mxu0 0
        %2022 = vmatpush1.bf16.msra.mxu0 %v2001
        %2023 = vmatprep.subr.bf16.mxu0 0
        %2024 = vmatpush1.bf16.msra.mxu0 %v2002
        %2025 = vmatprep.subr.bf16.mxu0 0
        %2026 = vmatpush1.bf16.msra.mxu0 %v2003
        %2027 = vmatprep.subr.bf16.mxu0 0
        %2028 = vmatpush1.bf16.msra.mxu0 %v2004
        %2029 = vmatprep.subr.bf16.mxu0 0
        %2030 = vmatpush1.bf16.msra.mxu0 0
        %2031 = vmatprep.subr.bf16.mxu0 0
        %2032 = vmatpush1.bf16.msra.mxu0 0
        %2033 = vmatprep.subr.bf16.mxu0 0
        %2034 = vmatpush1.bf16.msra.mxu0 0
        %2035 = vmatprep.subr.bf16.mxu0 0
        %2036 = vmatpush1.bf16.msra.mxu0 0
        %2037 = vmatprep.subr.bf16.mxu0 0
        %2038 = vmatpush1.bf16.msra.mxu0 0
        %2039 = vmatprep.subr.bf16.mxu0 0
        %2040 = vmatpush1.bf16.msra.mxu0 0
        %2041 = vmatprep.subr.bf16.mxu0 0
        %2042 = vmatpush1.bf16.msra.mxu0 0
        %2043 = vmatprep.subr.bf16.mxu0 0
        %2044 = vmatpush1.bf16.msra.mxu0 0
        %2045 = vmatprep.mubr.bf16.mxu0 0
        %2046 = vmatmul.mubr.bf16.gmra.mrb[0].mxu0 %v1963
        %v2047 = vpop.f32.mrb[0].mxu0
        %v2048 = vadd.f32 0.0, %v2047
        %v2049 = vpop.f32.mrb[0].mxu0
        %v2050 = vpop.f32.mrb[0].mxu0
        %v2051 = vpop.f32.mrb[0].mxu0
        %2052 = vdwg.mxu0
        %v2053 = vadd.f32 %v1934, %v2048
        %v2054 = vld [vmem:[#allocation7] sm:$0x1]
        %v2056 = vlaneseq
        %v2057 = vshrl.u32 %v2056, 7
        %v2058 = vsub.s32 0, %v2057
        %v2059 = vrot.slane %v2054, %v2058
        %v2061 = vadd.f32 %v2053, %v2059
        %2062 = vst [vmem:[%s215] sm:$0xff] %v2061
        %s2063 = sand.u32 %s97, 1
        %s2064 = scalar_lea.sflag [#allocation4], %s2063
        %s2065 = sand.u32 %s97, 1
        %s2066 = smul.addr %s2065, 8
        %s2067 = scalar_lea.vmem [#allocation8], %s2066
        // Predicated region
        $region45: #{fc_discriminator_forward.9} parent=31 // pred_check
          %p2068 = pneg %p107
        $region46: #{fc_discriminator_forward.9} parent=31 // pred_check_branch
          %2070 = sbr.rel (%p2068) target = $region48
        $region47: #{fc_discriminator_forward.9} parent=31 // pred_region
          %s2072 = ssub.s32 128, 128
          %2073 = vsyncadd %s2064, %s2072
          %s2074 = smul.addr %s21, 128
          %s2075 = scalar_lea.hbm %s3, %s2074
          %s2077 = sshll.u32 %s2067, 4
          %s2078 = int_to_ptr.vmem [resolvable:$true] %s2077
          %2080 = dma.vmem_to_hbm [thread:$0]  %s2078, 128, %s2075, %s2064
        $region48: #{fc_discriminator_forward.9} parent=31 // pred_fallthru
          _
      $region32: #{fc_discriminator_forward.9} parent=5 // pred_fallthru
        _
      %p2081 = scmp.le.s32.totalorder 2, %s16
      // Predicated region
      $region49: #{fc_discriminator_forward.9} parent=5 // pred_check
        %p2082 = pneg %p2081
      $region50: #{fc_discriminator_forward.9} parent=5 // pred_check_branch
        %2084 = sbr.rel (%p2082) target = $region52
      $region51: #{fc_discriminator_forward.9} parent=5 // pred_region
        %s2085 = ssub.s32 %s16, 2
        // Predicated region
        $region53: #{fc_discriminator_forward.9} parent=51 // pred_check
          %p2086 = pneg %p113
        $region54: #{fc_discriminator_forward.9} parent=51 // pred_check_branch
          %2088 = sbr.rel (%p2086) target = $region56
        $region55: #{fc_discriminator_forward.9} parent=51 // pred_region
          %s2089 = sand.u32 %s98, 1
          %s2090 = scalar_lea.sflag [#allocation4], %s2089
          %s2091 = sand.u32 %s98, 1
          %s2092 = smul.addr %s2091, 8
          %s2093 = scalar_lea.vmem [#allocation8], %s2092
          %2094 = dma.done %s2090, 128
        $region56: #{fc_discriminator_forward.9} parent=51 // pred_fallthru
          _
      $region52: #{fc_discriminator_forward.9} parent=5 // pred_fallthru
        _
    $region6: #{fc_discriminator_forward.9} parent=1 // loop_footer
      %s20 = sadd.s32 1, %s16
    $region7: #{fc_discriminator_forward.9} parent=1 // loop_footer_branch
      %15 = sbr.rel target = $region3
    $region8: #{fc_discriminator_forward.9} parent=1 // loop_exit
      _
    %2095 = vsyncpa [#allocation3], 1
    %s2096 = scalar_lea.sflag [#allocation3], 1
    %2097 = vsyncpa %s2096, 1
    %2098 = vsyncpa [#allocation6], 1
    %2099 = vsyncpa [#allocation4], 1
    %s2100 = scalar_lea.sflag [#allocation4], 1
    %2101 = vsyncpa %s2100, 1

</llo_original>
